<compile_context>
chip_gen: v7x
topology: tpu7x:2x2x1
jax: 0.10.0
libtpu: 0.0.40
codegen_flags: <defaults>
</compile_context>

<pallas_src>
import jax
import jax.numpy as jnp
import numpy as np
from jax.experimental import pallas as pl
from jax.experimental.pallas import tpu as pltpu

NUM_CLASSES = 10
BN_EPS = 1e-5
ROWS_PER_IMAGE = 4 * 3 * 14          # pooled rows per image (chunk, oh, ow)
FC1_IN = 128 * 3 * 14                # 5376
FC1_OUT_PAD = 640                    # 600 padded to 5*128 lanes


# ----------------------------- Pallas kernels ------------------------------

def layer1_kernel(p_ref, w_ref, scale_ref, shift_ref, o_ref):
    """Fused conv3x3 (im2col matmul, K=9) + folded BN + ReLU + MaxPool 2x2.

    p_ref:     (4, bm, 9)  im2col patches; leading axis = the 2x2 pool positions
    w_ref:     (9, 32)     conv weight (taps x out-channels), unpadded
    scale_ref: (1, 32)     folded BN scale  (gamma / sqrt(var+eps))
    shift_ref: (1, 32)     folded BN shift  (beta - mean*scale + conv_bias*scale)
    o_ref:     (bm, 32)    pooled output rows ordered (n, chunk, oh, ow)
    """
    def conv_bn_relu(i):
        y = jnp.dot(p_ref[i], w_ref[...], preferred_element_type=jnp.float32)
        # BN + ReLU per pool candidate (scale may be negative -> must precede max).
        return jnp.maximum(y * scale_ref[...] + shift_ref[...], 0.0)

    o_ref[...] = jnp.maximum(
        jnp.maximum(conv_bn_relu(0), conv_bn_relu(1)),
        jnp.maximum(conv_bn_relu(2), conv_bn_relu(3)),
    )


def fc_fused_kernel(x_ref, w1_ref, b1_ref, w2_ref, b2_ref, w3_ref, b3_ref,
                    o_ref, acc_ref):
    """fc1 (K-tiled over the grid) + bias + ReLU, then fc2+ReLU and fc3 in the
    last-step epilogue.  acc_ref: (bsz, 640) f32 scratch accumulator."""
    k = pl.program_id(0)

    @pl.when(k == 0)
    def _():
        acc_ref[...] = jnp.zeros_like(acc_ref)

    acc_ref[...] += jnp.dot(x_ref[...], w1_ref[...],
                            preferred_element_type=jnp.float32)

    @pl.when(k == pl.num_programs(0) - 1)
    def _():
        h1 = jnp.maximum(acc_ref[...] + b1_ref[...], 0.0)            # (bsz, 640)
        h2 = jnp.maximum(
            jnp.dot(h1, w2_ref[...], preferred_element_type=jnp.float32)
            + b2_ref[...], 0.0)                                       # (bsz, 120)
        o_ref[...] = (jnp.dot(h2, w3_ref[...], preferred_element_type=jnp.float32)
                      + b3_ref[...]).astype(o_ref.dtype)              # (bsz, nc)


# --------------------------------- Glue -------------------------------------

def build_patches(x):
    """x: (N,1,28,28) -> pool-aware im2col patches (4, Ms, 9), Ms = N*4*3*14.

    Leading axis = pool position (ph, pw); rows ordered (n, chunk, oh, ow);
    lanes = the 9 conv taps (UNpadded -> 14x less HBM than the old 128-lane pad).
    """
    n = x.shape[0]
    xc = x.reshape(n, 4, 7, 28)                          # torch.split(x, 7, dim=2)
    xp = jnp.pad(xc, ((0, 0), (0, 0), (1, 1), (1, 1)))   # conv padding=1 per chunk
    slabs = []
    for ph in range(2):            # pool row offset
        for pw in range(2):        # pool col offset
            taps = []
            for dy in range(3):
                for dx in range(3):
                    h0 = ph + dy
                    w0 = pw + dx
                    # output rows h = 2*oh+ph (oh<3), cols w = 2*ow+pw (ow<14)
                    taps.append(xp[:, :, h0:h0 + 5:2, w0:w0 + 27:2])  # (N,4,3,14)
            slabs.append(jnp.stack(taps, axis=-1).reshape(1, -1, 9))
    return jnp.concatenate(slabs, axis=0)                # (4, Ms, 9) f32


def prepare_params(params):
    """One-time parameter folding: BN fold, w1 row-permute to the pooled layout
    (kills the runtime activation transpose), 600->640 column pad, bf16 cast."""
    inv_std = 1.0 / jnp.sqrt(params["bn_var"] + BN_EPS)
    scale = params["bn_gamma"] * inv_std
    shift = params["bn_beta"] - params["bn_mean"] * scale + params["conv_b"] * scale

    wmat = params["conv_w"].reshape(32, 9).T             # (9, 32), taps = 3*dy+dx

    # torch flatten order is (chunk, channel, oh, ow); pooled layout is
    # (chunk, oh, ow, channel) -> permute w1 rows accordingly (free, done once).
    w1 = params["w1"].reshape(4, 32, 3, 14, 600).transpose(0, 2, 3, 1, 4)
    w1 = w1.reshape(FC1_IN, 600)
    w1 = jnp.pad(w1, ((0, 0), (0, FC1_OUT_PAD - 600))).astype(jnp.bfloat16)
    b1 = jnp.pad(params["b1"], (0, FC1_OUT_PAD - 600)).reshape(1, FC1_OUT_PAD)
    w2 = jnp.pad(params["w2"], ((0, FC1_OUT_PAD - 600), (0, 0)))  # zero extra rows

    return {
        "conv_wmat": wmat.astype(jnp.float32),
        "scale": scale.reshape(1, 32).astype(jnp.float32),
        "shift": shift.reshape(1, 32).astype(jnp.float32),
        "w1": w1, "b1": b1.astype(jnp.float32),
        "w2": w2.astype(jnp.float32), "b2": params["b2"].reshape(1, 120),
        "w3": params["w3"], "b3": params["b3"].reshape(1, NUM_CLASSES),
    }


def _pick_block_images(n):
    """Images per layer1 grid step: ~8 images/block, keep >=2 steps when possible,
    and make the block count divide N (avoids a ragged tail)."""
    imgs = min(8, max(1, n // 2))
    while n % imgs:
        imgs -= 1
    return imgs


def layer1(patches, prepped, n):
    ms = n * ROWS_PER_IMAGE
    imgs = _pick_block_images(n)
    bm = imgs * ROWS_PER_IMAGE                       # multiple of 8 (168*imgs)
    return pl.pallas_call(
        layer1_kernel,
        out_shape=jax.ShapeDtypeStruct((ms, 32), jnp.float32),
        grid_spec=pltpu.PrefetchScalarGridSpec(
            num_scalar_prefetch=0,
            grid=(n // imgs,),
            in_specs=[
                pl.BlockSpec((4, bm, 9), lambda i: (0, i, 0)),
                pl.BlockSpec((9, 32), lambda i: (0, 0)),
                pl.BlockSpec((1, 32), lambda i: (0, 0)),
                pl.BlockSpec((1, 32), lambda i: (0, 0)),
            ],
            out_specs=pl.BlockSpec((bm, 32), lambda i: (i, 0)),
        ),
        compiler_params=pltpu.CompilerParams(
            dimension_semantics=("parallel",)),      # independent row blocks (v7x)
    )(patches, prepped["conv_wmat"], prepped["scale"], prepped["shift"])


def fc_stack(feat, p, *, block_k=2688):
    """Single fused pallas_call for fc1+ReLU -> fc2+ReLU -> fc3."""
    bsz, kdim = feat.shape
    nh1 = p["w1"].shape[1]                           # 640
    nh2 = p["w2"].shape[1]                           # 120
    nout = p["w3"].shape[1]                          # num_classes
    assert kdim % block_k == 0
    nsteps = kdim // block_k

    flops = 2 * bsz * (kdim * nh1 + nh1 * nh2 + nh2 * nout)
    bytes_accessed = int(
        p["w1"].size * 2 + feat.size * 2
        + (p["w2"].size + p["w3"].size + p["b1"].size + p["b2"].size
           + p["b3"].size + bsz * nout) * 4)

    return pl.pallas_call(
        fc_fused_kernel,
        out_shape=jax.ShapeDtypeStruct((bsz, nout), jnp.float32),
        grid_spec=pltpu.PrefetchScalarGridSpec(
            num_scalar_prefetch=0,
            grid=(nsteps,),
            in_specs=[
                pl.BlockSpec((bsz, block_k), lambda k: (0, k)),   # feat (bf16)
                pl.BlockSpec((block_k, nh1), lambda k: (k, 0)),   # w1 (bf16 stream)
                pl.BlockSpec((1, nh1), lambda k: (0, 0)),         # b1
                pl.BlockSpec((nh1, nh2), lambda k: (0, 0)),       # w2 (resident)
                pl.BlockSpec((1, nh2), lambda k: (0, 0)),         # b2
                pl.BlockSpec((nh2, nout), lambda k: (0, 0)),      # w3 (resident)
                pl.BlockSpec((1, nout), lambda k: (0, 0)),        # b3
            ],
            out_specs=pl.BlockSpec((bsz, nout), lambda k: (0, 0)),
            scratch_shapes=[pltpu.VMEM((bsz, nh1), jnp.float32)],
        ),
        compiler_params=pltpu.CompilerParams(dimension_semantics=("arbitrary",)),
        cost_estimate=pl.CostEstimate(flops=flops, transcendentals=0,
                                      bytes_accessed=bytes_accessed),
    )(feat, p["w1"], p["b1"], p["w2"], p["b2"], p["w3"], p["b3"])


def cnn1_forward(prepped, x):
    n, c, h, w = x.shape
    assert (c, h, w) == (1, 28, 28), "fc1 in_features=128*3*14 requires 1x28x28"

    patches = build_patches(x)                        # (4, Ms, 9) f32
    pooled = layer1(patches, prepped, n)              # (Ms, 32) f32

    # pooled rows are (n, chunk, oh, ow) with channels on lanes; w1 was permuted
    # to this order, so `feat` is a pure reshape (no activation transpose).
    feat = pooled.reshape(n, FC1_IN).astype(jnp.bfloat16)

    return fc_stack(feat, prepped)


# ------------------------- Pure-JAX reference check -------------------------

def cnn1_reference(params, x):
    n = x.shape[0]
    inv_std = 1.0 / jnp.sqrt(params["bn_var"] + BN_EPS)
    outs = []
    for i in range(4):
        xs = x[:, :, 7 * i:7 * (i + 1), :]
        z = jax.lax.conv_general_dilated(
            xs, params["conv_w"], window_strides=(1, 1),
            padding=((1, 1), (1, 1)),
            dimension_numbers=("NCHW", "OIHW", "NCHW"))
        z = z + params["conv_b"][None, :, None, None]
        z = (z - params["bn_mean"][None, :, None, None]) * inv_std[None, :, None, None]
        z = z * params["bn_gamma"][None, :, None, None] + params["bn_beta"][None, :, None, None]
        z = jnp.maximum(z, 0.0)
        z = z[:, :, :6, :].reshape(n, 32, 3, 2, 14, 2).max(axis=(3, 5))   # MaxPool2d(2,2)
        outs.append(z)
    out = jnp.concatenate(outs, axis=1).reshape(n, -1)
    out = jnp.maximum(out @ params["w1"] + params["b1"], 0.0)
    out = jnp.maximum(out @ params["w2"] + params["b2"], 0.0)
    return out @ params["w3"] + params["b3"]


# --------------------------------- Main --------------------------------------

if __name__ == "__main__":
    key = jax.random.PRNGKey(0)
    keys = jax.random.split(key, 13)
    f32 = jnp.float32
    params = {
        "conv_w": jax.random.normal(keys[0], (32, 1, 3, 3), f32) / 3.0,
        "conv_b": 0.1 * jax.random.normal(keys[1], (32,), f32),
        "bn_gamma": 1.0 + 0.1 * jax.random.normal(keys[2], (32,), f32),
        "bn_beta": 0.1 * jax.random.normal(keys[3], (32,), f32),
        "bn_mean": 0.1 * jax.random.normal(keys[4], (32,), f32),
        "bn_var": jax.random.uniform(keys[5], (32,), f32, 0.5, 1.5),
        "w1": jax.random.normal(keys[6], (FC1_IN, 600), f32) / np.sqrt(float(FC1_IN)),
        "b1": 0.1 * jax.random.normal(keys[7], (600,), f32),
        "w2": jax.random.normal(keys[8], (600, 120), f32) / np.sqrt(600.0),
        "b2": 0.1 * jax.random.normal(keys[9], (120,), f32),
        "w3": jax.random.normal(keys[10], (120, NUM_CLASSES), f32) / np.sqrt(120.0),
        "b3": 0.1 * jax.random.normal(keys[11], (NUM_CLASSES,), f32),
    }
    # Input must be (N, 1, 28, 28) for fc1's in_features = 128*3*14 to hold.
    x = jax.random.normal(keys[12], (2, 1, 28, 28), f32)

    prepped = prepare_params(params)                  # one-time host-side fold
    fwd = jax.jit(cnn1_forward)
    out = jax.block_until_ready(fwd(prepped, x))
    assert out.shape == (2, NUM_CLASSES)

    ref = cnn1_reference(params, x)
    np.testing.assert_allclose(np.asarray(out), np.asarray(ref), rtol=5e-2, atol=5e-2)

    print("KERNEL_OK")
</pallas_src>

<mosaic_0001>
module attributes {stable_mosaic.version = 11 : i64} {
  func.func @layer1_kernel(%arg0: i32, %arg1: memref<4x168x9xf32, #tpu.memory_space<vmem>>, %arg2: memref<9x32xf32, #tpu.memory_space<vmem>>, %arg3: memref<1x32xf32, #tpu.memory_space<vmem>>, %arg4: memref<1x32xf32, #tpu.memory_space<vmem>>, %arg5: memref<168x32xf32, #tpu.memory_space<vmem>>) attributes {dimension_semantics = [#tpu.dimension_semantics<parallel>], iteration_bounds = array<i64: 2>, scalar_prefetch = 0 : i64, scratch_operands = 0 : i64, tpu.core_type = #tpu.core_type<tc>, window_params = [{transform_indices = @transform_0, window_bounds = array<i64: 4, 168, 9>}, {pipeline_mode = #tpu.pipeline_mode<synchronous>, transform_indices = @transform_1, window_bounds = array<i64: 9, 32>}, {pipeline_mode = #tpu.pipeline_mode<synchronous>, transform_indices = @transform_2, window_bounds = array<i64: 1, 32>}, {pipeline_mode = #tpu.pipeline_mode<synchronous>, transform_indices = @transform_3, window_bounds = array<i64: 1, 32>}, {transform_indices = @transform_4, window_bounds = array<i64: 168, 32>}]} {
    %c0 = arith.constant 0 : index
    %c0_0 = arith.constant 0 : index
    %c0_1 = arith.constant 0 : index
    %0 = vector.load %arg1[%c0, %c0_0, %c0_1] : memref<4x168x9xf32, #tpu.memory_space<vmem>>, vector<1x168x9xf32>
    %1 = vector.shape_cast %0 : vector<1x168x9xf32> to vector<168x9xf32>
    %c0_2 = arith.constant 0 : index
    %c0_3 = arith.constant 0 : index
    %2 = vector.load %arg2[%c0_2, %c0_3] : memref<9x32xf32, #tpu.memory_space<vmem>>, vector<9x32xf32>
    %cst = arith.constant dense<0.000000e+00> : vector<168x32xf32>
    %3 = tpu.matmul %1, %2, %cst {dimension_numbers = #tpu.dot_dimension_numbers<[1], [0], [0], [1], [0, 0, 1, 1], [], []>} : vector<168x9xf32>, vector<9x32xf32>, vector<168x32xf32> -> vector<168x32xf32>
    %c0_4 = arith.constant 0 : index
    %c0_5 = arith.constant 0 : index
    %4 = vector.load %arg3[%c0_4, %c0_5] : memref<1x32xf32, #tpu.memory_space<vmem>>, vector<1x32xf32>
    %5 = vector.broadcast %4 : vector<1x32xf32> to vector<168x32xf32>
    %6 = arith.mulf %3, %5 : vector<168x32xf32>
    %c0_6 = arith.constant 0 : index
    %c0_7 = arith.constant 0 : index
    %7 = vector.load %arg4[%c0_6, %c0_7] : memref<1x32xf32, #tpu.memory_space<vmem>>, vector<1x32xf32>
    %8 = vector.broadcast %7 : vector<1x32xf32> to vector<168x32xf32>
    %9 = arith.addf %6, %8 : vector<168x32xf32>
    %cst_8 = arith.constant 0.000000e+00 : f32
    %10 = vector.broadcast %cst_8 : f32 to vector<168x32xf32>
    %11 = arith.maximumf %9, %10 : vector<168x32xf32>
    %c1 = arith.constant 1 : index
    %c0_9 = arith.constant 0 : index
    %c0_10 = arith.constant 0 : index
    %12 = vector.load %arg1[%c1, %c0_9, %c0_10] : memref<4x168x9xf32, #tpu.memory_space<vmem>>, vector<1x168x9xf32>
    %13 = vector.shape_cast %12 : vector<1x168x9xf32> to vector<168x9xf32>
    %c0_11 = arith.constant 0 : index
    %c0_12 = arith.constant 0 : index
    %14 = vector.load %arg2[%c0_11, %c0_12] : memref<9x32xf32, #tpu.memory_space<vmem>>, vector<9x32xf32>
    %cst_13 = arith.constant dense<0.000000e+00> : vector<168x32xf32>
    %15 = tpu.matmul %13, %14, %cst_13 {dimension_numbers = #tpu.dot_dimension_numbers<[1], [0], [0], [1], [0, 0, 1, 1], [], []>} : vector<168x9xf32>, vector<9x32xf32>, vector<168x32xf32> -> vector<168x32xf32>
    %c0_14 = arith.constant 0 : index
    %c0_15 = arith.constant 0 : index
    %16 = vector.load %arg3[%c0_14, %c0_15] : memref<1x32xf32, #tpu.memory_space<vmem>>, vector<1x32xf32>
    %17 = vector.broadcast %16 : vector<1x32xf32> to vector<168x32xf32>
    %18 = arith.mulf %15, %17 : vector<168x32xf32>
    %c0_16 = arith.constant 0 : index
    %c0_17 = arith.constant 0 : index
    %19 = vector.load %arg4[%c0_16, %c0_17] : memref<1x32xf32, #tpu.memory_space<vmem>>, vector<1x32xf32>
    %20 = vector.broadcast %19 : vector<1x32xf32> to vector<168x32xf32>
    %21 = arith.addf %18, %20 : vector<168x32xf32>
    %cst_18 = arith.constant 0.000000e+00 : f32
    %22 = vector.broadcast %cst_18 : f32 to vector<168x32xf32>
    %23 = arith.maximumf %21, %22 : vector<168x32xf32>
    %24 = arith.maximumf %11, %23 : vector<168x32xf32>
    %c2 = arith.constant 2 : index
    %c0_19 = arith.constant 0 : index
    %c0_20 = arith.constant 0 : index
    %25 = vector.load %arg1[%c2, %c0_19, %c0_20] : memref<4x168x9xf32, #tpu.memory_space<vmem>>, vector<1x168x9xf32>
    %26 = vector.shape_cast %25 : vector<1x168x9xf32> to vector<168x9xf32>
    %c0_21 = arith.constant 0 : index
    %c0_22 = arith.constant 0 : index
    %27 = vector.load %arg2[%c0_21, %c0_22] : memref<9x32xf32, #tpu.memory_space<vmem>>, vector<9x32xf32>
    %cst_23 = arith.constant dense<0.000000e+00> : vector<168x32xf32>
    %28 = tpu.matmul %26, %27, %cst_23 {dimension_numbers = #tpu.dot_dimension_numbers<[1], [0], [0], [1], [0, 0, 1, 1], [], []>} : vector<168x9xf32>, vector<9x32xf32>, vector<168x32xf32> -> vector<168x32xf32>
    %c0_24 = arith.constant 0 : index
    %c0_25 = arith.constant 0 : index
    %29 = vector.load %arg3[%c0_24, %c0_25] : memref<1x32xf32, #tpu.memory_space<vmem>>, vector<1x32xf32>
    %30 = vector.broadcast %29 : vector<1x32xf32> to vector<168x32xf32>
    %31 = arith.mulf %28, %30 : vector<168x32xf32>
    %c0_26 = arith.constant 0 : index
    %c0_27 = arith.constant 0 : index
    %32 = vector.load %arg4[%c0_26, %c0_27] : memref<1x32xf32, #tpu.memory_space<vmem>>, vector<1x32xf32>
    %33 = vector.broadcast %32 : vector<1x32xf32> to vector<168x32xf32>
    %34 = arith.addf %31, %33 : vector<168x32xf32>
    %cst_28 = arith.constant 0.000000e+00 : f32
    %35 = vector.broadcast %cst_28 : f32 to vector<168x32xf32>
    %36 = arith.maximumf %34, %35 : vector<168x32xf32>
    %c3 = arith.constant 3 : index
    %c0_29 = arith.constant 0 : index
    %c0_30 = arith.constant 0 : index
    %37 = vector.load %arg1[%c3, %c0_29, %c0_30] : memref<4x168x9xf32, #tpu.memory_space<vmem>>, vector<1x168x9xf32>
    %38 = vector.shape_cast %37 : vector<1x168x9xf32> to vector<168x9xf32>
    %c0_31 = arith.constant 0 : index
    %c0_32 = arith.constant 0 : index
    %39 = vector.load %arg2[%c0_31, %c0_32] : memref<9x32xf32, #tpu.memory_space<vmem>>, vector<9x32xf32>
    %cst_33 = arith.constant dense<0.000000e+00> : vector<168x32xf32>
    %40 = tpu.matmul %38, %39, %cst_33 {dimension_numbers = #tpu.dot_dimension_numbers<[1], [0], [0], [1], [0, 0, 1, 1], [], []>} : vector<168x9xf32>, vector<9x32xf32>, vector<168x32xf32> -> vector<168x32xf32>
    %c0_34 = arith.constant 0 : index
    %c0_35 = arith.constant 0 : index
    %41 = vector.load %arg3[%c0_34, %c0_35] : memref<1x32xf32, #tpu.memory_space<vmem>>, vector<1x32xf32>
    %42 = vector.broadcast %41 : vector<1x32xf32> to vector<168x32xf32>
    %43 = arith.mulf %40, %42 : vector<168x32xf32>
    %c0_36 = arith.constant 0 : index
    %c0_37 = arith.constant 0 : index
    %44 = vector.load %arg4[%c0_36, %c0_37] : memref<1x32xf32, #tpu.memory_space<vmem>>, vector<1x32xf32>
    %45 = vector.broadcast %44 : vector<1x32xf32> to vector<168x32xf32>
    %46 = arith.addf %43, %45 : vector<168x32xf32>
    %cst_38 = arith.constant 0.000000e+00 : f32
    %47 = vector.broadcast %cst_38 : f32 to vector<168x32xf32>
    %48 = arith.maximumf %46, %47 : vector<168x32xf32>
    %49 = arith.maximumf %36, %48 : vector<168x32xf32>
    %50 = arith.maximumf %24, %49 : vector<168x32xf32>
    %c0_39 = arith.constant 0 : index
    %c0_40 = arith.constant 0 : index
    %51 = vector.load %arg5[%c0_39, %c0_40] : memref<168x32xf32, #tpu.memory_space<vmem>>, vector<168x32xf32>
    tpu.vector_store %arg5[%c0_39, %c0_40], %50 {strides = array<i32>} : memref<168x32xf32, #tpu.memory_space<vmem>>, vector<168x32xf32>,
    return
  }
  func.func @transform_0(%arg0: i32) -> (i32, i32, i32) {
    %c0_i32 = arith.constant 0 : i32
    %c0_i32_0 = arith.constant 0 : i32
    %c0_i32_1 = arith.constant 0 : i32
    return %c0_i32, %arg0, %c0_i32_0 : i32, i32, i32
  }
  func.func @transform_1(%arg0: i32) -> (i32, i32) {
    %c0_i32 = arith.constant 0 : i32
    %c0_i32_0 = arith.constant 0 : i32
    %c0_i32_1 = arith.constant 0 : i32
    return %c0_i32, %c0_i32_0 : i32, i32
  }
  func.func @transform_2(%arg0: i32) -> (i32, i32) {
    %c0_i32 = arith.constant 0 : i32
    %c0_i32_0 = arith.constant 0 : i32
    %c0_i32_1 = arith.constant 0 : i32
    return %c0_i32, %c0_i32_0 : i32, i32
  }
  func.func @transform_3(%arg0: i32) -> (i32, i32) {
    %c0_i32 = arith.constant 0 : i32
    %c0_i32_0 = arith.constant 0 : i32
    %c0_i32_1 = arith.constant 0 : i32
    return %c0_i32, %c0_i32_0 : i32, i32
  }
  func.func @transform_4(%arg0: i32) -> (i32, i32) {
    %c0_i32 = arith.constant 0 : i32
    %c0_i32_0 = arith.constant 0 : i32
    return %arg0, %c0_i32 : i32, i32
  }
}

module attributes {stable_mosaic.version = 11 : i64} {
  func.func @fc_fused_kernel(%arg0: i32, %arg1: memref<2x2688xbf16, #tpu.memory_space<vmem>>, %arg2: memref<2688x640xbf16, #tpu.memory_space<vmem>>, %arg3: memref<1x640xf32, #tpu.memory_space<vmem>>, %arg4: memref<640x120xf32, #tpu.memory_space<vmem>>, %arg5: memref<1x120xf32, #tpu.memory_space<vmem>>, %arg6: memref<120x10xf32, #tpu.memory_space<vmem>>, %arg7: memref<1x10xf32, #tpu.memory_space<vmem>>, %arg8: memref<2x10xf32, #tpu.memory_space<vmem>>, %arg9: memref<2x640xf32, #tpu.memory_space<vmem>>) attributes {dimension_semantics = [#tpu.dimension_semantics<arbitrary>], iteration_bounds = array<i64: 2>, scalar_prefetch = 0 : i64, scratch_operands = 1 : i64, tpu.core_type = #tpu.core_type<tc>, window_params = [{transform_indices = @transform_0, window_bounds = array<i64: 2, 2688>}, {transform_indices = @transform_1, window_bounds = array<i64: 2688, 640>}, {pipeline_mode = #tpu.pipeline_mode<synchronous>, transform_indices = @transform_2, window_bounds = array<i64: 1, 640>}, {pipeline_mode = #tpu.pipeline_mode<synchronous>, transform_indices = @transform_3, window_bounds = array<i64: 640, 120>}, {pipeline_mode = #tpu.pipeline_mode<synchronous>, transform_indices = @transform_4, window_bounds = array<i64: 1, 120>}, {pipeline_mode = #tpu.pipeline_mode<synchronous>, transform_indices = @transform_5, window_bounds = array<i64: 120, 10>}, {pipeline_mode = #tpu.pipeline_mode<synchronous>, transform_indices = @transform_6, window_bounds = array<i64: 1, 10>}, {pipeline_mode = #tpu.pipeline_mode<synchronous>, transform_indices = @transform_7, window_bounds = array<i64: 2, 10>}]} {
    %c0_i32 = arith.constant 0 : i32
    %0 = arith.cmpi eq, %arg0, %c0_i32 : i32
    %1 = arith.extui %0 : i1 to i32
    %c0_i32_0 = arith.constant 0 : i32
    %2 = arith.cmpi ne, %1, %c0_i32_0 : i32
    scf.if %2 {
      %cst_9 = arith.constant 0.000000e+00 : f32
      %12 = vector.broadcast %cst_9 : f32 to vector<2x640xf32>
      %c0_10 = arith.constant 0 : index
      %c0_11 = arith.constant 0 : index
      %13 = vector.load %arg9[%c0_10, %c0_11] : memref<2x640xf32, #tpu.memory_space<vmem>>, vector<2x640xf32>
      tpu.vector_store %arg9[%c0_10, %c0_11], %12 {strides = array<i32>} : memref<2x640xf32, #tpu.memory_space<vmem>>, vector<2x640xf32>,
    } else {
    }
    %c0 = arith.constant 0 : index
    %c0_1 = arith.constant 0 : index
    %3 = vector.load %arg9[%c0, %c0_1] : memref<2x640xf32, #tpu.memory_space<vmem>>, vector<2x640xf32>
    %c0_2 = arith.constant 0 : index
    %c0_3 = arith.constant 0 : index
    %4 = vector.load %arg1[%c0_2, %c0_3] : memref<2x2688xbf16, #tpu.memory_space<vmem>>, vector<2x2688xbf16>
    %c0_4 = arith.constant 0 : index
    %c0_5 = arith.constant 0 : index
    %5 = vector.load %arg2[%c0_4, %c0_5] : memref<2688x640xbf16, #tpu.memory_space<vmem>>, vector<2688x640xbf16>
    %cst = arith.constant dense<0.000000e+00> : vector<2x640xf32>
    %6 = tpu.matmul %4, %5, %cst {dimension_numbers = #tpu.dot_dimension_numbers<[1], [0], [0], [1], [0, 0, 1, 1], [], []>} : vector<2x2688xbf16>, vector<2688x640xbf16>, vector<2x640xf32> -> vector<2x640xf32>
    %7 = arith.addf %3, %6 : vector<2x640xf32>
    %c0_6 = arith.constant 0 : index
    %c0_7 = arith.constant 0 : index
    %8 = vector.load %arg9[%c0_6, %c0_7] : memref<2x640xf32, #tpu.memory_space<vmem>>, vector<2x640xf32>
    tpu.vector_store %arg9[%c0_6, %c0_7], %7 {strides = array<i32>} : memref<2x640xf32, #tpu.memory_space<vmem>>, vector<2x640xf32>,
    %c1_i32 = arith.constant 1 : i32
    %9 = arith.cmpi eq, %arg0, %c1_i32 : i32
    %10 = arith.extui %9 : i1 to i32
    %c0_i32_8 = arith.constant 0 : i32
    %11 = arith.cmpi ne, %10, %c0_i32_8 : i32
    scf.if %11 {
      %c0_9 = arith.constant 0 : index
      %c0_10 = arith.constant 0 : index
      %12 = vector.load %arg9[%c0_9, %c0_10] : memref<2x640xf32, #tpu.memory_space<vmem>>, vector<2x640xf32>
      %c0_11 = arith.constant 0 : index
      %c0_12 = arith.constant 0 : index
      %13 = vector.load %arg3[%c0_11, %c0_12] : memref<1x640xf32, #tpu.memory_space<vmem>>, vector<1x640xf32>
      %14 = vector.broadcast %13 : vector<1x640xf32> to vector<2x640xf32>
      %15 = arith.addf %12, %14 : vector<2x640xf32>
      %cst_13 = arith.constant 0.000000e+00 : f32
      %16 = vector.broadcast %cst_13 : f32 to vector<2x640xf32>
      %17 = arith.maximumf %15, %16 : vector<2x640xf32>
      %c0_14 = arith.constant 0 : index
      %c0_15 = arith.constant 0 : index
      %18 = vector.load %arg4[%c0_14, %c0_15] : memref<640x120xf32, #tpu.memory_space<vmem>>, vector<640x120xf32>
      %cst_16 = arith.constant dense<0.000000e+00> : vector<2x120xf32>
      %19 = tpu.matmul %17, %18, %cst_16 {dimension_numbers = #tpu.dot_dimension_numbers<[1], [0], [0], [1], [0, 0, 1, 1], [], []>} : vector<2x640xf32>, vector<640x120xf32>, vector<2x120xf32> -> vector<2x120xf32>
      %c0_17 = arith.constant 0 : index
      %c0_18 = arith.constant 0 : index
      %20 = vector.load %arg5[%c0_17, %c0_18] : memref<1x120xf32, #tpu.memory_space<vmem>>, vector<1x120xf32>
      %21 = vector.broadcast %20 : vector<1x120xf32> to vector<2x120xf32>
      %22 = arith.addf %19, %21 : vector<2x120xf32>
      %cst_19 = arith.constant 0.000000e+00 : f32
      %23 = vector.broadcast %cst_19 : f32 to vector<2x120xf32>
      %24 = arith.maximumf %22, %23 : vector<2x120xf32>
      %c0_20 = arith.constant 0 : index
      %c0_21 = arith.constant 0 : index
      %25 = vector.load %arg6[%c0_20, %c0_21] : memref<120x10xf32, #tpu.memory_space<vmem>>, vector<120x10xf32>
      %cst_22 = arith.constant dense<0.000000e+00> : vector<2x10xf32>
      %26 = tpu.matmul %24, %25, %cst_22 {dimension_numbers = #tpu.dot_dimension_numbers<[1], [0], [0], [1], [0, 0, 1, 1], [], []>} : vector<2x120xf32>, vector<120x10xf32>, vector<2x10xf32> -> vector<2x10xf32>
      %c0_23 = arith.constant 0 : index
      %c0_24 = arith.constant 0 : index
      %27 = vector.load %arg7[%c0_23, %c0_24] : memref<1x10xf32, #tpu.memory_space<vmem>>, vector<1x10xf32>
      %28 = vector.broadcast %27 : vector<1x10xf32> to vector<2x10xf32>
      %29 = arith.addf %26, %28 : vector<2x10xf32>
      %c0_25 = arith.constant 0 : index
      %c0_26 = arith.constant 0 : index
      %30 = vector.load %arg8[%c0_25, %c0_26] : memref<2x10xf32, #tpu.memory_space<vmem>>, vector<2x10xf32>
      tpu.vector_store %arg8[%c0_25, %c0_26], %29 {strides = array<i32>} : memref<2x10xf32, #tpu.memory_space<vmem>>, vector<2x10xf32>,
    } else {
    }
    return
  }
  func.func @transform_0(%arg0: i32) -> (i32, i32) {
    %c0_i32 = arith.constant 0 : i32
    %c0_i32_0 = arith.constant 0 : i32
    return %c0_i32, %arg0 : i32, i32
  }
  func.func @transform_1(%arg0: i32) -> (i32, i32) {
    %c0_i32 = arith.constant 0 : i32
    %c0_i32_0 = arith.constant 0 : i32
    return %arg0, %c0_i32 : i32, i32
  }
  func.func @transform_2(%arg0: i32) -> (i32, i32) {
    %c0_i32 = arith.constant 0 : i32
    %c0_i32_0 = arith.constant 0 : i32
    %c0_i32_1 = arith.constant 0 : i32
    return %c0_i32, %c0_i32_0 : i32, i32
  }
  func.func @transform_3(%arg0: i32) -> (i32, i32) {
    %c0_i32 = arith.constant 0 : i32
    %c0_i32_0 = arith.constant 0 : i32
    %c0_i32_1 = arith.constant 0 : i32
    return %c0_i32, %c0_i32_0 : i32, i32
  }
  func.func @transform_4(%arg0: i32) -> (i32, i32) {
    %c0_i32 = arith.constant 0 : i32
    %c0_i32_0 = arith.constant 0 : i32
    %c0_i32_1 = arith.constant 0 : i32
    return %c0_i32, %c0_i32_0 : i32, i32
  }
  func.func @transform_5(%arg0: i32) -> (i32, i32) {
    %c0_i32 = arith.constant 0 : i32
    %c0_i32_0 = arith.constant 0 : i32
    %c0_i32_1 = arith.constant 0 : i32
    return %c0_i32, %c0_i32_0 : i32, i32
  }
  func.func @transform_6(%arg0: i32) -> (i32, i32) {
    %c0_i32 = arith.constant 0 : i32
    %c0_i32_0 = arith.constant 0 : i32
    %c0_i32_1 = arith.constant 0 : i32
    return %c0_i32, %c0_i32_0 : i32, i32
  }
  func.func @transform_7(%arg0: i32) -> (i32, i32) {
    %c0_i32 = arith.constant 0 : i32
    %c0_i32_0 = arith.constant 0 : i32
    %c0_i32_1 = arith.constant 0 : i32
    return %c0_i32, %c0_i32_0 : i32, i32
  }
}

</mosaic_0001>

<llo_original>
// kernel: cnn1_forward.2
$region0: #{cnn1_forward.2}
  #allocation0 [shape = 'u32[]', space=smem, size = 0x4, offset = 0x4, fixed_abs, tag = 'smem constant byte address 0x4 - core index']
  #allocation1 [shape = 'u32[144,128]{1,0:T(1,128)}', space=vmem, size = 0x12000, scoped, tag = 'internal scratch']
  %s0 = inlined_call_operand.vmem [shape: f32[4,336,9], index: 0, kind: input, shape index: {}]
  %s1 = inlined_call_operand.hbm [shape: f32[9,32], index: 1, kind: input, shape index: {}]
  %s2 = inlined_call_operand.hbm [shape: f32[1,32], index: 2, kind: input, shape index: {}]
  %s3 = inlined_call_operand.hbm [shape: f32[1,32], index: 3, kind: input, shape index: {}]
  %s4 = inlined_call_operand.vmem [shape: f32[336,32], index: 4, kind: output, shape index: {}]
  %s5 = sld [smem:[#allocation0]]
  $region99: #{cnn1_forward.2} parent=0
    _
  %s7 = ssub.s32 1, %s5
  %s8 = scalar_select 0, %s7, %s5
  $region1: #{cnn1_forward.2} parent=0
    #allocation2 [shape = 'u8[688128]{0}', space=vmem, size = 0xa8000, scoped, tag = 'input window, operand 0']
    #allocation3 [shape = 'u8[8192]{0}', space=vmem, size = 0x2000, scoped, tag = 'input window, operand 1, single buffered']
    #allocation4 [shape = 's32[2]{0}', space=sflag, size = 0x8, scoped, tag = 'scoped memory for cnn1_forward.2']
    #allocation5 [shape = 'u8[512]{0}', space=vmem, size = 0x400, scoped, tag = 'input window, operand 2, single buffered']
    #allocation6 [shape = 's32[1]{0}', space=sflag, size = 0x4, scoped, tag = 'scoped memory for cnn1_forward.2']
    #allocation7 [shape = 'u8[512]{0}', space=vmem, size = 0x400, scoped, tag = 'input window, operand 3, single buffered']
    %9 = vsyncpa [#allocation4], 0
    %10 = vsyncpa [#allocation6], 0
    loop: start=0, step=1, limit=4
    $region2: #{cnn1_forward.2} parent=1 // loop_pre_header
      _
    $region3: #{cnn1_forward.2} parent=1 // loop_header
      %s12 = sphi 0, %s16
      %p13 = scmp.ge.s32.totalorder %s12, 4
      %s22 = sphi 0, %s24
      %s25 = sphi 0, %s22
      %s26 = sphi 0, %s25
      %s42 = sphi 0, %s26
      %s46 = sphi 0, %s46
      %s48 = sphi 0, %s46
      %s49 = sphi 0, %s48
      %s63 = sphi 0, %s49
      %s67 = sphi 0, %s67
      %s69 = sphi 0, %s67
      %s70 = sphi 0, %s69
      %s84 = sphi 0, %s70
      %s88 = sphi 0, %s88
      %s90 = sphi 0, %s88
      %s91 = sphi 0, %s90
      %s105 = sphi 0, %s91
      %s111 = sphi 0, %s113
      %s114 = sphi 0, %s111
      %s115 = sphi 0, %s114
      %s131 = sphi 0, %s115
    $region4: #{cnn1_forward.2} parent=1 // loop_header_branch
      %15 = sbr.rel (%p13) target = $region8
    $region5: #{cnn1_forward.2} parent=1 // loop_body
      %s17 = ssub.s32 %s12, 1
      %s18 = ssub.s32 %s12, 2
      %s19 = sadd.s32 %s12, 1
      %s20 = ssub.s32 %s12, %s19
      %p21 = scmp.eq.s32.totalorder %s20, 0
      %s23 = sadd.s32 %s22, 1
      %s24 = scalar_select %p21, %s22, %s23
      %p27 = pneg %p21
      %p28 = scmp.eq.s32.totalorder %s12, 1
      %p29 = por %p27, %p28
      %p30 = scmp.ne.s32.totalorder %s22, %s25
      %p31 = scmp.eq.s32.totalorder %s12, 0
      %p32 = por %p30, %p31
      %p33 = scmp.ne.s32.totalorder %s22, %s25
      %p34 = scmp.eq.s32.totalorder %s17, 1
      %p35 = por %p33, %p34
      %p36 = scmp.ne.s32.totalorder %s25, %s26
      %p37 = scmp.eq.s32.totalorder %s17, 0
      %p38 = por %p36, %p37
      %p39 = scmp.ne.s32.totalorder %s25, %s26
      %p40 = scmp.eq.s32.totalorder %s18, 1
      %p41 = por %p39, %p40
      %p43 = scmp.ne.s32.totalorder %s26, %s42
      %p44 = scmp.eq.s32.totalorder %s18, 0
      %p45 = por %p43, %p44
      %s47 = sadd.s32 %s46, 1
      %p50 = scmp.eq.s32.totalorder %s12, 1
      %p51 = scmp.ne.s32.totalorder %s46, %s48
      %p52 = scmp.eq.s32.totalorder %s12, 0
      %p53 = por %p51, %p52
      %p54 = scmp.ne.s32.totalorder %s46, %s48
      %p55 = scmp.eq.s32.totalorder %s17, 1
      %p56 = por %p54, %p55
      %p57 = scmp.ne.s32.totalorder %s48, %s49
      %p58 = scmp.eq.s32.totalorder %s17, 0
      %p59 = por %p57, %p58
      %p60 = scmp.ne.s32.totalorder %s48, %s49
      %p61 = scmp.eq.s32.totalorder %s18, 1
      %p62 = por %p60, %p61
      %p64 = scmp.ne.s32.totalorder %s49, %s63
      %p65 = scmp.eq.s32.totalorder %s18, 0
      %p66 = por %p64, %p65
      %s68 = sadd.s32 %s67, 1
      %p71 = scmp.eq.s32.totalorder %s12, 1
      %p72 = scmp.ne.s32.totalorder %s67, %s69
      %p73 = scmp.eq.s32.totalorder %s12, 0
      %p74 = por %p72, %p73
      %p75 = scmp.ne.s32.totalorder %s67, %s69
      %p76 = scmp.eq.s32.totalorder %s17, 1
      %p77 = por %p75, %p76
      %p78 = scmp.ne.s32.totalorder %s69, %s70
      %p79 = scmp.eq.s32.totalorder %s17, 0
      %p80 = por %p78, %p79
      %p81 = scmp.ne.s32.totalorder %s69, %s70
      %p82 = scmp.eq.s32.totalorder %s18, 1
      %p83 = por %p81, %p82
      %p85 = scmp.ne.s32.totalorder %s70, %s84
      %p86 = scmp.eq.s32.totalorder %s18, 0
      %p87 = por %p85, %p86
      %s89 = sadd.s32 %s88, 1
      %p92 = scmp.eq.s32.totalorder %s12, 1
      %p93 = scmp.ne.s32.totalorder %s88, %s90
      %p94 = scmp.eq.s32.totalorder %s12, 0
      %p95 = por %p93, %p94
      %p96 = scmp.ne.s32.totalorder %s88, %s90
      %p97 = scmp.eq.s32.totalorder %s17, 1
      %p98 = por %p96, %p97
      %p99 = scmp.ne.s32.totalorder %s90, %s91
      %p100 = scmp.eq.s32.totalorder %s17, 0
      %p101 = por %p99, %p100
      %p102 = scmp.ne.s32.totalorder %s90, %s91
      %p103 = scmp.eq.s32.totalorder %s18, 1
      %p104 = por %p102, %p103
      %p106 = scmp.ne.s32.totalorder %s91, %s105
      %p107 = scmp.eq.s32.totalorder %s18, 0
      %p108 = por %p106, %p107
      %s109 = ssub.s32 %s12, %s19
      %p110 = scmp.eq.s32.totalorder %s109, 0
      %s112 = sadd.s32 %s111, 1
      %s113 = scalar_select %p110, %s111, %s112
      %p116 = pneg %p110
      %p117 = scmp.eq.s32.totalorder %s12, 1
      %p118 = por %p116, %p117
      %p119 = scmp.ne.s32.totalorder %s111, %s114
      %p120 = scmp.eq.s32.totalorder %s12, 0
      %p121 = por %p119, %p120
      %p122 = scmp.ne.s32.totalorder %s111, %s114
      %p123 = scmp.eq.s32.totalorder %s17, 1
      %p124 = por %p122, %p123
      %p125 = scmp.ne.s32.totalorder %s114, %s115
      %p126 = scmp.eq.s32.totalorder %s17, 0
      %p127 = por %p125, %p126
      %p128 = scmp.ne.s32.totalorder %s114, %s115
      %p129 = scmp.eq.s32.totalorder %s18, 1
      %p130 = por %p128, %p129
      %p132 = scmp.ne.s32.totalorder %s115, %s131
      %p133 = scmp.eq.s32.totalorder %s18, 0
      %p134 = por %p132, %p133
      %p135 = scmp.le.s32.totalorder 1, %s12
      %p136 = scmp.lt.s32.totalorder %s12, 3
      %p137 = pnand %p135, %p136
      %p138 = pneg %p137
      // Predicated region
      $region9: #{cnn1_forward.2} parent=5 // pred_check
        _
      $region10: #{cnn1_forward.2} parent=5 // pred_check_branch
        %140 = sbr.rel (%p137) target = $region12
      $region11: #{cnn1_forward.2} parent=5 // pred_region
        %s141 = ssub.s32 %s12, 1
        // Predicated region
        $region13: #{cnn1_forward.2} parent=11 // pred_check
          %p142 = pneg %p59
        $region14: #{cnn1_forward.2} parent=11 // pred_check_branch
          %144 = sbr.rel (%p142) target = $region16
        $region15: #{cnn1_forward.2} parent=11 // pred_region
          %s146 = ssub.s32 256, 256
          %147 = vsyncadd [#allocation4], %s146
          %s148 = sshll.u32 [#allocation3], 4
          %s149 = int_to_ptr.vmem [resolvable:$true] %s148
          %154 = dma.hbm_to_vmem [thread:$0]  %s1, 256, %s149, [#allocation4], 128, 128, 8
        $region16: #{cnn1_forward.2} parent=11 // pred_fallthru
          _
        // Predicated region
        $region17: #{cnn1_forward.2} parent=11 // pred_check
          %p155 = pneg %p80
        $region18: #{cnn1_forward.2} parent=11 // pred_check_branch
          %157 = sbr.rel (%p155) target = $region20
        $region19: #{cnn1_forward.2} parent=11 // pred_region
          %s159 = ssub.s32 16, 16
          %160 = vsyncadd [#allocation6], %s159
          %s162 = sshll.u32 [#allocation5], 4
          %s163 = int_to_ptr.vmem [resolvable:$true] %s162
          %165 = dma.hbm_to_vmem [thread:$0]  %s2, 16, %s163, [#allocation6]
        $region20: #{cnn1_forward.2} parent=11 // pred_fallthru
          _
        // Predicated region
        $region21: #{cnn1_forward.2} parent=11 // pred_check
          %p166 = pneg %p101
        $region22: #{cnn1_forward.2} parent=11 // pred_check_branch
          %168 = sbr.rel (%p166) target = $region24
        $region23: #{cnn1_forward.2} parent=11 // pred_region
          %s170 = ssub.s32 16, 16
          %171 = vsyncadd [#allocation6], %s170
          %s173 = sshll.u32 [#allocation7], 4
          %s174 = int_to_ptr.vmem [resolvable:$true] %s173
          %176 = dma.hbm_to_vmem [thread:$0]  %s3, 16, %s174, [#allocation6]
        $region24: #{cnn1_forward.2} parent=11 // pred_fallthru
          _
      $region12: #{cnn1_forward.2} parent=5 // pred_fallthru
        _
      %p177 = scmp.lt.s32.totalorder %s12, 2
      // Predicated region
      $region25: #{cnn1_forward.2} parent=5 // pred_check
        %p178 = pneg %p177
      $region26: #{cnn1_forward.2} parent=5 // pred_check_branch
        %180 = sbr.rel (%p178) target = $region28
      $region27: #{cnn1_forward.2} parent=5 // pred_region
        // Predicated region
        $region29: #{cnn1_forward.2} parent=27 // pred_check
          %p181 = pneg %p32
        $region30: #{cnn1_forward.2} parent=27 // pred_check_branch
          %183 = sbr.rel (%p181) target = $region32
        $region31: #{cnn1_forward.2} parent=27 // pred_region
          %s184 = sand.u32 %s22, 1
          %s185 = sand.u32 %s22, 1
          %s186 = smul.addr %s185, 672
          %s187 = scalar_lea.vmem [#allocation2], %s186
          %s188 = smul.u32 21, %s12
          %s189 = smul.addr %s188, 8
          %s190 = scalar_lea.vmem %s0, %s189
          // Predicated region
          $region33: #{cnn1_forward.2} parent=31 // pred_check
            _
          $region34: #{cnn1_forward.2} parent=31 // pred_check_branch
            %192 = sbr.rel (0) target = $region36
          $region35: #{cnn1_forward.2} parent=31 // pred_region
            // Predicated region
            $region37: #{cnn1_forward.2} parent=35 // pred_check
              _
            $region38: #{cnn1_forward.2} parent=35 // pred_check_branch
              %194 = sbr.rel (0) target = $region40
            $region39: #{cnn1_forward.2} parent=35 // pred_region
              // Predicated region
              $region52: #{cnn1_forward.2} parent=39 // pred_check
                _
              $region53: #{cnn1_forward.2} parent=39 // pred_check_branch
                %375 = sbr.rel (0) target = $region55
              $region54: #{cnn1_forward.2} parent=39 // pred_region
                loop: start=0, step=1, limit=1
                $region56: #{cnn1_forward.2} parent=54 // loop_pre_header
                  _
                $region57: #{cnn1_forward.2} parent=54 // loop_header
                  %s377 = sphi 0, %s381
                  %p378 = scmp.ge.s32.totalorder %s377, 1
                  %s382 = sphi %s190, %s190
                  %s383 = sphi %s187, %s187
                $region58: #{cnn1_forward.2} parent=54 // loop_header_branch
                  %380 = sbr.rel (%p378) target = $region62
                $region59: #{cnn1_forward.2} parent=54 // loop_body
                  %v384 = vld [vmem:[%s382] sm:$0xff]
                  %385 = vst [vmem:[%s383] sm:$0xff] %v384
                  %v386 = vld [vmem:[%s382 + $0x8] sm:$0xff]
                  %387 = vst [vmem:[%s383 + $0x8] sm:$0xff] %v386
                  %v388 = vld [vmem:[%s382 + $0x10] sm:$0xff]
                  %389 = vst [vmem:[%s383 + $0x10] sm:$0xff] %v388
                  %v390 = vld [vmem:[%s382 + $0x18] sm:$0xff]
                  %391 = vst [vmem:[%s383 + $0x18] sm:$0xff] %v390
                  %v392 = vld [vmem:[%s382 + $0x20] sm:$0xff]
                  %393 = vst [vmem:[%s383 + $0x20] sm:$0xff] %v392
                  %v394 = vld [vmem:[%s382 + $0x28] sm:$0xff]
                  %395 = vst [vmem:[%s383 + $0x28] sm:$0xff] %v394
                  %v396 = vld [vmem:[%s382 + $0x30] sm:$0xff]
                  %397 = vst [vmem:[%s383 + $0x30] sm:$0xff] %v396
                  %v398 = vld [vmem:[%s382 + $0x38] sm:$0xff]
                  %399 = vst [vmem:[%s383 + $0x38] sm:$0xff] %v398
                  %v400 = vld [vmem:[%s382 + $0x40] sm:$0xff]
                  %401 = vst [vmem:[%s383 + $0x40] sm:$0xff] %v400
                  %v402 = vld [vmem:[%s382 + $0x48] sm:$0xff]
                  %403 = vst [vmem:[%s383 + $0x48] sm:$0xff] %v402
                  %v404 = vld [vmem:[%s382 + $0x50] sm:$0xff]
                  %405 = vst [vmem:[%s383 + $0x50] sm:$0xff] %v404
                  %v406 = vld [vmem:[%s382 + $0x58] sm:$0xff]
                  %407 = vst [vmem:[%s383 + $0x58] sm:$0xff] %v406
                  %v408 = vld [vmem:[%s382 + $0x60] sm:$0xff]
                  %409 = vst [vmem:[%s383 + $0x60] sm:$0xff] %v408
                  %v410 = vld [vmem:[%s382 + $0x68] sm:$0xff]
                  %411 = vst [vmem:[%s383 + $0x68] sm:$0xff] %v410
                  %v412 = vld [vmem:[%s382 + $0x70] sm:$0xff]
                  %413 = vst [vmem:[%s383 + $0x70] sm:$0xff] %v412
                  %v414 = vld [vmem:[%s382 + $0x78] sm:$0xff]
                  %415 = vst [vmem:[%s383 + $0x78] sm:$0xff] %v414
                  %v416 = vld [vmem:[%s382 + $0x80] sm:$0xff]
                  %417 = vst [vmem:[%s383 + $0x80] sm:$0xff] %v416
                  %v418 = vld [vmem:[%s382 + $0x88] sm:$0xff]
                  %419 = vst [vmem:[%s383 + $0x88] sm:$0xff] %v418
                  %v420 = vld [vmem:[%s382 + $0x90] sm:$0xff]
                  %421 = vst [vmem:[%s383 + $0x90] sm:$0xff] %v420
                  %v422 = vld [vmem:[%s382 + $0x98] sm:$0xff]
                  %423 = vst [vmem:[%s383 + $0x98] sm:$0xff] %v422
                  %v424 = vld [vmem:[%s382 + $0xa0] sm:$0xff]
                  %425 = vst [vmem:[%s383 + $0xa0] sm:$0xff] %v424
                  %v426 = vld [vmem:[%s382 + $0x150] sm:$0xff]
                  %427 = vst [vmem:[%s383 + $0xa8] sm:$0xff] %v426
                  %v428 = vld [vmem:[%s382 + $0x158] sm:$0xff]
                  %429 = vst [vmem:[%s383 + $0xb0] sm:$0xff] %v428
                  %v430 = vld [vmem:[%s382 + $0x160] sm:$0xff]
                  %431 = vst [vmem:[%s383 + $0xb8] sm:$0xff] %v430
                  %v432 = vld [vmem:[%s382 + $0x168] sm:$0xff]
                  %433 = vst [vmem:[%s383 + $0xc0] sm:$0xff] %v432
                  %v434 = vld [vmem:[%s382 + $0x170] sm:$0xff]
                  %435 = vst [vmem:[%s383 + $0xc8] sm:$0xff] %v434
                  %v436 = vld [vmem:[%s382 + $0x178] sm:$0xff]
                  %437 = vst [vmem:[%s383 + $0xd0] sm:$0xff] %v436
                  %v438 = vld [vmem:[%s382 + $0x180] sm:$0xff]
                  %439 = vst [vmem:[%s383 + $0xd8] sm:$0xff] %v438
                  %v440 = vld [vmem:[%s382 + $0x188] sm:$0xff]
                  %441 = vst [vmem:[%s383 + $0xe0] sm:$0xff] %v440
                  %v442 = vld [vmem:[%s382 + $0x190] sm:$0xff]
                  %443 = vst [vmem:[%s383 + $0xe8] sm:$0xff] %v442
                  %v444 = vld [vmem:[%s382 + $0x198] sm:$0xff]
                  %445 = vst [vmem:[%s383 + $0xf0] sm:$0xff] %v444
                  %v446 = vld [vmem:[%s382 + $0x1a0] sm:$0xff]
                  %447 = vst [vmem:[%s383 + $0xf8] sm:$0xff] %v446
                  %v448 = vld [vmem:[%s382 + $0x1a8] sm:$0xff]
                  %449 = vst [vmem:[%s383 + $0x100] sm:$0xff] %v448
                  %v450 = vld [vmem:[%s382 + $0x1b0] sm:$0xff]
                  %451 = vst [vmem:[%s383 + $0x108] sm:$0xff] %v450
                  %v452 = vld [vmem:[%s382 + $0x1b8] sm:$0xff]
                  %453 = vst [vmem:[%s383 + $0x110] sm:$0xff] %v452
                  %v454 = vld [vmem:[%s382 + $0x1c0] sm:$0xff]
                  %455 = vst [vmem:[%s383 + $0x118] sm:$0xff] %v454
                  %v456 = vld [vmem:[%s382 + $0x1c8] sm:$0xff]
                  %457 = vst [vmem:[%s383 + $0x120] sm:$0xff] %v456
                  %v458 = vld [vmem:[%s382 + $0x1d0] sm:$0xff]
                  %459 = vst [vmem:[%s383 + $0x128] sm:$0xff] %v458
                  %v460 = vld [vmem:[%s382 + $0x1d8] sm:$0xff]
                  %461 = vst [vmem:[%s383 + $0x130] sm:$0xff] %v460
                  %v462 = vld [vmem:[%s382 + $0x1e0] sm:$0xff]
                  %463 = vst [vmem:[%s383 + $0x138] sm:$0xff] %v462
                  %v464 = vld [vmem:[%s382 + $0x1e8] sm:$0xff]
                  %465 = vst [vmem:[%s383 + $0x140] sm:$0xff] %v464
                  %v466 = vld [vmem:[%s382 + $0x1f0] sm:$0xff]
                  %467 = vst [vmem:[%s383 + $0x148] sm:$0xff] %v466
                  %v468 = vld [vmem:[%s382 + $0x2a0] sm:$0xff]
                  %469 = vst [vmem:[%s383 + $0x150] sm:$0xff] %v468
                  %v470 = vld [vmem:[%s382 + $0x2a8] sm:$0xff]
                  %471 = vst [vmem:[%s383 + $0x158] sm:$0xff] %v470
                  %v472 = vld [vmem:[%s382 + $0x2b0] sm:$0xff]
                  %473 = vst [vmem:[%s383 + $0x160] sm:$0xff] %v472
                  %v474 = vld [vmem:[%s382 + $0x2b8] sm:$0xff]
                  %475 = vst [vmem:[%s383 + $0x168] sm:$0xff] %v474
                  %v476 = vld [vmem:[%s382 + $0x2c0] sm:$0xff]
                  %477 = vst [vmem:[%s383 + $0x170] sm:$0xff] %v476
                  %v478 = vld [vmem:[%s382 + $0x2c8] sm:$0xff]
                  %479 = vst [vmem:[%s383 + $0x178] sm:$0xff] %v478
                  %v480 = vld [vmem:[%s382 + $0x2d0] sm:$0xff]
                  %481 = vst [vmem:[%s383 + $0x180] sm:$0xff] %v480
                  %v482 = vld [vmem:[%s382 + $0x2d8] sm:$0xff]
                  %483 = vst [vmem:[%s383 + $0x188] sm:$0xff] %v482
                  %v484 = vld [vmem:[%s382 + $0x2e0] sm:$0xff]
                  %485 = vst [vmem:[%s383 + $0x190] sm:$0xff] %v484
                  %v486 = vld [vmem:[%s382 + $0x2e8] sm:$0xff]
                  %487 = vst [vmem:[%s383 + $0x198] sm:$0xff] %v486
                  %v488 = vld [vmem:[%s382 + $0x2f0] sm:$0xff]
                  %489 = vst [vmem:[%s383 + $0x1a0] sm:$0xff] %v488
                  %v490 = vld [vmem:[%s382 + $0x2f8] sm:$0xff]
                  %491 = vst [vmem:[%s383 + $0x1a8] sm:$0xff] %v490
                  %v492 = vld [vmem:[%s382 + $0x300] sm:$0xff]
                  %493 = vst [vmem:[%s383 + $0x1b0] sm:$0xff] %v492
                  %v494 = vld [vmem:[%s382 + $0x308] sm:$0xff]
                  %495 = vst [vmem:[%s383 + $0x1b8] sm:$0xff] %v494
                  %v496 = vld [vmem:[%s382 + $0x310] sm:$0xff]
                  %497 = vst [vmem:[%s383 + $0x1c0] sm:$0xff] %v496
                  %v498 = vld [vmem:[%s382 + $0x318] sm:$0xff]
                  %499 = vst [vmem:[%s383 + $0x1c8] sm:$0xff] %v498
                  %v500 = vld [vmem:[%s382 + $0x320] sm:$0xff]
                  %501 = vst [vmem:[%s383 + $0x1d0] sm:$0xff] %v500
                  %v502 = vld [vmem:[%s382 + $0x328] sm:$0xff]
                  %503 = vst [vmem:[%s383 + $0x1d8] sm:$0xff] %v502
                  %v504 = vld [vmem:[%s382 + $0x330] sm:$0xff]
                  %505 = vst [vmem:[%s383 + $0x1e0] sm:$0xff] %v504
                  %v506 = vld [vmem:[%s382 + $0x338] sm:$0xff]
                  %507 = vst [vmem:[%s383 + $0x1e8] sm:$0xff] %v506
                  %v508 = vld [vmem:[%s382 + $0x340] sm:$0xff]
                  %509 = vst [vmem:[%s383 + $0x1f0] sm:$0xff] %v508
                  %v510 = vld [vmem:[%s382 + $0x3f0] sm:$0xff]
                  %511 = vst [vmem:[%s383 + $0x1f8] sm:$0xff] %v510
                  %v512 = vld [vmem:[%s382 + $0x3f8] sm:$0xff]
                  %513 = vst [vmem:[%s383 + $0x200] sm:$0xff] %v512
                  %v514 = vld [vmem:[%s382 + $0x400] sm:$0xff]
                  %515 = vst [vmem:[%s383 + $0x208] sm:$0xff] %v514
                  %v516 = vld [vmem:[%s382 + $0x408] sm:$0xff]
                  %517 = vst [vmem:[%s383 + $0x210] sm:$0xff] %v516
                  %v518 = vld [vmem:[%s382 + $0x410] sm:$0xff]
                  %519 = vst [vmem:[%s383 + $0x218] sm:$0xff] %v518
                  %v520 = vld [vmem:[%s382 + $0x418] sm:$0xff]
                  %521 = vst [vmem:[%s383 + $0x220] sm:$0xff] %v520
                  %v522 = vld [vmem:[%s382 + $0x420] sm:$0xff]
                  %523 = vst [vmem:[%s383 + $0x228] sm:$0xff] %v522
                  %v524 = vld [vmem:[%s382 + $0x428] sm:$0xff]
                  %525 = vst [vmem:[%s383 + $0x230] sm:$0xff] %v524
                  %v526 = vld [vmem:[%s382 + $0x430] sm:$0xff]
                  %527 = vst [vmem:[%s383 + $0x238] sm:$0xff] %v526
                  %v528 = vld [vmem:[%s382 + $0x438] sm:$0xff]
                  %529 = vst [vmem:[%s383 + $0x240] sm:$0xff] %v528
                  %v530 = vld [vmem:[%s382 + $0x440] sm:$0xff]
                  %531 = vst [vmem:[%s383 + $0x248] sm:$0xff] %v530
                  %v532 = vld [vmem:[%s382 + $0x448] sm:$0xff]
                  %533 = vst [vmem:[%s383 + $0x250] sm:$0xff] %v532
                  %v534 = vld [vmem:[%s382 + $0x450] sm:$0xff]
                  %535 = vst [vmem:[%s383 + $0x258] sm:$0xff] %v534
                  %v536 = vld [vmem:[%s382 + $0x458] sm:$0xff]
                  %537 = vst [vmem:[%s383 + $0x260] sm:$0xff] %v536
                  %v538 = vld [vmem:[%s382 + $0x460] sm:$0xff]
                  %539 = vst [vmem:[%s383 + $0x268] sm:$0xff] %v538
                  %v540 = vld [vmem:[%s382 + $0x468] sm:$0xff]
                  %541 = vst [vmem:[%s383 + $0x270] sm:$0xff] %v540
                  %v542 = vld [vmem:[%s382 + $0x470] sm:$0xff]
                  %543 = vst [vmem:[%s383 + $0x278] sm:$0xff] %v542
                  %v544 = vld [vmem:[%s382 + $0x478] sm:$0xff]
                  %545 = vst [vmem:[%s383 + $0x280] sm:$0xff] %v544
                  %v546 = vld [vmem:[%s382 + $0x480] sm:$0xff]
                  %547 = vst [vmem:[%s383 + $0x288] sm:$0xff] %v546
                  %v548 = vld [vmem:[%s382 + $0x488] sm:$0xff]
                  %549 = vst [vmem:[%s383 + $0x290] sm:$0xff] %v548
                  %v550 = vld [vmem:[%s382 + $0x490] sm:$0xff]
                  %551 = vst [vmem:[%s383 + $0x298] sm:$0xff] %v550
                $region60: #{cnn1_forward.2} parent=54 // loop_footer
                  %s381 = sadd.s32 1, %s377
                $region61: #{cnn1_forward.2} parent=54 // loop_footer_branch
                  %376 = sbr.rel target = $region57
                $region62: #{cnn1_forward.2} parent=54 // loop_exit
                  _
              $region55: #{cnn1_forward.2} parent=39 // pred_fallthru
                _
              // Predicated region
              $region63: #{cnn1_forward.2} parent=39 // pred_check
                _
              $region64: #{cnn1_forward.2} parent=39 // pred_check_branch
                %553 = sbr.rel target = $region66
              $region65: #{cnn1_forward.2} parent=39 // pred_region
                _
              $region66: #{cnn1_forward.2} parent=39 // pred_fallthru
                _
            $region40: #{cnn1_forward.2} parent=35 // pred_fallthru
              _
            // Predicated region
            $region41: #{cnn1_forward.2} parent=35 // pred_check
              _
            $region42: #{cnn1_forward.2} parent=35 // pred_check_branch
              %196 = sbr.rel target = $region44
            $region43: #{cnn1_forward.2} parent=35 // pred_region
              loop: start=0, step=1, limit=1
              $region45: #{cnn1_forward.2} parent=43 // loop_pre_header
                _
              $region46: #{cnn1_forward.2} parent=43 // loop_header
                %s199 = sphi 0, %s203
                %p200 = scmp.ge.s32.totalorder %s199, 1
                %s204 = sphi %s190, %s190
                %s205 = sphi %s187, %s187
              $region47: #{cnn1_forward.2} parent=43 // loop_header_branch
                %202 = sbr.rel (%p200) target = $region51
              $region48: #{cnn1_forward.2} parent=43 // loop_body
                %v206 = vld [vmem:[%s204] sm:$0xff]
                %207 = vst [vmem:[%s205] sm:$0xff] %v206
                %v208 = vld [vmem:[%s204 + $0x8] sm:$0xff]
                %209 = vst [vmem:[%s205 + $0x8] sm:$0xff] %v208
                %v210 = vld [vmem:[%s204 + $0x10] sm:$0xff]
                %211 = vst [vmem:[%s205 + $0x10] sm:$0xff] %v210
                %v212 = vld [vmem:[%s204 + $0x18] sm:$0xff]
                %213 = vst [vmem:[%s205 + $0x18] sm:$0xff] %v212
                %v214 = vld [vmem:[%s204 + $0x20] sm:$0xff]
                %215 = vst [vmem:[%s205 + $0x20] sm:$0xff] %v214
                %v216 = vld [vmem:[%s204 + $0x28] sm:$0xff]
                %217 = vst [vmem:[%s205 + $0x28] sm:$0xff] %v216
                %v218 = vld [vmem:[%s204 + $0x30] sm:$0xff]
                %219 = vst [vmem:[%s205 + $0x30] sm:$0xff] %v218
                %v220 = vld [vmem:[%s204 + $0x38] sm:$0xff]
                %221 = vst [vmem:[%s205 + $0x38] sm:$0xff] %v220
                %v222 = vld [vmem:[%s204 + $0x40] sm:$0xff]
                %223 = vst [vmem:[%s205 + $0x40] sm:$0xff] %v222
                %v224 = vld [vmem:[%s204 + $0x48] sm:$0xff]
                %225 = vst [vmem:[%s205 + $0x48] sm:$0xff] %v224
                %v226 = vld [vmem:[%s204 + $0x50] sm:$0xff]
                %227 = vst [vmem:[%s205 + $0x50] sm:$0xff] %v226
                %v228 = vld [vmem:[%s204 + $0x58] sm:$0xff]
                %229 = vst [vmem:[%s205 + $0x58] sm:$0xff] %v228
                %v230 = vld [vmem:[%s204 + $0x60] sm:$0xff]
                %231 = vst [vmem:[%s205 + $0x60] sm:$0xff] %v230
                %v232 = vld [vmem:[%s204 + $0x68] sm:$0xff]
                %233 = vst [vmem:[%s205 + $0x68] sm:$0xff] %v232
                %v234 = vld [vmem:[%s204 + $0x70] sm:$0xff]
                %235 = vst [vmem:[%s205 + $0x70] sm:$0xff] %v234
                %v236 = vld [vmem:[%s204 + $0x78] sm:$0xff]
                %237 = vst [vmem:[%s205 + $0x78] sm:$0xff] %v236
                %v238 = vld [vmem:[%s204 + $0x80] sm:$0xff]
                %239 = vst [vmem:[%s205 + $0x80] sm:$0xff] %v238
                %v240 = vld [vmem:[%s204 + $0x88] sm:$0xff]
                %241 = vst [vmem:[%s205 + $0x88] sm:$0xff] %v240
                %v242 = vld [vmem:[%s204 + $0x90] sm:$0xff]
                %243 = vst [vmem:[%s205 + $0x90] sm:$0xff] %v242
                %v244 = vld [vmem:[%s204 + $0x98] sm:$0xff]
                %245 = vst [vmem:[%s205 + $0x98] sm:$0xff] %v244
                %v246 = vld [vmem:[%s204 + $0xa0] sm:$0xff]
                %247 = vst [vmem:[%s205 + $0xa0] sm:$0xff] %v246
                %v248 = vld [vmem:[%s204 + $0x150] sm:$0xff]
                %249 = vst [vmem:[%s205 + $0xa8] sm:$0xff] %v248
                %v250 = vld [vmem:[%s204 + $0x158] sm:$0xff]
                %251 = vst [vmem:[%s205 + $0xb0] sm:$0xff] %v250
                %v252 = vld [vmem:[%s204 + $0x160] sm:$0xff]
                %253 = vst [vmem:[%s205 + $0xb8] sm:$0xff] %v252
                %v254 = vld [vmem:[%s204 + $0x168] sm:$0xff]
                %255 = vst [vmem:[%s205 + $0xc0] sm:$0xff] %v254
                %v256 = vld [vmem:[%s204 + $0x170] sm:$0xff]
                %257 = vst [vmem:[%s205 + $0xc8] sm:$0xff] %v256
                %v258 = vld [vmem:[%s204 + $0x178] sm:$0xff]
                %259 = vst [vmem:[%s205 + $0xd0] sm:$0xff] %v258
                %v260 = vld [vmem:[%s204 + $0x180] sm:$0xff]
                %261 = vst [vmem:[%s205 + $0xd8] sm:$0xff] %v260
                %v262 = vld [vmem:[%s204 + $0x188] sm:$0xff]
                %263 = vst [vmem:[%s205 + $0xe0] sm:$0xff] %v262
                %v264 = vld [vmem:[%s204 + $0x190] sm:$0xff]
                %265 = vst [vmem:[%s205 + $0xe8] sm:$0xff] %v264
                %v266 = vld [vmem:[%s204 + $0x198] sm:$0xff]
                %267 = vst [vmem:[%s205 + $0xf0] sm:$0xff] %v266
                %v268 = vld [vmem:[%s204 + $0x1a0] sm:$0xff]
                %269 = vst [vmem:[%s205 + $0xf8] sm:$0xff] %v268
                %v270 = vld [vmem:[%s204 + $0x1a8] sm:$0xff]
                %271 = vst [vmem:[%s205 + $0x100] sm:$0xff] %v270
                %v272 = vld [vmem:[%s204 + $0x1b0] sm:$0xff]
                %273 = vst [vmem:[%s205 + $0x108] sm:$0xff] %v272
                %v274 = vld [vmem:[%s204 + $0x1b8] sm:$0xff]
                %275 = vst [vmem:[%s205 + $0x110] sm:$0xff] %v274
                %v276 = vld [vmem:[%s204 + $0x1c0] sm:$0xff]
                %277 = vst [vmem:[%s205 + $0x118] sm:$0xff] %v276
                %v278 = vld [vmem:[%s204 + $0x1c8] sm:$0xff]
                %279 = vst [vmem:[%s205 + $0x120] sm:$0xff] %v278
                %v280 = vld [vmem:[%s204 + $0x1d0] sm:$0xff]
                %281 = vst [vmem:[%s205 + $0x128] sm:$0xff] %v280
                %v282 = vld [vmem:[%s204 + $0x1d8] sm:$0xff]
                %283 = vst [vmem:[%s205 + $0x130] sm:$0xff] %v282
                %v284 = vld [vmem:[%s204 + $0x1e0] sm:$0xff]
                %285 = vst [vmem:[%s205 + $0x138] sm:$0xff] %v284
                %v286 = vld [vmem:[%s204 + $0x1e8] sm:$0xff]
                %287 = vst [vmem:[%s205 + $0x140] sm:$0xff] %v286
                %v288 = vld [vmem:[%s204 + $0x1f0] sm:$0xff]
                %289 = vst [vmem:[%s205 + $0x148] sm:$0xff] %v288
                %v290 = vld [vmem:[%s204 + $0x2a0] sm:$0xff]
                %291 = vst [vmem:[%s205 + $0x150] sm:$0xff] %v290
                %v292 = vld [vmem:[%s204 + $0x2a8] sm:$0xff]
                %293 = vst [vmem:[%s205 + $0x158] sm:$0xff] %v292
                %v294 = vld [vmem:[%s204 + $0x2b0] sm:$0xff]
                %295 = vst [vmem:[%s205 + $0x160] sm:$0xff] %v294
                %v296 = vld [vmem:[%s204 + $0x2b8] sm:$0xff]
                %297 = vst [vmem:[%s205 + $0x168] sm:$0xff] %v296
                %v298 = vld [vmem:[%s204 + $0x2c0] sm:$0xff]
                %299 = vst [vmem:[%s205 + $0x170] sm:$0xff] %v298
                %v300 = vld [vmem:[%s204 + $0x2c8] sm:$0xff]
                %301 = vst [vmem:[%s205 + $0x178] sm:$0xff] %v300
                %v302 = vld [vmem:[%s204 + $0x2d0] sm:$0xff]
                %303 = vst [vmem:[%s205 + $0x180] sm:$0xff] %v302
                %v304 = vld [vmem:[%s204 + $0x2d8] sm:$0xff]
                %305 = vst [vmem:[%s205 + $0x188] sm:$0xff] %v304
                %v306 = vld [vmem:[%s204 + $0x2e0] sm:$0xff]
                %307 = vst [vmem:[%s205 + $0x190] sm:$0xff] %v306
                %v308 = vld [vmem:[%s204 + $0x2e8] sm:$0xff]
                %309 = vst [vmem:[%s205 + $0x198] sm:$0xff] %v308
                %v310 = vld [vmem:[%s204 + $0x2f0] sm:$0xff]
                %311 = vst [vmem:[%s205 + $0x1a0] sm:$0xff] %v310
                %v312 = vld [vmem:[%s204 + $0x2f8] sm:$0xff]
                %313 = vst [vmem:[%s205 + $0x1a8] sm:$0xff] %v312
                %v314 = vld [vmem:[%s204 + $0x300] sm:$0xff]
                %315 = vst [vmem:[%s205 + $0x1b0] sm:$0xff] %v314
                %v316 = vld [vmem:[%s204 + $0x308] sm:$0xff]
                %317 = vst [vmem:[%s205 + $0x1b8] sm:$0xff] %v316
                %v318 = vld [vmem:[%s204 + $0x310] sm:$0xff]
                %319 = vst [vmem:[%s205 + $0x1c0] sm:$0xff] %v318
                %v320 = vld [vmem:[%s204 + $0x318] sm:$0xff]
                %321 = vst [vmem:[%s205 + $0x1c8] sm:$0xff] %v320
                %v322 = vld [vmem:[%s204 + $0x320] sm:$0xff]
                %323 = vst [vmem:[%s205 + $0x1d0] sm:$0xff] %v322
                %v324 = vld [vmem:[%s204 + $0x328] sm:$0xff]
                %325 = vst [vmem:[%s205 + $0x1d8] sm:$0xff] %v324
                %v326 = vld [vmem:[%s204 + $0x330] sm:$0xff]
                %327 = vst [vmem:[%s205 + $0x1e0] sm:$0xff] %v326
                %v328 = vld [vmem:[%s204 + $0x338] sm:$0xff]
                %329 = vst [vmem:[%s205 + $0x1e8] sm:$0xff] %v328
                %v330 = vld [vmem:[%s204 + $0x340] sm:$0xff]
                %331 = vst [vmem:[%s205 + $0x1f0] sm:$0xff] %v330
                %v332 = vld [vmem:[%s204 + $0x3f0] sm:$0xff]
                %333 = vst [vmem:[%s205 + $0x1f8] sm:$0xff] %v332
                %v334 = vld [vmem:[%s204 + $0x3f8] sm:$0xff]
                %335 = vst [vmem:[%s205 + $0x200] sm:$0xff] %v334
                %v336 = vld [vmem:[%s204 + $0x400] sm:$0xff]
                %337 = vst [vmem:[%s205 + $0x208] sm:$0xff] %v336
                %v338 = vld [vmem:[%s204 + $0x408] sm:$0xff]
                %339 = vst [vmem:[%s205 + $0x210] sm:$0xff] %v338
                %v340 = vld [vmem:[%s204 + $0x410] sm:$0xff]
                %341 = vst [vmem:[%s205 + $0x218] sm:$0xff] %v340
                %v342 = vld [vmem:[%s204 + $0x418] sm:$0xff]
                %343 = vst [vmem:[%s205 + $0x220] sm:$0xff] %v342
                %v344 = vld [vmem:[%s204 + $0x420] sm:$0xff]
                %345 = vst [vmem:[%s205 + $0x228] sm:$0xff] %v344
                %v346 = vld [vmem:[%s204 + $0x428] sm:$0xff]
                %347 = vst [vmem:[%s205 + $0x230] sm:$0xff] %v346
                %v348 = vld [vmem:[%s204 + $0x430] sm:$0xff]
                %349 = vst [vmem:[%s205 + $0x238] sm:$0xff] %v348
                %v350 = vld [vmem:[%s204 + $0x438] sm:$0xff]
                %351 = vst [vmem:[%s205 + $0x240] sm:$0xff] %v350
                %v352 = vld [vmem:[%s204 + $0x440] sm:$0xff]
                %353 = vst [vmem:[%s205 + $0x248] sm:$0xff] %v352
                %v354 = vld [vmem:[%s204 + $0x448] sm:$0xff]
                %355 = vst [vmem:[%s205 + $0x250] sm:$0xff] %v354
                %v356 = vld [vmem:[%s204 + $0x450] sm:$0xff]
                %357 = vst [vmem:[%s205 + $0x258] sm:$0xff] %v356
                %v358 = vld [vmem:[%s204 + $0x458] sm:$0xff]
                %359 = vst [vmem:[%s205 + $0x260] sm:$0xff] %v358
                %v360 = vld [vmem:[%s204 + $0x460] sm:$0xff]
                %361 = vst [vmem:[%s205 + $0x268] sm:$0xff] %v360
                %v362 = vld [vmem:[%s204 + $0x468] sm:$0xff]
                %363 = vst [vmem:[%s205 + $0x270] sm:$0xff] %v362
                %v364 = vld [vmem:[%s204 + $0x470] sm:$0xff]
                %365 = vst [vmem:[%s205 + $0x278] sm:$0xff] %v364
                %v366 = vld [vmem:[%s204 + $0x478] sm:$0xff]
                %367 = vst [vmem:[%s205 + $0x280] sm:$0xff] %v366
                %v368 = vld [vmem:[%s204 + $0x480] sm:$0xff]
                %369 = vst [vmem:[%s205 + $0x288] sm:$0xff] %v368
                %v370 = vld [vmem:[%s204 + $0x488] sm:$0xff]
                %371 = vst [vmem:[%s205 + $0x290] sm:$0xff] %v370
                %v372 = vld [vmem:[%s204 + $0x490] sm:$0xff]
                %373 = vst [vmem:[%s205 + $0x298] sm:$0xff] %v372
              $region49: #{cnn1_forward.2} parent=43 // loop_footer
                %s203 = sadd.s32 1, %s199
              $region50: #{cnn1_forward.2} parent=43 // loop_footer_branch
                %198 = sbr.rel target = $region46
              $region51: #{cnn1_forward.2} parent=43 // loop_exit
                _
            $region44: #{cnn1_forward.2} parent=35 // pred_fallthru
              _
          $region36: #{cnn1_forward.2} parent=31 // pred_fallthru
            _
          %554 = vnop
        $region32: #{cnn1_forward.2} parent=27 // pred_fallthru
          _
      $region28: #{cnn1_forward.2} parent=5 // pred_fallthru
        _
      %p555 = scmp.le.s32.totalorder 1, %s12
      %p556 = scmp.lt.s32.totalorder %s12, 3
      %p557 = pnand %p555, %p556
      %p558 = pneg %p557
      // Predicated region
      $region67: #{cnn1_forward.2} parent=5 // pred_check
        _
      $region68: #{cnn1_forward.2} parent=5 // pred_check_branch
        %560 = sbr.rel (%p557) target = $region70
      $region69: #{cnn1_forward.2} parent=5 // pred_region
        %s561 = ssub.s32 %s12, 1
        %s562 = sand.u32 %s25, 1
        %s563 = sand.u32 %s25, 1
        %s564 = smul.addr %s563, 672
        %s565 = scalar_lea.vmem [#allocation2], %s564
        // Predicated region
        $region71: #{cnn1_forward.2} parent=69 // pred_check
          %p566 = pneg %p38
        $region72: #{cnn1_forward.2} parent=69 // pred_check_branch
          %568 = sbr.rel (%p566) target = $region74
        $region73: #{cnn1_forward.2} parent=69 // pred_region
          _
        $region74: #{cnn1_forward.2} parent=69 // pred_fallthru
          _
        // Predicated region
        $region75: #{cnn1_forward.2} parent=69 // pred_check
          %p569 = pneg %p59
        $region76: #{cnn1_forward.2} parent=69 // pred_check_branch
          %571 = sbr.rel (%p569) target = $region78
        $region77: #{cnn1_forward.2} parent=69 // pred_region
          %572 = dma.done [#allocation4], 256
        $region78: #{cnn1_forward.2} parent=69 // pred_fallthru
          _
        // Predicated region
        $region79: #{cnn1_forward.2} parent=69 // pred_check
          %p573 = pneg %p80
        $region80: #{cnn1_forward.2} parent=69 // pred_check_branch
          %575 = sbr.rel (%p573) target = $region82
        $region81: #{cnn1_forward.2} parent=69 // pred_region
          %576 = dma.done [#allocation6], 16
        $region82: #{cnn1_forward.2} parent=69 // pred_fallthru
          _
        // Predicated region
        $region83: #{cnn1_forward.2} parent=69 // pred_check
          %p577 = pneg %p101
        $region84: #{cnn1_forward.2} parent=69 // pred_check_branch
          %579 = sbr.rel (%p577) target = $region86
        $region85: #{cnn1_forward.2} parent=69 // pred_region
          %580 = dma.done [#allocation6], 16
        $region86: #{cnn1_forward.2} parent=69 // pred_fallthru
          _
        %s581 = sand.u32 %s25, 1
        %s582 = sand.u32 %s25, 1
        %s583 = smul.addr %s582, 672
        %s584 = scalar_lea.vmem [#allocation2], %s583
        %p585 = pneg %p38
        %p586 = pneg %p35
        %p587 = pneg %p59
        %p588 = pneg %p56
        %p589 = pneg %p80
        %p590 = pneg %p77
        %p591 = pneg %p101
        %p592 = pneg %p98
        %p593 = pneg %p127
        %p594 = pneg %p124
        %s595 = smul.u32 21, %s17
        %p596 = scmp.lt.s32.totalorder %s595, 41
        %s597 = scalar_select %p596, %s595, 41
        %s598 = smul.addr %s597, 8
        %s599 = scalar_lea.vmem %s4, %s598
        %s600 = smul.u32 21, %s17
        %s601 = smul.u32 21, %s17
        %p602 = scmp.lt.s32.totalorder %s601, 41
        %s603 = scalar_select %p602, %s601, 41
        %s604 = smul.addr %s603, 8
        %s605 = scalar_lea.vmem %s4, %s604
        %s606 = smul.u32 21, %s17
        %v607 = vld [vmem:[%s565] sm:$0xff]
        %v608 = vld [vmem:[%s565 + $0x8] sm:$0xff]
        %v609 = vld [vmem:[%s565 + $0x10] sm:$0xff]
        %v610 = vld [vmem:[%s565 + $0x18] sm:$0xff]
        %v611 = vld [vmem:[%s565 + $0x20] sm:$0xff]
        %v612 = vld [vmem:[%s565 + $0x28] sm:$0xff]
        %v613 = vld [vmem:[%s565 + $0x30] sm:$0xff]
        %v614 = vld [vmem:[%s565 + $0x38] sm:$0xff]
        %v615 = vld [vmem:[%s565 + $0x40] sm:$0xff]
        %v616 = vld [vmem:[%s565 + $0x48] sm:$0xff]
        %v617 = vld [vmem:[%s565 + $0x50] sm:$0xff]
        %v618 = vld [vmem:[%s565 + $0x58] sm:$0xff]
        %v619 = vld [vmem:[%s565 + $0x60] sm:$0xff]
        %v620 = vld [vmem:[%s565 + $0x68] sm:$0xff]
        %v621 = vld [vmem:[%s565 + $0x70] sm:$0xff]
        %v622 = vld [vmem:[%s565 + $0x78] sm:$0xff]
        %v623 = vld [vmem:[%s565 + $0x80] sm:$0xff]
        %v624 = vld [vmem:[%s565 + $0x88] sm:$0xff]
        %v625 = vld [vmem:[%s565 + $0x90] sm:$0xff]
        %v626 = vld [vmem:[%s565 + $0x98] sm:$0xff]
        %v627 = vld [vmem:[%s565 + $0xa0] sm:$0xff]
        %v628 = vld [vmem:[#allocation3] sm:$0xff]
        %v629 = vld [vmem:[#allocation3 + $0x8] sm:$0x1]
        %vm630 = vcmask 72704
        %v632 = vsel %vm630, %v607, 0
        %v635 = vsel %vm630, %v608, 0
        %v638 = vsel %vm630, %v609, 0
        %v641 = vsel %vm630, %v610, 0
        %v644 = vsel %vm630, %v611, 0
        %v647 = vsel %vm630, %v612, 0
        %v650 = vsel %vm630, %v613, 0
        %v653 = vsel %vm630, %v614, 0
        %v656 = vsel %vm630, %v615, 0
        %v659 = vsel %vm630, %v616, 0
        %v662 = vsel %vm630, %v617, 0
        %v665 = vsel %vm630, %v618, 0
        %v668 = vsel %vm630, %v619, 0
        %v671 = vsel %vm630, %v620, 0
        %v674 = vsel %vm630, %v621, 0
        %v677 = vsel %vm630, %v622, 0
        %v680 = vsel %vm630, %v623, 0
        %v683 = vsel %vm630, %v624, 0
        %v686 = vsel %vm630, %v625, 0
        %v689 = vsel %vm630, %v626, 0
        %v692 = vsel %vm630, %v627, 0
        %vm694 = vcmask 1040384
        %v696 = vsel %vm694, %v629, 0
        %698 = vmatprep.subr.mxu0 0.0
        %699 = vmatpush1.msra.mxu0 %v628
        %700 = vmatprep.subr.mxu0 0.0
        %701 = vmatpush1.msra.mxu0 %v696
        %702 = vmatprep.subr.mxu0 0.0
        %703 = vmatpush1.msra.mxu0 0.0
        %704 = vmatprep.subr.mxu0 0.0
        %705 = vmatpush1.msra.mxu0 0.0
        %706 = vmatprep.subr.mxu0 0.0
        %707 = vmatpush1.msra.mxu0 0.0
        %708 = vmatprep.subr.mxu0 0.0
        %709 = vmatpush1.msra.mxu0 0.0
        %710 = vmatprep.subr.mxu0 0.0
        %711 = vmatpush1.msra.mxu0 0.0
        %712 = vmatprep.subr.mxu0 0.0
        %713 = vmatpush1.msra.mxu0 0.0
        %714 = vmatprep.subr.mxu0 0.0
        %715 = vmatpush1.msra.mxu0 0.0
        %716 = vmatprep.subr.mxu0 0.0
        %717 = vmatpush1.msra.mxu0 0.0
        %718 = vmatprep.subr.mxu0 0.0
        %719 = vmatpush1.msra.mxu0 0.0
        %720 = vmatprep.subr.mxu0 0.0
        %721 = vmatpush1.msra.mxu0 0.0
        %722 = vmatprep.subr.mxu0 0.0
        %723 = vmatpush1.msra.mxu0 0.0
        %724 = vmatprep.subr.mxu0 0.0
        %725 = vmatpush1.msra.mxu0 0.0
        %726 = vmatprep.subr.mxu0 0.0
        %727 = vmatpush1.msra.mxu0 0.0
        %728 = vmatprep.subr.mxu0 0.0
        %729 = vmatpush1.msra.mxu0 0.0
        %730 = vmatprep.subr.mxu0 0.0
        %731 = vmatpush1.msra.mxu0 0.0
        %732 = vmatprep.subr.mxu0 0.0
        %733 = vmatpush1.msra.mxu0 0.0
        %734 = vmatprep.subr.mxu0 0.0
        %735 = vmatpush1.msra.mxu0 0.0
        %736 = vmatprep.subr.mxu0 0.0
        %737 = vmatpush1.msra.mxu0 0.0
        %738 = vmatprep.subr.mxu0 0.0
        %739 = vmatpush1.msra.mxu0 0.0
        %740 = vmatprep.subr.mxu0 0.0
        %741 = vmatpush1.msra.mxu0 0.0
        %742 = vmatprep.subr.mxu0 0.0
        %743 = vmatpush1.msra.mxu0 0.0
        %744 = vmatprep.subr.mxu0 0.0
        %745 = vmatpush1.msra.mxu0 0.0
        %746 = vmatprep.subr.mxu0 0.0
        %747 = vmatpush1.msra.mxu0 0.0
        %748 = vmatprep.subr.mxu0 0.0
        %749 = vmatpush1.msra.mxu0 0.0
        %750 = vmatprep.subr.mxu0 0.0
        %751 = vmatpush1.msra.mxu0 0.0
        %752 = vmatprep.subr.mxu0 0.0
        %753 = vmatpush1.msra.mxu0 0.0
        %754 = vmatprep.subr.mxu0 0.0
        %755 = vmatpush1.msra.mxu0 0.0
        %756 = vmatprep.subr.mxu0 0.0
        %757 = vmatpush1.msra.mxu0 0.0
        %758 = vmatprep.subr.mxu0 0.0
        %759 = vmatpush1.msra.mxu0 0.0
        %760 = vmatprep.subr.mxu0 0.0
        %761 = vmatpush1.msra.mxu0 0.0
        %762 = vmatprep.mubr.f32.mxu0 0.0
        %763 = vmatmul.mubr.f32.gmra.mrb[0].mxu0 %v632
        %v764 = vpop.f32.mrb[0].mxu0
        %v765 = vadd.f32 0.0, %v764
        %v766 = vpop.f32.mrb[0].mxu0
        %767 = vmatprep.mubr.f32.mxu0 0.0
        %768 = vmatmul.mubr.f32.gmra.mrb[0].mxu0 %v635
        %v769 = vpop.f32.mrb[0].mxu0
        %v770 = vadd.f32 0.0, %v769
        %v771 = vpop.f32.mrb[0].mxu0
        %772 = vmatprep.mubr.f32.mxu0 0.0
        %773 = vmatmul.mubr.f32.gmra.mrb[0].mxu0 %v638
        %v774 = vpop.f32.mrb[0].mxu0
        %v775 = vadd.f32 0.0, %v774
        %v776 = vpop.f32.mrb[0].mxu0
        %777 = vmatprep.mubr.f32.mxu0 0.0
        %778 = vmatmul.mubr.f32.gmra.mrb[0].mxu0 %v641
        %v779 = vpop.f32.mrb[0].mxu0
        %v780 = vadd.f32 0.0, %v779
        %v781 = vpop.f32.mrb[0].mxu0
        %782 = vmatprep.mubr.f32.mxu0 0.0
        %783 = vmatmul.mubr.f32.gmra.mrb[0].mxu0 %v644
        %v784 = vpop.f32.mrb[0].mxu0
        %v785 = vadd.f32 0.0, %v784
        %v786 = vpop.f32.mrb[0].mxu0
        %787 = vmatprep.mubr.f32.mxu0 0.0
        %788 = vmatmul.mubr.f32.gmra.mrb[0].mxu0 %v647
        %v789 = vpop.f32.mrb[0].mxu0
        %v790 = vadd.f32 0.0, %v789
        %v791 = vpop.f32.mrb[0].mxu0
        %792 = vmatprep.mubr.f32.mxu0 0.0
        %793 = vmatmul.mubr.f32.gmra.mrb[0].mxu0 %v650
        %v794 = vpop.f32.mrb[0].mxu0
        %v795 = vadd.f32 0.0, %v794
        %v796 = vpop.f32.mrb[0].mxu0
        %797 = vmatprep.mubr.f32.mxu0 0.0
        %798 = vmatmul.mubr.f32.gmra.mrb[0].mxu0 %v653
        %v799 = vpop.f32.mrb[0].mxu0
        %v800 = vadd.f32 0.0, %v799
        %v801 = vpop.f32.mrb[0].mxu0
        %802 = vmatprep.mubr.f32.mxu0 0.0
        %803 = vmatmul.mubr.f32.gmra.mrb[0].mxu0 %v656
        %v804 = vpop.f32.mrb[0].mxu0
        %v805 = vadd.f32 0.0, %v804
        %v806 = vpop.f32.mrb[0].mxu0
        %807 = vmatprep.mubr.f32.mxu0 0.0
        %808 = vmatmul.mubr.f32.gmra.mrb[0].mxu0 %v659
        %v809 = vpop.f32.mrb[0].mxu0
        %v810 = vadd.f32 0.0, %v809
        %v811 = vpop.f32.mrb[0].mxu0
        %812 = vmatprep.mubr.f32.mxu0 0.0
        %813 = vmatmul.mubr.f32.gmra.mrb[0].mxu0 %v662
        %v814 = vpop.f32.mrb[0].mxu0
        %v815 = vadd.f32 0.0, %v814
        %v816 = vpop.f32.mrb[0].mxu0
        %817 = vmatprep.mubr.f32.mxu0 0.0
        %818 = vmatmul.mubr.f32.gmra.mrb[0].mxu0 %v665
        %v819 = vpop.f32.mrb[0].mxu0
        %v820 = vadd.f32 0.0, %v819
        %v821 = vpop.f32.mrb[0].mxu0
        %822 = vmatprep.mubr.f32.mxu0 0.0
        %823 = vmatmul.mubr.f32.gmra.mrb[0].mxu0 %v668
        %v824 = vpop.f32.mrb[0].mxu0
        %v825 = vadd.f32 0.0, %v824
        %v826 = vpop.f32.mrb[0].mxu0
        %827 = vmatprep.mubr.f32.mxu0 0.0
        %828 = vmatmul.mubr.f32.gmra.mrb[0].mxu0 %v671
        %v829 = vpop.f32.mrb[0].mxu0
        %v830 = vadd.f32 0.0, %v829
        %v831 = vpop.f32.mrb[0].mxu0
        %832 = vmatprep.mubr.f32.mxu0 0.0
        %833 = vmatmul.mubr.f32.gmra.mrb[0].mxu0 %v674
        %v834 = vpop.f32.mrb[0].mxu0
        %v835 = vadd.f32 0.0, %v834
        %v836 = vpop.f32.mrb[0].mxu0
        %837 = vmatprep.mubr.f32.mxu0 0.0
        %838 = vmatmul.mubr.f32.gmra.mrb[0].mxu0 %v677
        %v839 = vpop.f32.mrb[0].mxu0
        %v840 = vadd.f32 0.0, %v839
        %v841 = vpop.f32.mrb[0].mxu0
        %842 = vmatprep.mubr.f32.mxu0 0.0
        %843 = vmatmul.mubr.f32.gmra.mrb[0].mxu0 %v680
        %v844 = vpop.f32.mrb[0].mxu0
        %v845 = vadd.f32 0.0, %v844
        %v846 = vpop.f32.mrb[0].mxu0
        %847 = vmatprep.mubr.f32.mxu0 0.0
        %848 = vmatmul.mubr.f32.gmra.mrb[0].mxu0 %v683
        %v849 = vpop.f32.mrb[0].mxu0
        %v850 = vadd.f32 0.0, %v849
        %v851 = vpop.f32.mrb[0].mxu0
        %852 = vmatprep.mubr.f32.mxu0 0.0
        %853 = vmatmul.mubr.f32.gmra.mrb[0].mxu0 %v686
        %v854 = vpop.f32.mrb[0].mxu0
        %v855 = vadd.f32 0.0, %v854
        %v856 = vpop.f32.mrb[0].mxu0
        %857 = vmatprep.mubr.f32.mxu0 0.0
        %858 = vmatmul.mubr.f32.gmra.mrb[0].mxu0 %v689
        %v859 = vpop.f32.mrb[0].mxu0
        %v860 = vadd.f32 0.0, %v859
        %v861 = vpop.f32.mrb[0].mxu0
        %862 = vmatprep.mubr.f32.mxu0 0.0
        %863 = vmatmul.mubr.f32.gmra.mrb[0].mxu0 %v692
        %v864 = vpop.f32.mrb[0].mxu0
        %v865 = vadd.f32 0.0, %v864
        %v866 = vpop.f32.mrb[0].mxu0
        %867 = vdwg.mxu0
        %v868 = vld [vmem:[#allocation5] sm:$0x1]
        %v870 = vlaneseq
        %v871 = vshrl.u32 %v870, 7
        %v872 = vsub.s32 0, %v871
        %v873 = vrot.slane %v868, %v872
        %v875 = vmul.f32 %v765, %v873
        %v876 = vmul.f32 %v770, %v873
        %v877 = vmul.f32 %v775, %v873
        %v878 = vmul.f32 %v780, %v873
        %v879 = vmul.f32 %v785, %v873
        %v880 = vmul.f32 %v790, %v873
        %v881 = vmul.f32 %v795, %v873
        %v882 = vmul.f32 %v800, %v873
        %v883 = vmul.f32 %v805, %v873
        %v884 = vmul.f32 %v810, %v873
        %v885 = vmul.f32 %v815, %v873
        %v886 = vmul.f32 %v820, %v873
        %v887 = vmul.f32 %v825, %v873
        %v888 = vmul.f32 %v830, %v873
        %v889 = vmul.f32 %v835, %v873
        %v890 = vmul.f32 %v840, %v873
        %v891 = vmul.f32 %v845, %v873
        %v892 = vmul.f32 %v850, %v873
        %v893 = vmul.f32 %v855, %v873
        %v894 = vmul.f32 %v860, %v873
        %v895 = vmul.f32 %v865, %v873
        %v896 = vld [vmem:[#allocation7] sm:$0x1]
        %v898 = vlaneseq
        %v899 = vshrl.u32 %v898, 7
        %v900 = vsub.s32 0, %v899
        %v901 = vrot.slane %v896, %v900
        %v903 = vadd.f32 %v875, %v901
        %v904 = vadd.f32 %v876, %v901
        %v905 = vadd.f32 %v877, %v901
        %v906 = vadd.f32 %v878, %v901
        %v907 = vadd.f32 %v879, %v901
        %v908 = vadd.f32 %v880, %v901
        %v909 = vadd.f32 %v881, %v901
        %v910 = vadd.f32 %v882, %v901
        %v911 = vadd.f32 %v883, %v901
        %v912 = vadd.f32 %v884, %v901
        %v913 = vadd.f32 %v885, %v901
        %v914 = vadd.f32 %v886, %v901
        %v915 = vadd.f32 %v887, %v901
        %v916 = vadd.f32 %v888, %v901
        %v917 = vadd.f32 %v889, %v901
        %v918 = vadd.f32 %v890, %v901
        %v919 = vadd.f32 %v891, %v901
        %v920 = vadd.f32 %v892, %v901
        %v921 = vadd.f32 %v893, %v901
        %v922 = vadd.f32 %v894, %v901
        %v923 = vadd.f32 %v895, %v901
        %v924 = vmax.f32 %v903, 0.0
        %v925 = vmax.f32 %v904, 0.0
        %v926 = vmax.f32 %v905, 0.0
        %v927 = vmax.f32 %v906, 0.0
        %v928 = vmax.f32 %v907, 0.0
        %v929 = vmax.f32 %v908, 0.0
        %v930 = vmax.f32 %v909, 0.0
        %v931 = vmax.f32 %v910, 0.0
        %v932 = vmax.f32 %v911, 0.0
        %v933 = vmax.f32 %v912, 0.0
        %v934 = vmax.f32 %v913, 0.0
        %v935 = vmax.f32 %v914, 0.0
        %v936 = vmax.f32 %v915, 0.0
        %v937 = vmax.f32 %v916, 0.0
        %v938 = vmax.f32 %v917, 0.0
        %v939 = vmax.f32 %v918, 0.0
        %v940 = vmax.f32 %v919, 0.0
        %v941 = vmax.f32 %v920, 0.0
        %v942 = vmax.f32 %v921, 0.0
        %v943 = vmax.f32 %v922, 0.0
        %v944 = vmax.f32 %v923, 0.0
        %s945 = scalar_lea.vmem %s565, 168 [#allocation2]
        %v946 = vld [vmem:[%s945] sm:$0xff]
        %v947 = vld [vmem:[%s945 + $0x8] sm:$0xff]
        %v948 = vld [vmem:[%s945 + $0x10] sm:$0xff]
        %v949 = vld [vmem:[%s945 + $0x18] sm:$0xff]
        %v950 = vld [vmem:[%s945 + $0x20] sm:$0xff]
        %v951 = vld [vmem:[%s945 + $0x28] sm:$0xff]
        %v952 = vld [vmem:[%s945 + $0x30] sm:$0xff]
        %v953 = vld [vmem:[%s945 + $0x38] sm:$0xff]
        %v954 = vld [vmem:[%s945 + $0x40] sm:$0xff]
        %v955 = vld [vmem:[%s945 + $0x48] sm:$0xff]
        %v956 = vld [vmem:[%s945 + $0x50] sm:$0xff]
        %v957 = vld [vmem:[%s945 + $0x58] sm:$0xff]
        %v958 = vld [vmem:[%s945 + $0x60] sm:$0xff]
        %v959 = vld [vmem:[%s945 + $0x68] sm:$0xff]
        %v960 = vld [vmem:[%s945 + $0x70] sm:$0xff]
        %v961 = vld [vmem:[%s945 + $0x78] sm:$0xff]
        %v962 = vld [vmem:[%s945 + $0x80] sm:$0xff]
        %v963 = vld [vmem:[%s945 + $0x88] sm:$0xff]
        %v964 = vld [vmem:[%s945 + $0x90] sm:$0xff]
        %v965 = vld [vmem:[%s945 + $0x98] sm:$0xff]
        %v966 = vld [vmem:[%s945 + $0xa0] sm:$0xff]
        %v968 = vsel %vm630, %v946, 0
        %v971 = vsel %vm630, %v947, 0
        %v974 = vsel %vm630, %v948, 0
        %v977 = vsel %vm630, %v949, 0
        %v980 = vsel %vm630, %v950, 0
        %v983 = vsel %vm630, %v951, 0
        %v986 = vsel %vm630, %v952, 0
        %v989 = vsel %vm630, %v953, 0
        %v992 = vsel %vm630, %v954, 0
        %v995 = vsel %vm630, %v955, 0
        %v998 = vsel %vm630, %v956, 0
        %v1001 = vsel %vm630, %v957, 0
        %v1004 = vsel %vm630, %v958, 0
        %v1007 = vsel %vm630, %v959, 0
        %v1010 = vsel %vm630, %v960, 0
        %v1013 = vsel %vm630, %v961, 0
        %v1016 = vsel %vm630, %v962, 0
        %v1019 = vsel %vm630, %v963, 0
        %v1022 = vsel %vm630, %v964, 0
        %v1025 = vsel %vm630, %v965, 0
        %v1028 = vsel %vm630, %v966, 0
        %1030 = vmatprep.subr.mxu0 0.0
        %1031 = vmatpush1.msra.mxu0 %v628
        %1032 = vmatprep.subr.mxu0 0.0
        %1033 = vmatpush1.msra.mxu0 %v696
        %1034 = vmatprep.subr.mxu0 0.0
        %1035 = vmatpush1.msra.mxu0 0.0
        %1036 = vmatprep.subr.mxu0 0.0
        %1037 = vmatpush1.msra.mxu0 0.0
        %1038 = vmatprep.subr.mxu0 0.0
        %1039 = vmatpush1.msra.mxu0 0.0
        %1040 = vmatprep.subr.mxu0 0.0
        %1041 = vmatpush1.msra.mxu0 0.0
        %1042 = vmatprep.subr.mxu0 0.0
        %1043 = vmatpush1.msra.mxu0 0.0
        %1044 = vmatprep.subr.mxu0 0.0
        %1045 = vmatpush1.msra.mxu0 0.0
        %1046 = vmatprep.subr.mxu0 0.0
        %1047 = vmatpush1.msra.mxu0 0.0
        %1048 = vmatprep.subr.mxu0 0.0
        %1049 = vmatpush1.msra.mxu0 0.0
        %1050 = vmatprep.subr.mxu0 0.0
        %1051 = vmatpush1.msra.mxu0 0.0
        %1052 = vmatprep.subr.mxu0 0.0
        %1053 = vmatpush1.msra.mxu0 0.0
        %1054 = vmatprep.subr.mxu0 0.0
        %1055 = vmatpush1.msra.mxu0 0.0
        %1056 = vmatprep.subr.mxu0 0.0
        %1057 = vmatpush1.msra.mxu0 0.0
        %1058 = vmatprep.subr.mxu0 0.0
        %1059 = vmatpush1.msra.mxu0 0.0
        %1060 = vmatprep.subr.mxu0 0.0
        %1061 = vmatpush1.msra.mxu0 0.0
        %1062 = vmatprep.subr.mxu0 0.0
        %1063 = vmatpush1.msra.mxu0 0.0
        %1064 = vmatprep.subr.mxu0 0.0
        %1065 = vmatpush1.msra.mxu0 0.0
        %1066 = vmatprep.subr.mxu0 0.0
        %1067 = vmatpush1.msra.mxu0 0.0
        %1068 = vmatprep.subr.mxu0 0.0
        %1069 = vmatpush1.msra.mxu0 0.0
        %1070 = vmatprep.subr.mxu0 0.0
        %1071 = vmatpush1.msra.mxu0 0.0
        %1072 = vmatprep.subr.mxu0 0.0
        %1073 = vmatpush1.msra.mxu0 0.0
        %1074 = vmatprep.subr.mxu0 0.0
        %1075 = vmatpush1.msra.mxu0 0.0
        %1076 = vmatprep.subr.mxu0 0.0
        %1077 = vmatpush1.msra.mxu0 0.0
        %1078 = vmatprep.subr.mxu0 0.0
        %1079 = vmatpush1.msra.mxu0 0.0
        %1080 = vmatprep.subr.mxu0 0.0
        %1081 = vmatpush1.msra.mxu0 0.0
        %1082 = vmatprep.subr.mxu0 0.0
        %1083 = vmatpush1.msra.mxu0 0.0
        %1084 = vmatprep.subr.mxu0 0.0
        %1085 = vmatpush1.msra.mxu0 0.0
        %1086 = vmatprep.subr.mxu0 0.0
        %1087 = vmatpush1.msra.mxu0 0.0
        %1088 = vmatprep.subr.mxu0 0.0
        %1089 = vmatpush1.msra.mxu0 0.0
        %1090 = vmatprep.subr.mxu0 0.0
        %1091 = vmatpush1.msra.mxu0 0.0
        %1092 = vmatprep.subr.mxu0 0.0
        %1093 = vmatpush1.msra.mxu0 0.0
        %1094 = vmatprep.mubr.f32.mxu0 0.0
        %1095 = vmatmul.mubr.f32.gmra.mrb[0].mxu0 %v968
        %v1096 = vpop.f32.mrb[0].mxu0
        %v1097 = vadd.f32 0.0, %v1096
        %v1098 = vpop.f32.mrb[0].mxu0
        %1099 = vmatprep.mubr.f32.mxu0 0.0
        %1100 = vmatmul.mubr.f32.gmra.mrb[0].mxu0 %v971
        %v1101 = vpop.f32.mrb[0].mxu0
        %v1102 = vadd.f32 0.0, %v1101
        %v1103 = vpop.f32.mrb[0].mxu0
        %1104 = vmatprep.mubr.f32.mxu0 0.0
        %1105 = vmatmul.mubr.f32.gmra.mrb[0].mxu0 %v974
        %v1106 = vpop.f32.mrb[0].mxu0
        %v1107 = vadd.f32 0.0, %v1106
        %v1108 = vpop.f32.mrb[0].mxu0
        %1109 = vmatprep.mubr.f32.mxu0 0.0
        %1110 = vmatmul.mubr.f32.gmra.mrb[0].mxu0 %v977
        %v1111 = vpop.f32.mrb[0].mxu0
        %v1112 = vadd.f32 0.0, %v1111
        %v1113 = vpop.f32.mrb[0].mxu0
        %1114 = vmatprep.mubr.f32.mxu0 0.0
        %1115 = vmatmul.mubr.f32.gmra.mrb[0].mxu0 %v980
        %v1116 = vpop.f32.mrb[0].mxu0
        %v1117 = vadd.f32 0.0, %v1116
        %v1118 = vpop.f32.mrb[0].mxu0
        %1119 = vmatprep.mubr.f32.mxu0 0.0
        %1120 = vmatmul.mubr.f32.gmra.mrb[0].mxu0 %v983
        %v1121 = vpop.f32.mrb[0].mxu0
        %v1122 = vadd.f32 0.0, %v1121
        %v1123 = vpop.f32.mrb[0].mxu0
        %1124 = vmatprep.mubr.f32.mxu0 0.0
        %1125 = vmatmul.mubr.f32.gmra.mrb[0].mxu0 %v986
        %v1126 = vpop.f32.mrb[0].mxu0
        %v1127 = vadd.f32 0.0, %v1126
        %v1128 = vpop.f32.mrb[0].mxu0
        %1129 = vmatprep.mubr.f32.mxu0 0.0
        %1130 = vmatmul.mubr.f32.gmra.mrb[0].mxu0 %v989
        %v1131 = vpop.f32.mrb[0].mxu0
        %v1132 = vadd.f32 0.0, %v1131
        %v1133 = vpop.f32.mrb[0].mxu0
        %1134 = vmatprep.mubr.f32.mxu0 0.0
        %1135 = vmatmul.mubr.f32.gmra.mrb[0].mxu0 %v992
        %v1136 = vpop.f32.mrb[0].mxu0
        %v1137 = vadd.f32 0.0, %v1136
        %v1138 = vpop.f32.mrb[0].mxu0
        %1139 = vmatprep.mubr.f32.mxu0 0.0
        %1140 = vmatmul.mubr.f32.gmra.mrb[0].mxu0 %v995
        %v1141 = vpop.f32.mrb[0].mxu0
        %v1142 = vadd.f32 0.0, %v1141
        %v1143 = vpop.f32.mrb[0].mxu0
        %1144 = vmatprep.mubr.f32.mxu0 0.0
        %1145 = vmatmul.mubr.f32.gmra.mrb[0].mxu0 %v998
        %v1146 = vpop.f32.mrb[0].mxu0
        %v1147 = vadd.f32 0.0, %v1146
        %v1148 = vpop.f32.mrb[0].mxu0
        %1149 = vmatprep.mubr.f32.mxu0 0.0
        %1150 = vmatmul.mubr.f32.gmra.mrb[0].mxu0 %v1001
        %v1151 = vpop.f32.mrb[0].mxu0
        %v1152 = vadd.f32 0.0, %v1151
        %v1153 = vpop.f32.mrb[0].mxu0
        %1154 = vmatprep.mubr.f32.mxu0 0.0
        %1155 = vmatmul.mubr.f32.gmra.mrb[0].mxu0 %v1004
        %v1156 = vpop.f32.mrb[0].mxu0
        %v1157 = vadd.f32 0.0, %v1156
        %v1158 = vpop.f32.mrb[0].mxu0
        %1159 = vmatprep.mubr.f32.mxu0 0.0
        %1160 = vmatmul.mubr.f32.gmra.mrb[0].mxu0 %v1007
        %v1161 = vpop.f32.mrb[0].mxu0
        %v1162 = vadd.f32 0.0, %v1161
        %v1163 = vpop.f32.mrb[0].mxu0
        %1164 = vmatprep.mubr.f32.mxu0 0.0
        %1165 = vmatmul.mubr.f32.gmra.mrb[0].mxu0 %v1010
        %v1166 = vpop.f32.mrb[0].mxu0
        %v1167 = vadd.f32 0.0, %v1166
        %v1168 = vpop.f32.mrb[0].mxu0
        %1169 = vmatprep.mubr.f32.mxu0 0.0
        %1170 = vmatmul.mubr.f32.gmra.mrb[0].mxu0 %v1013
        %v1171 = vpop.f32.mrb[0].mxu0
        %v1172 = vadd.f32 0.0, %v1171
        %v1173 = vpop.f32.mrb[0].mxu0
        %1174 = vmatprep.mubr.f32.mxu0 0.0
        %1175 = vmatmul.mubr.f32.gmra.mrb[0].mxu0 %v1016
        %v1176 = vpop.f32.mrb[0].mxu0
        %v1177 = vadd.f32 0.0, %v1176
        %v1178 = vpop.f32.mrb[0].mxu0
        %1179 = vmatprep.mubr.f32.mxu0 0.0
        %1180 = vmatmul.mubr.f32.gmra.mrb[0].mxu0 %v1019
        %v1181 = vpop.f32.mrb[0].mxu0
        %v1182 = vadd.f32 0.0, %v1181
        %v1183 = vpop.f32.mrb[0].mxu0
        %1184 = vmatprep.mubr.f32.mxu0 0.0
        %1185 = vmatmul.mubr.f32.gmra.mrb[0].mxu0 %v1022
        %v1186 = vpop.f32.mrb[0].mxu0
        %v1187 = vadd.f32 0.0, %v1186
        %v1188 = vpop.f32.mrb[0].mxu0
        %1189 = vmatprep.mubr.f32.mxu0 0.0
        %1190 = vmatmul.mubr.f32.gmra.mrb[0].mxu0 %v1025
        %v1191 = vpop.f32.mrb[0].mxu0
        %v1192 = vadd.f32 0.0, %v1191
        %v1193 = vpop.f32.mrb[0].mxu0
        %1194 = vmatprep.mubr.f32.mxu0 0.0
        %1195 = vmatmul.mubr.f32.gmra.mrb[0].mxu0 %v1028
        %v1196 = vpop.f32.mrb[0].mxu0
        %v1197 = vadd.f32 0.0, %v1196
        %v1198 = vpop.f32.mrb[0].mxu0
        %1199 = vdwg.mxu0
        %v1200 = vmul.f32 %v1097, %v873
        %v1201 = vmul.f32 %v1102, %v873
        %v1202 = vmul.f32 %v1107, %v873
        %v1203 = vmul.f32 %v1112, %v873
        %v1204 = vmul.f32 %v1117, %v873
        %v1205 = vmul.f32 %v1122, %v873
        %v1206 = vmul.f32 %v1127, %v873
        %v1207 = vmul.f32 %v1132, %v873
        %v1208 = vmul.f32 %v1137, %v873
        %v1209 = vmul.f32 %v1142, %v873
        %v1210 = vmul.f32 %v1147, %v873
        %v1211 = vmul.f32 %v1152, %v873
        %v1212 = vmul.f32 %v1157, %v873
        %v1213 = vmul.f32 %v1162, %v873
        %v1214 = vmul.f32 %v1167, %v873
        %v1215 = vmul.f32 %v1172, %v873
        %v1216 = vmul.f32 %v1177, %v873
        %v1217 = vmul.f32 %v1182, %v873
        %v1218 = vmul.f32 %v1187, %v873
        %v1219 = vmul.f32 %v1192, %v873
        %v1220 = vmul.f32 %v1197, %v873
        %v1221 = vadd.f32 %v1200, %v901
        %v1222 = vadd.f32 %v1201, %v901
        %v1223 = vadd.f32 %v1202, %v901
        %v1224 = vadd.f32 %v1203, %v901
        %v1225 = vadd.f32 %v1204, %v901
        %v1226 = vadd.f32 %v1205, %v901
        %v1227 = vadd.f32 %v1206, %v901
        %v1228 = vadd.f32 %v1207, %v901
        %v1229 = vadd.f32 %v1208, %v901
        %v1230 = vadd.f32 %v1209, %v901
        %v1231 = vadd.f32 %v1210, %v901
        %v1232 = vadd.f32 %v1211, %v901
        %v1233 = vadd.f32 %v1212, %v901
        %v1234 = vadd.f32 %v1213, %v901
        %v1235 = vadd.f32 %v1214, %v901
        %v1236 = vadd.f32 %v1215, %v901
        %v1237 = vadd.f32 %v1216, %v901
        %v1238 = vadd.f32 %v1217, %v901
        %v1239 = vadd.f32 %v1218, %v901
        %v1240 = vadd.f32 %v1219, %v901
        %v1241 = vadd.f32 %v1220, %v901
        %v1242 = vmax.f32 %v1221, 0.0
        %v1243 = vmax.f32 %v1222, 0.0
        %v1244 = vmax.f32 %v1223, 0.0
        %v1245 = vmax.f32 %v1224, 0.0
        %v1246 = vmax.f32 %v1225, 0.0
        %v1247 = vmax.f32 %v1226, 0.0
        %v1248 = vmax.f32 %v1227, 0.0
        %v1249 = vmax.f32 %v1228, 0.0
        %v1250 = vmax.f32 %v1229, 0.0
        %v1251 = vmax.f32 %v1230, 0.0
        %v1252 = vmax.f32 %v1231, 0.0
        %v1253 = vmax.f32 %v1232, 0.0
        %v1254 = vmax.f32 %v1233, 0.0
        %v1255 = vmax.f32 %v1234, 0.0
        %v1256 = vmax.f32 %v1235, 0.0
        %v1257 = vmax.f32 %v1236, 0.0
        %v1258 = vmax.f32 %v1237, 0.0
        %v1259 = vmax.f32 %v1238, 0.0
        %v1260 = vmax.f32 %v1239, 0.0
        %v1261 = vmax.f32 %v1240, 0.0
        %v1262 = vmax.f32 %v1241, 0.0
        %v1263 = vmax.f32 %v924, %v1242
        %v1264 = vmax.f32 %v925, %v1243
        %v1265 = vmax.f32 %v926, %v1244
        %v1266 = vmax.f32 %v927, %v1245
        %v1267 = vmax.f32 %v928, %v1246
        %v1268 = vmax.f32 %v929, %v1247
        %v1269 = vmax.f32 %v930, %v1248
        %v1270 = vmax.f32 %v931, %v1249
        %v1271 = vmax.f32 %v932, %v1250
        %v1272 = vmax.f32 %v933, %v1251
        %v1273 = vmax.f32 %v934, %v1252
        %v1274 = vmax.f32 %v935, %v1253
        %v1275 = vmax.f32 %v936, %v1254
        %v1276 = vmax.f32 %v937, %v1255
        %v1277 = vmax.f32 %v938, %v1256
        %v1278 = vmax.f32 %v939, %v1257
        %v1279 = vmax.f32 %v940, %v1258
        %v1280 = vmax.f32 %v941, %v1259
        %v1281 = vmax.f32 %v942, %v1260
        %v1282 = vmax.f32 %v943, %v1261
        %v1283 = vmax.f32 %v944, %v1262
        %s1284 = scalar_lea.vmem %s565, 336 [#allocation2]
        %v1285 = vld [vmem:[%s1284] sm:$0xff]
        %v1286 = vld [vmem:[%s1284 + $0x8] sm:$0xff]
        %v1287 = vld [vmem:[%s1284 + $0x10] sm:$0xff]
        %v1288 = vld [vmem:[%s1284 + $0x18] sm:$0xff]
        %v1289 = vld [vmem:[%s1284 + $0x20] sm:$0xff]
        %v1290 = vld [vmem:[%s1284 + $0x28] sm:$0xff]
        %v1291 = vld [vmem:[%s1284 + $0x30] sm:$0xff]
        %v1292 = vld [vmem:[%s1284 + $0x38] sm:$0xff]
        %v1293 = vld [vmem:[%s1284 + $0x40] sm:$0xff]
        %v1294 = vld [vmem:[%s1284 + $0x48] sm:$0xff]
        %v1295 = vld [vmem:[%s1284 + $0x50] sm:$0xff]
        %v1296 = vld [vmem:[%s1284 + $0x58] sm:$0xff]
        %v1297 = vld [vmem:[%s1284 + $0x60] sm:$0xff]
        %v1298 = vld [vmem:[%s1284 + $0x68] sm:$0xff]
        %v1299 = vld [vmem:[%s1284 + $0x70] sm:$0xff]
        %v1300 = vld [vmem:[%s1284 + $0x78] sm:$0xff]
        %v1301 = vld [vmem:[%s1284 + $0x80] sm:$0xff]
        %v1302 = vld [vmem:[%s1284 + $0x88] sm:$0xff]
        %v1303 = vld [vmem:[%s1284 + $0x90] sm:$0xff]
        %v1304 = vld [vmem:[%s1284 + $0x98] sm:$0xff]
        %v1305 = vld [vmem:[%s1284 + $0xa0] sm:$0xff]
        %v1307 = vsel %vm630, %v1285, 0
        %v1310 = vsel %vm630, %v1286, 0
        %v1313 = vsel %vm630, %v1287, 0
        %v1316 = vsel %vm630, %v1288, 0
        %v1319 = vsel %vm630, %v1289, 0
        %v1322 = vsel %vm630, %v1290, 0
        %v1325 = vsel %vm630, %v1291, 0
        %v1328 = vsel %vm630, %v1292, 0
        %v1331 = vsel %vm630, %v1293, 0
        %v1334 = vsel %vm630, %v1294, 0
        %v1337 = vsel %vm630, %v1295, 0
        %v1340 = vsel %vm630, %v1296, 0
        %v1343 = vsel %vm630, %v1297, 0
        %v1346 = vsel %vm630, %v1298, 0
        %v1349 = vsel %vm630, %v1299, 0
        %v1352 = vsel %vm630, %v1300, 0
        %v1355 = vsel %vm630, %v1301, 0
        %v1358 = vsel %vm630, %v1302, 0
        %v1361 = vsel %vm630, %v1303, 0
        %v1364 = vsel %vm630, %v1304, 0
        %v1367 = vsel %vm630, %v1305, 0
        %1369 = vmatprep.subr.mxu0 0.0
        %1370 = vmatpush1.msra.mxu0 %v628
        %1371 = vmatprep.subr.mxu0 0.0
        %1372 = vmatpush1.msra.mxu0 %v696
        %1373 = vmatprep.subr.mxu0 0.0
        %1374 = vmatpush1.msra.mxu0 0.0
        %1375 = vmatprep.subr.mxu0 0.0
        %1376 = vmatpush1.msra.mxu0 0.0
        %1377 = vmatprep.subr.mxu0 0.0
        %1378 = vmatpush1.msra.mxu0 0.0
        %1379 = vmatprep.subr.mxu0 0.0
        %1380 = vmatpush1.msra.mxu0 0.0
        %1381 = vmatprep.subr.mxu0 0.0
        %1382 = vmatpush1.msra.mxu0 0.0
        %1383 = vmatprep.subr.mxu0 0.0
        %1384 = vmatpush1.msra.mxu0 0.0
        %1385 = vmatprep.subr.mxu0 0.0
        %1386 = vmatpush1.msra.mxu0 0.0
        %1387 = vmatprep.subr.mxu0 0.0
        %1388 = vmatpush1.msra.mxu0 0.0
        %1389 = vmatprep.subr.mxu0 0.0
        %1390 = vmatpush1.msra.mxu0 0.0
        %1391 = vmatprep.subr.mxu0 0.0
        %1392 = vmatpush1.msra.mxu0 0.0
        %1393 = vmatprep.subr.mxu0 0.0
        %1394 = vmatpush1.msra.mxu0 0.0
        %1395 = vmatprep.subr.mxu0 0.0
        %1396 = vmatpush1.msra.mxu0 0.0
        %1397 = vmatprep.subr.mxu0 0.0
        %1398 = vmatpush1.msra.mxu0 0.0
        %1399 = vmatprep.subr.mxu0 0.0
        %1400 = vmatpush1.msra.mxu0 0.0
        %1401 = vmatprep.subr.mxu0 0.0
        %1402 = vmatpush1.msra.mxu0 0.0
        %1403 = vmatprep.subr.mxu0 0.0
        %1404 = vmatpush1.msra.mxu0 0.0
        %1405 = vmatprep.subr.mxu0 0.0
        %1406 = vmatpush1.msra.mxu0 0.0
        %1407 = vmatprep.subr.mxu0 0.0
        %1408 = vmatpush1.msra.mxu0 0.0
        %1409 = vmatprep.subr.mxu0 0.0
        %1410 = vmatpush1.msra.mxu0 0.0
        %1411 = vmatprep.subr.mxu0 0.0
        %1412 = vmatpush1.msra.mxu0 0.0
        %1413 = vmatprep.subr.mxu0 0.0
        %1414 = vmatpush1.msra.mxu0 0.0
        %1415 = vmatprep.subr.mxu0 0.0
        %1416 = vmatpush1.msra.mxu0 0.0
        %1417 = vmatprep.subr.mxu0 0.0
        %1418 = vmatpush1.msra.mxu0 0.0
        %1419 = vmatprep.subr.mxu0 0.0
        %1420 = vmatpush1.msra.mxu0 0.0
        %1421 = vmatprep.subr.mxu0 0.0
        %1422 = vmatpush1.msra.mxu0 0.0
        %1423 = vmatprep.subr.mxu0 0.0
        %1424 = vmatpush1.msra.mxu0 0.0
        %1425 = vmatprep.subr.mxu0 0.0
        %1426 = vmatpush1.msra.mxu0 0.0
        %1427 = vmatprep.subr.mxu0 0.0
        %1428 = vmatpush1.msra.mxu0 0.0
        %1429 = vmatprep.subr.mxu0 0.0
        %1430 = vmatpush1.msra.mxu0 0.0
        %1431 = vmatprep.subr.mxu0 0.0
        %1432 = vmatpush1.msra.mxu0 0.0
        %1433 = vmatprep.mubr.f32.mxu0 0.0
        %1434 = vmatmul.mubr.f32.gmra.mrb[0].mxu0 %v1307
        %v1435 = vpop.f32.mrb[0].mxu0
        %v1436 = vadd.f32 0.0, %v1435
        %v1437 = vpop.f32.mrb[0].mxu0
        %1438 = vmatprep.mubr.f32.mxu0 0.0
        %1439 = vmatmul.mubr.f32.gmra.mrb[0].mxu0 %v1310
        %v1440 = vpop.f32.mrb[0].mxu0
        %v1441 = vadd.f32 0.0, %v1440
        %v1442 = vpop.f32.mrb[0].mxu0
        %1443 = vmatprep.mubr.f32.mxu0 0.0
        %1444 = vmatmul.mubr.f32.gmra.mrb[0].mxu0 %v1313
        %v1445 = vpop.f32.mrb[0].mxu0
        %v1446 = vadd.f32 0.0, %v1445
        %v1447 = vpop.f32.mrb[0].mxu0
        %1448 = vmatprep.mubr.f32.mxu0 0.0
        %1449 = vmatmul.mubr.f32.gmra.mrb[0].mxu0 %v1316
        %v1450 = vpop.f32.mrb[0].mxu0
        %v1451 = vadd.f32 0.0, %v1450
        %v1452 = vpop.f32.mrb[0].mxu0
        %1453 = vmatprep.mubr.f32.mxu0 0.0
        %1454 = vmatmul.mubr.f32.gmra.mrb[0].mxu0 %v1319
        %v1455 = vpop.f32.mrb[0].mxu0
        %v1456 = vadd.f32 0.0, %v1455
        %v1457 = vpop.f32.mrb[0].mxu0
        %1458 = vmatprep.mubr.f32.mxu0 0.0
        %1459 = vmatmul.mubr.f32.gmra.mrb[0].mxu0 %v1322
        %v1460 = vpop.f32.mrb[0].mxu0
        %v1461 = vadd.f32 0.0, %v1460
        %v1462 = vpop.f32.mrb[0].mxu0
        %1463 = vmatprep.mubr.f32.mxu0 0.0
        %1464 = vmatmul.mubr.f32.gmra.mrb[0].mxu0 %v1325
        %v1465 = vpop.f32.mrb[0].mxu0
        %v1466 = vadd.f32 0.0, %v1465
        %v1467 = vpop.f32.mrb[0].mxu0
        %1468 = vmatprep.mubr.f32.mxu0 0.0
        %1469 = vmatmul.mubr.f32.gmra.mrb[0].mxu0 %v1328
        %v1470 = vpop.f32.mrb[0].mxu0
        %v1471 = vadd.f32 0.0, %v1470
        %v1472 = vpop.f32.mrb[0].mxu0
        %1473 = vmatprep.mubr.f32.mxu0 0.0
        %1474 = vmatmul.mubr.f32.gmra.mrb[0].mxu0 %v1331
        %v1475 = vpop.f32.mrb[0].mxu0
        %v1476 = vadd.f32 0.0, %v1475
        %v1477 = vpop.f32.mrb[0].mxu0
        %1478 = vmatprep.mubr.f32.mxu0 0.0
        %1479 = vmatmul.mubr.f32.gmra.mrb[0].mxu0 %v1334
        %v1480 = vpop.f32.mrb[0].mxu0
        %v1481 = vadd.f32 0.0, %v1480
        %v1482 = vpop.f32.mrb[0].mxu0
        %1483 = vmatprep.mubr.f32.mxu0 0.0
        %1484 = vmatmul.mubr.f32.gmra.mrb[0].mxu0 %v1337
        %v1485 = vpop.f32.mrb[0].mxu0
        %v1486 = vadd.f32 0.0, %v1485
        %v1487 = vpop.f32.mrb[0].mxu0
        %1488 = vmatprep.mubr.f32.mxu0 0.0
        %1489 = vmatmul.mubr.f32.gmra.mrb[0].mxu0 %v1340
        %v1490 = vpop.f32.mrb[0].mxu0
        %v1491 = vadd.f32 0.0, %v1490
        %v1492 = vpop.f32.mrb[0].mxu0
        %1493 = vmatprep.mubr.f32.mxu0 0.0
        %1494 = vmatmul.mubr.f32.gmra.mrb[0].mxu0 %v1343
        %v1495 = vpop.f32.mrb[0].mxu0
        %v1496 = vadd.f32 0.0, %v1495
        %v1497 = vpop.f32.mrb[0].mxu0
        %1498 = vmatprep.mubr.f32.mxu0 0.0
        %1499 = vmatmul.mubr.f32.gmra.mrb[0].mxu0 %v1346
        %v1500 = vpop.f32.mrb[0].mxu0
        %v1501 = vadd.f32 0.0, %v1500
        %v1502 = vpop.f32.mrb[0].mxu0
        %1503 = vmatprep.mubr.f32.mxu0 0.0
        %1504 = vmatmul.mubr.f32.gmra.mrb[0].mxu0 %v1349
        %v1505 = vpop.f32.mrb[0].mxu0
        %v1506 = vadd.f32 0.0, %v1505
        %v1507 = vpop.f32.mrb[0].mxu0
        %1508 = vmatprep.mubr.f32.mxu0 0.0
        %1509 = vmatmul.mubr.f32.gmra.mrb[0].mxu0 %v1352
        %v1510 = vpop.f32.mrb[0].mxu0
        %v1511 = vadd.f32 0.0, %v1510
        %v1512 = vpop.f32.mrb[0].mxu0
        %1513 = vmatprep.mubr.f32.mxu0 0.0
        %1514 = vmatmul.mubr.f32.gmra.mrb[0].mxu0 %v1355
        %v1515 = vpop.f32.mrb[0].mxu0
        %v1516 = vadd.f32 0.0, %v1515
        %v1517 = vpop.f32.mrb[0].mxu0
        %1518 = vmatprep.mubr.f32.mxu0 0.0
        %1519 = vmatmul.mubr.f32.gmra.mrb[0].mxu0 %v1358
        %v1520 = vpop.f32.mrb[0].mxu0
        %v1521 = vadd.f32 0.0, %v1520
        %v1522 = vpop.f32.mrb[0].mxu0
        %1523 = vmatprep.mubr.f32.mxu0 0.0
        %1524 = vmatmul.mubr.f32.gmra.mrb[0].mxu0 %v1361
        %v1525 = vpop.f32.mrb[0].mxu0
        %v1526 = vadd.f32 0.0, %v1525
        %v1527 = vpop.f32.mrb[0].mxu0
        %1528 = vmatprep.mubr.f32.mxu0 0.0
        %1529 = vmatmul.mubr.f32.gmra.mrb[0].mxu0 %v1364
        %v1530 = vpop.f32.mrb[0].mxu0
        %v1531 = vadd.f32 0.0, %v1530
        %v1532 = vpop.f32.mrb[0].mxu0
        %1533 = vmatprep.mubr.f32.mxu0 0.0
        %1534 = vmatmul.mubr.f32.gmra.mrb[0].mxu0 %v1367
        %v1535 = vpop.f32.mrb[0].mxu0
        %v1536 = vadd.f32 0.0, %v1535
        %v1537 = vpop.f32.mrb[0].mxu0
        %1538 = vdwg.mxu0
        %v1539 = vmul.f32 %v1436, %v873
        %v1540 = vmul.f32 %v1441, %v873
        %v1541 = vmul.f32 %v1446, %v873
        %v1542 = vmul.f32 %v1451, %v873
        %v1543 = vmul.f32 %v1456, %v873
        %v1544 = vmul.f32 %v1461, %v873
        %v1545 = vmul.f32 %v1466, %v873
        %v1546 = vmul.f32 %v1471, %v873
        %v1547 = vmul.f32 %v1476, %v873
        %v1548 = vmul.f32 %v1481, %v873
        %v1549 = vmul.f32 %v1486, %v873
        %v1550 = vmul.f32 %v1491, %v873
        %v1551 = vmul.f32 %v1496, %v873
        %v1552 = vmul.f32 %v1501, %v873
        %v1553 = vmul.f32 %v1506, %v873
        %v1554 = vmul.f32 %v1511, %v873
        %v1555 = vmul.f32 %v1516, %v873
        %v1556 = vmul.f32 %v1521, %v873
        %v1557 = vmul.f32 %v1526, %v873
        %v1558 = vmul.f32 %v1531, %v873
        %v1559 = vmul.f32 %v1536, %v873
        %v1560 = vadd.f32 %v1539, %v901
        %v1561 = vadd.f32 %v1540, %v901
        %v1562 = vadd.f32 %v1541, %v901
        %v1563 = vadd.f32 %v1542, %v901
        %v1564 = vadd.f32 %v1543, %v901
        %v1565 = vadd.f32 %v1544, %v901
        %v1566 = vadd.f32 %v1545, %v901
        %v1567 = vadd.f32 %v1546, %v901
        %v1568 = vadd.f32 %v1547, %v901
        %v1569 = vadd.f32 %v1548, %v901
        %v1570 = vadd.f32 %v1549, %v901
        %v1571 = vadd.f32 %v1550, %v901
        %v1572 = vadd.f32 %v1551, %v901
        %v1573 = vadd.f32 %v1552, %v901
        %v1574 = vadd.f32 %v1553, %v901
        %v1575 = vadd.f32 %v1554, %v901
        %v1576 = vadd.f32 %v1555, %v901
        %v1577 = vadd.f32 %v1556, %v901
        %v1578 = vadd.f32 %v1557, %v901
        %v1579 = vadd.f32 %v1558, %v901
        %v1580 = vadd.f32 %v1559, %v901
        %v1581 = vmax.f32 %v1560, 0.0
        %v1582 = vmax.f32 %v1561, 0.0
        %v1583 = vmax.f32 %v1562, 0.0
        %v1584 = vmax.f32 %v1563, 0.0
        %v1585 = vmax.f32 %v1564, 0.0
        %v1586 = vmax.f32 %v1565, 0.0
        %v1587 = vmax.f32 %v1566, 0.0
        %v1588 = vmax.f32 %v1567, 0.0
        %v1589 = vmax.f32 %v1568, 0.0
        %v1590 = vmax.f32 %v1569, 0.0
        %v1591 = vmax.f32 %v1570, 0.0
        %v1592 = vmax.f32 %v1571, 0.0
        %v1593 = vmax.f32 %v1572, 0.0
        %v1594 = vmax.f32 %v1573, 0.0
        %v1595 = vmax.f32 %v1574, 0.0
        %v1596 = vmax.f32 %v1575, 0.0
        %v1597 = vmax.f32 %v1576, 0.0
        %v1598 = vmax.f32 %v1577, 0.0
        %v1599 = vmax.f32 %v1578, 0.0
        %v1600 = vmax.f32 %v1579, 0.0
        %v1601 = vmax.f32 %v1580, 0.0
        %s1602 = scalar_lea.vmem %s565, 504 [#allocation2]
        %v1603 = vld [vmem:[%s1602] sm:$0xff]
        %v1604 = vld [vmem:[%s1602 + $0x8] sm:$0xff]
        %v1605 = vld [vmem:[%s1602 + $0x10] sm:$0xff]
        %v1606 = vld [vmem:[%s1602 + $0x18] sm:$0xff]
        %v1607 = vld [vmem:[%s1602 + $0x20] sm:$0xff]
        %v1608 = vld [vmem:[%s1602 + $0x28] sm:$0xff]
        %v1609 = vld [vmem:[%s1602 + $0x30] sm:$0xff]
        %v1610 = vld [vmem:[%s1602 + $0x38] sm:$0xff]
        %v1611 = vld [vmem:[%s1602 + $0x40] sm:$0xff]
        %v1612 = vld [vmem:[%s1602 + $0x48] sm:$0xff]
        %v1613 = vld [vmem:[%s1602 + $0x50] sm:$0xff]
        %v1614 = vld [vmem:[%s1602 + $0x58] sm:$0xff]
        %v1615 = vld [vmem:[%s1602 + $0x60] sm:$0xff]
        %v1616 = vld [vmem:[%s1602 + $0x68] sm:$0xff]
        %v1617 = vld [vmem:[%s1602 + $0x70] sm:$0xff]
        %v1618 = vld [vmem:[%s1602 + $0x78] sm:$0xff]
        %v1619 = vld [vmem:[%s1602 + $0x80] sm:$0xff]
        %v1620 = vld [vmem:[%s1602 + $0x88] sm:$0xff]
        %v1621 = vld [vmem:[%s1602 + $0x90] sm:$0xff]
        %v1622 = vld [vmem:[%s1602 + $0x98] sm:$0xff]
        %v1623 = vld [vmem:[%s1602 + $0xa0] sm:$0xff]
        %v1625 = vsel %vm630, %v1603, 0
        %v1628 = vsel %vm630, %v1604, 0
        %v1631 = vsel %vm630, %v1605, 0
        %v1634 = vsel %vm630, %v1606, 0
        %v1637 = vsel %vm630, %v1607, 0
        %v1640 = vsel %vm630, %v1608, 0
        %v1643 = vsel %vm630, %v1609, 0
        %v1646 = vsel %vm630, %v1610, 0
        %v1649 = vsel %vm630, %v1611, 0
        %v1652 = vsel %vm630, %v1612, 0
        %v1655 = vsel %vm630, %v1613, 0
        %v1658 = vsel %vm630, %v1614, 0
        %v1661 = vsel %vm630, %v1615, 0
        %v1664 = vsel %vm630, %v1616, 0
        %v1667 = vsel %vm630, %v1617, 0
        %v1670 = vsel %vm630, %v1618, 0
        %v1673 = vsel %vm630, %v1619, 0
        %v1676 = vsel %vm630, %v1620, 0
        %v1679 = vsel %vm630, %v1621, 0
        %v1682 = vsel %vm630, %v1622, 0
        %v1685 = vsel %vm630, %v1623, 0
        %1687 = vmatprep.subr.mxu0 0.0
        %1688 = vmatpush1.msra.mxu0 %v628
        %1689 = vmatprep.subr.mxu0 0.0
        %1690 = vmatpush1.msra.mxu0 %v696
        %1691 = vmatprep.subr.mxu0 0.0
        %1692 = vmatpush1.msra.mxu0 0.0
        %1693 = vmatprep.subr.mxu0 0.0
        %1694 = vmatpush1.msra.mxu0 0.0
        %1695 = vmatprep.subr.mxu0 0.0
        %1696 = vmatpush1.msra.mxu0 0.0
        %1697 = vmatprep.subr.mxu0 0.0
        %1698 = vmatpush1.msra.mxu0 0.0
        %1699 = vmatprep.subr.mxu0 0.0
        %1700 = vmatpush1.msra.mxu0 0.0
        %1701 = vmatprep.subr.mxu0 0.0
        %1702 = vmatpush1.msra.mxu0 0.0
        %1703 = vmatprep.subr.mxu0 0.0
        %1704 = vmatpush1.msra.mxu0 0.0
        %1705 = vmatprep.subr.mxu0 0.0
        %1706 = vmatpush1.msra.mxu0 0.0
        %1707 = vmatprep.subr.mxu0 0.0
        %1708 = vmatpush1.msra.mxu0 0.0
        %1709 = vmatprep.subr.mxu0 0.0
        %1710 = vmatpush1.msra.mxu0 0.0
        %1711 = vmatprep.subr.mxu0 0.0
        %1712 = vmatpush1.msra.mxu0 0.0
        %1713 = vmatprep.subr.mxu0 0.0
        %1714 = vmatpush1.msra.mxu0 0.0
        %1715 = vmatprep.subr.mxu0 0.0
        %1716 = vmatpush1.msra.mxu0 0.0
        %1717 = vmatprep.subr.mxu0 0.0
        %1718 = vmatpush1.msra.mxu0 0.0
        %1719 = vmatprep.subr.mxu0 0.0
        %1720 = vmatpush1.msra.mxu0 0.0
        %1721 = vmatprep.subr.mxu0 0.0
        %1722 = vmatpush1.msra.mxu0 0.0
        %1723 = vmatprep.subr.mxu0 0.0
        %1724 = vmatpush1.msra.mxu0 0.0
        %1725 = vmatprep.subr.mxu0 0.0
        %1726 = vmatpush1.msra.mxu0 0.0
        %1727 = vmatprep.subr.mxu0 0.0
        %1728 = vmatpush1.msra.mxu0 0.0
        %1729 = vmatprep.subr.mxu0 0.0
        %1730 = vmatpush1.msra.mxu0 0.0
        %1731 = vmatprep.subr.mxu0 0.0
        %1732 = vmatpush1.msra.mxu0 0.0
        %1733 = vmatprep.subr.mxu0 0.0
        %1734 = vmatpush1.msra.mxu0 0.0
        %1735 = vmatprep.subr.mxu0 0.0
        %1736 = vmatpush1.msra.mxu0 0.0
        %1737 = vmatprep.subr.mxu0 0.0
        %1738 = vmatpush1.msra.mxu0 0.0
        %1739 = vmatprep.subr.mxu0 0.0
        %1740 = vmatpush1.msra.mxu0 0.0
        %1741 = vmatprep.subr.mxu0 0.0
        %1742 = vmatpush1.msra.mxu0 0.0
        %1743 = vmatprep.subr.mxu0 0.0
        %1744 = vmatpush1.msra.mxu0 0.0
        %1745 = vmatprep.subr.mxu0 0.0
        %1746 = vmatpush1.msra.mxu0 0.0
        %1747 = vmatprep.subr.mxu0 0.0
        %1748 = vmatpush1.msra.mxu0 0.0
        %1749 = vmatprep.subr.mxu0 0.0
        %1750 = vmatpush1.msra.mxu0 0.0
        %1751 = vmatprep.mubr.f32.mxu0 0.0
        %1752 = vmatmul.mubr.f32.gmra.mrb[0].mxu0 %v1625
        %v1753 = vpop.f32.mrb[0].mxu0
        %v1754 = vadd.f32 0.0, %v1753
        %v1755 = vpop.f32.mrb[0].mxu0
        %1756 = vmatprep.mubr.f32.mxu0 0.0
        %1757 = vmatmul.mubr.f32.gmra.mrb[0].mxu0 %v1628
        %v1758 = vpop.f32.mrb[0].mxu0
        %v1759 = vadd.f32 0.0, %v1758
        %v1760 = vpop.f32.mrb[0].mxu0
        %1761 = vmatprep.mubr.f32.mxu0 0.0
        %1762 = vmatmul.mubr.f32.gmra.mrb[0].mxu0 %v1631
        %v1763 = vpop.f32.mrb[0].mxu0
        %v1764 = vadd.f32 0.0, %v1763
        %v1765 = vpop.f32.mrb[0].mxu0
        %1766 = vmatprep.mubr.f32.mxu0 0.0
        %1767 = vmatmul.mubr.f32.gmra.mrb[0].mxu0 %v1634
        %v1768 = vpop.f32.mrb[0].mxu0
        %v1769 = vadd.f32 0.0, %v1768
        %v1770 = vpop.f32.mrb[0].mxu0
        %1771 = vmatprep.mubr.f32.mxu0 0.0
        %1772 = vmatmul.mubr.f32.gmra.mrb[0].mxu0 %v1637
        %v1773 = vpop.f32.mrb[0].mxu0
        %v1774 = vadd.f32 0.0, %v1773
        %v1775 = vpop.f32.mrb[0].mxu0
        %1776 = vmatprep.mubr.f32.mxu0 0.0
        %1777 = vmatmul.mubr.f32.gmra.mrb[0].mxu0 %v1640
        %v1778 = vpop.f32.mrb[0].mxu0
        %v1779 = vadd.f32 0.0, %v1778
        %v1780 = vpop.f32.mrb[0].mxu0
        %1781 = vmatprep.mubr.f32.mxu0 0.0
        %1782 = vmatmul.mubr.f32.gmra.mrb[0].mxu0 %v1643
        %v1783 = vpop.f32.mrb[0].mxu0
        %v1784 = vadd.f32 0.0, %v1783
        %v1785 = vpop.f32.mrb[0].mxu0
        %1786 = vmatprep.mubr.f32.mxu0 0.0
        %1787 = vmatmul.mubr.f32.gmra.mrb[0].mxu0 %v1646
        %v1788 = vpop.f32.mrb[0].mxu0
        %v1789 = vadd.f32 0.0, %v1788
        %v1790 = vpop.f32.mrb[0].mxu0
        %1791 = vmatprep.mubr.f32.mxu0 0.0
        %1792 = vmatmul.mubr.f32.gmra.mrb[0].mxu0 %v1649
        %v1793 = vpop.f32.mrb[0].mxu0
        %v1794 = vadd.f32 0.0, %v1793
        %v1795 = vpop.f32.mrb[0].mxu0
        %1796 = vmatprep.mubr.f32.mxu0 0.0
        %1797 = vmatmul.mubr.f32.gmra.mrb[0].mxu0 %v1652
        %v1798 = vpop.f32.mrb[0].mxu0
        %v1799 = vadd.f32 0.0, %v1798
        %v1800 = vpop.f32.mrb[0].mxu0
        %1801 = vmatprep.mubr.f32.mxu0 0.0
        %1802 = vmatmul.mubr.f32.gmra.mrb[0].mxu0 %v1655
        %v1803 = vpop.f32.mrb[0].mxu0
        %v1804 = vadd.f32 0.0, %v1803
        %v1805 = vpop.f32.mrb[0].mxu0
        %1806 = vmatprep.mubr.f32.mxu0 0.0
        %1807 = vmatmul.mubr.f32.gmra.mrb[0].mxu0 %v1658
        %v1808 = vpop.f32.mrb[0].mxu0
        %v1809 = vadd.f32 0.0, %v1808
        %v1810 = vpop.f32.mrb[0].mxu0
        %1811 = vmatprep.mubr.f32.mxu0 0.0
        %1812 = vmatmul.mubr.f32.gmra.mrb[0].mxu0 %v1661
        %v1813 = vpop.f32.mrb[0].mxu0
        %v1814 = vadd.f32 0.0, %v1813
        %v1815 = vpop.f32.mrb[0].mxu0
        %1816 = vmatprep.mubr.f32.mxu0 0.0
        %1817 = vmatmul.mubr.f32.gmra.mrb[0].mxu0 %v1664
        %v1818 = vpop.f32.mrb[0].mxu0
        %v1819 = vadd.f32 0.0, %v1818
        %v1820 = vpop.f32.mrb[0].mxu0
        %1821 = vmatprep.mubr.f32.mxu0 0.0
        %1822 = vmatmul.mubr.f32.gmra.mrb[0].mxu0 %v1667
        %v1823 = vpop.f32.mrb[0].mxu0
        %v1824 = vadd.f32 0.0, %v1823
        %v1825 = vpop.f32.mrb[0].mxu0
        %1826 = vmatprep.mubr.f32.mxu0 0.0
        %1827 = vmatmul.mubr.f32.gmra.mrb[0].mxu0 %v1670
        %v1828 = vpop.f32.mrb[0].mxu0
        %v1829 = vadd.f32 0.0, %v1828
        %v1830 = vpop.f32.mrb[0].mxu0
        %1831 = vmatprep.mubr.f32.mxu0 0.0
        %1832 = vmatmul.mubr.f32.gmra.mrb[0].mxu0 %v1673
        %v1833 = vpop.f32.mrb[0].mxu0
        %v1834 = vadd.f32 0.0, %v1833
        %v1835 = vpop.f32.mrb[0].mxu0
        %1836 = vmatprep.mubr.f32.mxu0 0.0
        %1837 = vmatmul.mubr.f32.gmra.mrb[0].mxu0 %v1676
        %v1838 = vpop.f32.mrb[0].mxu0
        %v1839 = vadd.f32 0.0, %v1838
        %v1840 = vpop.f32.mrb[0].mxu0
        %1841 = vmatprep.mubr.f32.mxu0 0.0
        %1842 = vmatmul.mubr.f32.gmra.mrb[0].mxu0 %v1679
        %v1843 = vpop.f32.mrb[0].mxu0
        %v1844 = vadd.f32 0.0, %v1843
        %v1845 = vpop.f32.mrb[0].mxu0
        %1846 = vmatprep.mubr.f32.mxu0 0.0
        %1847 = vmatmul.mubr.f32.gmra.mrb[0].mxu0 %v1682
        %v1848 = vpop.f32.mrb[0].mxu0
        %v1849 = vadd.f32 0.0, %v1848
        %v1850 = vpop.f32.mrb[0].mxu0
        %1851 = vmatprep.mubr.f32.mxu0 0.0
        %1852 = vmatmul.mubr.f32.gmra.mrb[0].mxu0 %v1685
        %v1853 = vpop.f32.mrb[0].mxu0
        %v1854 = vadd.f32 0.0, %v1853
        %v1855 = vpop.f32.mrb[0].mxu0
        %1856 = vdwg.mxu0
        %v1857 = vmul.f32 %v1754, %v873
        %v1858 = vmul.f32 %v1759, %v873
        %v1859 = vmul.f32 %v1764, %v873
        %v1860 = vmul.f32 %v1769, %v873
        %v1861 = vmul.f32 %v1774, %v873
        %v1862 = vmul.f32 %v1779, %v873
        %v1863 = vmul.f32 %v1784, %v873
        %v1864 = vmul.f32 %v1789, %v873
        %v1865 = vmul.f32 %v1794, %v873
        %v1866 = vmul.f32 %v1799, %v873
        %v1867 = vmul.f32 %v1804, %v873
        %v1868 = vmul.f32 %v1809, %v873
        %v1869 = vmul.f32 %v1814, %v873
        %v1870 = vmul.f32 %v1819, %v873
        %v1871 = vmul.f32 %v1824, %v873
        %v1872 = vmul.f32 %v1829, %v873
        %v1873 = vmul.f32 %v1834, %v873
        %v1874 = vmul.f32 %v1839, %v873
        %v1875 = vmul.f32 %v1844, %v873
        %v1876 = vmul.f32 %v1849, %v873
        %v1877 = vmul.f32 %v1854, %v873
        %v1878 = vadd.f32 %v1857, %v901
        %v1879 = vadd.f32 %v1858, %v901
        %v1880 = vadd.f32 %v1859, %v901
        %v1881 = vadd.f32 %v1860, %v901
        %v1882 = vadd.f32 %v1861, %v901
        %v1883 = vadd.f32 %v1862, %v901
        %v1884 = vadd.f32 %v1863, %v901
        %v1885 = vadd.f32 %v1864, %v901
        %v1886 = vadd.f32 %v1865, %v901
        %v1887 = vadd.f32 %v1866, %v901
        %v1888 = vadd.f32 %v1867, %v901
        %v1889 = vadd.f32 %v1868, %v901
        %v1890 = vadd.f32 %v1869, %v901
        %v1891 = vadd.f32 %v1870, %v901
        %v1892 = vadd.f32 %v1871, %v901
        %v1893 = vadd.f32 %v1872, %v901
        %v1894 = vadd.f32 %v1873, %v901
        %v1895 = vadd.f32 %v1874, %v901
        %v1896 = vadd.f32 %v1875, %v901
        %v1897 = vadd.f32 %v1876, %v901
        %v1898 = vadd.f32 %v1877, %v901
        %v1899 = vmax.f32 %v1878, 0.0
        %v1900 = vmax.f32 %v1879, 0.0
        %v1901 = vmax.f32 %v1880, 0.0
        %v1902 = vmax.f32 %v1881, 0.0
        %v1903 = vmax.f32 %v1882, 0.0
        %v1904 = vmax.f32 %v1883, 0.0
        %v1905 = vmax.f32 %v1884, 0.0
        %v1906 = vmax.f32 %v1885, 0.0
        %v1907 = vmax.f32 %v1886, 0.0
        %v1908 = vmax.f32 %v1887, 0.0
        %v1909 = vmax.f32 %v1888, 0.0
        %v1910 = vmax.f32 %v1889, 0.0
        %v1911 = vmax.f32 %v1890, 0.0
        %v1912 = vmax.f32 %v1891, 0.0
        %v1913 = vmax.f32 %v1892, 0.0
        %v1914 = vmax.f32 %v1893, 0.0
        %v1915 = vmax.f32 %v1894, 0.0
        %v1916 = vmax.f32 %v1895, 0.0
        %v1917 = vmax.f32 %v1896, 0.0
        %v1918 = vmax.f32 %v1897, 0.0
        %v1919 = vmax.f32 %v1898, 0.0
        %v1920 = vmax.f32 %v1581, %v1899
        %v1921 = vmax.f32 %v1582, %v1900
        %v1922 = vmax.f32 %v1583, %v1901
        %v1923 = vmax.f32 %v1584, %v1902
        %v1924 = vmax.f32 %v1585, %v1903
        %v1925 = vmax.f32 %v1586, %v1904
        %v1926 = vmax.f32 %v1587, %v1905
        %v1927 = vmax.f32 %v1588, %v1906
        %v1928 = vmax.f32 %v1589, %v1907
        %v1929 = vmax.f32 %v1590, %v1908
        %v1930 = vmax.f32 %v1591, %v1909
        %v1931 = vmax.f32 %v1592, %v1910
        %v1932 = vmax.f32 %v1593, %v1911
        %v1933 = vmax.f32 %v1594, %v1912
        %v1934 = vmax.f32 %v1595, %v1913
        %v1935 = vmax.f32 %v1596, %v1914
        %v1936 = vmax.f32 %v1597, %v1915
        %v1937 = vmax.f32 %v1598, %v1916
        %v1938 = vmax.f32 %v1599, %v1917
        %v1939 = vmax.f32 %v1600, %v1918
        %v1940 = vmax.f32 %v1601, %v1919
        %v1941 = vmax.f32 %v1263, %v1920
        %v1942 = vmax.f32 %v1264, %v1921
        %v1943 = vmax.f32 %v1265, %v1922
        %v1944 = vmax.f32 %v1266, %v1923
        %v1945 = vmax.f32 %v1267, %v1924
        %v1946 = vmax.f32 %v1268, %v1925
        %v1947 = vmax.f32 %v1269, %v1926
        %v1948 = vmax.f32 %v1270, %v1927
        %v1949 = vmax.f32 %v1271, %v1928
        %v1950 = vmax.f32 %v1272, %v1929
        %v1951 = vmax.f32 %v1273, %v1930
        %v1952 = vmax.f32 %v1274, %v1931
        %v1953 = vmax.f32 %v1275, %v1932
        %v1954 = vmax.f32 %v1276, %v1933
        %v1955 = vmax.f32 %v1277, %v1934
        %v1956 = vmax.f32 %v1278, %v1935
        %v1957 = vmax.f32 %v1279, %v1936
        %v1958 = vmax.f32 %v1280, %v1937
        %v1959 = vmax.f32 %v1281, %v1938
        %v1960 = vmax.f32 %v1282, %v1939
        %v1961 = vmax.f32 %v1283, %v1940
        %vm1962 = vcmask 261120
        %1963 = vst.msk [vmem:[%s605] sm:$0xff] %vm1962, %v1941
        %1964 = vst.msk [vmem:[%s605 + $0x8] sm:$0xff] %vm1962, %v1942
        %1965 = vst.msk [vmem:[%s605 + $0x10] sm:$0xff] %vm1962, %v1943
        %1966 = vst.msk [vmem:[%s605 + $0x18] sm:$0xff] %vm1962, %v1944
        %1967 = vst.msk [vmem:[%s605 + $0x20] sm:$0xff] %vm1962, %v1945
        %1968 = vst.msk [vmem:[%s605 + $0x28] sm:$0xff] %vm1962, %v1946
        %1969 = vst.msk [vmem:[%s605 + $0x30] sm:$0xff] %vm1962, %v1947
        %1970 = vst.msk [vmem:[%s605 + $0x38] sm:$0xff] %vm1962, %v1948
        %1971 = vst.msk [vmem:[%s605 + $0x40] sm:$0xff] %vm1962, %v1949
        %1972 = vst.msk [vmem:[%s605 + $0x48] sm:$0xff] %vm1962, %v1950
        %1973 = vst.msk [vmem:[%s605 + $0x50] sm:$0xff] %vm1962, %v1951
        %1974 = vst.msk [vmem:[%s605 + $0x58] sm:$0xff] %vm1962, %v1952
        %1975 = vst.msk [vmem:[%s605 + $0x60] sm:$0xff] %vm1962, %v1953
        %1976 = vst.msk [vmem:[%s605 + $0x68] sm:$0xff] %vm1962, %v1954
        %1977 = vst.msk [vmem:[%s605 + $0x70] sm:$0xff] %vm1962, %v1955
        %1978 = vst.msk [vmem:[%s605 + $0x78] sm:$0xff] %vm1962, %v1956
        %1979 = vst.msk [vmem:[%s605 + $0x80] sm:$0xff] %vm1962, %v1957
        %1980 = vst.msk [vmem:[%s605 + $0x88] sm:$0xff] %vm1962, %v1958
        %1981 = vst.msk [vmem:[%s605 + $0x90] sm:$0xff] %vm1962, %v1959
        %1982 = vst.msk [vmem:[%s605 + $0x98] sm:$0xff] %vm1962, %v1960
        %1983 = vst.msk [vmem:[%s605 + $0xa0] sm:$0xff] %vm1962, %v1961
        %s1984 = smul.u32 21, %s17
        %p1985 = scmp.lt.s32.totalorder %s1984, 41
        %s1986 = scalar_select %p1985, %s1984, 41
        %s1987 = smul.addr %s1986, 8
        %s1988 = scalar_lea.vmem %s4, %s1987
        // Predicated region
        $region87: #{cnn1_forward.2} parent=69 // pred_check
          %p1989 = pneg %p124
        $region88: #{cnn1_forward.2} parent=69 // pred_check_branch
          %1991 = sbr.rel (%p1989) target = $region90
        $region89: #{cnn1_forward.2} parent=69 // pred_region
          %s1992 = smul.u32 21, %s17
        $region90: #{cnn1_forward.2} parent=69 // pred_fallthru
          _
      $region70: #{cnn1_forward.2} parent=5 // pred_fallthru
        _
      %p1993 = scmp.le.s32.totalorder 2, %s12
      // Predicated region
      $region91: #{cnn1_forward.2} parent=5 // pred_check
        %p1994 = pneg %p1993
      $region92: #{cnn1_forward.2} parent=5 // pred_check_branch
        %1996 = sbr.rel (%p1994) target = $region94
      $region93: #{cnn1_forward.2} parent=5 // pred_region
        %s1997 = ssub.s32 %s12, 2
        // Predicated region
        $region95: #{cnn1_forward.2} parent=93 // pred_check
          %p1998 = pneg %p130
        $region96: #{cnn1_forward.2} parent=93 // pred_check_branch
          %2000 = sbr.rel (%p1998) target = $region98
        $region97: #{cnn1_forward.2} parent=93 // pred_region
          %s2001 = smul.u32 21, %s18
          %p2002 = scmp.lt.s32.totalorder %s2001, 41
          %s2003 = scalar_select %p2002, %s2001, 41
          %s2004 = smul.addr %s2003, 8
          %s2005 = scalar_lea.vmem %s4, %s2004
        $region98: #{cnn1_forward.2} parent=93 // pred_fallthru
          _
      $region94: #{cnn1_forward.2} parent=5 // pred_fallthru
        _
    $region6: #{cnn1_forward.2} parent=1 // loop_footer
      %s16 = sadd.s32 1, %s12
    $region7: #{cnn1_forward.2} parent=1 // loop_footer_branch
      %11 = sbr.rel target = $region3
    $region8: #{cnn1_forward.2} parent=1 // loop_exit
      _
    %2006 = vsyncpa [#allocation4], 1
    %s2007 = scalar_lea.sflag [#allocation4], 1
    %2008 = vsyncpa %s2007, 1
    %2009 = vsyncpa [#allocation6], 1

// kernel: cnn1_forward.3
$region0: #{cnn1_forward.3}
  #allocation0 [shape = 'u32[]', space=smem, size = 0x4, offset = 0x4, fixed_abs, tag = 'smem constant byte address 0x4 - core index']
  #allocation1 [shape = 'u32[144,128]{1,0:T(1,128)}', space=vmem, size = 0x12000, scoped, tag = 'internal scratch']
  #allocation2 [shape = 'f32[2,640]{1,0:T(2,128)}', space=vmem, size = 0x1400, scoped, tag = 'scratch operand']
  %s0 = inlined_call_operand.vmem [shape: bf16[2,5376], index: 0, kind: input, shape index: {}]
  %s1 = inlined_call_operand.hbm [shape: bf16[5376,640], index: 1, kind: input, shape index: {}]
  %s2 = inlined_call_operand.hbm [shape: f32[1,640], index: 2, kind: input, shape index: {}]
  %s3 = inlined_call_operand.vmem [shape: f32[640,120], index: 3, kind: input, shape index: {}]
  %s4 = inlined_call_operand.hbm [shape: f32[1,120], index: 4, kind: input, shape index: {}]
  %s5 = inlined_call_operand.vmem [shape: f32[120,10], index: 5, kind: input, shape index: {}]
  %s6 = inlined_call_operand.hbm [shape: f32[1,10], index: 6, kind: input, shape index: {}]
  %s7 = inlined_call_operand.hbm [shape: f32[2,10], index: 7, kind: output, shape index: {}]
  %s8 = sld [smem:[#allocation0]]
  $region85: #{cnn1_forward.3} parent=0
    _
  %s10 = ssub.s32 1, %s8
  %s11 = scalar_select 0, %s10, %s8
  $region1: #{cnn1_forward.3} parent=0
    #allocation3 [shape = 'u8[6881280]{0}', space=vmem, size = 0x690000, scoped, tag = 'input window, operand 1']
    #allocation4 [shape = 's32[2]{0}', space=sflag, size = 0x8, scoped, tag = 'scoped memory for cnn1_forward.3']
    #allocation5 [shape = 's32[2]{0}', space=sflag, size = 0x8, scoped, tag = 'scoped memory for cnn1_forward.3']
    #allocation6 [shape = 'u8[2560]{0}', space=vmem, size = 0xc00, scoped, tag = 'input window, operand 2, single buffered']
    #allocation7 [shape = 's32[1]{0}', space=sflag, size = 0x4, scoped, tag = 'scoped memory for cnn1_forward.3']
    #allocation8 [shape = 'u8[512]{0}', space=vmem, size = 0x400, scoped, tag = 'input window, operand 4, single buffered']
    #allocation9 [shape = 'u8[512]{0}', space=vmem, size = 0x400, scoped, tag = 'input window, operand 6, single buffered']
    #allocation10 [shape = 's32[1]{0}', space=sflag, size = 0x4, scoped, tag = 'scoped memory for cnn1_forward.3']
    #allocation11 [shape = 'u8[1024]{0}', space=vmem, size = 0x400, scoped, tag = 'output window, operand 0, single buffered']
    %12 = vsyncpa [#allocation4], 0
    %s13 = scalar_lea.sflag [#allocation4], 1
    %14 = vsyncpa %s13, 0
    %15 = vsyncpa [#allocation7], 0
    %16 = vsyncpa [#allocation10], 0
    %17 = vsyncpa [#allocation5], 0
    loop: start=0, step=1, limit=4
    $region2: #{cnn1_forward.3} parent=1 // loop_pre_header
      _
    $region3: #{cnn1_forward.3} parent=1 // loop_header
      %s19 = sphi 0, %s23
      %p20 = scmp.ge.s32.totalorder %s19, 4
      %s29 = sphi 0, %s31
      %s32 = sphi 0, %s29
      %s33 = sphi 0, %s32
      %s49 = sphi 0, %s33
      %s55 = sphi 0, %s57
      %s58 = sphi 0, %s55
      %s59 = sphi 0, %s58
      %s75 = sphi 0, %s59
      %s79 = sphi 0, %s79
      %s81 = sphi 0, %s79
      %s82 = sphi 0, %s81
      %s96 = sphi 0, %s82
      %s100 = sphi 0, %s100
      %s102 = sphi 0, %s100
      %s103 = sphi 0, %s102
      %s117 = sphi 0, %s103
      %s121 = sphi 0, %s121
      %s123 = sphi 0, %s121
      %s124 = sphi 0, %s123
      %s138 = sphi 0, %s124
      %s142 = sphi 0, %s142
      %s144 = sphi 0, %s142
      %s145 = sphi 0, %s144
      %s159 = sphi 0, %s145
      %s163 = sphi 0, %s163
      %s165 = sphi 0, %s163
      %s166 = sphi 0, %s165
      %s180 = sphi 0, %s166
      %s184 = sphi 0, %s184
      %s186 = sphi 0, %s184
      %s187 = sphi 0, %s186
      %s201 = sphi 0, %s187
    $region4: #{cnn1_forward.3} parent=1 // loop_header_branch
      %22 = sbr.rel (%p20) target = $region8
    $region5: #{cnn1_forward.3} parent=1 // loop_body
      %s24 = ssub.s32 %s19, 1
      %s25 = ssub.s32 %s19, 2
      %s26 = sadd.s32 %s19, 1
      %s27 = ssub.s32 %s19, %s26
      %p28 = scmp.eq.s32.totalorder %s27, 0
      %s30 = sadd.s32 %s29, 1
      %s31 = scalar_select %p28, %s29, %s30
      %p34 = pneg %p28
      %p35 = scmp.eq.s32.totalorder %s19, 1
      %p36 = por %p34, %p35
      %p37 = scmp.ne.s32.totalorder %s29, %s32
      %p38 = scmp.eq.s32.totalorder %s19, 0
      %p39 = por %p37, %p38
      %p40 = scmp.ne.s32.totalorder %s29, %s32
      %p41 = scmp.eq.s32.totalorder %s24, 1
      %p42 = por %p40, %p41
      %p43 = scmp.ne.s32.totalorder %s32, %s33
      %p44 = scmp.eq.s32.totalorder %s24, 0
      %p45 = por %p43, %p44
      %p46 = scmp.ne.s32.totalorder %s32, %s33
      %p47 = scmp.eq.s32.totalorder %s25, 1
      %p48 = por %p46, %p47
      %p50 = scmp.ne.s32.totalorder %s33, %s49
      %p51 = scmp.eq.s32.totalorder %s25, 0
      %p52 = por %p50, %p51
      %s53 = ssub.s32 %s19, %s26
      %p54 = scmp.eq.s32.totalorder %s53, 0
      %s56 = sadd.s32 %s55, 1
      %s57 = scalar_select %p54, %s55, %s56
      %p60 = pneg %p54
      %p61 = scmp.eq.s32.totalorder %s19, 1
      %p62 = por %p60, %p61
      %p63 = scmp.ne.s32.totalorder %s55, %s58
      %p64 = scmp.eq.s32.totalorder %s19, 0
      %p65 = por %p63, %p64
      %p66 = scmp.ne.s32.totalorder %s55, %s58
      %p67 = scmp.eq.s32.totalorder %s24, 1
      %p68 = por %p66, %p67
      %p69 = scmp.ne.s32.totalorder %s58, %s59
      %p70 = scmp.eq.s32.totalorder %s24, 0
      %p71 = por %p69, %p70
      %p72 = scmp.ne.s32.totalorder %s58, %s59
      %p73 = scmp.eq.s32.totalorder %s25, 1
      %p74 = por %p72, %p73
      %p76 = scmp.ne.s32.totalorder %s59, %s75
      %p77 = scmp.eq.s32.totalorder %s25, 0
      %p78 = por %p76, %p77
      %s80 = sadd.s32 %s79, 1
      %p83 = scmp.eq.s32.totalorder %s19, 1
      %p84 = scmp.ne.s32.totalorder %s79, %s81
      %p85 = scmp.eq.s32.totalorder %s19, 0
      %p86 = por %p84, %p85
      %p87 = scmp.ne.s32.totalorder %s79, %s81
      %p88 = scmp.eq.s32.totalorder %s24, 1
      %p89 = por %p87, %p88
      %p90 = scmp.ne.s32.totalorder %s81, %s82
      %p91 = scmp.eq.s32.totalorder %s24, 0
      %p92 = por %p90, %p91
      %p93 = scmp.ne.s32.totalorder %s81, %s82
      %p94 = scmp.eq.s32.totalorder %s25, 1
      %p95 = por %p93, %p94
      %p97 = scmp.ne.s32.totalorder %s82, %s96
      %p98 = scmp.eq.s32.totalorder %s25, 0
      %p99 = por %p97, %p98
      %s101 = sadd.s32 %s100, 1
      %p104 = scmp.eq.s32.totalorder %s19, 1
      %p105 = scmp.ne.s32.totalorder %s100, %s102
      %p106 = scmp.eq.s32.totalorder %s19, 0
      %p107 = por %p105, %p106
      %p108 = scmp.ne.s32.totalorder %s100, %s102
      %p109 = scmp.eq.s32.totalorder %s24, 1
      %p110 = por %p108, %p109
      %p111 = scmp.ne.s32.totalorder %s102, %s103
      %p112 = scmp.eq.s32.totalorder %s24, 0
      %p113 = por %p111, %p112
      %p114 = scmp.ne.s32.totalorder %s102, %s103
      %p115 = scmp.eq.s32.totalorder %s25, 1
      %p116 = por %p114, %p115
      %p118 = scmp.ne.s32.totalorder %s103, %s117
      %p119 = scmp.eq.s32.totalorder %s25, 0
      %p120 = por %p118, %p119
      %s122 = sadd.s32 %s121, 1
      %p125 = scmp.eq.s32.totalorder %s19, 1
      %p126 = scmp.ne.s32.totalorder %s121, %s123
      %p127 = scmp.eq.s32.totalorder %s19, 0
      %p128 = por %p126, %p127
      %p129 = scmp.ne.s32.totalorder %s121, %s123
      %p130 = scmp.eq.s32.totalorder %s24, 1
      %p131 = por %p129, %p130
      %p132 = scmp.ne.s32.totalorder %s123, %s124
      %p133 = scmp.eq.s32.totalorder %s24, 0
      %p134 = por %p132, %p133
      %p135 = scmp.ne.s32.totalorder %s123, %s124
      %p136 = scmp.eq.s32.totalorder %s25, 1
      %p137 = por %p135, %p136
      %p139 = scmp.ne.s32.totalorder %s124, %s138
      %p140 = scmp.eq.s32.totalorder %s25, 0
      %p141 = por %p139, %p140
      %s143 = sadd.s32 %s142, 1
      %p146 = scmp.eq.s32.totalorder %s19, 1
      %p147 = scmp.ne.s32.totalorder %s142, %s144
      %p148 = scmp.eq.s32.totalorder %s19, 0
      %p149 = por %p147, %p148
      %p150 = scmp.ne.s32.totalorder %s142, %s144
      %p151 = scmp.eq.s32.totalorder %s24, 1
      %p152 = por %p150, %p151
      %p153 = scmp.ne.s32.totalorder %s144, %s145
      %p154 = scmp.eq.s32.totalorder %s24, 0
      %p155 = por %p153, %p154
      %p156 = scmp.ne.s32.totalorder %s144, %s145
      %p157 = scmp.eq.s32.totalorder %s25, 1
      %p158 = por %p156, %p157
      %p160 = scmp.ne.s32.totalorder %s145, %s159
      %p161 = scmp.eq.s32.totalorder %s25, 0
      %p162 = por %p160, %p161
      %s164 = sadd.s32 %s163, 1
      %p167 = scmp.eq.s32.totalorder %s19, 1
      %p168 = scmp.ne.s32.totalorder %s163, %s165
      %p169 = scmp.eq.s32.totalorder %s19, 0
      %p170 = por %p168, %p169
      %p171 = scmp.ne.s32.totalorder %s163, %s165
      %p172 = scmp.eq.s32.totalorder %s24, 1
      %p173 = por %p171, %p172
      %p174 = scmp.ne.s32.totalorder %s165, %s166
      %p175 = scmp.eq.s32.totalorder %s24, 0
      %p176 = por %p174, %p175
      %p177 = scmp.ne.s32.totalorder %s165, %s166
      %p178 = scmp.eq.s32.totalorder %s25, 1
      %p179 = por %p177, %p178
      %p181 = scmp.ne.s32.totalorder %s166, %s180
      %p182 = scmp.eq.s32.totalorder %s25, 0
      %p183 = por %p181, %p182
      %s185 = sadd.s32 %s184, 1
      %p188 = scmp.eq.s32.totalorder %s19, 1
      %p189 = scmp.ne.s32.totalorder %s184, %s186
      %p190 = scmp.eq.s32.totalorder %s19, 0
      %p191 = por %p189, %p190
      %p192 = scmp.ne.s32.totalorder %s184, %s186
      %p193 = scmp.eq.s32.totalorder %s24, 1
      %p194 = por %p192, %p193
      %p195 = scmp.ne.s32.totalorder %s186, %s187
      %p196 = scmp.eq.s32.totalorder %s24, 0
      %p197 = por %p195, %p196
      %p198 = scmp.ne.s32.totalorder %s186, %s187
      %p199 = scmp.eq.s32.totalorder %s25, 1
      %p200 = por %p198, %p199
      %p202 = scmp.ne.s32.totalorder %s187, %s201
      %p203 = scmp.eq.s32.totalorder %s25, 0
      %p204 = por %p202, %p203
      %p205 = scmp.le.s32.totalorder 1, %s19
      %p206 = scmp.lt.s32.totalorder %s19, 3
      %p207 = pnand %p205, %p206
      %p208 = pneg %p207
      // Predicated region
      $region9: #{cnn1_forward.3} parent=5 // pred_check
        _
      $region10: #{cnn1_forward.3} parent=5 // pred_check_branch
        %210 = sbr.rel (%p207) target = $region12
      $region11: #{cnn1_forward.3} parent=5 // pred_region
        %s211 = ssub.s32 %s19, 1
        // Predicated region
        $region13: #{cnn1_forward.3} parent=11 // pred_check
          %p212 = pneg %p92
        $region14: #{cnn1_forward.3} parent=11 // pred_check_branch
          %214 = sbr.rel (%p212) target = $region16
        $region15: #{cnn1_forward.3} parent=11 // pred_region
          %s216 = ssub.s32 80, 80
          %217 = vsyncadd [#allocation7], %s216
          %s219 = sshll.u32 [#allocation6], 4
          %s220 = int_to_ptr.vmem [resolvable:$true] %s219
          %222 = dma.hbm_to_vmem [thread:$0]  %s2, 80, %s220, [#allocation7]
        $region16: #{cnn1_forward.3} parent=11 // pred_fallthru
          _
        // Predicated region
        $region17: #{cnn1_forward.3} parent=11 // pred_check
          %p223 = pneg %p113
        $region18: #{cnn1_forward.3} parent=11 // pred_check_branch
          %225 = sbr.rel (%p223) target = $region20
        $region19: #{cnn1_forward.3} parent=11 // pred_region
          _
        $region20: #{cnn1_forward.3} parent=11 // pred_fallthru
          _
        // Predicated region
        $region21: #{cnn1_forward.3} parent=11 // pred_check
          %p226 = pneg %p134
        $region22: #{cnn1_forward.3} parent=11 // pred_check_branch
          %228 = sbr.rel (%p226) target = $region24
        $region23: #{cnn1_forward.3} parent=11 // pred_region
          %s230 = ssub.s32 16, 16
          %231 = vsyncadd [#allocation7], %s230
          %s233 = sshll.u32 [#allocation8], 4
          %s234 = int_to_ptr.vmem [resolvable:$true] %s233
          %236 = dma.hbm_to_vmem [thread:$0]  %s4, 16, %s234, [#allocation7]
        $region24: #{cnn1_forward.3} parent=11 // pred_fallthru
          _
        // Predicated region
        $region25: #{cnn1_forward.3} parent=11 // pred_check
          %p237 = pneg %p155
        $region26: #{cnn1_forward.3} parent=11 // pred_check_branch
          %239 = sbr.rel (%p237) target = $region28
        $region27: #{cnn1_forward.3} parent=11 // pred_region
          _
        $region28: #{cnn1_forward.3} parent=11 // pred_fallthru
          _
        // Predicated region
        $region29: #{cnn1_forward.3} parent=11 // pred_check
          %p240 = pneg %p176
        $region30: #{cnn1_forward.3} parent=11 // pred_check_branch
          %242 = sbr.rel (%p240) target = $region32
        $region31: #{cnn1_forward.3} parent=11 // pred_region
          %s244 = ssub.s32 16, 16
          %245 = vsyncadd [#allocation10], %s244
          %s247 = sshll.u32 [#allocation9], 4
          %s248 = int_to_ptr.vmem [resolvable:$true] %s247
          %250 = dma.hbm_to_vmem [thread:$0]  %s6, 16, %s248, [#allocation10]
        $region32: #{cnn1_forward.3} parent=11 // pred_fallthru
          _
      $region12: #{cnn1_forward.3} parent=5 // pred_fallthru
        _
      %p251 = scmp.lt.s32.totalorder %s19, 2
      // Predicated region
      $region33: #{cnn1_forward.3} parent=5 // pred_check
        %p252 = pneg %p251
      $region34: #{cnn1_forward.3} parent=5 // pred_check_branch
        %254 = sbr.rel (%p252) target = $region36
      $region35: #{cnn1_forward.3} parent=5 // pred_region
        // Predicated region
        $region37: #{cnn1_forward.3} parent=35 // pred_check
          %p255 = pneg %p39
        $region38: #{cnn1_forward.3} parent=35 // pred_check_branch
          %257 = sbr.rel (%p255) target = $region40
        $region39: #{cnn1_forward.3} parent=35 // pred_region
          %s258 = smul.u32 21, %s19
          %p259 = scmp.lt.s32.totalorder %s258, 41
          %s260 = scalar_select %p259, %s258, 41
          %s261 = scalar_lea.vmem %s0, %s260
          %s262 = smul.u32 21, %s19
        $region40: #{cnn1_forward.3} parent=35 // pred_fallthru
          _
        // Predicated region
        $region41: #{cnn1_forward.3} parent=35 // pred_check
          %p263 = pneg %p65
        $region42: #{cnn1_forward.3} parent=35 // pred_check_branch
          %265 = sbr.rel (%p263) target = $region44
        $region43: #{cnn1_forward.3} parent=35 // pred_region
          %s266 = sand.u32 %s55, 1
          %s267 = scalar_lea.sflag [#allocation4], %s266
          %s268 = sand.u32 %s55, 1
          %s269 = smul.addr %s268, 6720
          %s270 = scalar_lea.vmem [#allocation3], %s269
          %s271 = smul.u32 336, %s19
          %s273 = ssub.s32 107520, 107520
          %274 = vsyncadd %s267, %s273
          %s275 = smul.addr %s271, 5
          %s276 = smul.addr %s275, 64
          %s277 = scalar_lea.hbm %s1, %s276
          %s278 = sshll.u32 %s270, 4
          %s279 = int_to_ptr.vmem [resolvable:$true] %s278
          %284 = dma.hbm_to_vmem [thread:$0]  %s277, 107520, %s279, %s267, 320, 320, 20
        $region44: #{cnn1_forward.3} parent=35 // pred_fallthru
          _
      $region36: #{cnn1_forward.3} parent=5 // pred_fallthru
        _
      %p285 = scmp.le.s32.totalorder 1, %s19
      %p286 = scmp.lt.s32.totalorder %s19, 3
      %p287 = pnand %p285, %p286
      %p288 = pneg %p287
      // Predicated region
      $region45: #{cnn1_forward.3} parent=5 // pred_check
        _
      $region46: #{cnn1_forward.3} parent=5 // pred_check_branch
        %290 = sbr.rel (%p287) target = $region48
      $region47: #{cnn1_forward.3} parent=5 // pred_region
        %s291 = ssub.s32 %s19, 1
        %s292 = sand.u32 %s58, 1
        %s293 = scalar_lea.sflag [#allocation4], %s292
        %s294 = sand.u32 %s58, 1
        %s295 = smul.addr %s294, 6720
        %s296 = scalar_lea.vmem [#allocation3], %s295
        // Predicated region
        $region49: #{cnn1_forward.3} parent=47 // pred_check
          %p297 = pneg %p71
        $region50: #{cnn1_forward.3} parent=47 // pred_check_branch
          %299 = sbr.rel (%p297) target = $region52
        $region51: #{cnn1_forward.3} parent=47 // pred_region
          %300 = dma.done %s293, 107520
        $region52: #{cnn1_forward.3} parent=47 // pred_fallthru
          _
        // Predicated region
        $region53: #{cnn1_forward.3} parent=47 // pred_check
          %p301 = pneg %p92
        $region54: #{cnn1_forward.3} parent=47 // pred_check_branch
          %303 = sbr.rel (%p301) target = $region56
        $region55: #{cnn1_forward.3} parent=47 // pred_region
          %304 = dma.done [#allocation7], 80
        $region56: #{cnn1_forward.3} parent=47 // pred_fallthru
          _
        // Predicated region
        $region57: #{cnn1_forward.3} parent=47 // pred_check
          %p305 = pneg %p134
        $region58: #{cnn1_forward.3} parent=47 // pred_check_branch
          %307 = sbr.rel (%p305) target = $region60
        $region59: #{cnn1_forward.3} parent=47 // pred_region
          %308 = dma.done [#allocation7], 16
        $region60: #{cnn1_forward.3} parent=47 // pred_fallthru
          _
        // Predicated region
        $region61: #{cnn1_forward.3} parent=47 // pred_check
          %p309 = pneg %p176
        $region62: #{cnn1_forward.3} parent=47 // pred_check_branch
          %311 = sbr.rel (%p309) target = $region64
        $region63: #{cnn1_forward.3} parent=47 // pred_region
          %312 = dma.done [#allocation10], 16
        $region64: #{cnn1_forward.3} parent=47 // pred_fallthru
          _
        %s313 = smul.u32 21, %s24
        %p314 = scmp.lt.s32.totalorder %s313, 41
        %s315 = scalar_select %p314, %s313, 41
        %s316 = scalar_lea.vmem %s0, %s315
        %p317 = pneg %p45
        %p318 = pneg %p42
        %s319 = sand.u32 %s58, 1
        %s320 = scalar_lea.sflag [#allocation4], %s319
        %s321 = sand.u32 %s58, 1
        %s322 = smul.addr %s321, 6720
        %s323 = scalar_lea.vmem [#allocation3], %s322
        %p324 = pneg %p71
        %p325 = pneg %p68
        %p326 = pneg %p92
        %p327 = pneg %p89
        %p328 = pneg %p113
        %p329 = pneg %p110
        %p330 = pneg %p134
        %p331 = pneg %p131
        %p332 = pneg %p155
        %p333 = pneg %p152
        %p334 = pneg %p176
        %p335 = pneg %p173
        %p336 = pneg %p197
        %p337 = pneg %p194
        %s338 = smul.u32 21, %s24
        %p339 = scmp.lt.s32.totalorder %s338, 41
        %s340 = scalar_select %p339, %s338, 41
        %s341 = scalar_lea.vmem %s0, %s340
        %s342 = smul.u32 21, %s24
        %s343 = smul.u32 336, %s24
        %p345 = scmp.eq.s32.totalorder %s24, 0
        // Predicated region
        $region65: #{cnn1_forward.3} parent=47 // pred_check
          %p346 = pneg %p345
        $region66: #{cnn1_forward.3} parent=47 // pred_check_branch
          %348 = sbr.rel (%p346) target = $region68
        $region67: #{cnn1_forward.3} parent=47 // pred_region
          %349 = vst [vmem:[#allocation2] sm:$0xff] 0.0
          %350 = vst [vmem:[#allocation2 + $0x8] sm:$0x3] 0.0
        $region68: #{cnn1_forward.3} parent=47 // pred_fallthru
          _
        %v351 = vld [vmem:[#allocation2] sm:$0xff]
        %v352 = vld [vmem:[#allocation2 + $0x8] sm:$0x3]
        %v353 = vld [vmem:[%s341] sm:$0xff]
        %v354 = vld [vmem:[%s341 + $0x8] sm:$0xff]
        %v355 = vld [vmem:[%s341 + $0x10] sm:$0x1f]
        %v356 = vld [vmem:[%s296] sm:$0xff]
        %v357 = vld [vmem:[%s296 + $0x8] sm:$0xff]
        %v358 = vld [vmem:[%s296 + $0x10] sm:$0xf]
        %v359 = vld [vmem:[%s296 + $0x14] sm:$0xff]
        %v360 = vld [vmem:[%s296 + $0x1c] sm:$0xff]
        %v361 = vld [vmem:[%s296 + $0x24] sm:$0xf]
        %v362 = vld [vmem:[%s296 + $0x28] sm:$0xff]
        %v363 = vld [vmem:[%s296 + $0x30] sm:$0xff]
        %v364 = vld [vmem:[%s296 + $0x38] sm:$0xf]
        %v365 = vld [vmem:[%s296 + $0x3c] sm:$0xff]
        %v366 = vld [vmem:[%s296 + $0x44] sm:$0xff]
        %v367 = vld [vmem:[%s296 + $0x4c] sm:$0xf]
        %v368 = vld [vmem:[%s296 + $0x50] sm:$0xff]
        %v369 = vld [vmem:[%s296 + $0x58] sm:$0xff]
        %v370 = vld [vmem:[%s296 + $0x60] sm:$0xf]
        %v371 = vld [vmem:[%s296 + $0x64] sm:$0xff]
        %v372 = vld [vmem:[%s296 + $0x6c] sm:$0xff]
        %v373 = vld [vmem:[%s296 + $0x74] sm:$0xf]
        %v374 = vld [vmem:[%s296 + $0x78] sm:$0xff]
        %v375 = vld [vmem:[%s296 + $0x80] sm:$0xff]
        %v376 = vld [vmem:[%s296 + $0x88] sm:$0xf]
        %v377 = vld [vmem:[%s296 + $0x8c] sm:$0xff]
        %v378 = vld [vmem:[%s296 + $0x94] sm:$0xff]
        %v379 = vld [vmem:[%s296 + $0x9c] sm:$0xf]
        %v380 = vld [vmem:[%s296 + $0xa0] sm:$0xff]
        %v381 = vld [vmem:[%s296 + $0xa8] sm:$0xff]
        %v382 = vld [vmem:[%s296 + $0xb0] sm:$0xf]
        %v383 = vld [vmem:[%s296 + $0xb4] sm:$0xff]
        %v384 = vld [vmem:[%s296 + $0xbc] sm:$0xff]
        %v385 = vld [vmem:[%s296 + $0xc4] sm:$0xf]
        %v386 = vld [vmem:[%s296 + $0xc8] sm:$0xff]
        %v387 = vld [vmem:[%s296 + $0xd0] sm:$0xff]
        %v388 = vld [vmem:[%s296 + $0xd8] sm:$0xf]
        %v389 = vld [vmem:[%s296 + $0xdc] sm:$0xff]
        %v390 = vld [vmem:[%s296 + $0xe4] sm:$0xff]
        %v391 = vld [vmem:[%s296 + $0xec] sm:$0xf]
        %v392 = vld [vmem:[%s296 + $0xf0] sm:$0xff]
        %v393 = vld [vmem:[%s296 + $0xf8] sm:$0xff]
        %v394 = vld [vmem:[%s296 + $0x100] sm:$0xf]
        %v395 = vld [vmem:[%s296 + $0x104] sm:$0xff]
        %v396 = vld [vmem:[%s296 + $0x10c] sm:$0xff]
        %v397 = vld [vmem:[%s296 + $0x114] sm:$0xf]
        %v398 = vld [vmem:[%s296 + $0x118] sm:$0xff]
        %v399 = vld [vmem:[%s296 + $0x120] sm:$0xff]
        %v400 = vld [vmem:[%s296 + $0x128] sm:$0xf]
        %v401 = vld [vmem:[%s296 + $0x12c] sm:$0xff]
        %v402 = vld [vmem:[%s296 + $0x134] sm:$0xff]
        %v403 = vld [vmem:[%s296 + $0x13c] sm:$0xf]
        %v404 = vld [vmem:[%s296 + $0x140] sm:$0xff]
        %v405 = vld [vmem:[%s296 + $0x148] sm:$0xff]
        %v406 = vld [vmem:[%s296 + $0x150] sm:$0xf]
        %v407 = vld [vmem:[%s296 + $0x154] sm:$0xff]
        %v408 = vld [vmem:[%s296 + $0x15c] sm:$0xff]
        %v409 = vld [vmem:[%s296 + $0x164] sm:$0xf]
        %v410 = vld [vmem:[%s296 + $0x168] sm:$0xff]
        %v411 = vld [vmem:[%s296 + $0x170] sm:$0xff]
        %v412 = vld [vmem:[%s296 + $0x178] sm:$0xf]
        %v413 = vld [vmem:[%s296 + $0x17c] sm:$0xff]
        %v414 = vld [vmem:[%s296 + $0x184] sm:$0xff]
        %v415 = vld [vmem:[%s296 + $0x18c] sm:$0xf]
        %v416 = vld [vmem:[%s296 + $0x190] sm:$0xff]
        %v417 = vld [vmem:[%s296 + $0x198] sm:$0xff]
        %v418 = vld [vmem:[%s296 + $0x1a0] sm:$0xf]
        %v419 = vld [vmem:[%s296 + $0x1a4] sm:$0xff]
        %v420 = vld [vmem:[%s296 + $0x1ac] sm:$0xff]
        %v421 = vld [vmem:[%s296 + $0x1b4] sm:$0xf]
        %v422 = vld [vmem:[%s296 + $0x1b8] sm:$0xff]
        %v423 = vld [vmem:[%s296 + $0x1c0] sm:$0xff]
        %v424 = vld [vmem:[%s296 + $0x1c8] sm:$0xf]
        %v425 = vld [vmem:[%s296 + $0x1cc] sm:$0xff]
        %v426 = vld [vmem:[%s296 + $0x1d4] sm:$0xff]
        %v427 = vld [vmem:[%s296 + $0x1dc] sm:$0xf]
        %v428 = vld [vmem:[%s296 + $0x1e0] sm:$0xff]
        %v429 = vld [vmem:[%s296 + $0x1e8] sm:$0xff]
        %v430 = vld [vmem:[%s296 + $0x1f0] sm:$0xf]
        %v431 = vld [vmem:[%s296 + $0x1f4] sm:$0xff]
        %v432 = vld [vmem:[%s296 + $0x1fc] sm:$0xff]
        %v433 = vld [vmem:[%s296 + $0x204] sm:$0xf]
        %v434 = vld [vmem:[%s296 + $0x208] sm:$0xff]
        %v435 = vld [vmem:[%s296 + $0x210] sm:$0xff]
        %v436 = vld [vmem:[%s296 + $0x218] sm:$0xf]
        %v437 = vld [vmem:[%s296 + $0x21c] sm:$0xff]
        %v438 = vld [vmem:[%s296 + $0x224] sm:$0xff]
        %v439 = vld [vmem:[%s296 + $0x22c] sm:$0xf]
        %v440 = vld [vmem:[%s296 + $0x230] sm:$0xff]
        %v441 = vld [vmem:[%s296 + $0x238] sm:$0xff]
        %v442 = vld [vmem:[%s296 + $0x240] sm:$0xf]
        %v443 = vld [vmem:[%s296 + $0x244] sm:$0xff]
        %v444 = vld [vmem:[%s296 + $0x24c] sm:$0xff]
        %v445 = vld [vmem:[%s296 + $0x254] sm:$0xf]
        %v446 = vld [vmem:[%s296 + $0x258] sm:$0xff]
        %v447 = vld [vmem:[%s296 + $0x260] sm:$0xff]
        %v448 = vld [vmem:[%s296 + $0x268] sm:$0xf]
        %v449 = vld [vmem:[%s296 + $0x26c] sm:$0xff]
        %v450 = vld [vmem:[%s296 + $0x274] sm:$0xff]
        %v451 = vld [vmem:[%s296 + $0x27c] sm:$0xf]
        %v452 = vld [vmem:[%s296 + $0x280] sm:$0xff]
        %v453 = vld [vmem:[%s296 + $0x288] sm:$0xff]
        %v454 = vld [vmem:[%s296 + $0x290] sm:$0xf]
        %v455 = vld [vmem:[%s296 + $0x294] sm:$0xff]
        %v456 = vld [vmem:[%s296 + $0x29c] sm:$0xff]
        %v457 = vld [vmem:[%s296 + $0x2a4] sm:$0xf]
        %v458 = vld [vmem:[%s296 + $0x2a8] sm:$0xff]
        %v459 = vld [vmem:[%s296 + $0x2b0] sm:$0xff]
        %v460 = vld [vmem:[%s296 + $0x2b8] sm:$0xf]
        %v461 = vld [vmem:[%s296 + $0x2bc] sm:$0xff]
        %v462 = vld [vmem:[%s296 + $0x2c4] sm:$0xff]
        %v463 = vld [vmem:[%s296 + $0x2cc] sm:$0xf]
        %v464 = vld [vmem:[%s296 + $0x2d0] sm:$0xff]
        %v465 = vld [vmem:[%s296 + $0x2d8] sm:$0xff]
        %v466 = vld [vmem:[%s296 + $0x2e0] sm:$0xf]
        %v467 = vld [vmem:[%s296 + $0x2e4] sm:$0xff]
        %v468 = vld [vmem:[%s296 + $0x2ec] sm:$0xff]
        %v469 = vld [vmem:[%s296 + $0x2f4] sm:$0xf]
        %v470 = vld [vmem:[%s296 + $0x2f8] sm:$0xff]
        %v471 = vld [vmem:[%s296 + $0x300] sm:$0xff]
        %v472 = vld [vmem:[%s296 + $0x308] sm:$0xf]
        %v473 = vld [vmem:[%s296 + $0x30c] sm:$0xff]
        %v474 = vld [vmem:[%s296 + $0x314] sm:$0xff]
        %v475 = vld [vmem:[%s296 + $0x31c] sm:$0xf]
        %v476 = vld [vmem:[%s296 + $0x320] sm:$0xff]
        %v477 = vld [vmem:[%s296 + $0x328] sm:$0xff]
        %v478 = vld [vmem:[%s296 + $0x330] sm:$0xf]
        %v479 = vld [vmem:[%s296 + $0x334] sm:$0xff]
        %v480 = vld [vmem:[%s296 + $0x33c] sm:$0xff]
        %v481 = vld [vmem:[%s296 + $0x344] sm:$0xf]
        %v482 = vld [vmem:[%s296 + $0x348] sm:$0xff]
        %v483 = vld [vmem:[%s296 + $0x350] sm:$0xff]
        %v484 = vld [vmem:[%s296 + $0x358] sm:$0xf]
        %v485 = vld [vmem:[%s296 + $0x35c] sm:$0xff]
        %v486 = vld [vmem:[%s296 + $0x364] sm:$0xff]
        %v487 = vld [vmem:[%s296 + $0x36c] sm:$0xf]
        %v488 = vld [vmem:[%s296 + $0x370] sm:$0xff]
        %v489 = vld [vmem:[%s296 + $0x378] sm:$0xff]
        %v490 = vld [vmem:[%s296 + $0x380] sm:$0xf]
        %v491 = vld [vmem:[%s296 + $0x384] sm:$0xff]
        %v492 = vld [vmem:[%s296 + $0x38c] sm:$0xff]
        %v493 = vld [vmem:[%s296 + $0x394] sm:$0xf]
        %v494 = vld [vmem:[%s296 + $0x398] sm:$0xff]
        %v495 = vld [vmem:[%s296 + $0x3a0] sm:$0xff]
        %v496 = vld [vmem:[%s296 + $0x3a8] sm:$0xf]
        %v497 = vld [vmem:[%s296 + $0x3ac] sm:$0xff]
        %v498 = vld [vmem:[%s296 + $0x3b4] sm:$0xff]
        %v499 = vld [vmem:[%s296 + $0x3bc] sm:$0xf]
        %v500 = vld [vmem:[%s296 + $0x3c0] sm:$0xff]
        %v501 = vld [vmem:[%s296 + $0x3c8] sm:$0xff]
        %v502 = vld [vmem:[%s296 + $0x3d0] sm:$0xf]
        %v503 = vld [vmem:[%s296 + $0x3d4] sm:$0xff]
        %v504 = vld [vmem:[%s296 + $0x3dc] sm:$0xff]
        %v505 = vld [vmem:[%s296 + $0x3e4] sm:$0xf]
        %v506 = vld [vmem:[%s296 + $0x3e8] sm:$0xff]
        %v507 = vld [vmem:[%s296 + $0x3f0] sm:$0xff]
        %v508 = vld [vmem:[%s296 + $0x3f8] sm:$0xf]
        %v509 = vld [vmem:[%s296 + $0x3fc] sm:$0xff]
        %v510 = vld [vmem:[%s296 + $0x404] sm:$0xff]
        %v511 = vld [vmem:[%s296 + $0x40c] sm:$0xf]
        %v512 = vld [vmem:[%s296 + $0x410] sm:$0xff]
        %v513 = vld [vmem:[%s296 + $0x418] sm:$0xff]
        %v514 = vld [vmem:[%s296 + $0x420] sm:$0xf]
        %v515 = vld [vmem:[%s296 + $0x424] sm:$0xff]
        %v516 = vld [vmem:[%s296 + $0x42c] sm:$0xff]
        %v517 = vld [vmem:[%s296 + $0x434] sm:$0xf]
        %v518 = vld [vmem:[%s296 + $0x438] sm:$0xff]
        %v519 = vld [vmem:[%s296 + $0x440] sm:$0xff]
        %v520 = vld [vmem:[%s296 + $0x448] sm:$0xf]
        %v521 = vld [vmem:[%s296 + $0x44c] sm:$0xff]
        %v522 = vld [vmem:[%s296 + $0x454] sm:$0xff]
        %v523 = vld [vmem:[%s296 + $0x45c] sm:$0xf]
        %v524 = vld [vmem:[%s296 + $0x460] sm:$0xff]
        %v525 = vld [vmem:[%s296 + $0x468] sm:$0xff]
        %v526 = vld [vmem:[%s296 + $0x470] sm:$0xf]
        %v527 = vld [vmem:[%s296 + $0x474] sm:$0xff]
        %v528 = vld [vmem:[%s296 + $0x47c] sm:$0xff]
        %v529 = vld [vmem:[%s296 + $0x484] sm:$0xf]
        %v530 = vld [vmem:[%s296 + $0x488] sm:$0xff]
        %v531 = vld [vmem:[%s296 + $0x490] sm:$0xff]
        %v532 = vld [vmem:[%s296 + $0x498] sm:$0xf]
        %v533 = vld [vmem:[%s296 + $0x49c] sm:$0xff]
        %v534 = vld [vmem:[%s296 + $0x4a4] sm:$0xff]
        %v535 = vld [vmem:[%s296 + $0x4ac] sm:$0xf]
        %v536 = vld [vmem:[%s296 + $0x4b0] sm:$0xff]
        %v537 = vld [vmem:[%s296 + $0x4b8] sm:$0xff]
        %v538 = vld [vmem:[%s296 + $0x4c0] sm:$0xf]
        %v539 = vld [vmem:[%s296 + $0x4c4] sm:$0xff]
        %v540 = vld [vmem:[%s296 + $0x4cc] sm:$0xff]
        %v541 = vld [vmem:[%s296 + $0x4d4] sm:$0xf]
        %v542 = vld [vmem:[%s296 + $0x4d8] sm:$0xff]
        %v543 = vld [vmem:[%s296 + $0x4e0] sm:$0xff]
        %v544 = vld [vmem:[%s296 + $0x4e8] sm:$0xf]
        %v545 = vld [vmem:[%s296 + $0x4ec] sm:$0xff]
        %v546 = vld [vmem:[%s296 + $0x4f4] sm:$0xff]
        %v547 = vld [vmem:[%s296 + $0x4fc] sm:$0xf]
        %v548 = vld [vmem:[%s296 + $0x500] sm:$0xff]
        %v549 = vld [vmem:[%s296 + $0x508] sm:$0xff]
        %v550 = vld [vmem:[%s296 + $0x510] sm:$0xf]
        %v551 = vld [vmem:[%s296 + $0x514] sm:$0xff]
        %v552 = vld [vmem:[%s296 + $0x51c] sm:$0xff]
        %v553 = vld [vmem:[%s296 + $0x524] sm:$0xf]
        %v554 = vld [vmem:[%s296 + $0x528] sm:$0xff]
        %v555 = vld [vmem:[%s296 + $0x530] sm:$0xff]
        %v556 = vld [vmem:[%s296 + $0x538] sm:$0xf]
        %v557 = vld [vmem:[%s296 + $0x53c] sm:$0xff]
        %v558 = vld [vmem:[%s296 + $0x544] sm:$0xff]
        %v559 = vld [vmem:[%s296 + $0x54c] sm:$0xf]
        %v560 = vld [vmem:[%s296 + $0x550] sm:$0xff]
        %v561 = vld [vmem:[%s296 + $0x558] sm:$0xff]
        %v562 = vld [vmem:[%s296 + $0x560] sm:$0xf]
        %v563 = vld [vmem:[%s296 + $0x564] sm:$0xff]
        %v564 = vld [vmem:[%s296 + $0x56c] sm:$0xff]
        %v565 = vld [vmem:[%s296 + $0x574] sm:$0xf]
        %v566 = vld [vmem:[%s296 + $0x578] sm:$0xff]
        %v567 = vld [vmem:[%s296 + $0x580] sm:$0xff]
        %v568 = vld [vmem:[%s296 + $0x588] sm:$0xf]
        %v569 = vld [vmem:[%s296 + $0x58c] sm:$0xff]
        %v570 = vld [vmem:[%s296 + $0x594] sm:$0xff]
        %v571 = vld [vmem:[%s296 + $0x59c] sm:$0xf]
        %v572 = vld [vmem:[%s296 + $0x5a0] sm:$0xff]
        %v573 = vld [vmem:[%s296 + $0x5a8] sm:$0xff]
        %v574 = vld [vmem:[%s296 + $0x5b0] sm:$0xf]
        %v575 = vld [vmem:[%s296 + $0x5b4] sm:$0xff]
        %v576 = vld [vmem:[%s296 + $0x5bc] sm:$0xff]
        %v577 = vld [vmem:[%s296 + $0x5c4] sm:$0xf]
        %v578 = vld [vmem:[%s296 + $0x5c8] sm:$0xff]
        %v579 = vld [vmem:[%s296 + $0x5d0] sm:$0xff]
        %v580 = vld [vmem:[%s296 + $0x5d8] sm:$0xf]
        %v581 = vld [vmem:[%s296 + $0x5dc] sm:$0xff]
        %v582 = vld [vmem:[%s296 + $0x5e4] sm:$0xff]
        %v583 = vld [vmem:[%s296 + $0x5ec] sm:$0xf]
        %v584 = vld [vmem:[%s296 + $0x5f0] sm:$0xff]
        %v585 = vld [vmem:[%s296 + $0x5f8] sm:$0xff]
        %v586 = vld [vmem:[%s296 + $0x600] sm:$0xf]
        %v587 = vld [vmem:[%s296 + $0x604] sm:$0xff]
        %v588 = vld [vmem:[%s296 + $0x60c] sm:$0xff]
        %v589 = vld [vmem:[%s296 + $0x614] sm:$0xf]
        %v590 = vld [vmem:[%s296 + $0x618] sm:$0xff]
        %v591 = vld [vmem:[%s296 + $0x620] sm:$0xff]
        %v592 = vld [vmem:[%s296 + $0x628] sm:$0xf]
        %v593 = vld [vmem:[%s296 + $0x62c] sm:$0xff]
        %v594 = vld [vmem:[%s296 + $0x634] sm:$0xff]
        %v595 = vld [vmem:[%s296 + $0x63c] sm:$0xf]
        %v596 = vld [vmem:[%s296 + $0x640] sm:$0xff]
        %v597 = vld [vmem:[%s296 + $0x648] sm:$0xff]
        %v598 = vld [vmem:[%s296 + $0x650] sm:$0xf]
        %v599 = vld [vmem:[%s296 + $0x654] sm:$0xff]
        %v600 = vld [vmem:[%s296 + $0x65c] sm:$0xff]
        %v601 = vld [vmem:[%s296 + $0x664] sm:$0xf]
        %v602 = vld [vmem:[%s296 + $0x668] sm:$0xff]
        %v603 = vld [vmem:[%s296 + $0x670] sm:$0xff]
        %v604 = vld [vmem:[%s296 + $0x678] sm:$0xf]
        %v605 = vld [vmem:[%s296 + $0x67c] sm:$0xff]
        %v606 = vld [vmem:[%s296 + $0x684] sm:$0xff]
        %v607 = vld [vmem:[%s296 + $0x68c] sm:$0xf]
        %v608 = vld [vmem:[%s296 + $0x690] sm:$0xff]
        %v609 = vld [vmem:[%s296 + $0x698] sm:$0xff]
        %v610 = vld [vmem:[%s296 + $0x6a0] sm:$0xf]
        %v611 = vld [vmem:[%s296 + $0x6a4] sm:$0xff]
        %v612 = vld [vmem:[%s296 + $0x6ac] sm:$0xff]
        %v613 = vld [vmem:[%s296 + $0x6b4] sm:$0xf]
        %v614 = vld [vmem:[%s296 + $0x6b8] sm:$0xff]
        %v615 = vld [vmem:[%s296 + $0x6c0] sm:$0xff]
        %v616 = vld [vmem:[%s296 + $0x6c8] sm:$0xf]
        %v617 = vld [vmem:[%s296 + $0x6cc] sm:$0xff]
        %v618 = vld [vmem:[%s296 + $0x6d4] sm:$0xff]
        %v619 = vld [vmem:[%s296 + $0x6dc] sm:$0xf]
        %v620 = vld [vmem:[%s296 + $0x6e0] sm:$0xff]
        %v621 = vld [vmem:[%s296 + $0x6e8] sm:$0xff]
        %v622 = vld [vmem:[%s296 + $0x6f0] sm:$0xf]
        %v623 = vld [vmem:[%s296 + $0x6f4] sm:$0xff]
        %v624 = vld [vmem:[%s296 + $0x6fc] sm:$0xff]
        %v625 = vld [vmem:[%s296 + $0x704] sm:$0xf]
        %v626 = vld [vmem:[%s296 + $0x708] sm:$0xff]
        %v627 = vld [vmem:[%s296 + $0x710] sm:$0xff]
        %v628 = vld [vmem:[%s296 + $0x718] sm:$0xf]
        %v629 = vld [vmem:[%s296 + $0x71c] sm:$0xff]
        %v630 = vld [vmem:[%s296 + $0x724] sm:$0xff]
        %v631 = vld [vmem:[%s296 + $0x72c] sm:$0xf]
        %v632 = vld [vmem:[%s296 + $0x730] sm:$0xff]
        %v633 = vld [vmem:[%s296 + $0x738] sm:$0xff]
        %v634 = vld [vmem:[%s296 + $0x740] sm:$0xf]
        %v635 = vld [vmem:[%s296 + $0x744] sm:$0xff]
        %v636 = vld [vmem:[%s296 + $0x74c] sm:$0xff]
        %v637 = vld [vmem:[%s296 + $0x754] sm:$0xf]
        %v638 = vld [vmem:[%s296 + $0x758] sm:$0xff]
        %v639 = vld [vmem:[%s296 + $0x760] sm:$0xff]
        %v640 = vld [vmem:[%s296 + $0x768] sm:$0xf]
        %v641 = vld [vmem:[%s296 + $0x76c] sm:$0xff]
        %v642 = vld [vmem:[%s296 + $0x774] sm:$0xff]
        %v643 = vld [vmem:[%s296 + $0x77c] sm:$0xf]
        %v644 = vld [vmem:[%s296 + $0x780] sm:$0xff]
        %v645 = vld [vmem:[%s296 + $0x788] sm:$0xff]
        %v646 = vld [vmem:[%s296 + $0x790] sm:$0xf]
        %v647 = vld [vmem:[%s296 + $0x794] sm:$0xff]
        %v648 = vld [vmem:[%s296 + $0x79c] sm:$0xff]
        %v649 = vld [vmem:[%s296 + $0x7a4] sm:$0xf]
        %v650 = vld [vmem:[%s296 + $0x7a8] sm:$0xff]
        %v651 = vld [vmem:[%s296 + $0x7b0] sm:$0xff]
        %v652 = vld [vmem:[%s296 + $0x7b8] sm:$0xf]
        %v653 = vld [vmem:[%s296 + $0x7bc] sm:$0xff]
        %v654 = vld [vmem:[%s296 + $0x7c4] sm:$0xff]
        %v655 = vld [vmem:[%s296 + $0x7cc] sm:$0xf]
        %v656 = vld [vmem:[%s296 + $0x7d0] sm:$0xff]
        %v657 = vld [vmem:[%s296 + $0x7d8] sm:$0xff]
        %v658 = vld [vmem:[%s296 + $0x7e0] sm:$0xf]
        %v659 = vld [vmem:[%s296 + $0x7e4] sm:$0xff]
        %v660 = vld [vmem:[%s296 + $0x7ec] sm:$0xff]
        %v661 = vld [vmem:[%s296 + $0x7f4] sm:$0xf]
        %v662 = vld [vmem:[%s296 + $0x7f8] sm:$0xff]
        %v663 = vld [vmem:[%s296 + $0x800] sm:$0xff]
        %v664 = vld [vmem:[%s296 + $0x808] sm:$0xf]
        %v665 = vld [vmem:[%s296 + $0x80c] sm:$0xff]
        %v666 = vld [vmem:[%s296 + $0x814] sm:$0xff]
        %v667 = vld [vmem:[%s296 + $0x81c] sm:$0xf]
        %v668 = vld [vmem:[%s296 + $0x820] sm:$0xff]
        %v669 = vld [vmem:[%s296 + $0x828] sm:$0xff]
        %v670 = vld [vmem:[%s296 + $0x830] sm:$0xf]
        %v671 = vld [vmem:[%s296 + $0x834] sm:$0xff]
        %v672 = vld [vmem:[%s296 + $0x83c] sm:$0xff]
        %v673 = vld [vmem:[%s296 + $0x844] sm:$0xf]
        %v674 = vld [vmem:[%s296 + $0x848] sm:$0xff]
        %v675 = vld [vmem:[%s296 + $0x850] sm:$0xff]
        %v676 = vld [vmem:[%s296 + $0x858] sm:$0xf]
        %v677 = vld [vmem:[%s296 + $0x85c] sm:$0xff]
        %v678 = vld [vmem:[%s296 + $0x864] sm:$0xff]
        %v679 = vld [vmem:[%s296 + $0x86c] sm:$0xf]
        %v680 = vld [vmem:[%s296 + $0x870] sm:$0xff]
        %v681 = vld [vmem:[%s296 + $0x878] sm:$0xff]
        %v682 = vld [vmem:[%s296 + $0x880] sm:$0xf]
        %v683 = vld [vmem:[%s296 + $0x884] sm:$0xff]
        %v684 = vld [vmem:[%s296 + $0x88c] sm:$0xff]
        %v685 = vld [vmem:[%s296 + $0x894] sm:$0xf]
        %v686 = vld [vmem:[%s296 + $0x898] sm:$0xff]
        %v687 = vld [vmem:[%s296 + $0x8a0] sm:$0xff]
        %v688 = vld [vmem:[%s296 + $0x8a8] sm:$0xf]
        %v689 = vld [vmem:[%s296 + $0x8ac] sm:$0xff]
        %v690 = vld [vmem:[%s296 + $0x8b4] sm:$0xff]
        %v691 = vld [vmem:[%s296 + $0x8bc] sm:$0xf]
        %v692 = vld [vmem:[%s296 + $0x8c0] sm:$0xff]
        %v693 = vld [vmem:[%s296 + $0x8c8] sm:$0xff]
        %v694 = vld [vmem:[%s296 + $0x8d0] sm:$0xf]
        %v695 = vld [vmem:[%s296 + $0x8d4] sm:$0xff]
        %v696 = vld [vmem:[%s296 + $0x8dc] sm:$0xff]
        %v697 = vld [vmem:[%s296 + $0x8e4] sm:$0xf]
        %v698 = vld [vmem:[%s296 + $0x8e8] sm:$0xff]
        %v699 = vld [vmem:[%s296 + $0x8f0] sm:$0xff]
        %v700 = vld [vmem:[%s296 + $0x8f8] sm:$0xf]
        %v701 = vld [vmem:[%s296 + $0x8fc] sm:$0xff]
        %v702 = vld [vmem:[%s296 + $0x904] sm:$0xff]
        %v703 = vld [vmem:[%s296 + $0x90c] sm:$0xf]
        %v704 = vld [vmem:[%s296 + $0x910] sm:$0xff]
        %v705 = vld [vmem:[%s296 + $0x918] sm:$0xff]
        %v706 = vld [vmem:[%s296 + $0x920] sm:$0xf]
        %v707 = vld [vmem:[%s296 + $0x924] sm:$0xff]
        %v708 = vld [vmem:[%s296 + $0x92c] sm:$0xff]
        %v709 = vld [vmem:[%s296 + $0x934] sm:$0xf]
        %v710 = vld [vmem:[%s296 + $0x938] sm:$0xff]
        %v711 = vld [vmem:[%s296 + $0x940] sm:$0xff]
        %v712 = vld [vmem:[%s296 + $0x948] sm:$0xf]
        %v713 = vld [vmem:[%s296 + $0x94c] sm:$0xff]
        %v714 = vld [vmem:[%s296 + $0x954] sm:$0xff]
        %v715 = vld [vmem:[%s296 + $0x95c] sm:$0xf]
        %v716 = vld [vmem:[%s296 + $0x960] sm:$0xff]
        %v717 = vld [vmem:[%s296 + $0x968] sm:$0xff]
        %v718 = vld [vmem:[%s296 + $0x970] sm:$0xf]
        %v719 = vld [vmem:[%s296 + $0x974] sm:$0xff]
        %v720 = vld [vmem:[%s296 + $0x97c] sm:$0xff]
        %v721 = vld [vmem:[%s296 + $0x984] sm:$0xf]
        %v722 = vld [vmem:[%s296 + $0x988] sm:$0xff]
        %v723 = vld [vmem:[%s296 + $0x990] sm:$0xff]
        %v724 = vld [vmem:[%s296 + $0x998] sm:$0xf]
        %v725 = vld [vmem:[%s296 + $0x99c] sm:$0xff]
        %v726 = vld [vmem:[%s296 + $0x9a4] sm:$0xff]
        %v727 = vld [vmem:[%s296 + $0x9ac] sm:$0xf]
        %v728 = vld [vmem:[%s296 + $0x9b0] sm:$0xff]
        %v729 = vld [vmem:[%s296 + $0x9b8] sm:$0xff]
        %v730 = vld [vmem:[%s296 + $0x9c0] sm:$0xf]
        %v731 = vld [vmem:[%s296 + $0x9c4] sm:$0xff]
        %v732 = vld [vmem:[%s296 + $0x9cc] sm:$0xff]
        %v733 = vld [vmem:[%s296 + $0x9d4] sm:$0xf]
        %v734 = vld [vmem:[%s296 + $0x9d8] sm:$0xff]
        %v735 = vld [vmem:[%s296 + $0x9e0] sm:$0xff]
        %v736 = vld [vmem:[%s296 + $0x9e8] sm:$0xf]
        %v737 = vld [vmem:[%s296 + $0x9ec] sm:$0xff]
        %v738 = vld [vmem:[%s296 + $0x9f4] sm:$0xff]
        %v739 = vld [vmem:[%s296 + $0x9fc] sm:$0xf]
        %v740 = vld [vmem:[%s296 + $0xa00] sm:$0xff]
        %v741 = vld [vmem:[%s296 + $0xa08] sm:$0xff]
        %v742 = vld [vmem:[%s296 + $0xa10] sm:$0xf]
        %v743 = vld [vmem:[%s296 + $0xa14] sm:$0xff]
        %v744 = vld [vmem:[%s296 + $0xa1c] sm:$0xff]
        %v745 = vld [vmem:[%s296 + $0xa24] sm:$0xf]
        %v746 = vld [vmem:[%s296 + $0xa28] sm:$0xff]
        %v747 = vld [vmem:[%s296 + $0xa30] sm:$0xff]
        %v748 = vld [vmem:[%s296 + $0xa38] sm:$0xf]
        %v749 = vld [vmem:[%s296 + $0xa3c] sm:$0xff]
        %v750 = vld [vmem:[%s296 + $0xa44] sm:$0xff]
        %v751 = vld [vmem:[%s296 + $0xa4c] sm:$0xf]
        %v752 = vld [vmem:[%s296 + $0xa50] sm:$0xff]
        %v753 = vld [vmem:[%s296 + $0xa58] sm:$0xff]
        %v754 = vld [vmem:[%s296 + $0xa60] sm:$0xf]
        %v755 = vld [vmem:[%s296 + $0xa64] sm:$0xff]
        %v756 = vld [vmem:[%s296 + $0xa6c] sm:$0xff]
        %v757 = vld [vmem:[%s296 + $0xa74] sm:$0xf]
        %v758 = vld [vmem:[%s296 + $0xa78] sm:$0xff]
        %v759 = vld [vmem:[%s296 + $0xa80] sm:$0xff]
        %v760 = vld [vmem:[%s296 + $0xa88] sm:$0xf]
        %v761 = vld [vmem:[%s296 + $0xa8c] sm:$0xff]
        %v762 = vld [vmem:[%s296 + $0xa94] sm:$0xff]
        %v763 = vld [vmem:[%s296 + $0xa9c] sm:$0xf]
        %v764 = vld [vmem:[%s296 + $0xaa0] sm:$0xff]
        %v765 = vld [vmem:[%s296 + $0xaa8] sm:$0xff]
        %v766 = vld [vmem:[%s296 + $0xab0] sm:$0xf]
        %v767 = vld [vmem:[%s296 + $0xab4] sm:$0xff]
        %v768 = vld [vmem:[%s296 + $0xabc] sm:$0xff]
        %v769 = vld [vmem:[%s296 + $0xac4] sm:$0xf]
        %v770 = vld [vmem:[%s296 + $0xac8] sm:$0xff]
        %v771 = vld [vmem:[%s296 + $0xad0] sm:$0xff]
        %v772 = vld [vmem:[%s296 + $0xad8] sm:$0xf]
        %v773 = vld [vmem:[%s296 + $0xadc] sm:$0xff]
        %v774 = vld [vmem:[%s296 + $0xae4] sm:$0xff]
        %v775 = vld [vmem:[%s296 + $0xaec] sm:$0xf]
        %v776 = vld [vmem:[%s296 + $0xaf0] sm:$0xff]
        %v777 = vld [vmem:[%s296 + $0xaf8] sm:$0xff]
        %v778 = vld [vmem:[%s296 + $0xb00] sm:$0xf]
        %v779 = vld [vmem:[%s296 + $0xb04] sm:$0xff]
        %v780 = vld [vmem:[%s296 + $0xb0c] sm:$0xff]
        %v781 = vld [vmem:[%s296 + $0xb14] sm:$0xf]
        %v782 = vld [vmem:[%s296 + $0xb18] sm:$0xff]
        %v783 = vld [vmem:[%s296 + $0xb20] sm:$0xff]
        %v784 = vld [vmem:[%s296 + $0xb28] sm:$0xf]
        %v785 = vld [vmem:[%s296 + $0xb2c] sm:$0xff]
        %v786 = vld [vmem:[%s296 + $0xb34] sm:$0xff]
        %v787 = vld [vmem:[%s296 + $0xb3c] sm:$0xf]
        %v788 = vld [vmem:[%s296 + $0xb40] sm:$0xff]
        %v789 = vld [vmem:[%s296 + $0xb48] sm:$0xff]
        %v790 = vld [vmem:[%s296 + $0xb50] sm:$0xf]
        %v791 = vld [vmem:[%s296 + $0xb54] sm:$0xff]
        %v792 = vld [vmem:[%s296 + $0xb5c] sm:$0xff]
        %v793 = vld [vmem:[%s296 + $0xb64] sm:$0xf]
        %v794 = vld [vmem:[%s296 + $0xb68] sm:$0xff]
        %v795 = vld [vmem:[%s296 + $0xb70] sm:$0xff]
        %v796 = vld [vmem:[%s296 + $0xb78] sm:$0xf]
        %v797 = vld [vmem:[%s296 + $0xb7c] sm:$0xff]
        %v798 = vld [vmem:[%s296 + $0xb84] sm:$0xff]
        %v799 = vld [vmem:[%s296 + $0xb8c] sm:$0xf]
        %v800 = vld [vmem:[%s296 + $0xb90] sm:$0xff]
        %v801 = vld [vmem:[%s296 + $0xb98] sm:$0xff]
        %v802 = vld [vmem:[%s296 + $0xba0] sm:$0xf]
        %v803 = vld [vmem:[%s296 + $0xba4] sm:$0xff]
        %v804 = vld [vmem:[%s296 + $0xbac] sm:$0xff]
        %v805 = vld [vmem:[%s296 + $0xbb4] sm:$0xf]
        %v806 = vld [vmem:[%s296 + $0xbb8] sm:$0xff]
        %v807 = vld [vmem:[%s296 + $0xbc0] sm:$0xff]
        %v808 = vld [vmem:[%s296 + $0xbc8] sm:$0xf]
        %v809 = vld [vmem:[%s296 + $0xbcc] sm:$0xff]
        %v810 = vld [vmem:[%s296 + $0xbd4] sm:$0xff]
        %v811 = vld [vmem:[%s296 + $0xbdc] sm:$0xf]
        %v812 = vld [vmem:[%s296 + $0xbe0] sm:$0xff]
        %v813 = vld [vmem:[%s296 + $0xbe8] sm:$0xff]
        %v814 = vld [vmem:[%s296 + $0xbf0] sm:$0xf]
        %v815 = vld [vmem:[%s296 + $0xbf4] sm:$0xff]
        %v816 = vld [vmem:[%s296 + $0xbfc] sm:$0xff]
        %v817 = vld [vmem:[%s296 + $0xc04] sm:$0xf]
        %v818 = vld [vmem:[%s296 + $0xc08] sm:$0xff]
        %v819 = vld [vmem:[%s296 + $0xc10] sm:$0xff]
        %v820 = vld [vmem:[%s296 + $0xc18] sm:$0xf]
        %v821 = vld [vmem:[%s296 + $0xc1c] sm:$0xff]
        %v822 = vld [vmem:[%s296 + $0xc24] sm:$0xff]
        %v823 = vld [vmem:[%s296 + $0xc2c] sm:$0xf]
        %v824 = vld [vmem:[%s296 + $0xc30] sm:$0xff]
        %v825 = vld [vmem:[%s296 + $0xc38] sm:$0xff]
        %v826 = vld [vmem:[%s296 + $0xc40] sm:$0xf]
        %v827 = vld [vmem:[%s296 + $0xc44] sm:$0xff]
        %v828 = vld [vmem:[%s296 + $0xc4c] sm:$0xff]
        %v829 = vld [vmem:[%s296 + $0xc54] sm:$0xf]
        %v830 = vld [vmem:[%s296 + $0xc58] sm:$0xff]
        %v831 = vld [vmem:[%s296 + $0xc60] sm:$0xff]
        %v832 = vld [vmem:[%s296 + $0xc68] sm:$0xf]
        %v833 = vld [vmem:[%s296 + $0xc6c] sm:$0xff]
        %v834 = vld [vmem:[%s296 + $0xc74] sm:$0xff]
        %v835 = vld [vmem:[%s296 + $0xc7c] sm:$0xf]
        %v836 = vld [vmem:[%s296 + $0xc80] sm:$0xff]
        %v837 = vld [vmem:[%s296 + $0xc88] sm:$0xff]
        %v838 = vld [vmem:[%s296 + $0xc90] sm:$0xf]
        %v839 = vld [vmem:[%s296 + $0xc94] sm:$0xff]
        %v840 = vld [vmem:[%s296 + $0xc9c] sm:$0xff]
        %v841 = vld [vmem:[%s296 + $0xca4] sm:$0xf]
        %v842 = vld [vmem:[%s296 + $0xca8] sm:$0xff]
        %v843 = vld [vmem:[%s296 + $0xcb0] sm:$0xff]
        %v844 = vld [vmem:[%s296 + $0xcb8] sm:$0xf]
        %v845 = vld [vmem:[%s296 + $0xcbc] sm:$0xff]
        %v846 = vld [vmem:[%s296 + $0xcc4] sm:$0xff]
        %v847 = vld [vmem:[%s296 + $0xccc] sm:$0xf]
        %v848 = vld [vmem:[%s296 + $0xcd0] sm:$0xff]
        %v849 = vld [vmem:[%s296 + $0xcd8] sm:$0xff]
        %v850 = vld [vmem:[%s296 + $0xce0] sm:$0xf]
        %v851 = vld [vmem:[%s296 + $0xce4] sm:$0xff]
        %v852 = vld [vmem:[%s296 + $0xcec] sm:$0xff]
        %v853 = vld [vmem:[%s296 + $0xcf4] sm:$0xf]
        %v854 = vld [vmem:[%s296 + $0xcf8] sm:$0xff]
        %v855 = vld [vmem:[%s296 + $0xd00] sm:$0xff]
        %v856 = vld [vmem:[%s296 + $0xd08] sm:$0xf]
        %v857 = vld [vmem:[%s296 + $0xd0c] sm:$0xff]
        %v858 = vld [vmem:[%s296 + $0xd14] sm:$0xff]
        %v859 = vld [vmem:[%s296 + $0xd1c] sm:$0xf]
        %v860 = vld [vmem:[%s296 + $0xd20] sm:$0xff]
        %v861 = vld [vmem:[%s296 + $0xd28] sm:$0xff]
        %v862 = vld [vmem:[%s296 + $0xd30] sm:$0xf]
        %v863 = vld [vmem:[%s296 + $0xd34] sm:$0xff]
        %v864 = vld [vmem:[%s296 + $0xd3c] sm:$0xff]
        %v865 = vld [vmem:[%s296 + $0xd44] sm:$0xf]
        %v866 = vld [vmem:[%s296 + $0xd48] sm:$0xff]
        %v867 = vld [vmem:[%s296 + $0xd50] sm:$0xff]
        %v868 = vld [vmem:[%s296 + $0xd58] sm:$0xf]
        %v869 = vld [vmem:[%s296 + $0xd5c] sm:$0xff]
        %v870 = vld [vmem:[%s296 + $0xd64] sm:$0xff]
        %v871 = vld [vmem:[%s296 + $0xd6c] sm:$0xf]
        %v872 = vld [vmem:[%s296 + $0xd70] sm:$0xff]
        %v873 = vld [vmem:[%s296 + $0xd78] sm:$0xff]
        %v874 = vld [vmem:[%s296 + $0xd80] sm:$0xf]
        %v875 = vld [vmem:[%s296 + $0xd84] sm:$0xff]
        %v876 = vld [vmem:[%s296 + $0xd8c] sm:$0xff]
        %v877 = vld [vmem:[%s296 + $0xd94] sm:$0xf]
        %v878 = vld [vmem:[%s296 + $0xd98] sm:$0xff]
        %v879 = vld [vmem:[%s296 + $0xda0] sm:$0xff]
        %v880 = vld [vmem:[%s296 + $0xda8] sm:$0xf]
        %v881 = vld [vmem:[%s296 + $0xdac] sm:$0xff]
        %v882 = vld [vmem:[%s296 + $0xdb4] sm:$0xff]
        %v883 = vld [vmem:[%s296 + $0xdbc] sm:$0xf]
        %v884 = vld [vmem:[%s296 + $0xdc0] sm:$0xff]
        %v885 = vld [vmem:[%s296 + $0xdc8] sm:$0xff]
        %v886 = vld [vmem:[%s296 + $0xdd0] sm:$0xf]
        %v887 = vld [vmem:[%s296 + $0xdd4] sm:$0xff]
        %v888 = vld [vmem:[%s296 + $0xddc] sm:$0xff]
        %v889 = vld [vmem:[%s296 + $0xde4] sm:$0xf]
        %v890 = vld [vmem:[%s296 + $0xde8] sm:$0xff]
        %v891 = vld [vmem:[%s296 + $0xdf0] sm:$0xff]
        %v892 = vld [vmem:[%s296 + $0xdf8] sm:$0xf]
        %v893 = vld [vmem:[%s296 + $0xdfc] sm:$0xff]
        %v894 = vld [vmem:[%s296 + $0xe04] sm:$0xff]
        %v895 = vld [vmem:[%s296 + $0xe0c] sm:$0xf]
        %v896 = vld [vmem:[%s296 + $0xe10] sm:$0xff]
        %v897 = vld [vmem:[%s296 + $0xe18] sm:$0xff]
        %v898 = vld [vmem:[%s296 + $0xe20] sm:$0xf]
        %v899 = vld [vmem:[%s296 + $0xe24] sm:$0xff]
        %v900 = vld [vmem:[%s296 + $0xe2c] sm:$0xff]
        %v901 = vld [vmem:[%s296 + $0xe34] sm:$0xf]
        %v902 = vld [vmem:[%s296 + $0xe38] sm:$0xff]
        %v903 = vld [vmem:[%s296 + $0xe40] sm:$0xff]
        %v904 = vld [vmem:[%s296 + $0xe48] sm:$0xf]
        %v905 = vld [vmem:[%s296 + $0xe4c] sm:$0xff]
        %v906 = vld [vmem:[%s296 + $0xe54] sm:$0xff]
        %v907 = vld [vmem:[%s296 + $0xe5c] sm:$0xf]
        %v908 = vld [vmem:[%s296 + $0xe60] sm:$0xff]
        %v909 = vld [vmem:[%s296 + $0xe68] sm:$0xff]
        %v910 = vld [vmem:[%s296 + $0xe70] sm:$0xf]
        %v911 = vld [vmem:[%s296 + $0xe74] sm:$0xff]
        %v912 = vld [vmem:[%s296 + $0xe7c] sm:$0xff]
        %v913 = vld [vmem:[%s296 + $0xe84] sm:$0xf]
        %v914 = vld [vmem:[%s296 + $0xe88] sm:$0xff]
        %v915 = vld [vmem:[%s296 + $0xe90] sm:$0xff]
        %v916 = vld [vmem:[%s296 + $0xe98] sm:$0xf]
        %v917 = vld [vmem:[%s296 + $0xe9c] sm:$0xff]
        %v918 = vld [vmem:[%s296 + $0xea4] sm:$0xff]
        %v919 = vld [vmem:[%s296 + $0xeac] sm:$0xf]
        %v920 = vld [vmem:[%s296 + $0xeb0] sm:$0xff]
        %v921 = vld [vmem:[%s296 + $0xeb8] sm:$0xff]
        %v922 = vld [vmem:[%s296 + $0xec0] sm:$0xf]
        %v923 = vld [vmem:[%s296 + $0xec4] sm:$0xff]
        %v924 = vld [vmem:[%s296 + $0xecc] sm:$0xff]
        %v925 = vld [vmem:[%s296 + $0xed4] sm:$0xf]
        %v926 = vld [vmem:[%s296 + $0xed8] sm:$0xff]
        %v927 = vld [vmem:[%s296 + $0xee0] sm:$0xff]
        %v928 = vld [vmem:[%s296 + $0xee8] sm:$0xf]
        %v929 = vld [vmem:[%s296 + $0xeec] sm:$0xff]
        %v930 = vld [vmem:[%s296 + $0xef4] sm:$0xff]
        %v931 = vld [vmem:[%s296 + $0xefc] sm:$0xf]
        %v932 = vld [vmem:[%s296 + $0xf00] sm:$0xff]
        %v933 = vld [vmem:[%s296 + $0xf08] sm:$0xff]
        %v934 = vld [vmem:[%s296 + $0xf10] sm:$0xf]
        %v935 = vld [vmem:[%s296 + $0xf14] sm:$0xff]
        %v936 = vld [vmem:[%s296 + $0xf1c] sm:$0xff]
        %v937 = vld [vmem:[%s296 + $0xf24] sm:$0xf]
        %v938 = vld [vmem:[%s296 + $0xf28] sm:$0xff]
        %v939 = vld [vmem:[%s296 + $0xf30] sm:$0xff]
        %v940 = vld [vmem:[%s296 + $0xf38] sm:$0xf]
        %v941 = vld [vmem:[%s296 + $0xf3c] sm:$0xff]
        %v942 = vld [vmem:[%s296 + $0xf44] sm:$0xff]
        %v943 = vld [vmem:[%s296 + $0xf4c] sm:$0xf]
        %v944 = vld [vmem:[%s296 + $0xf50] sm:$0xff]
        %v945 = vld [vmem:[%s296 + $0xf58] sm:$0xff]
        %v946 = vld [vmem:[%s296 + $0xf60] sm:$0xf]
        %v947 = vld [vmem:[%s296 + $0xf64] sm:$0xff]
        %v948 = vld [vmem:[%s296 + $0xf6c] sm:$0xff]
        %v949 = vld [vmem:[%s296 + $0xf74] sm:$0xf]
        %v950 = vld [vmem:[%s296 + $0xf78] sm:$0xff]
        %v951 = vld [vmem:[%s296 + $0xf80] sm:$0xff]
        %v952 = vld [vmem:[%s296 + $0xf88] sm:$0xf]
        %v953 = vld [vmem:[%s296 + $0xf8c] sm:$0xff]
        %v954 = vld [vmem:[%s296 + $0xf94] sm:$0xff]
        %v955 = vld [vmem:[%s296 + $0xf9c] sm:$0xf]
        %v956 = vld [vmem:[%s296 + $0xfa0] sm:$0xff]
        %v957 = vld [vmem:[%s296 + $0xfa8] sm:$0xff]
        %v958 = vld [vmem:[%s296 + $0xfb0] sm:$0xf]
        %v959 = vld [vmem:[%s296 + $0xfb4] sm:$0xff]
        %v960 = vld [vmem:[%s296 + $0xfbc] sm:$0xff]
        %v961 = vld [vmem:[%s296 + $0xfc4] sm:$0xf]
        %v962 = vld [vmem:[%s296 + $0xfc8] sm:$0xff]
        %v963 = vld [vmem:[%s296 + $0xfd0] sm:$0xff]
        %v964 = vld [vmem:[%s296 + $0xfd8] sm:$0xf]
        %v965 = vld [vmem:[%s296 + $0xfdc] sm:$0xff]
        %v966 = vld [vmem:[%s296 + $0xfe4] sm:$0xff]
        %v967 = vld [vmem:[%s296 + $0xfec] sm:$0xf]
        %v968 = vld [vmem:[%s296 + $0xff0] sm:$0xff]
        %v969 = vld [vmem:[%s296 + $0xff8] sm:$0xff]
        %v970 = vld [vmem:[%s296 + $0x1000] sm:$0xf]
        %v971 = vld [vmem:[%s296 + $0x1004] sm:$0xff]
        %v972 = vld [vmem:[%s296 + $0x100c] sm:$0xff]
        %v973 = vld [vmem:[%s296 + $0x1014] sm:$0xf]
        %v974 = vld [vmem:[%s296 + $0x1018] sm:$0xff]
        %v975 = vld [vmem:[%s296 + $0x1020] sm:$0xff]
        %v976 = vld [vmem:[%s296 + $0x1028] sm:$0xf]
        %v977 = vld [vmem:[%s296 + $0x102c] sm:$0xff]
        %v978 = vld [vmem:[%s296 + $0x1034] sm:$0xff]
        %v979 = vld [vmem:[%s296 + $0x103c] sm:$0xf]
        %v980 = vld [vmem:[%s296 + $0x1040] sm:$0xff]
        %v981 = vld [vmem:[%s296 + $0x1048] sm:$0xff]
        %v982 = vld [vmem:[%s296 + $0x1050] sm:$0xf]
        %v983 = vld [vmem:[%s296 + $0x1054] sm:$0xff]
        %v984 = vld [vmem:[%s296 + $0x105c] sm:$0xff]
        %v985 = vld [vmem:[%s296 + $0x1064] sm:$0xf]
        %v986 = vld [vmem:[%s296 + $0x1068] sm:$0xff]
        %v987 = vld [vmem:[%s296 + $0x1070] sm:$0xff]
        %v988 = vld [vmem:[%s296 + $0x1078] sm:$0xf]
        %v989 = vld [vmem:[%s296 + $0x107c] sm:$0xff]
        %v990 = vld [vmem:[%s296 + $0x1084] sm:$0xff]
        %v991 = vld [vmem:[%s296 + $0x108c] sm:$0xf]
        %v992 = vld [vmem:[%s296 + $0x1090] sm:$0xff]
        %v993 = vld [vmem:[%s296 + $0x1098] sm:$0xff]
        %v994 = vld [vmem:[%s296 + $0x10a0] sm:$0xf]
        %v995 = vld [vmem:[%s296 + $0x10a4] sm:$0xff]
        %v996 = vld [vmem:[%s296 + $0x10ac] sm:$0xff]
        %v997 = vld [vmem:[%s296 + $0x10b4] sm:$0xf]
        %v998 = vld [vmem:[%s296 + $0x10b8] sm:$0xff]
        %v999 = vld [vmem:[%s296 + $0x10c0] sm:$0xff]
        %v1000 = vld [vmem:[%s296 + $0x10c8] sm:$0xf]
        %v1001 = vld [vmem:[%s296 + $0x10cc] sm:$0xff]
        %v1002 = vld [vmem:[%s296 + $0x10d4] sm:$0xff]
        %v1003 = vld [vmem:[%s296 + $0x10dc] sm:$0xf]
        %v1004 = vld [vmem:[%s296 + $0x10e0] sm:$0xff]
        %v1005 = vld [vmem:[%s296 + $0x10e8] sm:$0xff]
        %v1006 = vld [vmem:[%s296 + $0x10f0] sm:$0xf]
        %v1007 = vld [vmem:[%s296 + $0x10f4] sm:$0xff]
        %v1008 = vld [vmem:[%s296 + $0x10fc] sm:$0xff]
        %v1009 = vld [vmem:[%s296 + $0x1104] sm:$0xf]
        %v1010 = vld [vmem:[%s296 + $0x1108] sm:$0xff]
        %v1011 = vld [vmem:[%s296 + $0x1110] sm:$0xff]
        %v1012 = vld [vmem:[%s296 + $0x1118] sm:$0xf]
        %v1013 = vld [vmem:[%s296 + $0x111c] sm:$0xff]
        %v1014 = vld [vmem:[%s296 + $0x1124] sm:$0xff]
        %v1015 = vld [vmem:[%s296 + $0x112c] sm:$0xf]
        %v1016 = vld [vmem:[%s296 + $0x1130] sm:$0xff]
        %v1017 = vld [vmem:[%s296 + $0x1138] sm:$0xff]
        %v1018 = vld [vmem:[%s296 + $0x1140] sm:$0xf]
        %v1019 = vld [vmem:[%s296 + $0x1144] sm:$0xff]
        %v1020 = vld [vmem:[%s296 + $0x114c] sm:$0xff]
        %v1021 = vld [vmem:[%s296 + $0x1154] sm:$0xf]
        %v1022 = vld [vmem:[%s296 + $0x1158] sm:$0xff]
        %v1023 = vld [vmem:[%s296 + $0x1160] sm:$0xff]
        %v1024 = vld [vmem:[%s296 + $0x1168] sm:$0xf]
        %v1025 = vld [vmem:[%s296 + $0x116c] sm:$0xff]
        %v1026 = vld [vmem:[%s296 + $0x1174] sm:$0xff]
        %v1027 = vld [vmem:[%s296 + $0x117c] sm:$0xf]
        %v1028 = vld [vmem:[%s296 + $0x1180] sm:$0xff]
        %v1029 = vld [vmem:[%s296 + $0x1188] sm:$0xff]
        %v1030 = vld [vmem:[%s296 + $0x1190] sm:$0xf]
        %v1031 = vld [vmem:[%s296 + $0x1194] sm:$0xff]
        %v1032 = vld [vmem:[%s296 + $0x119c] sm:$0xff]
        %v1033 = vld [vmem:[%s296 + $0x11a4] sm:$0xf]
        %v1034 = vld [vmem:[%s296 + $0x11a8] sm:$0xff]
        %v1035 = vld [vmem:[%s296 + $0x11b0] sm:$0xff]
        %v1036 = vld [vmem:[%s296 + $0x11b8] sm:$0xf]
        %v1037 = vld [vmem:[%s296 + $0x11bc] sm:$0xff]
        %v1038 = vld [vmem:[%s296 + $0x11c4] sm:$0xff]
        %v1039 = vld [vmem:[%s296 + $0x11cc] sm:$0xf]
        %v1040 = vld [vmem:[%s296 + $0x11d0] sm:$0xff]
        %v1041 = vld [vmem:[%s296 + $0x11d8] sm:$0xff]
        %v1042 = vld [vmem:[%s296 + $0x11e0] sm:$0xf]
        %v1043 = vld [vmem:[%s296 + $0x11e4] sm:$0xff]
        %v1044 = vld [vmem:[%s296 + $0x11ec] sm:$0xff]
        %v1045 = vld [vmem:[%s296 + $0x11f4] sm:$0xf]
        %v1046 = vld [vmem:[%s296 + $0x11f8] sm:$0xff]
        %v1047 = vld [vmem:[%s296 + $0x1200] sm:$0xff]
        %v1048 = vld [vmem:[%s296 + $0x1208] sm:$0xf]
        %v1049 = vld [vmem:[%s296 + $0x120c] sm:$0xff]
        %v1050 = vld [vmem:[%s296 + $0x1214] sm:$0xff]
        %v1051 = vld [vmem:[%s296 + $0x121c] sm:$0xf]
        %v1052 = vld [vmem:[%s296 + $0x1220] sm:$0xff]
        %v1053 = vld [vmem:[%s296 + $0x1228] sm:$0xff]
        %v1054 = vld [vmem:[%s296 + $0x1230] sm:$0xf]
        %v1055 = vld [vmem:[%s296 + $0x1234] sm:$0xff]
        %v1056 = vld [vmem:[%s296 + $0x123c] sm:$0xff]
        %v1057 = vld [vmem:[%s296 + $0x1244] sm:$0xf]
        %v1058 = vld [vmem:[%s296 + $0x1248] sm:$0xff]
        %v1059 = vld [vmem:[%s296 + $0x1250] sm:$0xff]
        %v1060 = vld [vmem:[%s296 + $0x1258] sm:$0xf]
        %v1061 = vld [vmem:[%s296 + $0x125c] sm:$0xff]
        %v1062 = vld [vmem:[%s296 + $0x1264] sm:$0xff]
        %v1063 = vld [vmem:[%s296 + $0x126c] sm:$0xf]
        %v1064 = vld [vmem:[%s296 + $0x1270] sm:$0xff]
        %v1065 = vld [vmem:[%s296 + $0x1278] sm:$0xff]
        %v1066 = vld [vmem:[%s296 + $0x1280] sm:$0xf]
        %v1067 = vld [vmem:[%s296 + $0x1284] sm:$0xff]
        %v1068 = vld [vmem:[%s296 + $0x128c] sm:$0xff]
        %v1069 = vld [vmem:[%s296 + $0x1294] sm:$0xf]
        %v1070 = vld [vmem:[%s296 + $0x1298] sm:$0xff]
        %v1071 = vld [vmem:[%s296 + $0x12a0] sm:$0xff]
        %v1072 = vld [vmem:[%s296 + $0x12a8] sm:$0xf]
        %v1073 = vld [vmem:[%s296 + $0x12ac] sm:$0xff]
        %v1074 = vld [vmem:[%s296 + $0x12b4] sm:$0xff]
        %v1075 = vld [vmem:[%s296 + $0x12bc] sm:$0xf]
        %v1076 = vld [vmem:[%s296 + $0x12c0] sm:$0xff]
        %v1077 = vld [vmem:[%s296 + $0x12c8] sm:$0xff]
        %v1078 = vld [vmem:[%s296 + $0x12d0] sm:$0xf]
        %v1079 = vld [vmem:[%s296 + $0x12d4] sm:$0xff]
        %v1080 = vld [vmem:[%s296 + $0x12dc] sm:$0xff]
        %v1081 = vld [vmem:[%s296 + $0x12e4] sm:$0xf]
        %v1082 = vld [vmem:[%s296 + $0x12e8] sm:$0xff]
        %v1083 = vld [vmem:[%s296 + $0x12f0] sm:$0xff]
        %v1084 = vld [vmem:[%s296 + $0x12f8] sm:$0xf]
        %v1085 = vld [vmem:[%s296 + $0x12fc] sm:$0xff]
        %v1086 = vld [vmem:[%s296 + $0x1304] sm:$0xff]
        %v1087 = vld [vmem:[%s296 + $0x130c] sm:$0xf]
        %v1088 = vld [vmem:[%s296 + $0x1310] sm:$0xff]
        %v1089 = vld [vmem:[%s296 + $0x1318] sm:$0xff]
        %v1090 = vld [vmem:[%s296 + $0x1320] sm:$0xf]
        %v1091 = vld [vmem:[%s296 + $0x1324] sm:$0xff]
        %v1092 = vld [vmem:[%s296 + $0x132c] sm:$0xff]
        %v1093 = vld [vmem:[%s296 + $0x1334] sm:$0xf]
        %v1094 = vld [vmem:[%s296 + $0x1338] sm:$0xff]
        %v1095 = vld [vmem:[%s296 + $0x1340] sm:$0xff]
        %v1096 = vld [vmem:[%s296 + $0x1348] sm:$0xf]
        %v1097 = vld [vmem:[%s296 + $0x134c] sm:$0xff]
        %v1098 = vld [vmem:[%s296 + $0x1354] sm:$0xff]
        %v1099 = vld [vmem:[%s296 + $0x135c] sm:$0xf]
        %v1100 = vld [vmem:[%s296 + $0x1360] sm:$0xff]
        %v1101 = vld [vmem:[%s296 + $0x1368] sm:$0xff]
        %v1102 = vld [vmem:[%s296 + $0x1370] sm:$0xf]
        %v1103 = vld [vmem:[%s296 + $0x1374] sm:$0xff]
        %v1104 = vld [vmem:[%s296 + $0x137c] sm:$0xff]
        %v1105 = vld [vmem:[%s296 + $0x1384] sm:$0xf]
        %v1106 = vld [vmem:[%s296 + $0x1388] sm:$0xff]
        %v1107 = vld [vmem:[%s296 + $0x1390] sm:$0xff]
        %v1108 = vld [vmem:[%s296 + $0x1398] sm:$0xf]
        %v1109 = vld [vmem:[%s296 + $0x139c] sm:$0xff]
        %v1110 = vld [vmem:[%s296 + $0x13a4] sm:$0xff]
        %v1111 = vld [vmem:[%s296 + $0x13ac] sm:$0xf]
        %v1112 = vld [vmem:[%s296 + $0x13b0] sm:$0xff]
        %v1113 = vld [vmem:[%s296 + $0x13b8] sm:$0xff]
        %v1114 = vld [vmem:[%s296 + $0x13c0] sm:$0xf]
        %v1115 = vld [vmem:[%s296 + $0x13c4] sm:$0xff]
        %v1116 = vld [vmem:[%s296 + $0x13cc] sm:$0xff]
        %v1117 = vld [vmem:[%s296 + $0x13d4] sm:$0xf]
        %v1118 = vld [vmem:[%s296 + $0x13d8] sm:$0xff]
        %v1119 = vld [vmem:[%s296 + $0x13e0] sm:$0xff]
        %v1120 = vld [vmem:[%s296 + $0x13e8] sm:$0xf]
        %v1121 = vld [vmem:[%s296 + $0x13ec] sm:$0xff]
        %v1122 = vld [vmem:[%s296 + $0x13f4] sm:$0xff]
        %v1123 = vld [vmem:[%s296 + $0x13fc] sm:$0xf]
        %v1124 = vld [vmem:[%s296 + $0x1400] sm:$0xff]
        %v1125 = vld [vmem:[%s296 + $0x1408] sm:$0xff]
        %v1126 = vld [vmem:[%s296 + $0x1410] sm:$0xf]
        %v1127 = vld [vmem:[%s296 + $0x1414] sm:$0xff]
        %v1128 = vld [vmem:[%s296 + $0x141c] sm:$0xff]
        %v1129 = vld [vmem:[%s296 + $0x1424] sm:$0xf]
        %v1130 = vld [vmem:[%s296 + $0x1428] sm:$0xff]
        %v1131 = vld [vmem:[%s296 + $0x1430] sm:$0xff]
        %v1132 = vld [vmem:[%s296 + $0x1438] sm:$0xf]
        %v1133 = vld [vmem:[%s296 + $0x143c] sm:$0xff]
        %v1134 = vld [vmem:[%s296 + $0x1444] sm:$0xff]
        %v1135 = vld [vmem:[%s296 + $0x144c] sm:$0xf]
        %v1136 = vld [vmem:[%s296 + $0x1450] sm:$0xff]
        %v1137 = vld [vmem:[%s296 + $0x1458] sm:$0xff]
        %v1138 = vld [vmem:[%s296 + $0x1460] sm:$0xf]
        %v1139 = vld [vmem:[%s296 + $0x1464] sm:$0xff]
        %v1140 = vld [vmem:[%s296 + $0x146c] sm:$0xff]
        %v1141 = vld [vmem:[%s296 + $0x1474] sm:$0xf]
        %v1142 = vld [vmem:[%s296 + $0x1478] sm:$0xff]
        %v1143 = vld [vmem:[%s296 + $0x1480] sm:$0xff]
        %v1144 = vld [vmem:[%s296 + $0x1488] sm:$0xf]
        %v1145 = vld [vmem:[%s296 + $0x148c] sm:$0xff]
        %v1146 = vld [vmem:[%s296 + $0x1494] sm:$0xff]
        %v1147 = vld [vmem:[%s296 + $0x149c] sm:$0xf]
        %v1148 = vld [vmem:[%s296 + $0x14a0] sm:$0xff]
        %v1149 = vld [vmem:[%s296 + $0x14a8] sm:$0xff]
        %v1150 = vld [vmem:[%s296 + $0x14b0] sm:$0xf]
        %v1151 = vld [vmem:[%s296 + $0x14b4] sm:$0xff]
        %v1152 = vld [vmem:[%s296 + $0x14bc] sm:$0xff]
        %v1153 = vld [vmem:[%s296 + $0x14c4] sm:$0xf]
        %v1154 = vld [vmem:[%s296 + $0x14c8] sm:$0xff]
        %v1155 = vld [vmem:[%s296 + $0x14d0] sm:$0xff]
        %v1156 = vld [vmem:[%s296 + $0x14d8] sm:$0xf]
        %v1157 = vld [vmem:[%s296 + $0x14dc] sm:$0xff]
        %v1158 = vld [vmem:[%s296 + $0x14e4] sm:$0xff]
        %v1159 = vld [vmem:[%s296 + $0x14ec] sm:$0xf]
        %v1160 = vld [vmem:[%s296 + $0x14f0] sm:$0xff]
        %v1161 = vld [vmem:[%s296 + $0x14f8] sm:$0xff]
        %v1162 = vld [vmem:[%s296 + $0x1500] sm:$0xf]
        %v1163 = vld [vmem:[%s296 + $0x1504] sm:$0xff]
        %v1164 = vld [vmem:[%s296 + $0x150c] sm:$0xff]
        %v1165 = vld [vmem:[%s296 + $0x1514] sm:$0xf]
        %v1166 = vld [vmem:[%s296 + $0x1518] sm:$0xff]
        %v1167 = vld [vmem:[%s296 + $0x1520] sm:$0xff]
        %v1168 = vld [vmem:[%s296 + $0x1528] sm:$0xf]
        %v1169 = vld [vmem:[%s296 + $0x152c] sm:$0xff]
        %v1170 = vld [vmem:[%s296 + $0x1534] sm:$0xff]
        %v1171 = vld [vmem:[%s296 + $0x153c] sm:$0xf]
        %v1172 = vld [vmem:[%s296 + $0x1540] sm:$0xff]
        %v1173 = vld [vmem:[%s296 + $0x1548] sm:$0xff]
        %v1174 = vld [vmem:[%s296 + $0x1550] sm:$0xf]
        %v1175 = vld [vmem:[%s296 + $0x1554] sm:$0xff]
        %v1176 = vld [vmem:[%s296 + $0x155c] sm:$0xff]
        %v1177 = vld [vmem:[%s296 + $0x1564] sm:$0xf]
        %v1178 = vld [vmem:[%s296 + $0x1568] sm:$0xff]
        %v1179 = vld [vmem:[%s296 + $0x1570] sm:$0xff]
        %v1180 = vld [vmem:[%s296 + $0x1578] sm:$0xf]
        %v1181 = vld [vmem:[%s296 + $0x157c] sm:$0xff]
        %v1182 = vld [vmem:[%s296 + $0x1584] sm:$0xff]
        %v1183 = vld [vmem:[%s296 + $0x158c] sm:$0xf]
        %v1184 = vld [vmem:[%s296 + $0x1590] sm:$0xff]
        %v1185 = vld [vmem:[%s296 + $0x1598] sm:$0xff]
        %v1186 = vld [vmem:[%s296 + $0x15a0] sm:$0xf]
        %v1187 = vld [vmem:[%s296 + $0x15a4] sm:$0xff]
        %v1188 = vld [vmem:[%s296 + $0x15ac] sm:$0xff]
        %v1189 = vld [vmem:[%s296 + $0x15b4] sm:$0xf]
        %v1190 = vld [vmem:[%s296 + $0x15b8] sm:$0xff]
        %v1191 = vld [vmem:[%s296 + $0x15c0] sm:$0xff]
        %v1192 = vld [vmem:[%s296 + $0x15c8] sm:$0xf]
        %v1193 = vld [vmem:[%s296 + $0x15cc] sm:$0xff]
        %v1194 = vld [vmem:[%s296 + $0x15d4] sm:$0xff]
        %v1195 = vld [vmem:[%s296 + $0x15dc] sm:$0xf]
        %v1196 = vld [vmem:[%s296 + $0x15e0] sm:$0xff]
        %v1197 = vld [vmem:[%s296 + $0x15e8] sm:$0xff]
        %v1198 = vld [vmem:[%s296 + $0x15f0] sm:$0xf]
        %v1199 = vld [vmem:[%s296 + $0x15f4] sm:$0xff]
        %v1200 = vld [vmem:[%s296 + $0x15fc] sm:$0xff]
        %v1201 = vld [vmem:[%s296 + $0x1604] sm:$0xf]
        %v1202 = vld [vmem:[%s296 + $0x1608] sm:$0xff]
        %v1203 = vld [vmem:[%s296 + $0x1610] sm:$0xff]
        %v1204 = vld [vmem:[%s296 + $0x1618] sm:$0xf]
        %v1205 = vld [vmem:[%s296 + $0x161c] sm:$0xff]
        %v1206 = vld [vmem:[%s296 + $0x1624] sm:$0xff]
        %v1207 = vld [vmem:[%s296 + $0x162c] sm:$0xf]
        %v1208 = vld [vmem:[%s296 + $0x1630] sm:$0xff]
        %v1209 = vld [vmem:[%s296 + $0x1638] sm:$0xff]
        %v1210 = vld [vmem:[%s296 + $0x1640] sm:$0xf]
        %v1211 = vld [vmem:[%s296 + $0x1644] sm:$0xff]
        %v1212 = vld [vmem:[%s296 + $0x164c] sm:$0xff]
        %v1213 = vld [vmem:[%s296 + $0x1654] sm:$0xf]
        %v1214 = vld [vmem:[%s296 + $0x1658] sm:$0xff]
        %v1215 = vld [vmem:[%s296 + $0x1660] sm:$0xff]
        %v1216 = vld [vmem:[%s296 + $0x1668] sm:$0xf]
        %v1217 = vld [vmem:[%s296 + $0x166c] sm:$0xff]
        %v1218 = vld [vmem:[%s296 + $0x1674] sm:$0xff]
        %v1219 = vld [vmem:[%s296 + $0x167c] sm:$0xf]
        %v1220 = vld [vmem:[%s296 + $0x1680] sm:$0xff]
        %v1221 = vld [vmem:[%s296 + $0x1688] sm:$0xff]
        %v1222 = vld [vmem:[%s296 + $0x1690] sm:$0xf]
        %v1223 = vld [vmem:[%s296 + $0x1694] sm:$0xff]
        %v1224 = vld [vmem:[%s296 + $0x169c] sm:$0xff]
        %v1225 = vld [vmem:[%s296 + $0x16a4] sm:$0xf]
        %v1226 = vld [vmem:[%s296 + $0x16a8] sm:$0xff]
        %v1227 = vld [vmem:[%s296 + $0x16b0] sm:$0xff]
        %v1228 = vld [vmem:[%s296 + $0x16b8] sm:$0xf]
        %v1229 = vld [vmem:[%s296 + $0x16bc] sm:$0xff]
        %v1230 = vld [vmem:[%s296 + $0x16c4] sm:$0xff]
        %v1231 = vld [vmem:[%s296 + $0x16cc] sm:$0xf]
        %v1232 = vld [vmem:[%s296 + $0x16d0] sm:$0xff]
        %v1233 = vld [vmem:[%s296 + $0x16d8] sm:$0xff]
        %v1234 = vld [vmem:[%s296 + $0x16e0] sm:$0xf]
        %v1235 = vld [vmem:[%s296 + $0x16e4] sm:$0xff]
        %v1236 = vld [vmem:[%s296 + $0x16ec] sm:$0xff]
        %v1237 = vld [vmem:[%s296 + $0x16f4] sm:$0xf]
        %v1238 = vld [vmem:[%s296 + $0x16f8] sm:$0xff]
        %v1239 = vld [vmem:[%s296 + $0x1700] sm:$0xff]
        %v1240 = vld [vmem:[%s296 + $0x1708] sm:$0xf]
        %v1241 = vld [vmem:[%s296 + $0x170c] sm:$0xff]
        %v1242 = vld [vmem:[%s296 + $0x1714] sm:$0xff]
        %v1243 = vld [vmem:[%s296 + $0x171c] sm:$0xf]
        %v1244 = vld [vmem:[%s296 + $0x1720] sm:$0xff]
        %v1245 = vld [vmem:[%s296 + $0x1728] sm:$0xff]
        %v1246 = vld [vmem:[%s296 + $0x1730] sm:$0xf]
        %v1247 = vld [vmem:[%s296 + $0x1734] sm:$0xff]
        %v1248 = vld [vmem:[%s296 + $0x173c] sm:$0xff]
        %v1249 = vld [vmem:[%s296 + $0x1744] sm:$0xf]
        %v1250 = vld [vmem:[%s296 + $0x1748] sm:$0xff]
        %v1251 = vld [vmem:[%s296 + $0x1750] sm:$0xff]
        %v1252 = vld [vmem:[%s296 + $0x1758] sm:$0xf]
        %v1253 = vld [vmem:[%s296 + $0x175c] sm:$0xff]
        %v1254 = vld [vmem:[%s296 + $0x1764] sm:$0xff]
        %v1255 = vld [vmem:[%s296 + $0x176c] sm:$0xf]
        %v1256 = vld [vmem:[%s296 + $0x1770] sm:$0xff]
        %v1257 = vld [vmem:[%s296 + $0x1778] sm:$0xff]
        %v1258 = vld [vmem:[%s296 + $0x1780] sm:$0xf]
        %v1259 = vld [vmem:[%s296 + $0x1784] sm:$0xff]
        %v1260 = vld [vmem:[%s296 + $0x178c] sm:$0xff]
        %v1261 = vld [vmem:[%s296 + $0x1794] sm:$0xf]
        %v1262 = vld [vmem:[%s296 + $0x1798] sm:$0xff]
        %v1263 = vld [vmem:[%s296 + $0x17a0] sm:$0xff]
        %v1264 = vld [vmem:[%s296 + $0x17a8] sm:$0xf]
        %v1265 = vld [vmem:[%s296 + $0x17ac] sm:$0xff]
        %v1266 = vld [vmem:[%s296 + $0x17b4] sm:$0xff]
        %v1267 = vld [vmem:[%s296 + $0x17bc] sm:$0xf]
        %v1268 = vld [vmem:[%s296 + $0x17c0] sm:$0xff]
        %v1269 = vld [vmem:[%s296 + $0x17c8] sm:$0xff]
        %v1270 = vld [vmem:[%s296 + $0x17d0] sm:$0xf]
        %v1271 = vld [vmem:[%s296 + $0x17d4] sm:$0xff]
        %v1272 = vld [vmem:[%s296 + $0x17dc] sm:$0xff]
        %v1273 = vld [vmem:[%s296 + $0x17e4] sm:$0xf]
        %v1274 = vld [vmem:[%s296 + $0x17e8] sm:$0xff]
        %v1275 = vld [vmem:[%s296 + $0x17f0] sm:$0xff]
        %v1276 = vld [vmem:[%s296 + $0x17f8] sm:$0xf]
        %v1277 = vld [vmem:[%s296 + $0x17fc] sm:$0xff]
        %v1278 = vld [vmem:[%s296 + $0x1804] sm:$0xff]
        %v1279 = vld [vmem:[%s296 + $0x180c] sm:$0xf]
        %v1280 = vld [vmem:[%s296 + $0x1810] sm:$0xff]
        %v1281 = vld [vmem:[%s296 + $0x1818] sm:$0xff]
        %v1282 = vld [vmem:[%s296 + $0x1820] sm:$0xf]
        %v1283 = vld [vmem:[%s296 + $0x1824] sm:$0xff]
        %v1284 = vld [vmem:[%s296 + $0x182c] sm:$0xff]
        %v1285 = vld [vmem:[%s296 + $0x1834] sm:$0xf]
        %v1286 = vld [vmem:[%s296 + $0x1838] sm:$0xff]
        %v1287 = vld [vmem:[%s296 + $0x1840] sm:$0xff]
        %v1288 = vld [vmem:[%s296 + $0x1848] sm:$0xf]
        %v1289 = vld [vmem:[%s296 + $0x184c] sm:$0xff]
        %v1290 = vld [vmem:[%s296 + $0x1854] sm:$0xff]
        %v1291 = vld [vmem:[%s296 + $0x185c] sm:$0xf]
        %v1292 = vld [vmem:[%s296 + $0x1860] sm:$0xff]
        %v1293 = vld [vmem:[%s296 + $0x1868] sm:$0xff]
        %v1294 = vld [vmem:[%s296 + $0x1870] sm:$0xf]
        %v1295 = vld [vmem:[%s296 + $0x1874] sm:$0xff]
        %v1296 = vld [vmem:[%s296 + $0x187c] sm:$0xff]
        %v1297 = vld [vmem:[%s296 + $0x1884] sm:$0xf]
        %v1298 = vld [vmem:[%s296 + $0x1888] sm:$0xff]
        %v1299 = vld [vmem:[%s296 + $0x1890] sm:$0xff]
        %v1300 = vld [vmem:[%s296 + $0x1898] sm:$0xf]
        %v1301 = vld [vmem:[%s296 + $0x189c] sm:$0xff]
        %v1302 = vld [vmem:[%s296 + $0x18a4] sm:$0xff]
        %v1303 = vld [vmem:[%s296 + $0x18ac] sm:$0xf]
        %v1304 = vld [vmem:[%s296 + $0x18b0] sm:$0xff]
        %v1305 = vld [vmem:[%s296 + $0x18b8] sm:$0xff]
        %v1306 = vld [vmem:[%s296 + $0x18c0] sm:$0xf]
        %v1307 = vld [vmem:[%s296 + $0x18c4] sm:$0xff]
        %v1308 = vld [vmem:[%s296 + $0x18cc] sm:$0xff]
        %v1309 = vld [vmem:[%s296 + $0x18d4] sm:$0xf]
        %v1310 = vld [vmem:[%s296 + $0x18d8] sm:$0xff]
        %v1311 = vld [vmem:[%s296 + $0x18e0] sm:$0xff]
        %v1312 = vld [vmem:[%s296 + $0x18e8] sm:$0xf]
        %v1313 = vld [vmem:[%s296 + $0x18ec] sm:$0xff]
        %v1314 = vld [vmem:[%s296 + $0x18f4] sm:$0xff]
        %v1315 = vld [vmem:[%s296 + $0x18fc] sm:$0xf]
        %v1316 = vld [vmem:[%s296 + $0x1900] sm:$0xff]
        %v1317 = vld [vmem:[%s296 + $0x1908] sm:$0xff]
        %v1318 = vld [vmem:[%s296 + $0x1910] sm:$0xf]
        %v1319 = vld [vmem:[%s296 + $0x1914] sm:$0xff]
        %v1320 = vld [vmem:[%s296 + $0x191c] sm:$0xff]
        %v1321 = vld [vmem:[%s296 + $0x1924] sm:$0xf]
        %v1322 = vld [vmem:[%s296 + $0x1928] sm:$0xff]
        %v1323 = vld [vmem:[%s296 + $0x1930] sm:$0xff]
        %v1324 = vld [vmem:[%s296 + $0x1938] sm:$0xf]
        %v1325 = vld [vmem:[%s296 + $0x193c] sm:$0xff]
        %v1326 = vld [vmem:[%s296 + $0x1944] sm:$0xff]
        %v1327 = vld [vmem:[%s296 + $0x194c] sm:$0xf]
        %v1328 = vld [vmem:[%s296 + $0x1950] sm:$0xff]
        %v1329 = vld [vmem:[%s296 + $0x1958] sm:$0xff]
        %v1330 = vld [vmem:[%s296 + $0x1960] sm:$0xf]
        %v1331 = vld [vmem:[%s296 + $0x1964] sm:$0xff]
        %v1332 = vld [vmem:[%s296 + $0x196c] sm:$0xff]
        %v1333 = vld [vmem:[%s296 + $0x1974] sm:$0xf]
        %v1334 = vld [vmem:[%s296 + $0x1978] sm:$0xff]
        %v1335 = vld [vmem:[%s296 + $0x1980] sm:$0xff]
        %v1336 = vld [vmem:[%s296 + $0x1988] sm:$0xf]
        %v1337 = vld [vmem:[%s296 + $0x198c] sm:$0xff]
        %v1338 = vld [vmem:[%s296 + $0x1994] sm:$0xff]
        %v1339 = vld [vmem:[%s296 + $0x199c] sm:$0xf]
        %v1340 = vld [vmem:[%s296 + $0x19a0] sm:$0xff]
        %v1341 = vld [vmem:[%s296 + $0x19a8] sm:$0xff]
        %v1342 = vld [vmem:[%s296 + $0x19b0] sm:$0xf]
        %v1343 = vld [vmem:[%s296 + $0x19b4] sm:$0xff]
        %v1344 = vld [vmem:[%s296 + $0x19bc] sm:$0xff]
        %v1345 = vld [vmem:[%s296 + $0x19c4] sm:$0xf]
        %v1346 = vld [vmem:[%s296 + $0x19c8] sm:$0xff]
        %v1347 = vld [vmem:[%s296 + $0x19d0] sm:$0xff]
        %v1348 = vld [vmem:[%s296 + $0x19d8] sm:$0xf]
        %v1349 = vld [vmem:[%s296 + $0x19dc] sm:$0xff]
        %v1350 = vld [vmem:[%s296 + $0x19e4] sm:$0xff]
        %v1351 = vld [vmem:[%s296 + $0x19ec] sm:$0xf]
        %v1352 = vld [vmem:[%s296 + $0x19f0] sm:$0xff]
        %v1353 = vld [vmem:[%s296 + $0x19f8] sm:$0xff]
        %v1354 = vld [vmem:[%s296 + $0x1a00] sm:$0xf]
        %v1355 = vld [vmem:[%s296 + $0x1a04] sm:$0xff]
        %v1356 = vld [vmem:[%s296 + $0x1a0c] sm:$0xff]
        %v1357 = vld [vmem:[%s296 + $0x1a14] sm:$0xf]
        %v1358 = vld [vmem:[%s296 + $0x1a18] sm:$0xff]
        %v1359 = vld [vmem:[%s296 + $0x1a20] sm:$0xff]
        %v1360 = vld [vmem:[%s296 + $0x1a28] sm:$0xf]
        %v1361 = vld [vmem:[%s296 + $0x1a2c] sm:$0xff]
        %v1362 = vld [vmem:[%s296 + $0x1a34] sm:$0xff]
        %v1363 = vld [vmem:[%s296 + $0x1a3c] sm:$0xf]
        %v1367 = vcombine.high %v353, %v353
        %v1369 = vunpack.c.l.s4 1966171168
        %v1370 = vunpack.c.0.s8 %v1369
        %v1371 = vlaneseq
        %v1372 = vshrl.u32 %v1371, 7
        %v1373 = vsub.s32 %v1370, %v1372
        %v1374 = vrot.slane %v353, %v1373
        %v1376 = vunpack.c.l.s4 1966171168
        %v1377 = vunpack.c.0.s8 %v1376
        %v1378 = vlaneseq
        %v1379 = vshrl.u32 %v1378, 7
        %v1380 = vsub.s32 %v1377, %v1379
        %v1381 = vrot.slane %v1367, %v1380
        %v1382 = vcombine.high %v1374, %v1374
        %v1383 = vcombine.high %v1381, %v1381
        %v1385 = vunpack.c.l.s4 1966171168
        %v1386 = vunpack.c.0.s8 %v1385
        %v1387 = vlaneseq
        %v1388 = vshrl.u32 %v1387, 7
        %v1389 = vsub.s32 %v1386, %v1388
        %v1390 = vrot.slane %v1374, %v1389
        %v1392 = vunpack.c.l.s4 1966171168
        %v1393 = vunpack.c.0.s8 %v1392
        %v1394 = vlaneseq
        %v1395 = vshrl.u32 %v1394, 7
        %v1396 = vsub.s32 %v1393, %v1395
        %v1397 = vrot.slane %v1381, %v1396
        %v1399 = vunpack.c.l.s4 1966171168
        %v1400 = vunpack.c.0.s8 %v1399
        %v1401 = vlaneseq
        %v1402 = vshrl.u32 %v1401, 7
        %v1403 = vsub.s32 %v1400, %v1402
        %v1404 = vrot.slane %v1382, %v1403
        %v1406 = vunpack.c.l.s4 1966171168
        %v1407 = vunpack.c.0.s8 %v1406
        %v1408 = vlaneseq
        %v1409 = vshrl.u32 %v1408, 7
        %v1410 = vsub.s32 %v1407, %v1409
        %v1411 = vrot.slane %v1383, %v1410
        %v1412 = vcombine.high %v1390, %v1390
        %v1413 = vcombine.high %v1397, %v1397
        %v1414 = vcombine.high %v1404, %v1404
        %v1415 = vcombine.high %v1411, %v1411
        %v1416 = vcombine.high %v354, %v354
        %v1418 = vunpack.c.l.s4 1966171168
        %v1419 = vunpack.c.0.s8 %v1418
        %v1420 = vlaneseq
        %v1421 = vshrl.u32 %v1420, 7
        %v1422 = vsub.s32 %v1419, %v1421
        %v1423 = vrot.slane %v354, %v1422
        %v1425 = vunpack.c.l.s4 1966171168
        %v1426 = vunpack.c.0.s8 %v1425
        %v1427 = vlaneseq
        %v1428 = vshrl.u32 %v1427, 7
        %v1429 = vsub.s32 %v1426, %v1428
        %v1430 = vrot.slane %v1416, %v1429
        %v1431 = vcombine.high %v1423, %v1423
        %v1432 = vcombine.high %v1430, %v1430
        %v1434 = vunpack.c.l.s4 1966171168
        %v1435 = vunpack.c.0.s8 %v1434
        %v1436 = vlaneseq
        %v1437 = vshrl.u32 %v1436, 7
        %v1438 = vsub.s32 %v1435, %v1437
        %v1439 = vrot.slane %v1423, %v1438
        %v1441 = vunpack.c.l.s4 1966171168
        %v1442 = vunpack.c.0.s8 %v1441
        %v1443 = vlaneseq
        %v1444 = vshrl.u32 %v1443, 7
        %v1445 = vsub.s32 %v1442, %v1444
        %v1446 = vrot.slane %v1430, %v1445
        %v1448 = vunpack.c.l.s4 1966171168
        %v1449 = vunpack.c.0.s8 %v1448
        %v1450 = vlaneseq
        %v1451 = vshrl.u32 %v1450, 7
        %v1452 = vsub.s32 %v1449, %v1451
        %v1453 = vrot.slane %v1431, %v1452
        %v1455 = vunpack.c.l.s4 1966171168
        %v1456 = vunpack.c.0.s8 %v1455
        %v1457 = vlaneseq
        %v1458 = vshrl.u32 %v1457, 7
        %v1459 = vsub.s32 %v1456, %v1458
        %v1460 = vrot.slane %v1432, %v1459
        %v1461 = vcombine.high %v1439, %v1439
        %v1462 = vcombine.high %v1446, %v1446
        %v1463 = vcombine.high %v1453, %v1453
        %v1464 = vcombine.high %v1460, %v1460
        %v1465 = vcombine.high %v355, %v355
        %v1467 = vunpack.c.l.s4 1966171168
        %v1468 = vunpack.c.0.s8 %v1467
        %v1469 = vlaneseq
        %v1470 = vshrl.u32 %v1469, 7
        %v1471 = vsub.s32 %v1468, %v1470
        %v1472 = vrot.slane %v355, %v1471
        %v1474 = vunpack.c.l.s4 1966171168
        %v1475 = vunpack.c.0.s8 %v1474
        %v1476 = vlaneseq
        %v1477 = vshrl.u32 %v1476, 7
        %v1478 = vsub.s32 %v1475, %v1477
        %v1479 = vrot.slane %v1465, %v1478
        %v1480 = vcombine.high %v1472, %v1472
        %v1482 = vunpack.c.l.s4 1966171168
        %v1483 = vunpack.c.0.s8 %v1482
        %v1484 = vlaneseq
        %v1485 = vshrl.u32 %v1484, 7
        %v1486 = vsub.s32 %v1483, %v1485
        %v1487 = vrot.slane %v1472, %v1486
        %v1489 = vunpack.c.l.s4 1966171168
        %v1490 = vunpack.c.0.s8 %v1489
        %v1491 = vlaneseq
        %v1492 = vshrl.u32 %v1491, 7
        %v1493 = vsub.s32 %v1490, %v1492
        %v1494 = vrot.slane %v1479, %v1493
        %v1496 = vunpack.c.l.s4 1966171168
        %v1497 = vunpack.c.0.s8 %v1496
        %v1498 = vlaneseq
        %v1499 = vshrl.u32 %v1498, 7
        %v1500 = vsub.s32 %v1497, %v1499
        %v1501 = vrot.slane %v1480, %v1500
        %v1502 = vcombine.high %v1487, %v1487
        %v1503 = vcombine.high %v1501, %v1501
        %v2533 = vunpack.c.l.b16 %v356
        %v2534 = vunpack.c.h.b16 %v356
        %v2535 = vunpack.c.l.b16 %v357
        %v2536 = vunpack.c.h.b16 %v357
        %v2537 = vunpack.c.l.b16 %v358
        %v2538 = vunpack.c.l.b16 %v359
        %v2539 = vunpack.c.h.b16 %v359
        %v2540 = vunpack.c.l.b16 %v360
        %v2541 = vunpack.c.h.b16 %v360
        %v2542 = vunpack.c.l.b16 %v361
        %v2543 = vunpack.c.l.b16 %v362
        %v2544 = vunpack.c.h.b16 %v362
        %v2545 = vunpack.c.l.b16 %v363
        %v2546 = vunpack.c.h.b16 %v363
        %v2547 = vunpack.c.l.b16 %v364
        %v2548 = vunpack.c.l.b16 %v365
        %v2549 = vunpack.c.h.b16 %v365
        %v2550 = vunpack.c.l.b16 %v366
        %v2551 = vunpack.c.h.b16 %v366
        %v2552 = vunpack.c.l.b16 %v367
        %v2553 = vunpack.c.l.b16 %v368
        %v2554 = vunpack.c.h.b16 %v368
        %v2555 = vunpack.c.l.b16 %v369
        %v2556 = vunpack.c.h.b16 %v369
        %v2557 = vunpack.c.l.b16 %v370
        %v2558 = vunpack.c.l.b16 %v371
        %v2559 = vunpack.c.h.b16 %v371
        %v2560 = vunpack.c.l.b16 %v372
        %v2561 = vunpack.c.h.b16 %v372
        %v2562 = vunpack.c.l.b16 %v373
        %v2563 = vunpack.c.l.b16 %v374
        %v2564 = vunpack.c.h.b16 %v374
        %v2565 = vunpack.c.l.b16 %v375
        %v2566 = vunpack.c.h.b16 %v375
        %v2567 = vunpack.c.l.b16 %v376
        %v2568 = vunpack.c.l.b16 %v377
        %v2569 = vunpack.c.h.b16 %v377
        %v2570 = vunpack.c.l.b16 %v378
        %v2571 = vunpack.c.h.b16 %v378
        %v2572 = vunpack.c.l.b16 %v379
        %v2573 = vunpack.c.l.b16 %v380
        %v2574 = vunpack.c.h.b16 %v380
        %v2575 = vunpack.c.l.b16 %v381
        %v2576 = vunpack.c.h.b16 %v381
        %v2577 = vunpack.c.l.b16 %v382
        %v2578 = vunpack.c.l.b16 %v383
        %v2579 = vunpack.c.h.b16 %v383
        %v2580 = vunpack.c.l.b16 %v384
        %v2581 = vunpack.c.h.b16 %v384
        %v2582 = vunpack.c.l.b16 %v385
        %v2583 = vunpack.c.l.b16 %v386
        %v2584 = vunpack.c.h.b16 %v386
        %v2585 = vunpack.c.l.b16 %v387
        %v2586 = vunpack.c.h.b16 %v387
        %v2587 = vunpack.c.l.b16 %v388
        %v2588 = vunpack.c.l.b16 %v389
        %v2589 = vunpack.c.h.b16 %v389
        %v2590 = vunpack.c.l.b16 %v390
        %v2591 = vunpack.c.h.b16 %v390
        %v2592 = vunpack.c.l.b16 %v391
        %v2593 = vunpack.c.l.b16 %v392
        %v2594 = vunpack.c.h.b16 %v392
        %v2595 = vunpack.c.l.b16 %v393
        %v2596 = vunpack.c.h.b16 %v393
        %v2597 = vunpack.c.l.b16 %v394
        %v2598 = vunpack.c.l.b16 %v395
        %v2599 = vunpack.c.h.b16 %v395
        %v2600 = vunpack.c.l.b16 %v396
        %v2601 = vunpack.c.h.b16 %v396
        %v2602 = vunpack.c.l.b16 %v397
        %v2603 = vunpack.c.l.b16 %v398
        %v2604 = vunpack.c.h.b16 %v398
        %v2605 = vunpack.c.l.b16 %v399
        %v2606 = vunpack.c.h.b16 %v399
        %v2607 = vunpack.c.l.b16 %v400
        %v2608 = vunpack.c.l.b16 %v401
        %v2609 = vunpack.c.h.b16 %v401
        %v2610 = vunpack.c.l.b16 %v402
        %v2611 = vunpack.c.h.b16 %v402
        %v2612 = vunpack.c.l.b16 %v403
        %v2613 = vunpack.c.l.b16 %v404
        %v2614 = vunpack.c.h.b16 %v404
        %v2615 = vunpack.c.l.b16 %v405
        %v2616 = vunpack.c.h.b16 %v405
        %v2617 = vunpack.c.l.b16 %v406
        %v2618 = vunpack.c.l.b16 %v407
        %v2619 = vunpack.c.h.b16 %v407
        %v2620 = vunpack.c.l.b16 %v408
        %v2621 = vunpack.c.h.b16 %v408
        %v2622 = vunpack.c.l.b16 %v409
        %v2623 = vunpack.c.l.b16 %v410
        %v2624 = vunpack.c.h.b16 %v410
        %v2625 = vunpack.c.l.b16 %v411
        %v2626 = vunpack.c.h.b16 %v411
        %v2627 = vunpack.c.l.b16 %v412
        %v2628 = vunpack.c.l.b16 %v413
        %v2629 = vunpack.c.h.b16 %v413
        %v2630 = vunpack.c.l.b16 %v414
        %v2631 = vunpack.c.h.b16 %v414
        %v2632 = vunpack.c.l.b16 %v415
        %v2633 = vunpack.c.l.b16 %v416
        %v2634 = vunpack.c.h.b16 %v416
        %v2635 = vunpack.c.l.b16 %v417
        %v2636 = vunpack.c.h.b16 %v417
        %v2637 = vunpack.c.l.b16 %v418
        %v2638 = vunpack.c.l.b16 %v419
        %v2639 = vunpack.c.h.b16 %v419
        %v2640 = vunpack.c.l.b16 %v420
        %v2641 = vunpack.c.h.b16 %v420
        %v2642 = vunpack.c.l.b16 %v421
        %v2643 = vunpack.c.l.b16 %v422
        %v2644 = vunpack.c.h.b16 %v422
        %v2645 = vunpack.c.l.b16 %v423
        %v2646 = vunpack.c.h.b16 %v423
        %v2647 = vunpack.c.l.b16 %v424
        %v2648 = vunpack.c.l.b16 %v425
        %v2649 = vunpack.c.h.b16 %v425
        %v2650 = vunpack.c.l.b16 %v426
        %v2651 = vunpack.c.h.b16 %v426
        %v2652 = vunpack.c.l.b16 %v427
        %v2653 = vunpack.c.l.b16 %v428
        %v2654 = vunpack.c.h.b16 %v428
        %v2655 = vunpack.c.l.b16 %v429
        %v2656 = vunpack.c.h.b16 %v429
        %v2657 = vunpack.c.l.b16 %v430
        %v2658 = vunpack.c.l.b16 %v431
        %v2659 = vunpack.c.h.b16 %v431
        %v2660 = vunpack.c.l.b16 %v432
        %v2661 = vunpack.c.h.b16 %v432
        %v2662 = vunpack.c.l.b16 %v433
        %v2663 = vunpack.c.l.b16 %v434
        %v2664 = vunpack.c.h.b16 %v434
        %v2665 = vunpack.c.l.b16 %v435
        %v2666 = vunpack.c.h.b16 %v435
        %v2667 = vunpack.c.l.b16 %v436
        %v2668 = vunpack.c.l.b16 %v437
        %v2669 = vunpack.c.h.b16 %v437
        %v2670 = vunpack.c.l.b16 %v438
        %v2671 = vunpack.c.h.b16 %v438
        %v2672 = vunpack.c.l.b16 %v439
        %v2673 = vunpack.c.l.b16 %v440
        %v2674 = vunpack.c.h.b16 %v440
        %v2675 = vunpack.c.l.b16 %v441
        %v2676 = vunpack.c.h.b16 %v441
        %v2677 = vunpack.c.l.b16 %v442
        %v2678 = vunpack.c.l.b16 %v443
        %v2679 = vunpack.c.h.b16 %v443
        %v2680 = vunpack.c.l.b16 %v444
        %v2681 = vunpack.c.h.b16 %v444
        %v2682 = vunpack.c.l.b16 %v445
        %v2683 = vunpack.c.l.b16 %v446
        %v2684 = vunpack.c.h.b16 %v446
        %v2685 = vunpack.c.l.b16 %v447
        %v2686 = vunpack.c.h.b16 %v447
        %v2687 = vunpack.c.l.b16 %v448
        %v2688 = vunpack.c.l.b16 %v449
        %v2689 = vunpack.c.h.b16 %v449
        %v2690 = vunpack.c.l.b16 %v450
        %v2691 = vunpack.c.h.b16 %v450
        %v2692 = vunpack.c.l.b16 %v451
        %v2693 = vunpack.c.l.b16 %v452
        %v2694 = vunpack.c.h.b16 %v452
        %v2695 = vunpack.c.l.b16 %v453
        %v2696 = vunpack.c.h.b16 %v453
        %v2697 = vunpack.c.l.b16 %v454
        %v2698 = vunpack.c.l.b16 %v455
        %v2699 = vunpack.c.h.b16 %v455
        %v2700 = vunpack.c.l.b16 %v456
        %v2701 = vunpack.c.h.b16 %v456
        %v2702 = vunpack.c.l.b16 %v457
        %v2703 = vunpack.c.l.b16 %v458
        %v2704 = vunpack.c.h.b16 %v458
        %v2705 = vunpack.c.l.b16 %v459
        %v2706 = vunpack.c.h.b16 %v459
        %v2707 = vunpack.c.l.b16 %v460
        %v2708 = vunpack.c.l.b16 %v461
        %v2709 = vunpack.c.h.b16 %v461
        %v2710 = vunpack.c.l.b16 %v462
        %v2711 = vunpack.c.h.b16 %v462
        %v2712 = vunpack.c.l.b16 %v463
        %v2713 = vunpack.c.l.b16 %v464
        %v2714 = vunpack.c.h.b16 %v464
        %v2715 = vunpack.c.l.b16 %v465
        %v2716 = vunpack.c.h.b16 %v465
        %v2717 = vunpack.c.l.b16 %v466
        %v2718 = vunpack.c.l.b16 %v467
        %v2719 = vunpack.c.h.b16 %v467
        %v2720 = vunpack.c.l.b16 %v468
        %v2721 = vunpack.c.h.b16 %v468
        %v2722 = vunpack.c.l.b16 %v469
        %v2723 = vunpack.c.l.b16 %v470
        %v2724 = vunpack.c.h.b16 %v470
        %v2725 = vunpack.c.l.b16 %v471
        %v2726 = vunpack.c.h.b16 %v471
        %v2727 = vunpack.c.l.b16 %v472
        %v2728 = vunpack.c.l.b16 %v473
        %v2729 = vunpack.c.h.b16 %v473
        %v2730 = vunpack.c.l.b16 %v474
        %v2731 = vunpack.c.h.b16 %v474
        %v2732 = vunpack.c.l.b16 %v475
        %v2733 = vunpack.c.l.b16 %v476
        %v2734 = vunpack.c.h.b16 %v476
        %v2735 = vunpack.c.l.b16 %v477
        %v2736 = vunpack.c.h.b16 %v477
        %v2737 = vunpack.c.l.b16 %v478
        %v2738 = vunpack.c.l.b16 %v479
        %v2739 = vunpack.c.h.b16 %v479
        %v2740 = vunpack.c.l.b16 %v480
        %v2741 = vunpack.c.h.b16 %v480
        %v2742 = vunpack.c.l.b16 %v481
        %v2743 = vunpack.c.l.b16 %v482
        %v2744 = vunpack.c.h.b16 %v482
        %v2745 = vunpack.c.l.b16 %v483
        %v2746 = vunpack.c.h.b16 %v483
        %v2747 = vunpack.c.l.b16 %v484
        %v2748 = vunpack.c.l.b16 %v485
        %v2749 = vunpack.c.h.b16 %v485
        %v2750 = vunpack.c.l.b16 %v486
        %v2751 = vunpack.c.h.b16 %v486
        %v2752 = vunpack.c.l.b16 %v487
        %v2753 = vunpack.c.l.b16 %v488
        %v2754 = vunpack.c.h.b16 %v488
        %v2755 = vunpack.c.l.b16 %v489
        %v2756 = vunpack.c.h.b16 %v489
        %v2757 = vunpack.c.l.b16 %v490
        %v2758 = vunpack.c.l.b16 %v491
        %v2759 = vunpack.c.h.b16 %v491
        %v2760 = vunpack.c.l.b16 %v492
        %v2761 = vunpack.c.h.b16 %v492
        %v2762 = vunpack.c.l.b16 %v493
        %v2763 = vunpack.c.l.b16 %v494
        %v2764 = vunpack.c.h.b16 %v494
        %v2765 = vunpack.c.l.b16 %v495
        %v2766 = vunpack.c.h.b16 %v495
        %v2767 = vunpack.c.l.b16 %v496
        %v2768 = vunpack.c.l.b16 %v497
        %v2769 = vunpack.c.h.b16 %v497
        %v2770 = vunpack.c.l.b16 %v498
        %v2771 = vunpack.c.h.b16 %v498
        %v2772 = vunpack.c.l.b16 %v499
        %v2773 = vunpack.c.l.b16 %v500
        %v2774 = vunpack.c.h.b16 %v500
        %v2775 = vunpack.c.l.b16 %v501
        %v2776 = vunpack.c.h.b16 %v501
        %v2777 = vunpack.c.l.b16 %v502
        %v2778 = vunpack.c.l.b16 %v503
        %v2779 = vunpack.c.h.b16 %v503
        %v2780 = vunpack.c.l.b16 %v504
        %v2781 = vunpack.c.h.b16 %v504
        %v2782 = vunpack.c.l.b16 %v505
        %v2783 = vunpack.c.l.b16 %v506
        %v2784 = vunpack.c.h.b16 %v506
        %v2785 = vunpack.c.l.b16 %v507
        %v2786 = vunpack.c.h.b16 %v507
        %v2787 = vunpack.c.l.b16 %v508
        %v2788 = vunpack.c.l.b16 %v509
        %v2789 = vunpack.c.h.b16 %v509
        %v2790 = vunpack.c.l.b16 %v510
        %v2791 = vunpack.c.h.b16 %v510
        %v2792 = vunpack.c.l.b16 %v511
        %v2793 = vunpack.c.l.b16 %v512
        %v2794 = vunpack.c.h.b16 %v512
        %v2795 = vunpack.c.l.b16 %v513
        %v2796 = vunpack.c.h.b16 %v513
        %v2797 = vunpack.c.l.b16 %v514
        %v2798 = vunpack.c.l.b16 %v515
        %v2799 = vunpack.c.h.b16 %v515
        %v2800 = vunpack.c.l.b16 %v516
        %v2801 = vunpack.c.h.b16 %v516
        %v2802 = vunpack.c.l.b16 %v517
        %v2803 = vunpack.c.l.b16 %v518
        %v2804 = vunpack.c.h.b16 %v518
        %v2805 = vunpack.c.l.b16 %v519
        %v2806 = vunpack.c.h.b16 %v519
        %v2807 = vunpack.c.l.b16 %v520
        %v2808 = vunpack.c.l.b16 %v521
        %v2809 = vunpack.c.h.b16 %v521
        %v2810 = vunpack.c.l.b16 %v522
        %v2811 = vunpack.c.h.b16 %v522
        %v2812 = vunpack.c.l.b16 %v523
        %v2813 = vunpack.c.l.b16 %v524
        %v2814 = vunpack.c.h.b16 %v524
        %v2815 = vunpack.c.l.b16 %v525
        %v2816 = vunpack.c.h.b16 %v525
        %v2817 = vunpack.c.l.b16 %v526
        %v2818 = vunpack.c.l.b16 %v527
        %v2819 = vunpack.c.h.b16 %v527
        %v2820 = vunpack.c.l.b16 %v528
        %v2821 = vunpack.c.h.b16 %v528
        %v2822 = vunpack.c.l.b16 %v529
        %v2823 = vunpack.c.l.b16 %v530
        %v2824 = vunpack.c.h.b16 %v530
        %v2825 = vunpack.c.l.b16 %v531
        %v2826 = vunpack.c.h.b16 %v531
        %v2827 = vunpack.c.l.b16 %v532
        %v2828 = vunpack.c.l.b16 %v533
        %v2829 = vunpack.c.h.b16 %v533
        %v2830 = vunpack.c.l.b16 %v534
        %v2831 = vunpack.c.h.b16 %v534
        %v2832 = vunpack.c.l.b16 %v535
        %v2833 = vunpack.c.l.b16 %v536
        %v2834 = vunpack.c.h.b16 %v536
        %v2835 = vunpack.c.l.b16 %v537
        %v2836 = vunpack.c.h.b16 %v537
        %v2837 = vunpack.c.l.b16 %v538
        %v2838 = vunpack.c.l.b16 %v539
        %v2839 = vunpack.c.h.b16 %v539
        %v2840 = vunpack.c.l.b16 %v540
        %v2841 = vunpack.c.h.b16 %v540
        %v2842 = vunpack.c.l.b16 %v541
        %v2843 = vunpack.c.l.b16 %v542
        %v2844 = vunpack.c.h.b16 %v542
        %v2845 = vunpack.c.l.b16 %v543
        %v2846 = vunpack.c.h.b16 %v543
        %v2847 = vunpack.c.l.b16 %v544
        %v2848 = vunpack.c.l.b16 %v545
        %v2849 = vunpack.c.h.b16 %v545
        %v2850 = vunpack.c.l.b16 %v546
        %v2851 = vunpack.c.h.b16 %v546
        %v2852 = vunpack.c.l.b16 %v547
        %v2853 = vunpack.c.l.b16 %v548
        %v2854 = vunpack.c.h.b16 %v548
        %v2855 = vunpack.c.l.b16 %v549
        %v2856 = vunpack.c.h.b16 %v549
        %v2857 = vunpack.c.l.b16 %v550
        %v2858 = vunpack.c.l.b16 %v551
        %v2859 = vunpack.c.h.b16 %v551
        %v2860 = vunpack.c.l.b16 %v552
        %v2861 = vunpack.c.h.b16 %v552
        %v2862 = vunpack.c.l.b16 %v553
        %v2863 = vunpack.c.l.b16 %v554
        %v2864 = vunpack.c.h.b16 %v554
        %v2865 = vunpack.c.l.b16 %v555
        %v2866 = vunpack.c.h.b16 %v555
        %v2867 = vunpack.c.l.b16 %v556
        %v2868 = vunpack.c.l.b16 %v557
        %v2869 = vunpack.c.h.b16 %v557
        %v2870 = vunpack.c.l.b16 %v558
        %v2871 = vunpack.c.h.b16 %v558
        %v2872 = vunpack.c.l.b16 %v559
        %v2873 = vunpack.c.l.b16 %v560
        %v2874 = vunpack.c.h.b16 %v560
        %v2875 = vunpack.c.l.b16 %v561
        %v2876 = vunpack.c.h.b16 %v561
        %v2877 = vunpack.c.l.b16 %v562
        %v2878 = vunpack.c.l.b16 %v563
        %v2879 = vunpack.c.h.b16 %v563
        %v2880 = vunpack.c.l.b16 %v564
        %v2881 = vunpack.c.h.b16 %v564
        %v2882 = vunpack.c.l.b16 %v565
        %v2883 = vunpack.c.l.b16 %v566
        %v2884 = vunpack.c.h.b16 %v566
        %v2885 = vunpack.c.l.b16 %v567
        %v2886 = vunpack.c.h.b16 %v567
        %v2887 = vunpack.c.l.b16 %v568
        %v2888 = vunpack.c.l.b16 %v569
        %v2889 = vunpack.c.h.b16 %v569
        %v2890 = vunpack.c.l.b16 %v570
        %v2891 = vunpack.c.h.b16 %v570
        %v2892 = vunpack.c.l.b16 %v571
        %v2893 = vunpack.c.l.b16 %v572
        %v2894 = vunpack.c.h.b16 %v572
        %v2895 = vunpack.c.l.b16 %v573
        %v2896 = vunpack.c.h.b16 %v573
        %v2897 = vunpack.c.l.b16 %v574
        %v2898 = vunpack.c.l.b16 %v575
        %v2899 = vunpack.c.h.b16 %v575
        %v2900 = vunpack.c.l.b16 %v576
        %v2901 = vunpack.c.h.b16 %v576
        %v2902 = vunpack.c.l.b16 %v577
        %v2903 = vunpack.c.l.b16 %v578
        %v2904 = vunpack.c.h.b16 %v578
        %v2905 = vunpack.c.l.b16 %v579
        %v2906 = vunpack.c.h.b16 %v579
        %v2907 = vunpack.c.l.b16 %v580
        %v2908 = vunpack.c.l.b16 %v581
        %v2909 = vunpack.c.h.b16 %v581
        %v2910 = vunpack.c.l.b16 %v582
        %v2911 = vunpack.c.h.b16 %v582
        %v2912 = vunpack.c.l.b16 %v583
        %v2913 = vunpack.c.l.b16 %v584
        %v2914 = vunpack.c.h.b16 %v584
        %v2915 = vunpack.c.l.b16 %v585
        %v2916 = vunpack.c.h.b16 %v585
        %v2917 = vunpack.c.l.b16 %v586
        %v2918 = vunpack.c.l.b16 %v587
        %v2919 = vunpack.c.h.b16 %v587
        %v2920 = vunpack.c.l.b16 %v588
        %v2921 = vunpack.c.h.b16 %v588
        %v2922 = vunpack.c.l.b16 %v589
        %v2923 = vunpack.c.l.b16 %v590
        %v2924 = vunpack.c.h.b16 %v590
        %v2925 = vunpack.c.l.b16 %v591
        %v2926 = vunpack.c.h.b16 %v591
        %v2927 = vunpack.c.l.b16 %v592
        %v2928 = vunpack.c.l.b16 %v593
        %v2929 = vunpack.c.h.b16 %v593
        %v2930 = vunpack.c.l.b16 %v594
        %v2931 = vunpack.c.h.b16 %v594
        %v2932 = vunpack.c.l.b16 %v595
        %v2933 = vunpack.c.l.b16 %v596
        %v2934 = vunpack.c.h.b16 %v596
        %v2935 = vunpack.c.l.b16 %v597
        %v2936 = vunpack.c.h.b16 %v597
        %v2937 = vunpack.c.l.b16 %v598
        %v2938 = vunpack.c.l.b16 %v599
        %v2939 = vunpack.c.h.b16 %v599
        %v2940 = vunpack.c.l.b16 %v600
        %v2941 = vunpack.c.h.b16 %v600
        %v2942 = vunpack.c.l.b16 %v601
        %v2943 = vunpack.c.l.b16 %v602
        %v2944 = vunpack.c.h.b16 %v602
        %v2945 = vunpack.c.l.b16 %v603
        %v2946 = vunpack.c.h.b16 %v603
        %v2947 = vunpack.c.l.b16 %v604
        %v2948 = vunpack.c.l.b16 %v605
        %v2949 = vunpack.c.h.b16 %v605
        %v2950 = vunpack.c.l.b16 %v606
        %v2951 = vunpack.c.h.b16 %v606
        %v2952 = vunpack.c.l.b16 %v607
        %v2953 = vunpack.c.l.b16 %v608
        %v2954 = vunpack.c.h.b16 %v608
        %v2955 = vunpack.c.l.b16 %v609
        %v2956 = vunpack.c.h.b16 %v609
        %v2957 = vunpack.c.l.b16 %v610
        %v2958 = vunpack.c.l.b16 %v611
        %v2959 = vunpack.c.h.b16 %v611
        %v2960 = vunpack.c.l.b16 %v612
        %v2961 = vunpack.c.h.b16 %v612
        %v2962 = vunpack.c.l.b16 %v613
        %v2963 = vunpack.c.l.b16 %v614
        %v2964 = vunpack.c.h.b16 %v614
        %v2965 = vunpack.c.l.b16 %v615
        %v2966 = vunpack.c.h.b16 %v615
        %v2967 = vunpack.c.l.b16 %v616
        %v2968 = vunpack.c.l.b16 %v617
        %v2969 = vunpack.c.h.b16 %v617
        %v2970 = vunpack.c.l.b16 %v618
        %v2971 = vunpack.c.h.b16 %v618
        %v2972 = vunpack.c.l.b16 %v619
        %v2973 = vunpack.c.l.b16 %v620
        %v2974 = vunpack.c.h.b16 %v620
        %v2975 = vunpack.c.l.b16 %v621
        %v2976 = vunpack.c.h.b16 %v621
        %v2977 = vunpack.c.l.b16 %v622
        %v2978 = vunpack.c.l.b16 %v623
        %v2979 = vunpack.c.h.b16 %v623
        %v2980 = vunpack.c.l.b16 %v624
        %v2981 = vunpack.c.h.b16 %v624
        %v2982 = vunpack.c.l.b16 %v625
        %v2983 = vunpack.c.l.b16 %v626
        %v2984 = vunpack.c.h.b16 %v626
        %v2985 = vunpack.c.l.b16 %v627
        %v2986 = vunpack.c.h.b16 %v627
        %v2987 = vunpack.c.l.b16 %v628
        %v2988 = vunpack.c.l.b16 %v629
        %v2989 = vunpack.c.h.b16 %v629
        %v2990 = vunpack.c.l.b16 %v630
        %v2991 = vunpack.c.h.b16 %v630
        %v2992 = vunpack.c.l.b16 %v631
        %v2993 = vunpack.c.l.b16 %v632
        %v2994 = vunpack.c.h.b16 %v632
        %v2995 = vunpack.c.l.b16 %v633
        %v2996 = vunpack.c.h.b16 %v633
        %v2997 = vunpack.c.l.b16 %v634
        %v2998 = vunpack.c.l.b16 %v635
        %v2999 = vunpack.c.h.b16 %v635
        %v3000 = vunpack.c.l.b16 %v636
        %v3001 = vunpack.c.h.b16 %v636
        %v3002 = vunpack.c.l.b16 %v637
        %v3003 = vunpack.c.l.b16 %v638
        %v3004 = vunpack.c.h.b16 %v638
        %v3005 = vunpack.c.l.b16 %v639
        %v3006 = vunpack.c.h.b16 %v639
        %v3007 = vunpack.c.l.b16 %v640
        %v3008 = vunpack.c.l.b16 %v641
        %v3009 = vunpack.c.h.b16 %v641
        %v3010 = vunpack.c.l.b16 %v642
        %v3011 = vunpack.c.h.b16 %v642
        %v3012 = vunpack.c.l.b16 %v643
        %v3013 = vunpack.c.l.b16 %v644
        %v3014 = vunpack.c.h.b16 %v644
        %v3015 = vunpack.c.l.b16 %v645
        %v3016 = vunpack.c.h.b16 %v645
        %v3017 = vunpack.c.l.b16 %v646
        %v3018 = vunpack.c.l.b16 %v647
        %v3019 = vunpack.c.h.b16 %v647
        %v3020 = vunpack.c.l.b16 %v648
        %v3021 = vunpack.c.h.b16 %v648
        %v3022 = vunpack.c.l.b16 %v649
        %v3023 = vunpack.c.l.b16 %v650
        %v3024 = vunpack.c.h.b16 %v650
        %v3025 = vunpack.c.l.b16 %v651
        %v3026 = vunpack.c.h.b16 %v651
        %v3027 = vunpack.c.l.b16 %v652
        %v3028 = vunpack.c.l.b16 %v653
        %v3029 = vunpack.c.h.b16 %v653
        %v3030 = vunpack.c.l.b16 %v654
        %v3031 = vunpack.c.h.b16 %v654
        %v3032 = vunpack.c.l.b16 %v655
        %v3033 = vunpack.c.l.b16 %v656
        %v3034 = vunpack.c.h.b16 %v656
        %v3035 = vunpack.c.l.b16 %v657
        %v3036 = vunpack.c.h.b16 %v657
        %v3037 = vunpack.c.l.b16 %v658
        %v3038 = vunpack.c.l.b16 %v659
        %v3039 = vunpack.c.h.b16 %v659
        %v3040 = vunpack.c.l.b16 %v660
        %v3041 = vunpack.c.h.b16 %v660
        %v3042 = vunpack.c.l.b16 %v661
        %v3043 = vunpack.c.l.b16 %v662
        %v3044 = vunpack.c.h.b16 %v662
        %v3045 = vunpack.c.l.b16 %v663
        %v3046 = vunpack.c.h.b16 %v663
        %v3047 = vunpack.c.l.b16 %v664
        %v3048 = vunpack.c.l.b16 %v665
        %v3049 = vunpack.c.h.b16 %v665
        %v3050 = vunpack.c.l.b16 %v666
        %v3051 = vunpack.c.h.b16 %v666
        %v3052 = vunpack.c.l.b16 %v667
        %v3053 = vunpack.c.l.b16 %v668
        %v3054 = vunpack.c.h.b16 %v668
        %v3055 = vunpack.c.l.b16 %v669
        %v3056 = vunpack.c.h.b16 %v669
        %v3057 = vunpack.c.l.b16 %v670
        %v3058 = vunpack.c.l.b16 %v671
        %v3059 = vunpack.c.h.b16 %v671
        %v3060 = vunpack.c.l.b16 %v672
        %v3061 = vunpack.c.h.b16 %v672
        %v3062 = vunpack.c.l.b16 %v673
        %v3063 = vunpack.c.l.b16 %v674
        %v3064 = vunpack.c.h.b16 %v674
        %v3065 = vunpack.c.l.b16 %v675
        %v3066 = vunpack.c.h.b16 %v675
        %v3067 = vunpack.c.l.b16 %v676
        %v3068 = vunpack.c.l.b16 %v677
        %v3069 = vunpack.c.h.b16 %v677
        %v3070 = vunpack.c.l.b16 %v678
        %v3071 = vunpack.c.h.b16 %v678
        %v3072 = vunpack.c.l.b16 %v679
        %v3073 = vunpack.c.l.b16 %v680
        %v3074 = vunpack.c.h.b16 %v680
        %v3075 = vunpack.c.l.b16 %v681
        %v3076 = vunpack.c.h.b16 %v681
        %v3077 = vunpack.c.l.b16 %v682
        %v3078 = vunpack.c.l.b16 %v683
        %v3079 = vunpack.c.h.b16 %v683
        %v3080 = vunpack.c.l.b16 %v684
        %v3081 = vunpack.c.h.b16 %v684
        %v3082 = vunpack.c.l.b16 %v685
        %v3083 = vunpack.c.l.b16 %v686
        %v3084 = vunpack.c.h.b16 %v686
        %v3085 = vunpack.c.l.b16 %v687
        %v3086 = vunpack.c.h.b16 %v687
        %v3087 = vunpack.c.l.b16 %v688
        %v3088 = vunpack.c.l.b16 %v689
        %v3089 = vunpack.c.h.b16 %v689
        %v3090 = vunpack.c.l.b16 %v690
        %v3091 = vunpack.c.h.b16 %v690
        %v3092 = vunpack.c.l.b16 %v691
        %v3093 = vunpack.c.l.b16 %v692
        %v3094 = vunpack.c.h.b16 %v692
        %v3095 = vunpack.c.l.b16 %v693
        %v3096 = vunpack.c.h.b16 %v693
        %v3097 = vunpack.c.l.b16 %v694
        %v3098 = vunpack.c.l.b16 %v695
        %v3099 = vunpack.c.h.b16 %v695
        %v3100 = vunpack.c.l.b16 %v696
        %v3101 = vunpack.c.h.b16 %v696
        %v3102 = vunpack.c.l.b16 %v697
        %v3103 = vunpack.c.l.b16 %v698
        %v3104 = vunpack.c.h.b16 %v698
        %v3105 = vunpack.c.l.b16 %v699
        %v3106 = vunpack.c.h.b16 %v699
        %v3107 = vunpack.c.l.b16 %v700
        %v3108 = vunpack.c.l.b16 %v701
        %v3109 = vunpack.c.h.b16 %v701
        %v3110 = vunpack.c.l.b16 %v702
        %v3111 = vunpack.c.h.b16 %v702
        %v3112 = vunpack.c.l.b16 %v703
        %v3113 = vunpack.c.l.b16 %v704
        %v3114 = vunpack.c.h.b16 %v704
        %v3115 = vunpack.c.l.b16 %v705
        %v3116 = vunpack.c.h.b16 %v705
        %v3117 = vunpack.c.l.b16 %v706
        %v3118 = vunpack.c.l.b16 %v707
        %v3119 = vunpack.c.h.b16 %v707
        %v3120 = vunpack.c.l.b16 %v708
        %v3121 = vunpack.c.h.b16 %v708
        %v3122 = vunpack.c.l.b16 %v709
        %v3123 = vunpack.c.l.b16 %v710
        %v3124 = vunpack.c.h.b16 %v710
        %v3125 = vunpack.c.l.b16 %v711
        %v3126 = vunpack.c.h.b16 %v711
        %v3127 = vunpack.c.l.b16 %v712
        %v3128 = vunpack.c.l.b16 %v713
        %v3129 = vunpack.c.h.b16 %v713
        %v3130 = vunpack.c.l.b16 %v714
        %v3131 = vunpack.c.h.b16 %v714
        %v3132 = vunpack.c.l.b16 %v715
        %v3133 = vunpack.c.l.b16 %v716
        %v3134 = vunpack.c.h.b16 %v716
        %v3135 = vunpack.c.l.b16 %v717
        %v3136 = vunpack.c.h.b16 %v717
        %v3137 = vunpack.c.l.b16 %v718
        %v3138 = vunpack.c.l.b16 %v719
        %v3139 = vunpack.c.h.b16 %v719
        %v3140 = vunpack.c.l.b16 %v720
        %v3141 = vunpack.c.h.b16 %v720
        %v3142 = vunpack.c.l.b16 %v721
        %v3143 = vunpack.c.l.b16 %v722
        %v3144 = vunpack.c.h.b16 %v722
        %v3145 = vunpack.c.l.b16 %v723
        %v3146 = vunpack.c.h.b16 %v723
        %v3147 = vunpack.c.l.b16 %v724
        %v3148 = vunpack.c.l.b16 %v725
        %v3149 = vunpack.c.h.b16 %v725
        %v3150 = vunpack.c.l.b16 %v726
        %v3151 = vunpack.c.h.b16 %v726
        %v3152 = vunpack.c.l.b16 %v727
        %v3153 = vunpack.c.l.b16 %v728
        %v3154 = vunpack.c.h.b16 %v728
        %v3155 = vunpack.c.l.b16 %v729
        %v3156 = vunpack.c.h.b16 %v729
        %v3157 = vunpack.c.l.b16 %v730
        %v3158 = vunpack.c.l.b16 %v731
        %v3159 = vunpack.c.h.b16 %v731
        %v3160 = vunpack.c.l.b16 %v732
        %v3161 = vunpack.c.h.b16 %v732
        %v3162 = vunpack.c.l.b16 %v733
        %v3163 = vunpack.c.l.b16 %v734
        %v3164 = vunpack.c.h.b16 %v734
        %v3165 = vunpack.c.l.b16 %v735
        %v3166 = vunpack.c.h.b16 %v735
        %v3167 = vunpack.c.l.b16 %v736
        %v3168 = vunpack.c.l.b16 %v737
        %v3169 = vunpack.c.h.b16 %v737
        %v3170 = vunpack.c.l.b16 %v738
        %v3171 = vunpack.c.h.b16 %v738
        %v3172 = vunpack.c.l.b16 %v739
        %v3173 = vunpack.c.l.b16 %v740
        %v3174 = vunpack.c.h.b16 %v740
        %v3175 = vunpack.c.l.b16 %v741
        %v3176 = vunpack.c.h.b16 %v741
        %v3177 = vunpack.c.l.b16 %v742
        %v3178 = vunpack.c.l.b16 %v743
        %v3179 = vunpack.c.h.b16 %v743
        %v3180 = vunpack.c.l.b16 %v744
        %v3181 = vunpack.c.h.b16 %v744
        %v3182 = vunpack.c.l.b16 %v745
        %v3183 = vunpack.c.l.b16 %v746
        %v3184 = vunpack.c.h.b16 %v746
        %v3185 = vunpack.c.l.b16 %v747
        %v3186 = vunpack.c.h.b16 %v747
        %v3187 = vunpack.c.l.b16 %v748
        %v3188 = vunpack.c.l.b16 %v749
        %v3189 = vunpack.c.h.b16 %v749
        %v3190 = vunpack.c.l.b16 %v750
        %v3191 = vunpack.c.h.b16 %v750
        %v3192 = vunpack.c.l.b16 %v751
        %v3193 = vunpack.c.l.b16 %v752
        %v3194 = vunpack.c.h.b16 %v752
        %v3195 = vunpack.c.l.b16 %v753
        %v3196 = vunpack.c.h.b16 %v753
        %v3197 = vunpack.c.l.b16 %v754
        %v3198 = vunpack.c.l.b16 %v755
        %v3199 = vunpack.c.h.b16 %v755
        %v3200 = vunpack.c.l.b16 %v756
        %v3201 = vunpack.c.h.b16 %v756
        %v3202 = vunpack.c.l.b16 %v757
        %v3203 = vunpack.c.l.b16 %v758
        %v3204 = vunpack.c.h.b16 %v758
        %v3205 = vunpack.c.l.b16 %v759
        %v3206 = vunpack.c.h.b16 %v759
        %v3207 = vunpack.c.l.b16 %v760
        %v3208 = vunpack.c.l.b16 %v761
        %v3209 = vunpack.c.h.b16 %v761
        %v3210 = vunpack.c.l.b16 %v762
        %v3211 = vunpack.c.h.b16 %v762
        %v3212 = vunpack.c.l.b16 %v763
        %v3213 = vunpack.c.l.b16 %v764
        %v3214 = vunpack.c.h.b16 %v764
        %v3215 = vunpack.c.l.b16 %v765
        %v3216 = vunpack.c.h.b16 %v765
        %v3217 = vunpack.c.l.b16 %v766
        %v3218 = vunpack.c.l.b16 %v767
        %v3219 = vunpack.c.h.b16 %v767
        %v3220 = vunpack.c.l.b16 %v768
        %v3221 = vunpack.c.h.b16 %v768
        %v3222 = vunpack.c.l.b16 %v769
        %v3223 = vunpack.c.l.b16 %v770
        %v3224 = vunpack.c.h.b16 %v770
        %v3225 = vunpack.c.l.b16 %v771
        %v3226 = vunpack.c.h.b16 %v771
        %v3227 = vunpack.c.l.b16 %v772
        %v3228 = vunpack.c.l.b16 %v773
        %v3229 = vunpack.c.h.b16 %v773
        %v3230 = vunpack.c.l.b16 %v774
        %v3231 = vunpack.c.h.b16 %v774
        %v3232 = vunpack.c.l.b16 %v775
        %v3233 = vunpack.c.l.b16 %v776
        %v3234 = vunpack.c.h.b16 %v776
        %v3235 = vunpack.c.l.b16 %v777
        %v3236 = vunpack.c.h.b16 %v777
        %v3237 = vunpack.c.l.b16 %v778
        %v3238 = vunpack.c.l.b16 %v779
        %v3239 = vunpack.c.h.b16 %v779
        %v3240 = vunpack.c.l.b16 %v780
        %v3241 = vunpack.c.h.b16 %v780
        %v3242 = vunpack.c.l.b16 %v781
        %v3243 = vunpack.c.l.b16 %v782
        %v3244 = vunpack.c.h.b16 %v782
        %v3245 = vunpack.c.l.b16 %v783
        %v3246 = vunpack.c.h.b16 %v783
        %v3247 = vunpack.c.l.b16 %v784
        %v3248 = vunpack.c.l.b16 %v785
        %v3249 = vunpack.c.h.b16 %v785
        %v3250 = vunpack.c.l.b16 %v786
        %v3251 = vunpack.c.h.b16 %v786
        %v3252 = vunpack.c.l.b16 %v787
        %v3253 = vunpack.c.l.b16 %v788
        %v3254 = vunpack.c.h.b16 %v788
        %v3255 = vunpack.c.l.b16 %v789
        %v3256 = vunpack.c.h.b16 %v789
        %v3257 = vunpack.c.l.b16 %v790
        %v3258 = vunpack.c.l.b16 %v791
        %v3259 = vunpack.c.h.b16 %v791
        %v3260 = vunpack.c.l.b16 %v792
        %v3261 = vunpack.c.h.b16 %v792
        %v3262 = vunpack.c.l.b16 %v793
        %v3263 = vunpack.c.l.b16 %v794
        %v3264 = vunpack.c.h.b16 %v794
        %v3265 = vunpack.c.l.b16 %v795
        %v3266 = vunpack.c.h.b16 %v795
        %v3267 = vunpack.c.l.b16 %v796
        %v3268 = vunpack.c.l.b16 %v797
        %v3269 = vunpack.c.h.b16 %v797
        %v3270 = vunpack.c.l.b16 %v798
        %v3271 = vunpack.c.h.b16 %v798
        %v3272 = vunpack.c.l.b16 %v799
        %v3273 = vunpack.c.l.b16 %v800
        %v3274 = vunpack.c.h.b16 %v800
        %v3275 = vunpack.c.l.b16 %v801
        %v3276 = vunpack.c.h.b16 %v801
        %v3277 = vunpack.c.l.b16 %v802
        %v3278 = vunpack.c.l.b16 %v803
        %v3279 = vunpack.c.h.b16 %v803
        %v3280 = vunpack.c.l.b16 %v804
        %v3281 = vunpack.c.h.b16 %v804
        %v3282 = vunpack.c.l.b16 %v805
        %v3283 = vunpack.c.l.b16 %v806
        %v3284 = vunpack.c.h.b16 %v806
        %v3285 = vunpack.c.l.b16 %v807
        %v3286 = vunpack.c.h.b16 %v807
        %v3287 = vunpack.c.l.b16 %v808
        %v3288 = vunpack.c.l.b16 %v809
        %v3289 = vunpack.c.h.b16 %v809
        %v3290 = vunpack.c.l.b16 %v810
        %v3291 = vunpack.c.h.b16 %v810
        %v3292 = vunpack.c.l.b16 %v811
        %v3293 = vunpack.c.l.b16 %v812
        %v3294 = vunpack.c.h.b16 %v812
        %v3295 = vunpack.c.l.b16 %v813
        %v3296 = vunpack.c.h.b16 %v813
        %v3297 = vunpack.c.l.b16 %v814
        %v3298 = vunpack.c.l.b16 %v815
        %v3299 = vunpack.c.h.b16 %v815
        %v3300 = vunpack.c.l.b16 %v816
        %v3301 = vunpack.c.h.b16 %v816
        %v3302 = vunpack.c.l.b16 %v817
        %v3303 = vunpack.c.l.b16 %v818
        %v3304 = vunpack.c.h.b16 %v818
        %v3305 = vunpack.c.l.b16 %v819
        %v3306 = vunpack.c.h.b16 %v819
        %v3307 = vunpack.c.l.b16 %v820
        %v3308 = vunpack.c.l.b16 %v821
        %v3309 = vunpack.c.h.b16 %v821
        %v3310 = vunpack.c.l.b16 %v822
        %v3311 = vunpack.c.h.b16 %v822
        %v3312 = vunpack.c.l.b16 %v823
        %v3313 = vunpack.c.l.b16 %v824
        %v3314 = vunpack.c.h.b16 %v824
        %v3315 = vunpack.c.l.b16 %v825
        %v3316 = vunpack.c.h.b16 %v825
        %v3317 = vunpack.c.l.b16 %v826
        %v3318 = vunpack.c.l.b16 %v827
        %v3319 = vunpack.c.h.b16 %v827
        %v3320 = vunpack.c.l.b16 %v828
        %v3321 = vunpack.c.h.b16 %v828
        %v3322 = vunpack.c.l.b16 %v829
        %v3323 = vunpack.c.l.b16 %v830
        %v3324 = vunpack.c.h.b16 %v830
        %v3325 = vunpack.c.l.b16 %v831
        %v3326 = vunpack.c.h.b16 %v831
        %v3327 = vunpack.c.l.b16 %v832
        %v3328 = vunpack.c.l.b16 %v833
        %v3329 = vunpack.c.h.b16 %v833
        %v3330 = vunpack.c.l.b16 %v834
        %v3331 = vunpack.c.h.b16 %v834
        %v3332 = vunpack.c.l.b16 %v835
        %v3333 = vunpack.c.l.b16 %v836
        %v3334 = vunpack.c.h.b16 %v836
        %v3335 = vunpack.c.l.b16 %v837
        %v3336 = vunpack.c.h.b16 %v837
        %v3337 = vunpack.c.l.b16 %v838
        %v3338 = vunpack.c.l.b16 %v839
        %v3339 = vunpack.c.h.b16 %v839
        %v3340 = vunpack.c.l.b16 %v840
        %v3341 = vunpack.c.h.b16 %v840
        %v3342 = vunpack.c.l.b16 %v841
        %v3343 = vunpack.c.l.b16 %v842
        %v3344 = vunpack.c.h.b16 %v842
        %v3345 = vunpack.c.l.b16 %v843
        %v3346 = vunpack.c.h.b16 %v843
        %v3347 = vunpack.c.l.b16 %v844
        %v3348 = vunpack.c.l.b16 %v845
        %v3349 = vunpack.c.h.b16 %v845
        %v3350 = vunpack.c.l.b16 %v846
        %v3351 = vunpack.c.h.b16 %v846
        %v3352 = vunpack.c.l.b16 %v847
        %v3353 = vunpack.c.l.b16 %v848
        %v3354 = vunpack.c.h.b16 %v848
        %v3355 = vunpack.c.l.b16 %v849
        %v3356 = vunpack.c.h.b16 %v849
        %v3357 = vunpack.c.l.b16 %v850
        %v3358 = vunpack.c.l.b16 %v851
        %v3359 = vunpack.c.h.b16 %v851
        %v3360 = vunpack.c.l.b16 %v852
        %v3361 = vunpack.c.h.b16 %v852
        %v3362 = vunpack.c.l.b16 %v853
        %v3363 = vunpack.c.l.b16 %v854
        %v3364 = vunpack.c.h.b16 %v854
        %v3365 = vunpack.c.l.b16 %v855
        %v3366 = vunpack.c.h.b16 %v855
        %v3367 = vunpack.c.l.b16 %v856
        %v3368 = vunpack.c.l.b16 %v857
        %v3369 = vunpack.c.h.b16 %v857
        %v3370 = vunpack.c.l.b16 %v858
        %v3371 = vunpack.c.h.b16 %v858
        %v3372 = vunpack.c.l.b16 %v859
        %v3373 = vunpack.c.l.b16 %v860
        %v3374 = vunpack.c.h.b16 %v860
        %v3375 = vunpack.c.l.b16 %v861
        %v3376 = vunpack.c.h.b16 %v861
        %v3377 = vunpack.c.l.b16 %v862
        %v3378 = vunpack.c.l.b16 %v863
        %v3379 = vunpack.c.h.b16 %v863
        %v3380 = vunpack.c.l.b16 %v864
        %v3381 = vunpack.c.h.b16 %v864
        %v3382 = vunpack.c.l.b16 %v865
        %v3383 = vunpack.c.l.b16 %v866
        %v3384 = vunpack.c.h.b16 %v866
        %v3385 = vunpack.c.l.b16 %v867
        %v3386 = vunpack.c.h.b16 %v867
        %v3387 = vunpack.c.l.b16 %v868
        %v3388 = vunpack.c.l.b16 %v869
        %v3389 = vunpack.c.h.b16 %v869
        %v3390 = vunpack.c.l.b16 %v870
        %v3391 = vunpack.c.h.b16 %v870
        %v3392 = vunpack.c.l.b16 %v871
        %v3393 = vunpack.c.l.b16 %v872
        %v3394 = vunpack.c.h.b16 %v872
        %v3395 = vunpack.c.l.b16 %v873
        %v3396 = vunpack.c.h.b16 %v873
        %v3397 = vunpack.c.l.b16 %v874
        %v3398 = vunpack.c.l.b16 %v875
        %v3399 = vunpack.c.h.b16 %v875
        %v3400 = vunpack.c.l.b16 %v876
        %v3401 = vunpack.c.h.b16 %v876
        %v3402 = vunpack.c.l.b16 %v877
        %v3403 = vunpack.c.l.b16 %v878
        %v3404 = vunpack.c.h.b16 %v878
        %v3405 = vunpack.c.l.b16 %v879
        %v3406 = vunpack.c.h.b16 %v879
        %v3407 = vunpack.c.l.b16 %v880
        %v3408 = vunpack.c.l.b16 %v881
        %v3409 = vunpack.c.h.b16 %v881
        %v3410 = vunpack.c.l.b16 %v882
        %v3411 = vunpack.c.h.b16 %v882
        %v3412 = vunpack.c.l.b16 %v883
        %v3413 = vunpack.c.l.b16 %v884
        %v3414 = vunpack.c.h.b16 %v884
        %v3415 = vunpack.c.l.b16 %v885
        %v3416 = vunpack.c.h.b16 %v885
        %v3417 = vunpack.c.l.b16 %v886
        %v3418 = vunpack.c.l.b16 %v887
        %v3419 = vunpack.c.h.b16 %v887
        %v3420 = vunpack.c.l.b16 %v888
        %v3421 = vunpack.c.h.b16 %v888
        %v3422 = vunpack.c.l.b16 %v889
        %v3423 = vunpack.c.l.b16 %v890
        %v3424 = vunpack.c.h.b16 %v890
        %v3425 = vunpack.c.l.b16 %v891
        %v3426 = vunpack.c.h.b16 %v891
        %v3427 = vunpack.c.l.b16 %v892
        %v3428 = vunpack.c.l.b16 %v893
        %v3429 = vunpack.c.h.b16 %v893
        %v3430 = vunpack.c.l.b16 %v894
        %v3431 = vunpack.c.h.b16 %v894
        %v3432 = vunpack.c.l.b16 %v895
        %v3433 = vunpack.c.l.b16 %v896
        %v3434 = vunpack.c.h.b16 %v896
        %v3435 = vunpack.c.l.b16 %v897
        %v3436 = vunpack.c.h.b16 %v897
        %v3437 = vunpack.c.l.b16 %v898
        %v3438 = vunpack.c.l.b16 %v899
        %v3439 = vunpack.c.h.b16 %v899
        %v3440 = vunpack.c.l.b16 %v900
        %v3441 = vunpack.c.h.b16 %v900
        %v3442 = vunpack.c.l.b16 %v901
        %v3443 = vunpack.c.l.b16 %v902
        %v3444 = vunpack.c.h.b16 %v902
        %v3445 = vunpack.c.l.b16 %v903
        %v3446 = vunpack.c.h.b16 %v903
        %v3447 = vunpack.c.l.b16 %v904
        %v3448 = vunpack.c.l.b16 %v905
        %v3449 = vunpack.c.h.b16 %v905
        %v3450 = vunpack.c.l.b16 %v906
        %v3451 = vunpack.c.h.b16 %v906
        %v3452 = vunpack.c.l.b16 %v907
        %v3453 = vunpack.c.l.b16 %v908
        %v3454 = vunpack.c.h.b16 %v908
        %v3455 = vunpack.c.l.b16 %v909
        %v3456 = vunpack.c.h.b16 %v909
        %v3457 = vunpack.c.l.b16 %v910
        %v3458 = vunpack.c.l.b16 %v911
        %v3459 = vunpack.c.h.b16 %v911
        %v3460 = vunpack.c.l.b16 %v912
        %v3461 = vunpack.c.h.b16 %v912
        %v3462 = vunpack.c.l.b16 %v913
        %v3463 = vunpack.c.l.b16 %v914
        %v3464 = vunpack.c.h.b16 %v914
        %v3465 = vunpack.c.l.b16 %v915
        %v3466 = vunpack.c.h.b16 %v915
        %v3467 = vunpack.c.l.b16 %v916
        %v3468 = vunpack.c.l.b16 %v917
        %v3469 = vunpack.c.h.b16 %v917
        %v3470 = vunpack.c.l.b16 %v918
        %v3471 = vunpack.c.h.b16 %v918
        %v3472 = vunpack.c.l.b16 %v919
        %v3473 = vunpack.c.l.b16 %v920
        %v3474 = vunpack.c.h.b16 %v920
        %v3475 = vunpack.c.l.b16 %v921
        %v3476 = vunpack.c.h.b16 %v921
        %v3477 = vunpack.c.l.b16 %v922
        %v3478 = vunpack.c.l.b16 %v923
        %v3479 = vunpack.c.h.b16 %v923
        %v3480 = vunpack.c.l.b16 %v924
        %v3481 = vunpack.c.h.b16 %v924
        %v3482 = vunpack.c.l.b16 %v925
        %v3483 = vunpack.c.l.b16 %v926
        %v3484 = vunpack.c.h.b16 %v926
        %v3485 = vunpack.c.l.b16 %v927
        %v3486 = vunpack.c.h.b16 %v927
        %v3487 = vunpack.c.l.b16 %v928
        %v3488 = vunpack.c.l.b16 %v929
        %v3489 = vunpack.c.h.b16 %v929
        %v3490 = vunpack.c.l.b16 %v930
        %v3491 = vunpack.c.h.b16 %v930
        %v3492 = vunpack.c.l.b16 %v931
        %v3493 = vunpack.c.l.b16 %v932
        %v3494 = vunpack.c.h.b16 %v932
        %v3495 = vunpack.c.l.b16 %v933
        %v3496 = vunpack.c.h.b16 %v933
        %v3497 = vunpack.c.l.b16 %v934
        %v3498 = vunpack.c.l.b16 %v935
        %v3499 = vunpack.c.h.b16 %v935
        %v3500 = vunpack.c.l.b16 %v936
        %v3501 = vunpack.c.h.b16 %v936
        %v3502 = vunpack.c.l.b16 %v937
        %v3503 = vunpack.c.l.b16 %v938
        %v3504 = vunpack.c.h.b16 %v938
        %v3505 = vunpack.c.l.b16 %v939
        %v3506 = vunpack.c.h.b16 %v939
        %v3507 = vunpack.c.l.b16 %v940
        %v3508 = vunpack.c.l.b16 %v941
        %v3509 = vunpack.c.h.b16 %v941
        %v3510 = vunpack.c.l.b16 %v942
        %v3511 = vunpack.c.h.b16 %v942
        %v3512 = vunpack.c.l.b16 %v943
        %v3513 = vunpack.c.l.b16 %v944
        %v3514 = vunpack.c.h.b16 %v944
        %v3515 = vunpack.c.l.b16 %v945
        %v3516 = vunpack.c.h.b16 %v945
        %v3517 = vunpack.c.l.b16 %v946
        %v3518 = vunpack.c.l.b16 %v947
        %v3519 = vunpack.c.h.b16 %v947
        %v3520 = vunpack.c.l.b16 %v948
        %v3521 = vunpack.c.h.b16 %v948
        %v3522 = vunpack.c.l.b16 %v949
        %v3523 = vunpack.c.l.b16 %v950
        %v3524 = vunpack.c.h.b16 %v950
        %v3525 = vunpack.c.l.b16 %v951
        %v3526 = vunpack.c.h.b16 %v951
        %v3527 = vunpack.c.l.b16 %v952
        %v3528 = vunpack.c.l.b16 %v953
        %v3529 = vunpack.c.h.b16 %v953
        %v3530 = vunpack.c.l.b16 %v954
        %v3531 = vunpack.c.h.b16 %v954
        %v3532 = vunpack.c.l.b16 %v955
        %v3533 = vunpack.c.l.b16 %v956
        %v3534 = vunpack.c.h.b16 %v956
        %v3535 = vunpack.c.l.b16 %v957
        %v3536 = vunpack.c.h.b16 %v957
        %v3537 = vunpack.c.l.b16 %v958
        %v3538 = vunpack.c.l.b16 %v959
        %v3539 = vunpack.c.h.b16 %v959
        %v3540 = vunpack.c.l.b16 %v960
        %v3541 = vunpack.c.h.b16 %v960
        %v3542 = vunpack.c.l.b16 %v961
        %v3543 = vunpack.c.l.b16 %v962
        %v3544 = vunpack.c.h.b16 %v962
        %v3545 = vunpack.c.l.b16 %v963
        %v3546 = vunpack.c.h.b16 %v963
        %v3547 = vunpack.c.l.b16 %v964
        %v3548 = vunpack.c.l.b16 %v965
        %v3549 = vunpack.c.h.b16 %v965
        %v3550 = vunpack.c.l.b16 %v966
        %v3551 = vunpack.c.h.b16 %v966
        %v3552 = vunpack.c.l.b16 %v967
        %v3553 = vunpack.c.l.b16 %v968
        %v3554 = vunpack.c.h.b16 %v968
        %v3555 = vunpack.c.l.b16 %v969
        %v3556 = vunpack.c.h.b16 %v969
        %v3557 = vunpack.c.l.b16 %v970
        %v3558 = vunpack.c.l.b16 %v971
        %v3559 = vunpack.c.h.b16 %v971
        %v3560 = vunpack.c.l.b16 %v972
        %v3561 = vunpack.c.h.b16 %v972
        %v3562 = vunpack.c.l.b16 %v973
        %v3563 = vunpack.c.l.b16 %v974
        %v3564 = vunpack.c.h.b16 %v974
        %v3565 = vunpack.c.l.b16 %v975
        %v3566 = vunpack.c.h.b16 %v975
        %v3567 = vunpack.c.l.b16 %v976
        %v3568 = vunpack.c.l.b16 %v977
        %v3569 = vunpack.c.h.b16 %v977
        %v3570 = vunpack.c.l.b16 %v978
        %v3571 = vunpack.c.h.b16 %v978
        %v3572 = vunpack.c.l.b16 %v979
        %v3573 = vunpack.c.l.b16 %v980
        %v3574 = vunpack.c.h.b16 %v980
        %v3575 = vunpack.c.l.b16 %v981
        %v3576 = vunpack.c.h.b16 %v981
        %v3577 = vunpack.c.l.b16 %v982
        %v3578 = vunpack.c.l.b16 %v983
        %v3579 = vunpack.c.h.b16 %v983
        %v3580 = vunpack.c.l.b16 %v984
        %v3581 = vunpack.c.h.b16 %v984
        %v3582 = vunpack.c.l.b16 %v985
        %v3583 = vunpack.c.l.b16 %v986
        %v3584 = vunpack.c.h.b16 %v986
        %v3585 = vunpack.c.l.b16 %v987
        %v3586 = vunpack.c.h.b16 %v987
        %v3587 = vunpack.c.l.b16 %v988
        %v3588 = vunpack.c.l.b16 %v989
        %v3589 = vunpack.c.h.b16 %v989
        %v3590 = vunpack.c.l.b16 %v990
        %v3591 = vunpack.c.h.b16 %v990
        %v3592 = vunpack.c.l.b16 %v991
        %v3593 = vunpack.c.l.b16 %v992
        %v3594 = vunpack.c.h.b16 %v992
        %v3595 = vunpack.c.l.b16 %v993
        %v3596 = vunpack.c.h.b16 %v993
        %v3597 = vunpack.c.l.b16 %v994
        %v3598 = vunpack.c.l.b16 %v995
        %v3599 = vunpack.c.h.b16 %v995
        %v3600 = vunpack.c.l.b16 %v996
        %v3601 = vunpack.c.h.b16 %v996
        %v3602 = vunpack.c.l.b16 %v997
        %v3603 = vunpack.c.l.b16 %v998
        %v3604 = vunpack.c.h.b16 %v998
        %v3605 = vunpack.c.l.b16 %v999
        %v3606 = vunpack.c.h.b16 %v999
        %v3607 = vunpack.c.l.b16 %v1000
        %v3608 = vunpack.c.l.b16 %v1001
        %v3609 = vunpack.c.h.b16 %v1001
        %v3610 = vunpack.c.l.b16 %v1002
        %v3611 = vunpack.c.h.b16 %v1002
        %v3612 = vunpack.c.l.b16 %v1003
        %v3613 = vunpack.c.l.b16 %v1004
        %v3614 = vunpack.c.h.b16 %v1004
        %v3615 = vunpack.c.l.b16 %v1005
        %v3616 = vunpack.c.h.b16 %v1005
        %v3617 = vunpack.c.l.b16 %v1006
        %v3618 = vunpack.c.l.b16 %v1007
        %v3619 = vunpack.c.h.b16 %v1007
        %v3620 = vunpack.c.l.b16 %v1008
        %v3621 = vunpack.c.h.b16 %v1008
        %v3622 = vunpack.c.l.b16 %v1009
        %v3623 = vunpack.c.l.b16 %v1010
        %v3624 = vunpack.c.h.b16 %v1010
        %v3625 = vunpack.c.l.b16 %v1011
        %v3626 = vunpack.c.h.b16 %v1011
        %v3627 = vunpack.c.l.b16 %v1012
        %v3628 = vunpack.c.l.b16 %v1013
        %v3629 = vunpack.c.h.b16 %v1013
        %v3630 = vunpack.c.l.b16 %v1014
        %v3631 = vunpack.c.h.b16 %v1014
        %v3632 = vunpack.c.l.b16 %v1015
        %v3633 = vunpack.c.l.b16 %v1016
        %v3634 = vunpack.c.h.b16 %v1016
        %v3635 = vunpack.c.l.b16 %v1017
        %v3636 = vunpack.c.h.b16 %v1017
        %v3637 = vunpack.c.l.b16 %v1018
        %v3638 = vunpack.c.l.b16 %v1019
        %v3639 = vunpack.c.h.b16 %v1019
        %v3640 = vunpack.c.l.b16 %v1020
        %v3641 = vunpack.c.h.b16 %v1020
        %v3642 = vunpack.c.l.b16 %v1021
        %v3643 = vunpack.c.l.b16 %v1022
        %v3644 = vunpack.c.h.b16 %v1022
        %v3645 = vunpack.c.l.b16 %v1023
        %v3646 = vunpack.c.h.b16 %v1023
        %v3647 = vunpack.c.l.b16 %v1024
        %v3648 = vunpack.c.l.b16 %v1025
        %v3649 = vunpack.c.h.b16 %v1025
        %v3650 = vunpack.c.l.b16 %v1026
        %v3651 = vunpack.c.h.b16 %v1026
        %v3652 = vunpack.c.l.b16 %v1027
        %v3653 = vunpack.c.l.b16 %v1028
        %v3654 = vunpack.c.h.b16 %v1028
        %v3655 = vunpack.c.l.b16 %v1029
        %v3656 = vunpack.c.h.b16 %v1029
        %v3657 = vunpack.c.l.b16 %v1030
        %v3658 = vunpack.c.l.b16 %v1031
        %v3659 = vunpack.c.h.b16 %v1031
        %v3660 = vunpack.c.l.b16 %v1032
        %v3661 = vunpack.c.h.b16 %v1032
        %v3662 = vunpack.c.l.b16 %v1033
        %v3663 = vunpack.c.l.b16 %v1034
        %v3664 = vunpack.c.h.b16 %v1034
        %v3665 = vunpack.c.l.b16 %v1035
        %v3666 = vunpack.c.h.b16 %v1035
        %v3667 = vunpack.c.l.b16 %v1036
        %v3668 = vunpack.c.l.b16 %v1037
        %v3669 = vunpack.c.h.b16 %v1037
        %v3670 = vunpack.c.l.b16 %v1038
        %v3671 = vunpack.c.h.b16 %v1038
        %v3672 = vunpack.c.l.b16 %v1039
        %v3673 = vunpack.c.l.b16 %v1040
        %v3674 = vunpack.c.h.b16 %v1040
        %v3675 = vunpack.c.l.b16 %v1041
        %v3676 = vunpack.c.h.b16 %v1041
        %v3677 = vunpack.c.l.b16 %v1042
        %v3678 = vunpack.c.l.b16 %v1043
        %v3679 = vunpack.c.h.b16 %v1043
        %v3680 = vunpack.c.l.b16 %v1044
        %v3681 = vunpack.c.h.b16 %v1044
        %v3682 = vunpack.c.l.b16 %v1045
        %v3683 = vunpack.c.l.b16 %v1046
        %v3684 = vunpack.c.h.b16 %v1046
        %v3685 = vunpack.c.l.b16 %v1047
        %v3686 = vunpack.c.h.b16 %v1047
        %v3687 = vunpack.c.l.b16 %v1048
        %v3688 = vunpack.c.l.b16 %v1049
        %v3689 = vunpack.c.h.b16 %v1049
        %v3690 = vunpack.c.l.b16 %v1050
        %v3691 = vunpack.c.h.b16 %v1050
        %v3692 = vunpack.c.l.b16 %v1051
        %v3693 = vunpack.c.l.b16 %v1052
        %v3694 = vunpack.c.h.b16 %v1052
        %v3695 = vunpack.c.l.b16 %v1053
        %v3696 = vunpack.c.h.b16 %v1053
        %v3697 = vunpack.c.l.b16 %v1054
        %v3698 = vunpack.c.l.b16 %v1055
        %v3699 = vunpack.c.h.b16 %v1055
        %v3700 = vunpack.c.l.b16 %v1056
        %v3701 = vunpack.c.h.b16 %v1056
        %v3702 = vunpack.c.l.b16 %v1057
        %v3703 = vunpack.c.l.b16 %v1058
        %v3704 = vunpack.c.h.b16 %v1058
        %v3705 = vunpack.c.l.b16 %v1059
        %v3706 = vunpack.c.h.b16 %v1059
        %v3707 = vunpack.c.l.b16 %v1060
        %v3708 = vunpack.c.l.b16 %v1061
        %v3709 = vunpack.c.h.b16 %v1061
        %v3710 = vunpack.c.l.b16 %v1062
        %v3711 = vunpack.c.h.b16 %v1062
        %v3712 = vunpack.c.l.b16 %v1063
        %v3713 = vunpack.c.l.b16 %v1064
        %v3714 = vunpack.c.h.b16 %v1064
        %v3715 = vunpack.c.l.b16 %v1065
        %v3716 = vunpack.c.h.b16 %v1065
        %v3717 = vunpack.c.l.b16 %v1066
        %v3718 = vunpack.c.l.b16 %v1067
        %v3719 = vunpack.c.h.b16 %v1067
        %v3720 = vunpack.c.l.b16 %v1068
        %v3721 = vunpack.c.h.b16 %v1068
        %v3722 = vunpack.c.l.b16 %v1069
        %v3723 = vunpack.c.l.b16 %v1070
        %v3724 = vunpack.c.h.b16 %v1070
        %v3725 = vunpack.c.l.b16 %v1071
        %v3726 = vunpack.c.h.b16 %v1071
        %v3727 = vunpack.c.l.b16 %v1072
        %v3728 = vunpack.c.l.b16 %v1073
        %v3729 = vunpack.c.h.b16 %v1073
        %v3730 = vunpack.c.l.b16 %v1074
        %v3731 = vunpack.c.h.b16 %v1074
        %v3732 = vunpack.c.l.b16 %v1075
        %v3733 = vunpack.c.l.b16 %v1076
        %v3734 = vunpack.c.h.b16 %v1076
        %v3735 = vunpack.c.l.b16 %v1077
        %v3736 = vunpack.c.h.b16 %v1077
        %v3737 = vunpack.c.l.b16 %v1078
        %v3738 = vunpack.c.l.b16 %v1079
        %v3739 = vunpack.c.h.b16 %v1079
        %v3740 = vunpack.c.l.b16 %v1080
        %v3741 = vunpack.c.h.b16 %v1080
        %v3742 = vunpack.c.l.b16 %v1081
        %v3743 = vunpack.c.l.b16 %v1082
        %v3744 = vunpack.c.h.b16 %v1082
        %v3745 = vunpack.c.l.b16 %v1083
        %v3746 = vunpack.c.h.b16 %v1083
        %v3747 = vunpack.c.l.b16 %v1084
        %v3748 = vunpack.c.l.b16 %v1085
        %v3749 = vunpack.c.h.b16 %v1085
        %v3750 = vunpack.c.l.b16 %v1086
        %v3751 = vunpack.c.h.b16 %v1086
        %v3752 = vunpack.c.l.b16 %v1087
        %v3753 = vunpack.c.l.b16 %v1088
        %v3754 = vunpack.c.h.b16 %v1088
        %v3755 = vunpack.c.l.b16 %v1089
        %v3756 = vunpack.c.h.b16 %v1089
        %v3757 = vunpack.c.l.b16 %v1090
        %v3758 = vunpack.c.l.b16 %v1091
        %v3759 = vunpack.c.h.b16 %v1091
        %v3760 = vunpack.c.l.b16 %v1092
        %v3761 = vunpack.c.h.b16 %v1092
        %v3762 = vunpack.c.l.b16 %v1093
        %v3763 = vunpack.c.l.b16 %v1094
        %v3764 = vunpack.c.h.b16 %v1094
        %v3765 = vunpack.c.l.b16 %v1095
        %v3766 = vunpack.c.h.b16 %v1095
        %v3767 = vunpack.c.l.b16 %v1096
        %v3768 = vunpack.c.l.b16 %v1097
        %v3769 = vunpack.c.h.b16 %v1097
        %v3770 = vunpack.c.l.b16 %v1098
        %v3771 = vunpack.c.h.b16 %v1098
        %v3772 = vunpack.c.l.b16 %v1099
        %v3773 = vunpack.c.l.b16 %v1100
        %v3774 = vunpack.c.h.b16 %v1100
        %v3775 = vunpack.c.l.b16 %v1101
        %v3776 = vunpack.c.h.b16 %v1101
        %v3777 = vunpack.c.l.b16 %v1102
        %v3778 = vunpack.c.l.b16 %v1103
        %v3779 = vunpack.c.h.b16 %v1103
        %v3780 = vunpack.c.l.b16 %v1104
        %v3781 = vunpack.c.h.b16 %v1104
        %v3782 = vunpack.c.l.b16 %v1105
        %v3783 = vunpack.c.l.b16 %v1106
        %v3784 = vunpack.c.h.b16 %v1106
        %v3785 = vunpack.c.l.b16 %v1107
        %v3786 = vunpack.c.h.b16 %v1107
        %v3787 = vunpack.c.l.b16 %v1108
        %v3788 = vunpack.c.l.b16 %v1109
        %v3789 = vunpack.c.h.b16 %v1109
        %v3790 = vunpack.c.l.b16 %v1110
        %v3791 = vunpack.c.h.b16 %v1110
        %v3792 = vunpack.c.l.b16 %v1111
        %v3793 = vunpack.c.l.b16 %v1112
        %v3794 = vunpack.c.h.b16 %v1112
        %v3795 = vunpack.c.l.b16 %v1113
        %v3796 = vunpack.c.h.b16 %v1113
        %v3797 = vunpack.c.l.b16 %v1114
        %v3798 = vunpack.c.l.b16 %v1115
        %v3799 = vunpack.c.h.b16 %v1115
        %v3800 = vunpack.c.l.b16 %v1116
        %v3801 = vunpack.c.h.b16 %v1116
        %v3802 = vunpack.c.l.b16 %v1117
        %v3803 = vunpack.c.l.b16 %v1118
        %v3804 = vunpack.c.h.b16 %v1118
        %v3805 = vunpack.c.l.b16 %v1119
        %v3806 = vunpack.c.h.b16 %v1119
        %v3807 = vunpack.c.l.b16 %v1120
        %v3808 = vunpack.c.l.b16 %v1121
        %v3809 = vunpack.c.h.b16 %v1121
        %v3810 = vunpack.c.l.b16 %v1122
        %v3811 = vunpack.c.h.b16 %v1122
        %v3812 = vunpack.c.l.b16 %v1123
        %v3813 = vunpack.c.l.b16 %v1124
        %v3814 = vunpack.c.h.b16 %v1124
        %v3815 = vunpack.c.l.b16 %v1125
        %v3816 = vunpack.c.h.b16 %v1125
        %v3817 = vunpack.c.l.b16 %v1126
        %v3818 = vunpack.c.l.b16 %v1127
        %v3819 = vunpack.c.h.b16 %v1127
        %v3820 = vunpack.c.l.b16 %v1128
        %v3821 = vunpack.c.h.b16 %v1128
        %v3822 = vunpack.c.l.b16 %v1129
        %v3823 = vunpack.c.l.b16 %v1130
        %v3824 = vunpack.c.h.b16 %v1130
        %v3825 = vunpack.c.l.b16 %v1131
        %v3826 = vunpack.c.h.b16 %v1131
        %v3827 = vunpack.c.l.b16 %v1132
        %v3828 = vunpack.c.l.b16 %v1133
        %v3829 = vunpack.c.h.b16 %v1133
        %v3830 = vunpack.c.l.b16 %v1134
        %v3831 = vunpack.c.h.b16 %v1134
        %v3832 = vunpack.c.l.b16 %v1135
        %v3833 = vunpack.c.l.b16 %v1136
        %v3834 = vunpack.c.h.b16 %v1136
        %v3835 = vunpack.c.l.b16 %v1137
        %v3836 = vunpack.c.h.b16 %v1137
        %v3837 = vunpack.c.l.b16 %v1138
        %v3838 = vunpack.c.l.b16 %v1139
        %v3839 = vunpack.c.h.b16 %v1139
        %v3840 = vunpack.c.l.b16 %v1140
        %v3841 = vunpack.c.h.b16 %v1140
        %v3842 = vunpack.c.l.b16 %v1141
        %v3843 = vunpack.c.l.b16 %v1142
        %v3844 = vunpack.c.h.b16 %v1142
        %v3845 = vunpack.c.l.b16 %v1143
        %v3846 = vunpack.c.h.b16 %v1143
        %v3847 = vunpack.c.l.b16 %v1144
        %v3848 = vunpack.c.l.b16 %v1145
        %v3849 = vunpack.c.h.b16 %v1145
        %v3850 = vunpack.c.l.b16 %v1146
        %v3851 = vunpack.c.h.b16 %v1146
        %v3852 = vunpack.c.l.b16 %v1147
        %v3853 = vunpack.c.l.b16 %v1148
        %v3854 = vunpack.c.h.b16 %v1148
        %v3855 = vunpack.c.l.b16 %v1149
        %v3856 = vunpack.c.h.b16 %v1149
        %v3857 = vunpack.c.l.b16 %v1150
        %v3858 = vunpack.c.l.b16 %v1151
        %v3859 = vunpack.c.h.b16 %v1151
        %v3860 = vunpack.c.l.b16 %v1152
        %v3861 = vunpack.c.h.b16 %v1152
        %v3862 = vunpack.c.l.b16 %v1153
        %v3863 = vunpack.c.l.b16 %v1154
        %v3864 = vunpack.c.h.b16 %v1154
        %v3865 = vunpack.c.l.b16 %v1155
        %v3866 = vunpack.c.h.b16 %v1155
        %v3867 = vunpack.c.l.b16 %v1156
        %v3868 = vunpack.c.l.b16 %v1157
        %v3869 = vunpack.c.h.b16 %v1157
        %v3870 = vunpack.c.l.b16 %v1158
        %v3871 = vunpack.c.h.b16 %v1158
        %v3872 = vunpack.c.l.b16 %v1159
        %v3873 = vunpack.c.l.b16 %v1160
        %v3874 = vunpack.c.h.b16 %v1160
        %v3875 = vunpack.c.l.b16 %v1161
        %v3876 = vunpack.c.h.b16 %v1161
        %v3877 = vunpack.c.l.b16 %v1162
        %v3878 = vunpack.c.l.b16 %v1163
        %v3879 = vunpack.c.h.b16 %v1163
        %v3880 = vunpack.c.l.b16 %v1164
        %v3881 = vunpack.c.h.b16 %v1164
        %v3882 = vunpack.c.l.b16 %v1165
        %v3883 = vunpack.c.l.b16 %v1166
        %v3884 = vunpack.c.h.b16 %v1166
        %v3885 = vunpack.c.l.b16 %v1167
        %v3886 = vunpack.c.h.b16 %v1167
        %v3887 = vunpack.c.l.b16 %v1168
        %v3888 = vunpack.c.l.b16 %v1169
        %v3889 = vunpack.c.h.b16 %v1169
        %v3890 = vunpack.c.l.b16 %v1170
        %v3891 = vunpack.c.h.b16 %v1170
        %v3892 = vunpack.c.l.b16 %v1171
        %v3893 = vunpack.c.l.b16 %v1172
        %v3894 = vunpack.c.h.b16 %v1172
        %v3895 = vunpack.c.l.b16 %v1173
        %v3896 = vunpack.c.h.b16 %v1173
        %v3897 = vunpack.c.l.b16 %v1174
        %v3898 = vunpack.c.l.b16 %v1175
        %v3899 = vunpack.c.h.b16 %v1175
        %v3900 = vunpack.c.l.b16 %v1176
        %v3901 = vunpack.c.h.b16 %v1176
        %v3902 = vunpack.c.l.b16 %v1177
        %v3903 = vunpack.c.l.b16 %v1178
        %v3904 = vunpack.c.h.b16 %v1178
        %v3905 = vunpack.c.l.b16 %v1179
        %v3906 = vunpack.c.h.b16 %v1179
        %v3907 = vunpack.c.l.b16 %v1180
        %v3908 = vunpack.c.l.b16 %v1181
        %v3909 = vunpack.c.h.b16 %v1181
        %v3910 = vunpack.c.l.b16 %v1182
        %v3911 = vunpack.c.h.b16 %v1182
        %v3912 = vunpack.c.l.b16 %v1183
        %v3913 = vunpack.c.l.b16 %v1184
        %v3914 = vunpack.c.h.b16 %v1184
        %v3915 = vunpack.c.l.b16 %v1185
        %v3916 = vunpack.c.h.b16 %v1185
        %v3917 = vunpack.c.l.b16 %v1186
        %v3918 = vunpack.c.l.b16 %v1187
        %v3919 = vunpack.c.h.b16 %v1187
        %v3920 = vunpack.c.l.b16 %v1188
        %v3921 = vunpack.c.h.b16 %v1188
        %v3922 = vunpack.c.l.b16 %v1189
        %v3923 = vunpack.c.l.b16 %v1190
        %v3924 = vunpack.c.h.b16 %v1190
        %v3925 = vunpack.c.l.b16 %v1191
        %v3926 = vunpack.c.h.b16 %v1191
        %v3927 = vunpack.c.l.b16 %v1192
        %v3928 = vunpack.c.l.b16 %v1193
        %v3929 = vunpack.c.h.b16 %v1193
        %v3930 = vunpack.c.l.b16 %v1194
        %v3931 = vunpack.c.h.b16 %v1194
        %v3932 = vunpack.c.l.b16 %v1195
        %v3933 = vunpack.c.l.b16 %v1196
        %v3934 = vunpack.c.h.b16 %v1196
        %v3935 = vunpack.c.l.b16 %v1197
        %v3936 = vunpack.c.h.b16 %v1197
        %v3937 = vunpack.c.l.b16 %v1198
        %v3938 = vunpack.c.l.b16 %v1199
        %v3939 = vunpack.c.h.b16 %v1199
        %v3940 = vunpack.c.l.b16 %v1200
        %v3941 = vunpack.c.h.b16 %v1200
        %v3942 = vunpack.c.l.b16 %v1201
        %v3943 = vunpack.c.l.b16 %v1202
        %v3944 = vunpack.c.h.b16 %v1202
        %v3945 = vunpack.c.l.b16 %v1203
        %v3946 = vunpack.c.h.b16 %v1203
        %v3947 = vunpack.c.l.b16 %v1204
        %v3948 = vunpack.c.l.b16 %v1205
        %v3949 = vunpack.c.h.b16 %v1205
        %v3950 = vunpack.c.l.b16 %v1206
        %v3951 = vunpack.c.h.b16 %v1206
        %v3952 = vunpack.c.l.b16 %v1207
        %v3953 = vunpack.c.l.b16 %v1208
        %v3954 = vunpack.c.h.b16 %v1208
        %v3955 = vunpack.c.l.b16 %v1209
        %v3956 = vunpack.c.h.b16 %v1209
        %v3957 = vunpack.c.l.b16 %v1210
        %v3958 = vunpack.c.l.b16 %v1211
        %v3959 = vunpack.c.h.b16 %v1211
        %v3960 = vunpack.c.l.b16 %v1212
        %v3961 = vunpack.c.h.b16 %v1212
        %v3962 = vunpack.c.l.b16 %v1213
        %v3963 = vunpack.c.l.b16 %v1214
        %v3964 = vunpack.c.h.b16 %v1214
        %v3965 = vunpack.c.l.b16 %v1215
        %v3966 = vunpack.c.h.b16 %v1215
        %v3967 = vunpack.c.l.b16 %v1216
        %v3968 = vunpack.c.l.b16 %v1217
        %v3969 = vunpack.c.h.b16 %v1217
        %v3970 = vunpack.c.l.b16 %v1218
        %v3971 = vunpack.c.h.b16 %v1218
        %v3972 = vunpack.c.l.b16 %v1219
        %v3973 = vunpack.c.l.b16 %v1220
        %v3974 = vunpack.c.h.b16 %v1220
        %v3975 = vunpack.c.l.b16 %v1221
        %v3976 = vunpack.c.h.b16 %v1221
        %v3977 = vunpack.c.l.b16 %v1222
        %v3978 = vunpack.c.l.b16 %v1223
        %v3979 = vunpack.c.h.b16 %v1223
        %v3980 = vunpack.c.l.b16 %v1224
        %v3981 = vunpack.c.h.b16 %v1224
        %v3982 = vunpack.c.l.b16 %v1225
        %v3983 = vunpack.c.l.b16 %v1226
        %v3984 = vunpack.c.h.b16 %v1226
        %v3985 = vunpack.c.l.b16 %v1227
        %v3986 = vunpack.c.h.b16 %v1227
        %v3987 = vunpack.c.l.b16 %v1228
        %v3988 = vunpack.c.l.b16 %v1229
        %v3989 = vunpack.c.h.b16 %v1229
        %v3990 = vunpack.c.l.b16 %v1230
        %v3991 = vunpack.c.h.b16 %v1230
        %v3992 = vunpack.c.l.b16 %v1231
        %v3993 = vunpack.c.l.b16 %v1232
        %v3994 = vunpack.c.h.b16 %v1232
        %v3995 = vunpack.c.l.b16 %v1233
        %v3996 = vunpack.c.h.b16 %v1233
        %v3997 = vunpack.c.l.b16 %v1234
        %v3998 = vunpack.c.l.b16 %v1235
        %v3999 = vunpack.c.h.b16 %v1235
        %v4000 = vunpack.c.l.b16 %v1236
        %v4001 = vunpack.c.h.b16 %v1236
        %v4002 = vunpack.c.l.b16 %v1237
        %v4003 = vunpack.c.l.b16 %v1238
        %v4004 = vunpack.c.h.b16 %v1238
        %v4005 = vunpack.c.l.b16 %v1239
        %v4006 = vunpack.c.h.b16 %v1239
        %v4007 = vunpack.c.l.b16 %v1240
        %v4008 = vunpack.c.l.b16 %v1241
        %v4009 = vunpack.c.h.b16 %v1241
        %v4010 = vunpack.c.l.b16 %v1242
        %v4011 = vunpack.c.h.b16 %v1242
        %v4012 = vunpack.c.l.b16 %v1243
        %v4013 = vunpack.c.l.b16 %v1244
        %v4014 = vunpack.c.h.b16 %v1244
        %v4015 = vunpack.c.l.b16 %v1245
        %v4016 = vunpack.c.h.b16 %v1245
        %v4017 = vunpack.c.l.b16 %v1246
        %v4018 = vunpack.c.l.b16 %v1247
        %v4019 = vunpack.c.h.b16 %v1247
        %v4020 = vunpack.c.l.b16 %v1248
        %v4021 = vunpack.c.h.b16 %v1248
        %v4022 = vunpack.c.l.b16 %v1249
        %v4023 = vunpack.c.l.b16 %v1250
        %v4024 = vunpack.c.h.b16 %v1250
        %v4025 = vunpack.c.l.b16 %v1251
        %v4026 = vunpack.c.h.b16 %v1251
        %v4027 = vunpack.c.l.b16 %v1252
        %v4028 = vunpack.c.l.b16 %v1253
        %v4029 = vunpack.c.h.b16 %v1253
        %v4030 = vunpack.c.l.b16 %v1254
        %v4031 = vunpack.c.h.b16 %v1254
        %v4032 = vunpack.c.l.b16 %v1255
        %v4033 = vunpack.c.l.b16 %v1256
        %v4034 = vunpack.c.h.b16 %v1256
        %v4035 = vunpack.c.l.b16 %v1257
        %v4036 = vunpack.c.h.b16 %v1257
        %v4037 = vunpack.c.l.b16 %v1258
        %v4038 = vunpack.c.l.b16 %v1259
        %v4039 = vunpack.c.h.b16 %v1259
        %v4040 = vunpack.c.l.b16 %v1260
        %v4041 = vunpack.c.h.b16 %v1260
        %v4042 = vunpack.c.l.b16 %v1261
        %v4043 = vunpack.c.l.b16 %v1262
        %v4044 = vunpack.c.h.b16 %v1262
        %v4045 = vunpack.c.l.b16 %v1263
        %v4046 = vunpack.c.h.b16 %v1263
        %v4047 = vunpack.c.l.b16 %v1264
        %v4048 = vunpack.c.l.b16 %v1265
        %v4049 = vunpack.c.h.b16 %v1265
        %v4050 = vunpack.c.l.b16 %v1266
        %v4051 = vunpack.c.h.b16 %v1266
        %v4052 = vunpack.c.l.b16 %v1267
        %v4053 = vunpack.c.l.b16 %v1268
        %v4054 = vunpack.c.h.b16 %v1268
        %v4055 = vunpack.c.l.b16 %v1269
        %v4056 = vunpack.c.h.b16 %v1269
        %v4057 = vunpack.c.l.b16 %v1270
        %v4058 = vunpack.c.l.b16 %v1271
        %v4059 = vunpack.c.h.b16 %v1271
        %v4060 = vunpack.c.l.b16 %v1272
        %v4061 = vunpack.c.h.b16 %v1272
        %v4062 = vunpack.c.l.b16 %v1273
        %v4063 = vunpack.c.l.b16 %v1274
        %v4064 = vunpack.c.h.b16 %v1274
        %v4065 = vunpack.c.l.b16 %v1275
        %v4066 = vunpack.c.h.b16 %v1275
        %v4067 = vunpack.c.l.b16 %v1276
        %v4068 = vunpack.c.l.b16 %v1277
        %v4069 = vunpack.c.h.b16 %v1277
        %v4070 = vunpack.c.l.b16 %v1278
        %v4071 = vunpack.c.h.b16 %v1278
        %v4072 = vunpack.c.l.b16 %v1279
        %v4073 = vunpack.c.l.b16 %v1280
        %v4074 = vunpack.c.h.b16 %v1280
        %v4075 = vunpack.c.l.b16 %v1281
        %v4076 = vunpack.c.h.b16 %v1281
        %v4077 = vunpack.c.l.b16 %v1282
        %v4078 = vunpack.c.l.b16 %v1283
        %v4079 = vunpack.c.h.b16 %v1283
        %v4080 = vunpack.c.l.b16 %v1284
        %v4081 = vunpack.c.h.b16 %v1284
        %v4082 = vunpack.c.l.b16 %v1285
        %v4083 = vunpack.c.l.b16 %v1286
        %v4084 = vunpack.c.h.b16 %v1286
        %v4085 = vunpack.c.l.b16 %v1287
        %v4086 = vunpack.c.h.b16 %v1287
        %v4087 = vunpack.c.l.b16 %v1288
        %v4088 = vunpack.c.l.b16 %v1289
        %v4089 = vunpack.c.h.b16 %v1289
        %v4090 = vunpack.c.l.b16 %v1290
        %v4091 = vunpack.c.h.b16 %v1290
        %v4092 = vunpack.c.l.b16 %v1291
        %v4093 = vunpack.c.l.b16 %v1292
        %v4094 = vunpack.c.h.b16 %v1292
        %v4095 = vunpack.c.l.b16 %v1293
        %v4096 = vunpack.c.h.b16 %v1293
        %v4097 = vunpack.c.l.b16 %v1294
        %v4098 = vunpack.c.l.b16 %v1295
        %v4099 = vunpack.c.h.b16 %v1295
        %v4100 = vunpack.c.l.b16 %v1296
        %v4101 = vunpack.c.h.b16 %v1296
        %v4102 = vunpack.c.l.b16 %v1297
        %v4103 = vunpack.c.l.b16 %v1298
        %v4104 = vunpack.c.h.b16 %v1298
        %v4105 = vunpack.c.l.b16 %v1299
        %v4106 = vunpack.c.h.b16 %v1299
        %v4107 = vunpack.c.l.b16 %v1300
        %v4108 = vunpack.c.l.b16 %v1301
        %v4109 = vunpack.c.h.b16 %v1301
        %v4110 = vunpack.c.l.b16 %v1302
        %v4111 = vunpack.c.h.b16 %v1302
        %v4112 = vunpack.c.l.b16 %v1303
        %v4113 = vunpack.c.l.b16 %v1304
        %v4114 = vunpack.c.h.b16 %v1304
        %v4115 = vunpack.c.l.b16 %v1305
        %v4116 = vunpack.c.h.b16 %v1305
        %v4117 = vunpack.c.l.b16 %v1306
        %v4118 = vunpack.c.l.b16 %v1307
        %v4119 = vunpack.c.h.b16 %v1307
        %v4120 = vunpack.c.l.b16 %v1308
        %v4121 = vunpack.c.h.b16 %v1308
        %v4122 = vunpack.c.l.b16 %v1309
        %v4123 = vunpack.c.l.b16 %v1310
        %v4124 = vunpack.c.h.b16 %v1310
        %v4125 = vunpack.c.l.b16 %v1311
        %v4126 = vunpack.c.h.b16 %v1311
        %v4127 = vunpack.c.l.b16 %v1312
        %v4128 = vunpack.c.l.b16 %v1313
        %v4129 = vunpack.c.h.b16 %v1313
        %v4130 = vunpack.c.l.b16 %v1314
        %v4131 = vunpack.c.h.b16 %v1314
        %v4132 = vunpack.c.l.b16 %v1315
        %v4133 = vunpack.c.l.b16 %v1316
        %v4134 = vunpack.c.h.b16 %v1316
        %v4135 = vunpack.c.l.b16 %v1317
        %v4136 = vunpack.c.h.b16 %v1317
        %v4137 = vunpack.c.l.b16 %v1318
        %v4138 = vunpack.c.l.b16 %v1319
        %v4139 = vunpack.c.h.b16 %v1319
        %v4140 = vunpack.c.l.b16 %v1320
        %v4141 = vunpack.c.h.b16 %v1320
        %v4142 = vunpack.c.l.b16 %v1321
        %v4143 = vunpack.c.l.b16 %v1322
        %v4144 = vunpack.c.h.b16 %v1322
        %v4145 = vunpack.c.l.b16 %v1323
        %v4146 = vunpack.c.h.b16 %v1323
        %v4147 = vunpack.c.l.b16 %v1324
        %v4148 = vunpack.c.l.b16 %v1325
        %v4149 = vunpack.c.h.b16 %v1325
        %v4150 = vunpack.c.l.b16 %v1326
        %v4151 = vunpack.c.h.b16 %v1326
        %v4152 = vunpack.c.l.b16 %v1327
        %v4153 = vunpack.c.l.b16 %v1328
        %v4154 = vunpack.c.h.b16 %v1328
        %v4155 = vunpack.c.l.b16 %v1329
        %v4156 = vunpack.c.h.b16 %v1329
        %v4157 = vunpack.c.l.b16 %v1330
        %v4158 = vunpack.c.l.b16 %v1331
        %v4159 = vunpack.c.h.b16 %v1331
        %v4160 = vunpack.c.l.b16 %v1332
        %v4161 = vunpack.c.h.b16 %v1332
        %v4162 = vunpack.c.l.b16 %v1333
        %v4163 = vunpack.c.l.b16 %v1334
        %v4164 = vunpack.c.h.b16 %v1334
        %v4165 = vunpack.c.l.b16 %v1335
        %v4166 = vunpack.c.h.b16 %v1335
        %v4167 = vunpack.c.l.b16 %v1336
        %v4168 = vunpack.c.l.b16 %v1337
        %v4169 = vunpack.c.h.b16 %v1337
        %v4170 = vunpack.c.l.b16 %v1338
        %v4171 = vunpack.c.h.b16 %v1338
        %v4172 = vunpack.c.l.b16 %v1339
        %v4173 = vunpack.c.l.b16 %v1340
        %v4174 = vunpack.c.h.b16 %v1340
        %v4175 = vunpack.c.l.b16 %v1341
        %v4176 = vunpack.c.h.b16 %v1341
        %v4177 = vunpack.c.l.b16 %v1342
        %v4178 = vunpack.c.l.b16 %v1343
        %v4179 = vunpack.c.h.b16 %v1343
        %v4180 = vunpack.c.l.b16 %v1344
        %v4181 = vunpack.c.h.b16 %v1344
        %v4182 = vunpack.c.l.b16 %v1345
        %v4183 = vunpack.c.l.b16 %v1346
        %v4184 = vunpack.c.h.b16 %v1346
        %v4185 = vunpack.c.l.b16 %v1347
        %v4186 = vunpack.c.h.b16 %v1347
        %v4187 = vunpack.c.l.b16 %v1348
        %v4188 = vunpack.c.l.b16 %v1349
        %v4189 = vunpack.c.h.b16 %v1349
        %v4190 = vunpack.c.l.b16 %v1350
        %v4191 = vunpack.c.h.b16 %v1350
        %v4192 = vunpack.c.l.b16 %v1351
        %v4193 = vunpack.c.l.b16 %v1352
        %v4194 = vunpack.c.h.b16 %v1352
        %v4195 = vunpack.c.l.b16 %v1353
        %v4196 = vunpack.c.h.b16 %v1353
        %v4197 = vunpack.c.l.b16 %v1354
        %v4198 = vunpack.c.l.b16 %v1355
        %v4199 = vunpack.c.h.b16 %v1355
        %v4200 = vunpack.c.l.b16 %v1356
        %v4201 = vunpack.c.h.b16 %v1356
        %v4202 = vunpack.c.l.b16 %v1357
        %v4203 = vunpack.c.l.b16 %v1358
        %v4204 = vunpack.c.h.b16 %v1358
        %v4205 = vunpack.c.l.b16 %v1359
        %v4206 = vunpack.c.h.b16 %v1359
        %v4207 = vunpack.c.l.b16 %v1360
        %v4208 = vunpack.c.l.b16 %v1361
        %v4209 = vunpack.c.h.b16 %v1361
        %v4210 = vunpack.c.l.b16 %v1362
        %v4211 = vunpack.c.h.b16 %v1362
        %v4212 = vunpack.c.l.b16 %v1363
        %v4213 = vpack.c.b16 %v2538, %v2533
        %v4214 = vpack.c.b16 %v2539, %v2534
        %v4215 = vpack.c.b16 %v2540, %v2535
        %v4216 = vpack.c.b16 %v2541, %v2536
        %v4217 = vpack.c.b16 %v2542, %v2537
        %v4218 = vpack.c.b16 %v2548, %v2543
        %v4219 = vpack.c.b16 %v2549, %v2544
        %v4220 = vpack.c.b16 %v2550, %v2545
        %v4221 = vpack.c.b16 %v2551, %v2546
        %v4222 = vpack.c.b16 %v2552, %v2547
        %v4223 = vpack.c.b16 %v2558, %v2553
        %v4224 = vpack.c.b16 %v2559, %v2554
        %v4225 = vpack.c.b16 %v2560, %v2555
        %v4226 = vpack.c.b16 %v2561, %v2556
        %v4227 = vpack.c.b16 %v2562, %v2557
        %v4228 = vpack.c.b16 %v2568, %v2563
        %v4229 = vpack.c.b16 %v2569, %v2564
        %v4230 = vpack.c.b16 %v2570, %v2565
        %v4231 = vpack.c.b16 %v2571, %v2566
        %v4232 = vpack.c.b16 %v2572, %v2567
        %v4233 = vpack.c.b16 %v2578, %v2573
        %v4234 = vpack.c.b16 %v2579, %v2574
        %v4235 = vpack.c.b16 %v2580, %v2575
        %v4236 = vpack.c.b16 %v2581, %v2576
        %v4237 = vpack.c.b16 %v2582, %v2577
        %v4238 = vpack.c.b16 %v2588, %v2583
        %v4239 = vpack.c.b16 %v2589, %v2584
        %v4240 = vpack.c.b16 %v2590, %v2585
        %v4241 = vpack.c.b16 %v2591, %v2586
        %v4242 = vpack.c.b16 %v2592, %v2587
        %v4243 = vpack.c.b16 %v2598, %v2593
        %v4244 = vpack.c.b16 %v2599, %v2594
        %v4245 = vpack.c.b16 %v2600, %v2595
        %v4246 = vpack.c.b16 %v2601, %v2596
        %v4247 = vpack.c.b16 %v2602, %v2597
        %v4248 = vpack.c.b16 %v2608, %v2603
        %v4249 = vpack.c.b16 %v2609, %v2604
        %v4250 = vpack.c.b16 %v2610, %v2605
        %v4251 = vpack.c.b16 %v2611, %v2606
        %v4252 = vpack.c.b16 %v2612, %v2607
        %v4253 = vpack.c.b16 %v2618, %v2613
        %v4254 = vpack.c.b16 %v2619, %v2614
        %v4255 = vpack.c.b16 %v2620, %v2615
        %v4256 = vpack.c.b16 %v2621, %v2616
        %v4257 = vpack.c.b16 %v2622, %v2617
        %v4258 = vpack.c.b16 %v2628, %v2623
        %v4259 = vpack.c.b16 %v2629, %v2624
        %v4260 = vpack.c.b16 %v2630, %v2625
        %v4261 = vpack.c.b16 %v2631, %v2626
        %v4262 = vpack.c.b16 %v2632, %v2627
        %v4263 = vpack.c.b16 %v2638, %v2633
        %v4264 = vpack.c.b16 %v2639, %v2634
        %v4265 = vpack.c.b16 %v2640, %v2635
        %v4266 = vpack.c.b16 %v2641, %v2636
        %v4267 = vpack.c.b16 %v2642, %v2637
        %v4268 = vpack.c.b16 %v2648, %v2643
        %v4269 = vpack.c.b16 %v2649, %v2644
        %v4270 = vpack.c.b16 %v2650, %v2645
        %v4271 = vpack.c.b16 %v2651, %v2646
        %v4272 = vpack.c.b16 %v2652, %v2647
        %v4273 = vpack.c.b16 %v2658, %v2653
        %v4274 = vpack.c.b16 %v2659, %v2654
        %v4275 = vpack.c.b16 %v2660, %v2655
        %v4276 = vpack.c.b16 %v2661, %v2656
        %v4277 = vpack.c.b16 %v2662, %v2657
        %v4278 = vpack.c.b16 %v2668, %v2663
        %v4279 = vpack.c.b16 %v2669, %v2664
        %v4280 = vpack.c.b16 %v2670, %v2665
        %v4281 = vpack.c.b16 %v2671, %v2666
        %v4282 = vpack.c.b16 %v2672, %v2667
        %v4283 = vpack.c.b16 %v2678, %v2673
        %v4284 = vpack.c.b16 %v2679, %v2674
        %v4285 = vpack.c.b16 %v2680, %v2675
        %v4286 = vpack.c.b16 %v2681, %v2676
        %v4287 = vpack.c.b16 %v2682, %v2677
        %v4288 = vpack.c.b16 %v2688, %v2683
        %v4289 = vpack.c.b16 %v2689, %v2684
        %v4290 = vpack.c.b16 %v2690, %v2685
        %v4291 = vpack.c.b16 %v2691, %v2686
        %v4292 = vpack.c.b16 %v2692, %v2687
        %v4293 = vpack.c.b16 %v2698, %v2693
        %v4294 = vpack.c.b16 %v2699, %v2694
        %v4295 = vpack.c.b16 %v2700, %v2695
        %v4296 = vpack.c.b16 %v2701, %v2696
        %v4297 = vpack.c.b16 %v2702, %v2697
        %v4298 = vpack.c.b16 %v2708, %v2703
        %v4299 = vpack.c.b16 %v2709, %v2704
        %v4300 = vpack.c.b16 %v2710, %v2705
        %v4301 = vpack.c.b16 %v2711, %v2706
        %v4302 = vpack.c.b16 %v2712, %v2707
        %v4303 = vpack.c.b16 %v2718, %v2713
        %v4304 = vpack.c.b16 %v2719, %v2714
        %v4305 = vpack.c.b16 %v2720, %v2715
        %v4306 = vpack.c.b16 %v2721, %v2716
        %v4307 = vpack.c.b16 %v2722, %v2717
        %v4308 = vpack.c.b16 %v2728, %v2723
        %v4309 = vpack.c.b16 %v2729, %v2724
        %v4310 = vpack.c.b16 %v2730, %v2725
        %v4311 = vpack.c.b16 %v2731, %v2726
        %v4312 = vpack.c.b16 %v2732, %v2727
        %v4313 = vpack.c.b16 %v2738, %v2733
        %v4314 = vpack.c.b16 %v2739, %v2734
        %v4315 = vpack.c.b16 %v2740, %v2735
        %v4316 = vpack.c.b16 %v2741, %v2736
        %v4317 = vpack.c.b16 %v2742, %v2737
        %v4318 = vpack.c.b16 %v2748, %v2743
        %v4319 = vpack.c.b16 %v2749, %v2744
        %v4320 = vpack.c.b16 %v2750, %v2745
        %v4321 = vpack.c.b16 %v2751, %v2746
        %v4322 = vpack.c.b16 %v2752, %v2747
        %v4323 = vpack.c.b16 %v2758, %v2753
        %v4324 = vpack.c.b16 %v2759, %v2754
        %v4325 = vpack.c.b16 %v2760, %v2755
        %v4326 = vpack.c.b16 %v2761, %v2756
        %v4327 = vpack.c.b16 %v2762, %v2757
        %v4328 = vpack.c.b16 %v2768, %v2763
        %v4329 = vpack.c.b16 %v2769, %v2764
        %v4330 = vpack.c.b16 %v2770, %v2765
        %v4331 = vpack.c.b16 %v2771, %v2766
        %v4332 = vpack.c.b16 %v2772, %v2767
        %v4333 = vpack.c.b16 %v2778, %v2773
        %v4334 = vpack.c.b16 %v2779, %v2774
        %v4335 = vpack.c.b16 %v2780, %v2775
        %v4336 = vpack.c.b16 %v2781, %v2776
        %v4337 = vpack.c.b16 %v2782, %v2777
        %v4338 = vpack.c.b16 %v2788, %v2783
        %v4339 = vpack.c.b16 %v2789, %v2784
        %v4340 = vpack.c.b16 %v2790, %v2785
        %v4341 = vpack.c.b16 %v2791, %v2786
        %v4342 = vpack.c.b16 %v2792, %v2787
        %v4343 = vpack.c.b16 %v2798, %v2793
        %v4344 = vpack.c.b16 %v2799, %v2794
        %v4345 = vpack.c.b16 %v2800, %v2795
        %v4346 = vpack.c.b16 %v2801, %v2796
        %v4347 = vpack.c.b16 %v2802, %v2797
        %v4348 = vpack.c.b16 %v2808, %v2803
        %v4349 = vpack.c.b16 %v2809, %v2804
        %v4350 = vpack.c.b16 %v2810, %v2805
        %v4351 = vpack.c.b16 %v2811, %v2806
        %v4352 = vpack.c.b16 %v2812, %v2807
        %v4353 = vpack.c.b16 %v2818, %v2813
        %v4354 = vpack.c.b16 %v2819, %v2814
        %v4355 = vpack.c.b16 %v2820, %v2815
        %v4356 = vpack.c.b16 %v2821, %v2816
        %v4357 = vpack.c.b16 %v2822, %v2817
        %v4358 = vpack.c.b16 %v2828, %v2823
        %v4359 = vpack.c.b16 %v2829, %v2824
        %v4360 = vpack.c.b16 %v2830, %v2825
        %v4361 = vpack.c.b16 %v2831, %v2826
        %v4362 = vpack.c.b16 %v2832, %v2827
        %v4363 = vpack.c.b16 %v2838, %v2833
        %v4364 = vpack.c.b16 %v2839, %v2834
        %v4365 = vpack.c.b16 %v2840, %v2835
        %v4366 = vpack.c.b16 %v2841, %v2836
        %v4367 = vpack.c.b16 %v2842, %v2837
        %v4368 = vpack.c.b16 %v2848, %v2843
        %v4369 = vpack.c.b16 %v2849, %v2844
        %v4370 = vpack.c.b16 %v2850, %v2845
        %v4371 = vpack.c.b16 %v2851, %v2846
        %v4372 = vpack.c.b16 %v2852, %v2847
        %v4373 = vpack.c.b16 %v2858, %v2853
        %v4374 = vpack.c.b16 %v2859, %v2854
        %v4375 = vpack.c.b16 %v2860, %v2855
        %v4376 = vpack.c.b16 %v2861, %v2856
        %v4377 = vpack.c.b16 %v2862, %v2857
        %v4378 = vpack.c.b16 %v2868, %v2863
        %v4379 = vpack.c.b16 %v2869, %v2864
        %v4380 = vpack.c.b16 %v2870, %v2865
        %v4381 = vpack.c.b16 %v2871, %v2866
        %v4382 = vpack.c.b16 %v2872, %v2867
        %v4383 = vpack.c.b16 %v2878, %v2873
        %v4384 = vpack.c.b16 %v2879, %v2874
        %v4385 = vpack.c.b16 %v2880, %v2875
        %v4386 = vpack.c.b16 %v2881, %v2876
        %v4387 = vpack.c.b16 %v2882, %v2877
        %v4388 = vpack.c.b16 %v2888, %v2883
        %v4389 = vpack.c.b16 %v2889, %v2884
        %v4390 = vpack.c.b16 %v2890, %v2885
        %v4391 = vpack.c.b16 %v2891, %v2886
        %v4392 = vpack.c.b16 %v2892, %v2887
        %v4393 = vpack.c.b16 %v2898, %v2893
        %v4394 = vpack.c.b16 %v2899, %v2894
        %v4395 = vpack.c.b16 %v2900, %v2895
        %v4396 = vpack.c.b16 %v2901, %v2896
        %v4397 = vpack.c.b16 %v2902, %v2897
        %v4398 = vpack.c.b16 %v2908, %v2903
        %v4399 = vpack.c.b16 %v2909, %v2904
        %v4400 = vpack.c.b16 %v2910, %v2905
        %v4401 = vpack.c.b16 %v2911, %v2906
        %v4402 = vpack.c.b16 %v2912, %v2907
        %v4403 = vpack.c.b16 %v2918, %v2913
        %v4404 = vpack.c.b16 %v2919, %v2914
        %v4405 = vpack.c.b16 %v2920, %v2915
        %v4406 = vpack.c.b16 %v2921, %v2916
        %v4407 = vpack.c.b16 %v2922, %v2917
        %v4408 = vpack.c.b16 %v2928, %v2923
        %v4409 = vpack.c.b16 %v2929, %v2924
        %v4410 = vpack.c.b16 %v2930, %v2925
        %v4411 = vpack.c.b16 %v2931, %v2926
        %v4412 = vpack.c.b16 %v2932, %v2927
        %v4413 = vpack.c.b16 %v2938, %v2933
        %v4414 = vpack.c.b16 %v2939, %v2934
        %v4415 = vpack.c.b16 %v2940, %v2935
        %v4416 = vpack.c.b16 %v2941, %v2936
        %v4417 = vpack.c.b16 %v2942, %v2937
        %v4418 = vpack.c.b16 %v2948, %v2943
        %v4419 = vpack.c.b16 %v2949, %v2944
        %v4420 = vpack.c.b16 %v2950, %v2945
        %v4421 = vpack.c.b16 %v2951, %v2946
        %v4422 = vpack.c.b16 %v2952, %v2947
        %v4423 = vpack.c.b16 %v2958, %v2953
        %v4424 = vpack.c.b16 %v2959, %v2954
        %v4425 = vpack.c.b16 %v2960, %v2955
        %v4426 = vpack.c.b16 %v2961, %v2956
        %v4427 = vpack.c.b16 %v2962, %v2957
        %v4428 = vpack.c.b16 %v2968, %v2963
        %v4429 = vpack.c.b16 %v2969, %v2964
        %v4430 = vpack.c.b16 %v2970, %v2965
        %v4431 = vpack.c.b16 %v2971, %v2966
        %v4432 = vpack.c.b16 %v2972, %v2967
        %v4433 = vpack.c.b16 %v2978, %v2973
        %v4434 = vpack.c.b16 %v2979, %v2974
        %v4435 = vpack.c.b16 %v2980, %v2975
        %v4436 = vpack.c.b16 %v2981, %v2976
        %v4437 = vpack.c.b16 %v2982, %v2977
        %v4438 = vpack.c.b16 %v2988, %v2983
        %v4439 = vpack.c.b16 %v2989, %v2984
        %v4440 = vpack.c.b16 %v2990, %v2985
        %v4441 = vpack.c.b16 %v2991, %v2986
        %v4442 = vpack.c.b16 %v2992, %v2987
        %v4443 = vpack.c.b16 %v2998, %v2993
        %v4444 = vpack.c.b16 %v2999, %v2994
        %v4445 = vpack.c.b16 %v3000, %v2995
        %v4446 = vpack.c.b16 %v3001, %v2996
        %v4447 = vpack.c.b16 %v3002, %v2997
        %v4448 = vpack.c.b16 %v3008, %v3003
        %v4449 = vpack.c.b16 %v3009, %v3004
        %v4450 = vpack.c.b16 %v3010, %v3005
        %v4451 = vpack.c.b16 %v3011, %v3006
        %v4452 = vpack.c.b16 %v3012, %v3007
        %v4453 = vpack.c.b16 %v3018, %v3013
        %v4454 = vpack.c.b16 %v3019, %v3014
        %v4455 = vpack.c.b16 %v3020, %v3015
        %v4456 = vpack.c.b16 %v3021, %v3016
        %v4457 = vpack.c.b16 %v3022, %v3017
        %v4458 = vpack.c.b16 %v3028, %v3023
        %v4459 = vpack.c.b16 %v3029, %v3024
        %v4460 = vpack.c.b16 %v3030, %v3025
        %v4461 = vpack.c.b16 %v3031, %v3026
        %v4462 = vpack.c.b16 %v3032, %v3027
        %v4463 = vpack.c.b16 %v3038, %v3033
        %v4464 = vpack.c.b16 %v3039, %v3034
        %v4465 = vpack.c.b16 %v3040, %v3035
        %v4466 = vpack.c.b16 %v3041, %v3036
        %v4467 = vpack.c.b16 %v3042, %v3037
        %v4468 = vpack.c.b16 %v3048, %v3043
        %v4469 = vpack.c.b16 %v3049, %v3044
        %v4470 = vpack.c.b16 %v3050, %v3045
        %v4471 = vpack.c.b16 %v3051, %v3046
        %v4472 = vpack.c.b16 %v3052, %v3047
        %v4473 = vpack.c.b16 %v3058, %v3053
        %v4474 = vpack.c.b16 %v3059, %v3054
        %v4475 = vpack.c.b16 %v3060, %v3055
        %v4476 = vpack.c.b16 %v3061, %v3056
        %v4477 = vpack.c.b16 %v3062, %v3057
        %v4478 = vpack.c.b16 %v3068, %v3063
        %v4479 = vpack.c.b16 %v3069, %v3064
        %v4480 = vpack.c.b16 %v3070, %v3065
        %v4481 = vpack.c.b16 %v3071, %v3066
        %v4482 = vpack.c.b16 %v3072, %v3067
        %v4483 = vpack.c.b16 %v3078, %v3073
        %v4484 = vpack.c.b16 %v3079, %v3074
        %v4485 = vpack.c.b16 %v3080, %v3075
        %v4486 = vpack.c.b16 %v3081, %v3076
        %v4487 = vpack.c.b16 %v3082, %v3077
        %v4488 = vpack.c.b16 %v3088, %v3083
        %v4489 = vpack.c.b16 %v3089, %v3084
        %v4490 = vpack.c.b16 %v3090, %v3085
        %v4491 = vpack.c.b16 %v3091, %v3086
        %v4492 = vpack.c.b16 %v3092, %v3087
        %v4493 = vpack.c.b16 %v3098, %v3093
        %v4494 = vpack.c.b16 %v3099, %v3094
        %v4495 = vpack.c.b16 %v3100, %v3095
        %v4496 = vpack.c.b16 %v3101, %v3096
        %v4497 = vpack.c.b16 %v3102, %v3097
        %v4498 = vpack.c.b16 %v3108, %v3103
        %v4499 = vpack.c.b16 %v3109, %v3104
        %v4500 = vpack.c.b16 %v3110, %v3105
        %v4501 = vpack.c.b16 %v3111, %v3106
        %v4502 = vpack.c.b16 %v3112, %v3107
        %v4503 = vpack.c.b16 %v3118, %v3113
        %v4504 = vpack.c.b16 %v3119, %v3114
        %v4505 = vpack.c.b16 %v3120, %v3115
        %v4506 = vpack.c.b16 %v3121, %v3116
        %v4507 = vpack.c.b16 %v3122, %v3117
        %v4508 = vpack.c.b16 %v3128, %v3123
        %v4509 = vpack.c.b16 %v3129, %v3124
        %v4510 = vpack.c.b16 %v3130, %v3125
        %v4511 = vpack.c.b16 %v3131, %v3126
        %v4512 = vpack.c.b16 %v3132, %v3127
        %v4513 = vpack.c.b16 %v3138, %v3133
        %v4514 = vpack.c.b16 %v3139, %v3134
        %v4515 = vpack.c.b16 %v3140, %v3135
        %v4516 = vpack.c.b16 %v3141, %v3136
        %v4517 = vpack.c.b16 %v3142, %v3137
        %v4518 = vpack.c.b16 %v3148, %v3143
        %v4519 = vpack.c.b16 %v3149, %v3144
        %v4520 = vpack.c.b16 %v3150, %v3145
        %v4521 = vpack.c.b16 %v3151, %v3146
        %v4522 = vpack.c.b16 %v3152, %v3147
        %v4523 = vpack.c.b16 %v3158, %v3153
        %v4524 = vpack.c.b16 %v3159, %v3154
        %v4525 = vpack.c.b16 %v3160, %v3155
        %v4526 = vpack.c.b16 %v3161, %v3156
        %v4527 = vpack.c.b16 %v3162, %v3157
        %v4528 = vpack.c.b16 %v3168, %v3163
        %v4529 = vpack.c.b16 %v3169, %v3164
        %v4530 = vpack.c.b16 %v3170, %v3165
        %v4531 = vpack.c.b16 %v3171, %v3166
        %v4532 = vpack.c.b16 %v3172, %v3167
        %v4533 = vpack.c.b16 %v3178, %v3173
        %v4534 = vpack.c.b16 %v3179, %v3174
        %v4535 = vpack.c.b16 %v3180, %v3175
        %v4536 = vpack.c.b16 %v3181, %v3176
        %v4537 = vpack.c.b16 %v3182, %v3177
        %v4538 = vpack.c.b16 %v3188, %v3183
        %v4539 = vpack.c.b16 %v3189, %v3184
        %v4540 = vpack.c.b16 %v3190, %v3185
        %v4541 = vpack.c.b16 %v3191, %v3186
        %v4542 = vpack.c.b16 %v3192, %v3187
        %v4543 = vpack.c.b16 %v3198, %v3193
        %v4544 = vpack.c.b16 %v3199, %v3194
        %v4545 = vpack.c.b16 %v3200, %v3195
        %v4546 = vpack.c.b16 %v3201, %v3196
        %v4547 = vpack.c.b16 %v3202, %v3197
        %v4548 = vpack.c.b16 %v3208, %v3203
        %v4549 = vpack.c.b16 %v3209, %v3204
        %v4550 = vpack.c.b16 %v3210, %v3205
        %v4551 = vpack.c.b16 %v3211, %v3206
        %v4552 = vpack.c.b16 %v3212, %v3207
        %v4553 = vpack.c.b16 %v3218, %v3213
        %v4554 = vpack.c.b16 %v3219, %v3214
        %v4555 = vpack.c.b16 %v3220, %v3215
        %v4556 = vpack.c.b16 %v3221, %v3216
        %v4557 = vpack.c.b16 %v3222, %v3217
        %v4558 = vpack.c.b16 %v3228, %v3223
        %v4559 = vpack.c.b16 %v3229, %v3224
        %v4560 = vpack.c.b16 %v3230, %v3225
        %v4561 = vpack.c.b16 %v3231, %v3226
        %v4562 = vpack.c.b16 %v3232, %v3227
        %v4563 = vpack.c.b16 %v3238, %v3233
        %v4564 = vpack.c.b16 %v3239, %v3234
        %v4565 = vpack.c.b16 %v3240, %v3235
        %v4566 = vpack.c.b16 %v3241, %v3236
        %v4567 = vpack.c.b16 %v3242, %v3237
        %v4568 = vpack.c.b16 %v3248, %v3243
        %v4569 = vpack.c.b16 %v3249, %v3244
        %v4570 = vpack.c.b16 %v3250, %v3245
        %v4571 = vpack.c.b16 %v3251, %v3246
        %v4572 = vpack.c.b16 %v3252, %v3247
        %v4573 = vpack.c.b16 %v3258, %v3253
        %v4574 = vpack.c.b16 %v3259, %v3254
        %v4575 = vpack.c.b16 %v3260, %v3255
        %v4576 = vpack.c.b16 %v3261, %v3256
        %v4577 = vpack.c.b16 %v3262, %v3257
        %v4578 = vpack.c.b16 %v3268, %v3263
        %v4579 = vpack.c.b16 %v3269, %v3264
        %v4580 = vpack.c.b16 %v3270, %v3265
        %v4581 = vpack.c.b16 %v3271, %v3266
        %v4582 = vpack.c.b16 %v3272, %v3267
        %v4583 = vpack.c.b16 %v3278, %v3273
        %v4584 = vpack.c.b16 %v3279, %v3274
        %v4585 = vpack.c.b16 %v3280, %v3275
        %v4586 = vpack.c.b16 %v3281, %v3276
        %v4587 = vpack.c.b16 %v3282, %v3277
        %v4588 = vpack.c.b16 %v3288, %v3283
        %v4589 = vpack.c.b16 %v3289, %v3284
        %v4590 = vpack.c.b16 %v3290, %v3285
        %v4591 = vpack.c.b16 %v3291, %v3286
        %v4592 = vpack.c.b16 %v3292, %v3287
        %v4593 = vpack.c.b16 %v3298, %v3293
        %v4594 = vpack.c.b16 %v3299, %v3294
        %v4595 = vpack.c.b16 %v3300, %v3295
        %v4596 = vpack.c.b16 %v3301, %v3296
        %v4597 = vpack.c.b16 %v3302, %v3297
        %v4598 = vpack.c.b16 %v3308, %v3303
        %v4599 = vpack.c.b16 %v3309, %v3304
        %v4600 = vpack.c.b16 %v3310, %v3305
        %v4601 = vpack.c.b16 %v3311, %v3306
        %v4602 = vpack.c.b16 %v3312, %v3307
        %v4603 = vpack.c.b16 %v3318, %v3313
        %v4604 = vpack.c.b16 %v3319, %v3314
        %v4605 = vpack.c.b16 %v3320, %v3315
        %v4606 = vpack.c.b16 %v3321, %v3316
        %v4607 = vpack.c.b16 %v3322, %v3317
        %v4608 = vpack.c.b16 %v3328, %v3323
        %v4609 = vpack.c.b16 %v3329, %v3324
        %v4610 = vpack.c.b16 %v3330, %v3325
        %v4611 = vpack.c.b16 %v3331, %v3326
        %v4612 = vpack.c.b16 %v3332, %v3327
        %v4613 = vpack.c.b16 %v3338, %v3333
        %v4614 = vpack.c.b16 %v3339, %v3334
        %v4615 = vpack.c.b16 %v3340, %v3335
        %v4616 = vpack.c.b16 %v3341, %v3336
        %v4617 = vpack.c.b16 %v3342, %v3337
        %v4618 = vpack.c.b16 %v3348, %v3343
        %v4619 = vpack.c.b16 %v3349, %v3344
        %v4620 = vpack.c.b16 %v3350, %v3345
        %v4621 = vpack.c.b16 %v3351, %v3346
        %v4622 = vpack.c.b16 %v3352, %v3347
        %v4623 = vpack.c.b16 %v3358, %v3353
        %v4624 = vpack.c.b16 %v3359, %v3354
        %v4625 = vpack.c.b16 %v3360, %v3355
        %v4626 = vpack.c.b16 %v3361, %v3356
        %v4627 = vpack.c.b16 %v3362, %v3357
        %v4628 = vpack.c.b16 %v3368, %v3363
        %v4629 = vpack.c.b16 %v3369, %v3364
        %v4630 = vpack.c.b16 %v3370, %v3365
        %v4631 = vpack.c.b16 %v3371, %v3366
        %v4632 = vpack.c.b16 %v3372, %v3367
        %v4633 = vpack.c.b16 %v3378, %v3373
        %v4634 = vpack.c.b16 %v3379, %v3374
        %v4635 = vpack.c.b16 %v3380, %v3375
        %v4636 = vpack.c.b16 %v3381, %v3376
        %v4637 = vpack.c.b16 %v3382, %v3377
        %v4638 = vpack.c.b16 %v3388, %v3383
        %v4639 = vpack.c.b16 %v3389, %v3384
        %v4640 = vpack.c.b16 %v3390, %v3385
        %v4641 = vpack.c.b16 %v3391, %v3386
        %v4642 = vpack.c.b16 %v3392, %v3387
        %v4643 = vpack.c.b16 %v3398, %v3393
        %v4644 = vpack.c.b16 %v3399, %v3394
        %v4645 = vpack.c.b16 %v3400, %v3395
        %v4646 = vpack.c.b16 %v3401, %v3396
        %v4647 = vpack.c.b16 %v3402, %v3397
        %v4648 = vpack.c.b16 %v3408, %v3403
        %v4649 = vpack.c.b16 %v3409, %v3404
        %v4650 = vpack.c.b16 %v3410, %v3405
        %v4651 = vpack.c.b16 %v3411, %v3406
        %v4652 = vpack.c.b16 %v3412, %v3407
        %v4653 = vpack.c.b16 %v3418, %v3413
        %v4654 = vpack.c.b16 %v3419, %v3414
        %v4655 = vpack.c.b16 %v3420, %v3415
        %v4656 = vpack.c.b16 %v3421, %v3416
        %v4657 = vpack.c.b16 %v3422, %v3417
        %v4658 = vpack.c.b16 %v3428, %v3423
        %v4659 = vpack.c.b16 %v3429, %v3424
        %v4660 = vpack.c.b16 %v3430, %v3425
        %v4661 = vpack.c.b16 %v3431, %v3426
        %v4662 = vpack.c.b16 %v3432, %v3427
        %v4663 = vpack.c.b16 %v3438, %v3433
        %v4664 = vpack.c.b16 %v3439, %v3434
        %v4665 = vpack.c.b16 %v3440, %v3435
        %v4666 = vpack.c.b16 %v3441, %v3436
        %v4667 = vpack.c.b16 %v3442, %v3437
        %v4668 = vpack.c.b16 %v3448, %v3443
        %v4669 = vpack.c.b16 %v3449, %v3444
        %v4670 = vpack.c.b16 %v3450, %v3445
        %v4671 = vpack.c.b16 %v3451, %v3446
        %v4672 = vpack.c.b16 %v3452, %v3447
        %v4673 = vpack.c.b16 %v3458, %v3453
        %v4674 = vpack.c.b16 %v3459, %v3454
        %v4675 = vpack.c.b16 %v3460, %v3455
        %v4676 = vpack.c.b16 %v3461, %v3456
        %v4677 = vpack.c.b16 %v3462, %v3457
        %v4678 = vpack.c.b16 %v3468, %v3463
        %v4679 = vpack.c.b16 %v3469, %v3464
        %v4680 = vpack.c.b16 %v3470, %v3465
        %v4681 = vpack.c.b16 %v3471, %v3466
        %v4682 = vpack.c.b16 %v3472, %v3467
        %v4683 = vpack.c.b16 %v3478, %v3473
        %v4684 = vpack.c.b16 %v3479, %v3474
        %v4685 = vpack.c.b16 %v3480, %v3475
        %v4686 = vpack.c.b16 %v3481, %v3476
        %v4687 = vpack.c.b16 %v3482, %v3477
        %v4688 = vpack.c.b16 %v3488, %v3483
        %v4689 = vpack.c.b16 %v3489, %v3484
        %v4690 = vpack.c.b16 %v3490, %v3485
        %v4691 = vpack.c.b16 %v3491, %v3486
        %v4692 = vpack.c.b16 %v3492, %v3487
        %v4693 = vpack.c.b16 %v3498, %v3493
        %v4694 = vpack.c.b16 %v3499, %v3494
        %v4695 = vpack.c.b16 %v3500, %v3495
        %v4696 = vpack.c.b16 %v3501, %v3496
        %v4697 = vpack.c.b16 %v3502, %v3497
        %v4698 = vpack.c.b16 %v3508, %v3503
        %v4699 = vpack.c.b16 %v3509, %v3504
        %v4700 = vpack.c.b16 %v3510, %v3505
        %v4701 = vpack.c.b16 %v3511, %v3506
        %v4702 = vpack.c.b16 %v3512, %v3507
        %v4703 = vpack.c.b16 %v3518, %v3513
        %v4704 = vpack.c.b16 %v3519, %v3514
        %v4705 = vpack.c.b16 %v3520, %v3515
        %v4706 = vpack.c.b16 %v3521, %v3516
        %v4707 = vpack.c.b16 %v3522, %v3517
        %v4708 = vpack.c.b16 %v3528, %v3523
        %v4709 = vpack.c.b16 %v3529, %v3524
        %v4710 = vpack.c.b16 %v3530, %v3525
        %v4711 = vpack.c.b16 %v3531, %v3526
        %v4712 = vpack.c.b16 %v3532, %v3527
        %v4713 = vpack.c.b16 %v3538, %v3533
        %v4714 = vpack.c.b16 %v3539, %v3534
        %v4715 = vpack.c.b16 %v3540, %v3535
        %v4716 = vpack.c.b16 %v3541, %v3536
        %v4717 = vpack.c.b16 %v3542, %v3537
        %v4718 = vpack.c.b16 %v3548, %v3543
        %v4719 = vpack.c.b16 %v3549, %v3544
        %v4720 = vpack.c.b16 %v3550, %v3545
        %v4721 = vpack.c.b16 %v3551, %v3546
        %v4722 = vpack.c.b16 %v3552, %v3547
        %v4723 = vpack.c.b16 %v3558, %v3553
        %v4724 = vpack.c.b16 %v3559, %v3554
        %v4725 = vpack.c.b16 %v3560, %v3555
        %v4726 = vpack.c.b16 %v3561, %v3556
        %v4727 = vpack.c.b16 %v3562, %v3557
        %v4728 = vpack.c.b16 %v3568, %v3563
        %v4729 = vpack.c.b16 %v3569, %v3564
        %v4730 = vpack.c.b16 %v3570, %v3565
        %v4731 = vpack.c.b16 %v3571, %v3566
        %v4732 = vpack.c.b16 %v3572, %v3567
        %v4733 = vpack.c.b16 %v3578, %v3573
        %v4734 = vpack.c.b16 %v3579, %v3574
        %v4735 = vpack.c.b16 %v3580, %v3575
        %v4736 = vpack.c.b16 %v3581, %v3576
        %v4737 = vpack.c.b16 %v3582, %v3577
        %v4738 = vpack.c.b16 %v3588, %v3583
        %v4739 = vpack.c.b16 %v3589, %v3584
        %v4740 = vpack.c.b16 %v3590, %v3585
        %v4741 = vpack.c.b16 %v3591, %v3586
        %v4742 = vpack.c.b16 %v3592, %v3587
        %v4743 = vpack.c.b16 %v3598, %v3593
        %v4744 = vpack.c.b16 %v3599, %v3594
        %v4745 = vpack.c.b16 %v3600, %v3595
        %v4746 = vpack.c.b16 %v3601, %v3596
        %v4747 = vpack.c.b16 %v3602, %v3597
        %v4748 = vpack.c.b16 %v3608, %v3603
        %v4749 = vpack.c.b16 %v3609, %v3604
        %v4750 = vpack.c.b16 %v3610, %v3605
        %v4751 = vpack.c.b16 %v3611, %v3606
        %v4752 = vpack.c.b16 %v3612, %v3607
        %v4753 = vpack.c.b16 %v3618, %v3613
        %v4754 = vpack.c.b16 %v3619, %v3614
        %v4755 = vpack.c.b16 %v3620, %v3615
        %v4756 = vpack.c.b16 %v3621, %v3616
        %v4757 = vpack.c.b16 %v3622, %v3617
        %v4758 = vpack.c.b16 %v3628, %v3623
        %v4759 = vpack.c.b16 %v3629, %v3624
        %v4760 = vpack.c.b16 %v3630, %v3625
        %v4761 = vpack.c.b16 %v3631, %v3626
        %v4762 = vpack.c.b16 %v3632, %v3627
        %v4763 = vpack.c.b16 %v3638, %v3633
        %v4764 = vpack.c.b16 %v3639, %v3634
        %v4765 = vpack.c.b16 %v3640, %v3635
        %v4766 = vpack.c.b16 %v3641, %v3636
        %v4767 = vpack.c.b16 %v3642, %v3637
        %v4768 = vpack.c.b16 %v3648, %v3643
        %v4769 = vpack.c.b16 %v3649, %v3644
        %v4770 = vpack.c.b16 %v3650, %v3645
        %v4771 = vpack.c.b16 %v3651, %v3646
        %v4772 = vpack.c.b16 %v3652, %v3647
        %v4773 = vpack.c.b16 %v3658, %v3653
        %v4774 = vpack.c.b16 %v3659, %v3654
        %v4775 = vpack.c.b16 %v3660, %v3655
        %v4776 = vpack.c.b16 %v3661, %v3656
        %v4777 = vpack.c.b16 %v3662, %v3657
        %v4778 = vpack.c.b16 %v3668, %v3663
        %v4779 = vpack.c.b16 %v3669, %v3664
        %v4780 = vpack.c.b16 %v3670, %v3665
        %v4781 = vpack.c.b16 %v3671, %v3666
        %v4782 = vpack.c.b16 %v3672, %v3667
        %v4783 = vpack.c.b16 %v3678, %v3673
        %v4784 = vpack.c.b16 %v3679, %v3674
        %v4785 = vpack.c.b16 %v3680, %v3675
        %v4786 = vpack.c.b16 %v3681, %v3676
        %v4787 = vpack.c.b16 %v3682, %v3677
        %v4788 = vpack.c.b16 %v3688, %v3683
        %v4789 = vpack.c.b16 %v3689, %v3684
        %v4790 = vpack.c.b16 %v3690, %v3685
        %v4791 = vpack.c.b16 %v3691, %v3686
        %v4792 = vpack.c.b16 %v3692, %v3687
        %v4793 = vpack.c.b16 %v3698, %v3693
        %v4794 = vpack.c.b16 %v3699, %v3694
        %v4795 = vpack.c.b16 %v3700, %v3695
        %v4796 = vpack.c.b16 %v3701, %v3696
        %v4797 = vpack.c.b16 %v3702, %v3697
        %v4798 = vpack.c.b16 %v3708, %v3703
        %v4799 = vpack.c.b16 %v3709, %v3704
        %v4800 = vpack.c.b16 %v3710, %v3705
        %v4801 = vpack.c.b16 %v3711, %v3706
        %v4802 = vpack.c.b16 %v3712, %v3707
        %v4803 = vpack.c.b16 %v3718, %v3713
        %v4804 = vpack.c.b16 %v3719, %v3714
        %v4805 = vpack.c.b16 %v3720, %v3715
        %v4806 = vpack.c.b16 %v3721, %v3716
        %v4807 = vpack.c.b16 %v3722, %v3717
        %v4808 = vpack.c.b16 %v3728, %v3723
        %v4809 = vpack.c.b16 %v3729, %v3724
        %v4810 = vpack.c.b16 %v3730, %v3725
        %v4811 = vpack.c.b16 %v3731, %v3726
        %v4812 = vpack.c.b16 %v3732, %v3727
        %v4813 = vpack.c.b16 %v3738, %v3733
        %v4814 = vpack.c.b16 %v3739, %v3734
        %v4815 = vpack.c.b16 %v3740, %v3735
        %v4816 = vpack.c.b16 %v3741, %v3736
        %v4817 = vpack.c.b16 %v3742, %v3737
        %v4818 = vpack.c.b16 %v3748, %v3743
        %v4819 = vpack.c.b16 %v3749, %v3744
        %v4820 = vpack.c.b16 %v3750, %v3745
        %v4821 = vpack.c.b16 %v3751, %v3746
        %v4822 = vpack.c.b16 %v3752, %v3747
        %v4823 = vpack.c.b16 %v3758, %v3753
        %v4824 = vpack.c.b16 %v3759, %v3754
        %v4825 = vpack.c.b16 %v3760, %v3755
        %v4826 = vpack.c.b16 %v3761, %v3756
        %v4827 = vpack.c.b16 %v3762, %v3757
        %v4828 = vpack.c.b16 %v3768, %v3763
        %v4829 = vpack.c.b16 %v3769, %v3764
        %v4830 = vpack.c.b16 %v3770, %v3765
        %v4831 = vpack.c.b16 %v3771, %v3766
        %v4832 = vpack.c.b16 %v3772, %v3767
        %v4833 = vpack.c.b16 %v3778, %v3773
        %v4834 = vpack.c.b16 %v3779, %v3774
        %v4835 = vpack.c.b16 %v3780, %v3775
        %v4836 = vpack.c.b16 %v3781, %v3776
        %v4837 = vpack.c.b16 %v3782, %v3777
        %v4838 = vpack.c.b16 %v3788, %v3783
        %v4839 = vpack.c.b16 %v3789, %v3784
        %v4840 = vpack.c.b16 %v3790, %v3785
        %v4841 = vpack.c.b16 %v3791, %v3786
        %v4842 = vpack.c.b16 %v3792, %v3787
        %v4843 = vpack.c.b16 %v3798, %v3793
        %v4844 = vpack.c.b16 %v3799, %v3794
        %v4845 = vpack.c.b16 %v3800, %v3795
        %v4846 = vpack.c.b16 %v3801, %v3796
        %v4847 = vpack.c.b16 %v3802, %v3797
        %v4848 = vpack.c.b16 %v3808, %v3803
        %v4849 = vpack.c.b16 %v3809, %v3804
        %v4850 = vpack.c.b16 %v3810, %v3805
        %v4851 = vpack.c.b16 %v3811, %v3806
        %v4852 = vpack.c.b16 %v3812, %v3807
        %v4853 = vpack.c.b16 %v3818, %v3813
        %v4854 = vpack.c.b16 %v3819, %v3814
        %v4855 = vpack.c.b16 %v3820, %v3815
        %v4856 = vpack.c.b16 %v3821, %v3816
        %v4857 = vpack.c.b16 %v3822, %v3817
        %v4858 = vpack.c.b16 %v3828, %v3823
        %v4859 = vpack.c.b16 %v3829, %v3824
        %v4860 = vpack.c.b16 %v3830, %v3825
        %v4861 = vpack.c.b16 %v3831, %v3826
        %v4862 = vpack.c.b16 %v3832, %v3827
        %v4863 = vpack.c.b16 %v3838, %v3833
        %v4864 = vpack.c.b16 %v3839, %v3834
        %v4865 = vpack.c.b16 %v3840, %v3835
        %v4866 = vpack.c.b16 %v3841, %v3836
        %v4867 = vpack.c.b16 %v3842, %v3837
        %v4868 = vpack.c.b16 %v3848, %v3843
        %v4869 = vpack.c.b16 %v3849, %v3844
        %v4870 = vpack.c.b16 %v3850, %v3845
        %v4871 = vpack.c.b16 %v3851, %v3846
        %v4872 = vpack.c.b16 %v3852, %v3847
        %v4873 = vpack.c.b16 %v3858, %v3853
        %v4874 = vpack.c.b16 %v3859, %v3854
        %v4875 = vpack.c.b16 %v3860, %v3855
        %v4876 = vpack.c.b16 %v3861, %v3856
        %v4877 = vpack.c.b16 %v3862, %v3857
        %v4878 = vpack.c.b16 %v3868, %v3863
        %v4879 = vpack.c.b16 %v3869, %v3864
        %v4880 = vpack.c.b16 %v3870, %v3865
        %v4881 = vpack.c.b16 %v3871, %v3866
        %v4882 = vpack.c.b16 %v3872, %v3867
        %v4883 = vpack.c.b16 %v3878, %v3873
        %v4884 = vpack.c.b16 %v3879, %v3874
        %v4885 = vpack.c.b16 %v3880, %v3875
        %v4886 = vpack.c.b16 %v3881, %v3876
        %v4887 = vpack.c.b16 %v3882, %v3877
        %v4888 = vpack.c.b16 %v3888, %v3883
        %v4889 = vpack.c.b16 %v3889, %v3884
        %v4890 = vpack.c.b16 %v3890, %v3885
        %v4891 = vpack.c.b16 %v3891, %v3886
        %v4892 = vpack.c.b16 %v3892, %v3887
        %v4893 = vpack.c.b16 %v3898, %v3893
        %v4894 = vpack.c.b16 %v3899, %v3894
        %v4895 = vpack.c.b16 %v3900, %v3895
        %v4896 = vpack.c.b16 %v3901, %v3896
        %v4897 = vpack.c.b16 %v3902, %v3897
        %v4898 = vpack.c.b16 %v3908, %v3903
        %v4899 = vpack.c.b16 %v3909, %v3904
        %v4900 = vpack.c.b16 %v3910, %v3905
        %v4901 = vpack.c.b16 %v3911, %v3906
        %v4902 = vpack.c.b16 %v3912, %v3907
        %v4903 = vpack.c.b16 %v3918, %v3913
        %v4904 = vpack.c.b16 %v3919, %v3914
        %v4905 = vpack.c.b16 %v3920, %v3915
        %v4906 = vpack.c.b16 %v3921, %v3916
        %v4907 = vpack.c.b16 %v3922, %v3917
        %v4908 = vpack.c.b16 %v3928, %v3923
        %v4909 = vpack.c.b16 %v3929, %v3924
        %v4910 = vpack.c.b16 %v3930, %v3925
        %v4911 = vpack.c.b16 %v3931, %v3926
        %v4912 = vpack.c.b16 %v3932, %v3927
        %v4913 = vpack.c.b16 %v3938, %v3933
        %v4914 = vpack.c.b16 %v3939, %v3934
        %v4915 = vpack.c.b16 %v3940, %v3935
        %v4916 = vpack.c.b16 %v3941, %v3936
        %v4917 = vpack.c.b16 %v3942, %v3937
        %v4918 = vpack.c.b16 %v3948, %v3943
        %v4919 = vpack.c.b16 %v3949, %v3944
        %v4920 = vpack.c.b16 %v3950, %v3945
        %v4921 = vpack.c.b16 %v3951, %v3946
        %v4922 = vpack.c.b16 %v3952, %v3947
        %v4923 = vpack.c.b16 %v3958, %v3953
        %v4924 = vpack.c.b16 %v3959, %v3954
        %v4925 = vpack.c.b16 %v3960, %v3955
        %v4926 = vpack.c.b16 %v3961, %v3956
        %v4927 = vpack.c.b16 %v3962, %v3957
        %v4928 = vpack.c.b16 %v3968, %v3963
        %v4929 = vpack.c.b16 %v3969, %v3964
        %v4930 = vpack.c.b16 %v3970, %v3965
        %v4931 = vpack.c.b16 %v3971, %v3966
        %v4932 = vpack.c.b16 %v3972, %v3967
        %v4933 = vpack.c.b16 %v3978, %v3973
        %v4934 = vpack.c.b16 %v3979, %v3974
        %v4935 = vpack.c.b16 %v3980, %v3975
        %v4936 = vpack.c.b16 %v3981, %v3976
        %v4937 = vpack.c.b16 %v3982, %v3977
        %v4938 = vpack.c.b16 %v3988, %v3983
        %v4939 = vpack.c.b16 %v3989, %v3984
        %v4940 = vpack.c.b16 %v3990, %v3985
        %v4941 = vpack.c.b16 %v3991, %v3986
        %v4942 = vpack.c.b16 %v3992, %v3987
        %v4943 = vpack.c.b16 %v3998, %v3993
        %v4944 = vpack.c.b16 %v3999, %v3994
        %v4945 = vpack.c.b16 %v4000, %v3995
        %v4946 = vpack.c.b16 %v4001, %v3996
        %v4947 = vpack.c.b16 %v4002, %v3997
        %v4948 = vpack.c.b16 %v4008, %v4003
        %v4949 = vpack.c.b16 %v4009, %v4004
        %v4950 = vpack.c.b16 %v4010, %v4005
        %v4951 = vpack.c.b16 %v4011, %v4006
        %v4952 = vpack.c.b16 %v4012, %v4007
        %v4953 = vpack.c.b16 %v4018, %v4013
        %v4954 = vpack.c.b16 %v4019, %v4014
        %v4955 = vpack.c.b16 %v4020, %v4015
        %v4956 = vpack.c.b16 %v4021, %v4016
        %v4957 = vpack.c.b16 %v4022, %v4017
        %v4958 = vpack.c.b16 %v4028, %v4023
        %v4959 = vpack.c.b16 %v4029, %v4024
        %v4960 = vpack.c.b16 %v4030, %v4025
        %v4961 = vpack.c.b16 %v4031, %v4026
        %v4962 = vpack.c.b16 %v4032, %v4027
        %v4963 = vpack.c.b16 %v4038, %v4033
        %v4964 = vpack.c.b16 %v4039, %v4034
        %v4965 = vpack.c.b16 %v4040, %v4035
        %v4966 = vpack.c.b16 %v4041, %v4036
        %v4967 = vpack.c.b16 %v4042, %v4037
        %v4968 = vpack.c.b16 %v4048, %v4043
        %v4969 = vpack.c.b16 %v4049, %v4044
        %v4970 = vpack.c.b16 %v4050, %v4045
        %v4971 = vpack.c.b16 %v4051, %v4046
        %v4972 = vpack.c.b16 %v4052, %v4047
        %v4973 = vpack.c.b16 %v4058, %v4053
        %v4974 = vpack.c.b16 %v4059, %v4054
        %v4975 = vpack.c.b16 %v4060, %v4055
        %v4976 = vpack.c.b16 %v4061, %v4056
        %v4977 = vpack.c.b16 %v4062, %v4057
        %v4978 = vpack.c.b16 %v4068, %v4063
        %v4979 = vpack.c.b16 %v4069, %v4064
        %v4980 = vpack.c.b16 %v4070, %v4065
        %v4981 = vpack.c.b16 %v4071, %v4066
        %v4982 = vpack.c.b16 %v4072, %v4067
        %v4983 = vpack.c.b16 %v4078, %v4073
        %v4984 = vpack.c.b16 %v4079, %v4074
        %v4985 = vpack.c.b16 %v4080, %v4075
        %v4986 = vpack.c.b16 %v4081, %v4076
        %v4987 = vpack.c.b16 %v4082, %v4077
        %v4988 = vpack.c.b16 %v4088, %v4083
        %v4989 = vpack.c.b16 %v4089, %v4084
        %v4990 = vpack.c.b16 %v4090, %v4085
        %v4991 = vpack.c.b16 %v4091, %v4086
        %v4992 = vpack.c.b16 %v4092, %v4087
        %v4993 = vpack.c.b16 %v4098, %v4093
        %v4994 = vpack.c.b16 %v4099, %v4094
        %v4995 = vpack.c.b16 %v4100, %v4095
        %v4996 = vpack.c.b16 %v4101, %v4096
        %v4997 = vpack.c.b16 %v4102, %v4097
        %v4998 = vpack.c.b16 %v4108, %v4103
        %v4999 = vpack.c.b16 %v4109, %v4104
        %v5000 = vpack.c.b16 %v4110, %v4105
        %v5001 = vpack.c.b16 %v4111, %v4106
        %v5002 = vpack.c.b16 %v4112, %v4107
        %v5003 = vpack.c.b16 %v4118, %v4113
        %v5004 = vpack.c.b16 %v4119, %v4114
        %v5005 = vpack.c.b16 %v4120, %v4115
        %v5006 = vpack.c.b16 %v4121, %v4116
        %v5007 = vpack.c.b16 %v4122, %v4117
        %v5008 = vpack.c.b16 %v4128, %v4123
        %v5009 = vpack.c.b16 %v4129, %v4124
        %v5010 = vpack.c.b16 %v4130, %v4125
        %v5011 = vpack.c.b16 %v4131, %v4126
        %v5012 = vpack.c.b16 %v4132, %v4127
        %v5013 = vpack.c.b16 %v4138, %v4133
        %v5014 = vpack.c.b16 %v4139, %v4134
        %v5015 = vpack.c.b16 %v4140, %v4135
        %v5016 = vpack.c.b16 %v4141, %v4136
        %v5017 = vpack.c.b16 %v4142, %v4137
        %v5018 = vpack.c.b16 %v4148, %v4143
        %v5019 = vpack.c.b16 %v4149, %v4144
        %v5020 = vpack.c.b16 %v4150, %v4145
        %v5021 = vpack.c.b16 %v4151, %v4146
        %v5022 = vpack.c.b16 %v4152, %v4147
        %v5023 = vpack.c.b16 %v4158, %v4153
        %v5024 = vpack.c.b16 %v4159, %v4154
        %v5025 = vpack.c.b16 %v4160, %v4155
        %v5026 = vpack.c.b16 %v4161, %v4156
        %v5027 = vpack.c.b16 %v4162, %v4157
        %v5028 = vpack.c.b16 %v4168, %v4163
        %v5029 = vpack.c.b16 %v4169, %v4164
        %v5030 = vpack.c.b16 %v4170, %v4165
        %v5031 = vpack.c.b16 %v4171, %v4166
        %v5032 = vpack.c.b16 %v4172, %v4167
        %v5033 = vpack.c.b16 %v4178, %v4173
        %v5034 = vpack.c.b16 %v4179, %v4174
        %v5035 = vpack.c.b16 %v4180, %v4175
        %v5036 = vpack.c.b16 %v4181, %v4176
        %v5037 = vpack.c.b16 %v4182, %v4177
        %v5038 = vpack.c.b16 %v4188, %v4183
        %v5039 = vpack.c.b16 %v4189, %v4184
        %v5040 = vpack.c.b16 %v4190, %v4185
        %v5041 = vpack.c.b16 %v4191, %v4186
        %v5042 = vpack.c.b16 %v4192, %v4187
        %v5043 = vpack.c.b16 %v4198, %v4193
        %v5044 = vpack.c.b16 %v4199, %v4194
        %v5045 = vpack.c.b16 %v4200, %v4195
        %v5046 = vpack.c.b16 %v4201, %v4196
        %v5047 = vpack.c.b16 %v4202, %v4197
        %v5048 = vpack.c.b16 %v4208, %v4203
        %v5049 = vpack.c.b16 %v4209, %v4204
        %v5050 = vpack.c.b16 %v4210, %v4205
        %v5051 = vpack.c.b16 %v4211, %v4206
        %v5052 = vpack.c.b16 %v4212, %v4207
        %5893 = vmatprep.subr.bf16.mxu0 %v4214
        %5894 = vmatpush1.bf16.msra.mxu0 %v4213
        %5895 = vmatprep.subr.bf16.mxu0 %v4219
        %5896 = vmatpush1.bf16.msra.mxu0 %v4218
        %5897 = vmatprep.subr.bf16.mxu0 %v4224
        %5898 = vmatpush1.bf16.msra.mxu0 %v4223
        %5899 = vmatprep.subr.bf16.mxu0 %v4229
        %5900 = vmatpush1.bf16.msra.mxu0 %v4228
        %5901 = vmatprep.subr.bf16.mxu0 %v4234
        %5902 = vmatpush1.bf16.msra.mxu0 %v4233
        %5903 = vmatprep.subr.bf16.mxu0 %v4239
        %5904 = vmatpush1.bf16.msra.mxu0 %v4238
        %5905 = vmatprep.subr.bf16.mxu0 %v4244
        %5906 = vmatpush1.bf16.msra.mxu0 %v4243
        %5907 = vmatprep.subr.bf16.mxu0 %v4249
        %5908 = vmatpush1.bf16.msra.mxu0 %v4248
        %5909 = vmatprep.subr.bf16.mxu0 %v4254
        %5910 = vmatpush1.bf16.msra.mxu0 %v4253
        %5911 = vmatprep.subr.bf16.mxu0 %v4259
        %5912 = vmatpush1.bf16.msra.mxu0 %v4258
        %5913 = vmatprep.subr.bf16.mxu0 %v4264
        %5914 = vmatpush1.bf16.msra.mxu0 %v4263
        %5915 = vmatprep.subr.bf16.mxu0 %v4269
        %5916 = vmatpush1.bf16.msra.mxu0 %v4268
        %5917 = vmatprep.subr.bf16.mxu0 %v4274
        %5918 = vmatpush1.bf16.msra.mxu0 %v4273
        %5919 = vmatprep.subr.bf16.mxu0 %v4279
        %5920 = vmatpush1.bf16.msra.mxu0 %v4278
        %5921 = vmatprep.subr.bf16.mxu0 %v4284
        %5922 = vmatpush1.bf16.msra.mxu0 %v4283
        %5923 = vmatprep.subr.bf16.mxu0 %v4289
        %5924 = vmatpush1.bf16.msra.mxu0 %v4288
        %5925 = vmatprep.mubr.bf16.mxu0 %v1404
        %5926 = vmatmul.mubr.bf16.gmra.mrb[0].mxu0 %v1390
        %v5927 = vpop.f32.mrb[0].mxu0
        %v5928 = vadd.f32 0.0, %v5927
        %v5929 = vpop.f32.mrb[0].mxu0
        %v5930 = vadd.f32 0.0, %v5929
        %v5931 = vpop.f32.mrb[0].mxu0
        %v5932 = vpop.f32.mrb[0].mxu0
        %5933 = vdwg.mxu0
        %5934 = vmatprep.subr.bf16.mxu0 %v4294
        %5935 = vmatpush1.bf16.msra.mxu0 %v4293
        %5936 = vmatprep.subr.bf16.mxu0 %v4299
        %5937 = vmatpush1.bf16.msra.mxu0 %v4298
        %5938 = vmatprep.subr.bf16.mxu0 %v4304
        %5939 = vmatpush1.bf16.msra.mxu0 %v4303
        %5940 = vmatprep.subr.bf16.mxu0 %v4309
        %5941 = vmatpush1.bf16.msra.mxu0 %v4308
        %5942 = vmatprep.subr.bf16.mxu0 %v4314
        %5943 = vmatpush1.bf16.msra.mxu0 %v4313
        %5944 = vmatprep.subr.bf16.mxu0 %v4319
        %5945 = vmatpush1.bf16.msra.mxu0 %v4318
        %5946 = vmatprep.subr.bf16.mxu0 %v4324
        %5947 = vmatpush1.bf16.msra.mxu0 %v4323
        %5948 = vmatprep.subr.bf16.mxu0 %v4329
        %5949 = vmatpush1.bf16.msra.mxu0 %v4328
        %5950 = vmatprep.subr.bf16.mxu0 %v4334
        %5951 = vmatpush1.bf16.msra.mxu0 %v4333
        %5952 = vmatprep.subr.bf16.mxu0 %v4339
        %5953 = vmatpush1.bf16.msra.mxu0 %v4338
        %5954 = vmatprep.subr.bf16.mxu0 %v4344
        %5955 = vmatpush1.bf16.msra.mxu0 %v4343
        %5956 = vmatprep.subr.bf16.mxu0 %v4349
        %5957 = vmatpush1.bf16.msra.mxu0 %v4348
        %5958 = vmatprep.subr.bf16.mxu0 %v4354
        %5959 = vmatpush1.bf16.msra.mxu0 %v4353
        %5960 = vmatprep.subr.bf16.mxu0 %v4359
        %5961 = vmatpush1.bf16.msra.mxu0 %v4358
        %5962 = vmatprep.subr.bf16.mxu0 %v4364
        %5963 = vmatpush1.bf16.msra.mxu0 %v4363
        %5964 = vmatprep.subr.bf16.mxu0 %v4369
        %5965 = vmatpush1.bf16.msra.mxu0 %v4368
        %5966 = vmatprep.mubr.bf16.mxu0 %v1414
        %5967 = vmatmul.mubr.bf16.gmra.mrb[0].mxu0 %v1412
        %v5968 = vpop.f32.mrb[0].mxu0
        %v5969 = vadd.f32 %v5928, %v5968
        %v5970 = vpop.f32.mrb[0].mxu0
        %v5971 = vadd.f32 %v5930, %v5970
        %v5972 = vpop.f32.mrb[0].mxu0
        %v5973 = vpop.f32.mrb[0].mxu0
        %5974 = vdwg.mxu0
        %5975 = vmatprep.subr.bf16.mxu0 %v4374
        %5976 = vmatpush1.bf16.msra.mxu0 %v4373
        %5977 = vmatprep.subr.bf16.mxu0 %v4379
        %5978 = vmatpush1.bf16.msra.mxu0 %v4378
        %5979 = vmatprep.subr.bf16.mxu0 %v4384
        %5980 = vmatpush1.bf16.msra.mxu0 %v4383
        %5981 = vmatprep.subr.bf16.mxu0 %v4389
        %5982 = vmatpush1.bf16.msra.mxu0 %v4388
        %5983 = vmatprep.subr.bf16.mxu0 %v4394
        %5984 = vmatpush1.bf16.msra.mxu0 %v4393
        %5985 = vmatprep.subr.bf16.mxu0 %v4399
        %5986 = vmatpush1.bf16.msra.mxu0 %v4398
        %5987 = vmatprep.subr.bf16.mxu0 %v4404
        %5988 = vmatpush1.bf16.msra.mxu0 %v4403
        %5989 = vmatprep.subr.bf16.mxu0 %v4409
        %5990 = vmatpush1.bf16.msra.mxu0 %v4408
        %5991 = vmatprep.subr.bf16.mxu0 %v4414
        %5992 = vmatpush1.bf16.msra.mxu0 %v4413
        %5993 = vmatprep.subr.bf16.mxu0 %v4419
        %5994 = vmatpush1.bf16.msra.mxu0 %v4418
        %5995 = vmatprep.subr.bf16.mxu0 %v4424
        %5996 = vmatpush1.bf16.msra.mxu0 %v4423
        %5997 = vmatprep.subr.bf16.mxu0 %v4429
        %5998 = vmatpush1.bf16.msra.mxu0 %v4428
        %5999 = vmatprep.subr.bf16.mxu0 %v4434
        %6000 = vmatpush1.bf16.msra.mxu0 %v4433
        %6001 = vmatprep.subr.bf16.mxu0 %v4439
        %6002 = vmatpush1.bf16.msra.mxu0 %v4438
        %6003 = vmatprep.subr.bf16.mxu0 %v4444
        %6004 = vmatpush1.bf16.msra.mxu0 %v4443
        %6005 = vmatprep.subr.bf16.mxu0 %v4449
        %6006 = vmatpush1.bf16.msra.mxu0 %v4448
        %6007 = vmatprep.mubr.bf16.mxu0 %v1411
        %6008 = vmatmul.mubr.bf16.gmra.mrb[0].mxu0 %v1397
        %v6009 = vpop.f32.mrb[0].mxu0
        %v6010 = vadd.f32 %v5969, %v6009
        %v6011 = vpop.f32.mrb[0].mxu0
        %v6012 = vadd.f32 %v5971, %v6011
        %v6013 = vpop.f32.mrb[0].mxu0
        %v6014 = vpop.f32.mrb[0].mxu0
        %6015 = vdwg.mxu0
        %6016 = vmatprep.subr.bf16.mxu0 %v4454
        %6017 = vmatpush1.bf16.msra.mxu0 %v4453
        %6018 = vmatprep.subr.bf16.mxu0 %v4459
        %6019 = vmatpush1.bf16.msra.mxu0 %v4458
        %6020 = vmatprep.subr.bf16.mxu0 %v4464
        %6021 = vmatpush1.bf16.msra.mxu0 %v4463
        %6022 = vmatprep.subr.bf16.mxu0 %v4469
        %6023 = vmatpush1.bf16.msra.mxu0 %v4468
        %6024 = vmatprep.subr.bf16.mxu0 %v4474
        %6025 = vmatpush1.bf16.msra.mxu0 %v4473
        %6026 = vmatprep.subr.bf16.mxu0 %v4479
        %6027 = vmatpush1.bf16.msra.mxu0 %v4478
        %6028 = vmatprep.subr.bf16.mxu0 %v4484
        %6029 = vmatpush1.bf16.msra.mxu0 %v4483
        %6030 = vmatprep.subr.bf16.mxu0 %v4489
        %6031 = vmatpush1.bf16.msra.mxu0 %v4488
        %6032 = vmatprep.subr.bf16.mxu0 %v4494
        %6033 = vmatpush1.bf16.msra.mxu0 %v4493
        %6034 = vmatprep.subr.bf16.mxu0 %v4499
        %6035 = vmatpush1.bf16.msra.mxu0 %v4498
        %6036 = vmatprep.subr.bf16.mxu0 %v4504
        %6037 = vmatpush1.bf16.msra.mxu0 %v4503
        %6038 = vmatprep.subr.bf16.mxu0 %v4509
        %6039 = vmatpush1.bf16.msra.mxu0 %v4508
        %6040 = vmatprep.subr.bf16.mxu0 %v4514
        %6041 = vmatpush1.bf16.msra.mxu0 %v4513
        %6042 = vmatprep.subr.bf16.mxu0 %v4519
        %6043 = vmatpush1.bf16.msra.mxu0 %v4518
        %6044 = vmatprep.subr.bf16.mxu0 %v4524
        %6045 = vmatpush1.bf16.msra.mxu0 %v4523
        %6046 = vmatprep.subr.bf16.mxu0 %v4529
        %6047 = vmatpush1.bf16.msra.mxu0 %v4528
        %6048 = vmatprep.mubr.bf16.mxu0 %v1415
        %6049 = vmatmul.mubr.bf16.gmra.mrb[0].mxu0 %v1413
        %v6050 = vpop.f32.mrb[0].mxu0
        %v6051 = vadd.f32 %v6010, %v6050
        %v6052 = vpop.f32.mrb[0].mxu0
        %v6053 = vadd.f32 %v6012, %v6052
        %v6054 = vpop.f32.mrb[0].mxu0
        %v6055 = vpop.f32.mrb[0].mxu0
        %6056 = vdwg.mxu0
        %6057 = vmatprep.subr.bf16.mxu0 %v4534
        %6058 = vmatpush1.bf16.msra.mxu0 %v4533
        %6059 = vmatprep.subr.bf16.mxu0 %v4539
        %6060 = vmatpush1.bf16.msra.mxu0 %v4538
        %6061 = vmatprep.subr.bf16.mxu0 %v4544
        %6062 = vmatpush1.bf16.msra.mxu0 %v4543
        %6063 = vmatprep.subr.bf16.mxu0 %v4549
        %6064 = vmatpush1.bf16.msra.mxu0 %v4548
        %6065 = vmatprep.subr.bf16.mxu0 %v4554
        %6066 = vmatpush1.bf16.msra.mxu0 %v4553
        %6067 = vmatprep.subr.bf16.mxu0 %v4559
        %6068 = vmatpush1.bf16.msra.mxu0 %v4558
        %6069 = vmatprep.subr.bf16.mxu0 %v4564
        %6070 = vmatpush1.bf16.msra.mxu0 %v4563
        %6071 = vmatprep.subr.bf16.mxu0 %v4569
        %6072 = vmatpush1.bf16.msra.mxu0 %v4568
        %6073 = vmatprep.subr.bf16.mxu0 %v4574
        %6074 = vmatpush1.bf16.msra.mxu0 %v4573
        %6075 = vmatprep.subr.bf16.mxu0 %v4579
        %6076 = vmatpush1.bf16.msra.mxu0 %v4578
        %6077 = vmatprep.subr.bf16.mxu0 %v4584
        %6078 = vmatpush1.bf16.msra.mxu0 %v4583
        %6079 = vmatprep.subr.bf16.mxu0 %v4589
        %6080 = vmatpush1.bf16.msra.mxu0 %v4588
        %6081 = vmatprep.subr.bf16.mxu0 %v4594
        %6082 = vmatpush1.bf16.msra.mxu0 %v4593
        %6083 = vmatprep.subr.bf16.mxu0 %v4599
        %6084 = vmatpush1.bf16.msra.mxu0 %v4598
        %6085 = vmatprep.subr.bf16.mxu0 %v4604
        %6086 = vmatpush1.bf16.msra.mxu0 %v4603
        %6087 = vmatprep.subr.bf16.mxu0 %v4609
        %6088 = vmatpush1.bf16.msra.mxu0 %v4608
        %6089 = vmatprep.mubr.bf16.mxu0 %v1453
        %6090 = vmatmul.mubr.bf16.gmra.mrb[0].mxu0 %v1439
        %v6091 = vpop.f32.mrb[0].mxu0
        %v6092 = vadd.f32 %v6051, %v6091
        %v6093 = vpop.f32.mrb[0].mxu0
        %v6094 = vadd.f32 %v6053, %v6093
        %v6095 = vpop.f32.mrb[0].mxu0
        %v6096 = vpop.f32.mrb[0].mxu0
        %6097 = vdwg.mxu0
        %6098 = vmatprep.subr.bf16.mxu0 %v4614
        %6099 = vmatpush1.bf16.msra.mxu0 %v4613
        %6100 = vmatprep.subr.bf16.mxu0 %v4619
        %6101 = vmatpush1.bf16.msra.mxu0 %v4618
        %6102 = vmatprep.subr.bf16.mxu0 %v4624
        %6103 = vmatpush1.bf16.msra.mxu0 %v4623
        %6104 = vmatprep.subr.bf16.mxu0 %v4629
        %6105 = vmatpush1.bf16.msra.mxu0 %v4628
        %6106 = vmatprep.subr.bf16.mxu0 %v4634
        %6107 = vmatpush1.bf16.msra.mxu0 %v4633
        %6108 = vmatprep.subr.bf16.mxu0 %v4639
        %6109 = vmatpush1.bf16.msra.mxu0 %v4638
        %6110 = vmatprep.subr.bf16.mxu0 %v4644
        %6111 = vmatpush1.bf16.msra.mxu0 %v4643
        %6112 = vmatprep.subr.bf16.mxu0 %v4649
        %6113 = vmatpush1.bf16.msra.mxu0 %v4648
        %6114 = vmatprep.subr.bf16.mxu0 %v4654
        %6115 = vmatpush1.bf16.msra.mxu0 %v4653
        %6116 = vmatprep.subr.bf16.mxu0 %v4659
        %6117 = vmatpush1.bf16.msra.mxu0 %v4658
        %6118 = vmatprep.subr.bf16.mxu0 %v4664
        %6119 = vmatpush1.bf16.msra.mxu0 %v4663
        %6120 = vmatprep.subr.bf16.mxu0 %v4669
        %6121 = vmatpush1.bf16.msra.mxu0 %v4668
        %6122 = vmatprep.subr.bf16.mxu0 %v4674
        %6123 = vmatpush1.bf16.msra.mxu0 %v4673
        %6124 = vmatprep.subr.bf16.mxu0 %v4679
        %6125 = vmatpush1.bf16.msra.mxu0 %v4678
        %6126 = vmatprep.subr.bf16.mxu0 %v4684
        %6127 = vmatpush1.bf16.msra.mxu0 %v4683
        %6128 = vmatprep.subr.bf16.mxu0 %v4689
        %6129 = vmatpush1.bf16.msra.mxu0 %v4688
        %6130 = vmatprep.mubr.bf16.mxu0 %v1463
        %6131 = vmatmul.mubr.bf16.gmra.mrb[0].mxu0 %v1461
        %v6132 = vpop.f32.mrb[0].mxu0
        %v6133 = vadd.f32 %v6092, %v6132
        %v6134 = vpop.f32.mrb[0].mxu0
        %v6135 = vadd.f32 %v6094, %v6134
        %v6136 = vpop.f32.mrb[0].mxu0
        %v6137 = vpop.f32.mrb[0].mxu0
        %6138 = vdwg.mxu0
        %6139 = vmatprep.subr.bf16.mxu0 %v4694
        %6140 = vmatpush1.bf16.msra.mxu0 %v4693
        %6141 = vmatprep.subr.bf16.mxu0 %v4699
        %6142 = vmatpush1.bf16.msra.mxu0 %v4698
        %6143 = vmatprep.subr.bf16.mxu0 %v4704
        %6144 = vmatpush1.bf16.msra.mxu0 %v4703
        %6145 = vmatprep.subr.bf16.mxu0 %v4709
        %6146 = vmatpush1.bf16.msra.mxu0 %v4708
        %6147 = vmatprep.subr.bf16.mxu0 %v4714
        %6148 = vmatpush1.bf16.msra.mxu0 %v4713
        %6149 = vmatprep.subr.bf16.mxu0 %v4719
        %6150 = vmatpush1.bf16.msra.mxu0 %v4718
        %6151 = vmatprep.subr.bf16.mxu0 %v4724
        %6152 = vmatpush1.bf16.msra.mxu0 %v4723
        %6153 = vmatprep.subr.bf16.mxu0 %v4729
        %6154 = vmatpush1.bf16.msra.mxu0 %v4728
        %6155 = vmatprep.subr.bf16.mxu0 %v4734
        %6156 = vmatpush1.bf16.msra.mxu0 %v4733
        %6157 = vmatprep.subr.bf16.mxu0 %v4739
        %6158 = vmatpush1.bf16.msra.mxu0 %v4738
        %6159 = vmatprep.subr.bf16.mxu0 %v4744
        %6160 = vmatpush1.bf16.msra.mxu0 %v4743
        %6161 = vmatprep.subr.bf16.mxu0 %v4749
        %6162 = vmatpush1.bf16.msra.mxu0 %v4748
        %6163 = vmatprep.subr.bf16.mxu0 %v4754
        %6164 = vmatpush1.bf16.msra.mxu0 %v4753
        %6165 = vmatprep.subr.bf16.mxu0 %v4759
        %6166 = vmatpush1.bf16.msra.mxu0 %v4758
        %6167 = vmatprep.subr.bf16.mxu0 %v4764
        %6168 = vmatpush1.bf16.msra.mxu0 %v4763
        %6169 = vmatprep.subr.bf16.mxu0 %v4769
        %6170 = vmatpush1.bf16.msra.mxu0 %v4768
        %6171 = vmatprep.mubr.bf16.mxu0 %v1460
        %6172 = vmatmul.mubr.bf16.gmra.mrb[0].mxu0 %v1446
        %v6173 = vpop.f32.mrb[0].mxu0
        %v6174 = vadd.f32 %v6133, %v6173
        %v6175 = vpop.f32.mrb[0].mxu0
        %v6176 = vadd.f32 %v6135, %v6175
        %v6177 = vpop.f32.mrb[0].mxu0
        %v6178 = vpop.f32.mrb[0].mxu0
        %6179 = vdwg.mxu0
        %6180 = vmatprep.subr.bf16.mxu0 %v4774
        %6181 = vmatpush1.bf16.msra.mxu0 %v4773
        %6182 = vmatprep.subr.bf16.mxu0 %v4779
        %6183 = vmatpush1.bf16.msra.mxu0 %v4778
        %6184 = vmatprep.subr.bf16.mxu0 %v4784
        %6185 = vmatpush1.bf16.msra.mxu0 %v4783
        %6186 = vmatprep.subr.bf16.mxu0 %v4789
        %6187 = vmatpush1.bf16.msra.mxu0 %v4788
        %6188 = vmatprep.subr.bf16.mxu0 %v4794
        %6189 = vmatpush1.bf16.msra.mxu0 %v4793
        %6190 = vmatprep.subr.bf16.mxu0 %v4799
        %6191 = vmatpush1.bf16.msra.mxu0 %v4798
        %6192 = vmatprep.subr.bf16.mxu0 %v4804
        %6193 = vmatpush1.bf16.msra.mxu0 %v4803
        %6194 = vmatprep.subr.bf16.mxu0 %v4809
        %6195 = vmatpush1.bf16.msra.mxu0 %v4808
        %6196 = vmatprep.subr.bf16.mxu0 %v4814
        %6197 = vmatpush1.bf16.msra.mxu0 %v4813
        %6198 = vmatprep.subr.bf16.mxu0 %v4819
        %6199 = vmatpush1.bf16.msra.mxu0 %v4818
        %6200 = vmatprep.subr.bf16.mxu0 %v4824
        %6201 = vmatpush1.bf16.msra.mxu0 %v4823
        %6202 = vmatprep.subr.bf16.mxu0 %v4829
        %6203 = vmatpush1.bf16.msra.mxu0 %v4828
        %6204 = vmatprep.subr.bf16.mxu0 %v4834
        %6205 = vmatpush1.bf16.msra.mxu0 %v4833
        %6206 = vmatprep.subr.bf16.mxu0 %v4839
        %6207 = vmatpush1.bf16.msra.mxu0 %v4838
        %6208 = vmatprep.subr.bf16.mxu0 %v4844
        %6209 = vmatpush1.bf16.msra.mxu0 %v4843
        %6210 = vmatprep.subr.bf16.mxu0 %v4849
        %6211 = vmatpush1.bf16.msra.mxu0 %v4848
        %6212 = vmatprep.mubr.bf16.mxu0 %v1464
        %6213 = vmatmul.mubr.bf16.gmra.mrb[0].mxu0 %v1462
        %v6214 = vpop.f32.mrb[0].mxu0
        %v6215 = vadd.f32 %v6174, %v6214
        %v6216 = vpop.f32.mrb[0].mxu0
        %v6217 = vadd.f32 %v6176, %v6216
        %v6218 = vpop.f32.mrb[0].mxu0
        %v6219 = vpop.f32.mrb[0].mxu0
        %6220 = vdwg.mxu0
        %6221 = vmatprep.subr.bf16.mxu0 %v4854
        %6222 = vmatpush1.bf16.msra.mxu0 %v4853
        %6223 = vmatprep.subr.bf16.mxu0 %v4859
        %6224 = vmatpush1.bf16.msra.mxu0 %v4858
        %6225 = vmatprep.subr.bf16.mxu0 %v4864
        %6226 = vmatpush1.bf16.msra.mxu0 %v4863
        %6227 = vmatprep.subr.bf16.mxu0 %v4869
        %6228 = vmatpush1.bf16.msra.mxu0 %v4868
        %6229 = vmatprep.subr.bf16.mxu0 %v4874
        %6230 = vmatpush1.bf16.msra.mxu0 %v4873
        %6231 = vmatprep.subr.bf16.mxu0 %v4879
        %6232 = vmatpush1.bf16.msra.mxu0 %v4878
        %6233 = vmatprep.subr.bf16.mxu0 %v4884
        %6234 = vmatpush1.bf16.msra.mxu0 %v4883
        %6235 = vmatprep.subr.bf16.mxu0 %v4889
        %6236 = vmatpush1.bf16.msra.mxu0 %v4888
        %6237 = vmatprep.subr.bf16.mxu0 %v4894
        %6238 = vmatpush1.bf16.msra.mxu0 %v4893
        %6239 = vmatprep.subr.bf16.mxu0 %v4899
        %6240 = vmatpush1.bf16.msra.mxu0 %v4898
        %6241 = vmatprep.subr.bf16.mxu0 %v4904
        %6242 = vmatpush1.bf16.msra.mxu0 %v4903
        %6243 = vmatprep.subr.bf16.mxu0 %v4909
        %6244 = vmatpush1.bf16.msra.mxu0 %v4908
        %6245 = vmatprep.subr.bf16.mxu0 %v4914
        %6246 = vmatpush1.bf16.msra.mxu0 %v4913
        %6247 = vmatprep.subr.bf16.mxu0 %v4919
        %6248 = vmatpush1.bf16.msra.mxu0 %v4918
        %6249 = vmatprep.subr.bf16.mxu0 %v4924
        %6250 = vmatpush1.bf16.msra.mxu0 %v4923
        %6251 = vmatprep.subr.bf16.mxu0 %v4929
        %6252 = vmatpush1.bf16.msra.mxu0 %v4928
        %6253 = vmatprep.mubr.bf16.mxu0 %v1501
        %6254 = vmatmul.mubr.bf16.gmra.mrb[0].mxu0 %v1487
        %v6255 = vpop.f32.mrb[0].mxu0
        %v6256 = vadd.f32 %v6215, %v6255
        %v6257 = vpop.f32.mrb[0].mxu0
        %v6258 = vadd.f32 %v6217, %v6257
        %v6259 = vpop.f32.mrb[0].mxu0
        %v6260 = vpop.f32.mrb[0].mxu0
        %6261 = vdwg.mxu0
        %6262 = vmatprep.subr.bf16.mxu0 %v4934
        %6263 = vmatpush1.bf16.msra.mxu0 %v4933
        %6264 = vmatprep.subr.bf16.mxu0 %v4939
        %6265 = vmatpush1.bf16.msra.mxu0 %v4938
        %6266 = vmatprep.subr.bf16.mxu0 %v4944
        %6267 = vmatpush1.bf16.msra.mxu0 %v4943
        %6268 = vmatprep.subr.bf16.mxu0 %v4949
        %6269 = vmatpush1.bf16.msra.mxu0 %v4948
        %6270 = vmatprep.subr.bf16.mxu0 %v4954
        %6271 = vmatpush1.bf16.msra.mxu0 %v4953
        %6272 = vmatprep.subr.bf16.mxu0 %v4959
        %6273 = vmatpush1.bf16.msra.mxu0 %v4958
        %6274 = vmatprep.subr.bf16.mxu0 %v4964
        %6275 = vmatpush1.bf16.msra.mxu0 %v4963
        %6276 = vmatprep.subr.bf16.mxu0 %v4969
        %6277 = vmatpush1.bf16.msra.mxu0 %v4968
        %6278 = vmatprep.subr.bf16.mxu0 %v4974
        %6279 = vmatpush1.bf16.msra.mxu0 %v4973
        %6280 = vmatprep.subr.bf16.mxu0 %v4979
        %6281 = vmatpush1.bf16.msra.mxu0 %v4978
        %6282 = vmatprep.subr.bf16.mxu0 %v4984
        %6283 = vmatpush1.bf16.msra.mxu0 %v4983
        %6284 = vmatprep.subr.bf16.mxu0 %v4989
        %6285 = vmatpush1.bf16.msra.mxu0 %v4988
        %6286 = vmatprep.subr.bf16.mxu0 %v4994
        %6287 = vmatpush1.bf16.msra.mxu0 %v4993
        %6288 = vmatprep.subr.bf16.mxu0 %v4999
        %6289 = vmatpush1.bf16.msra.mxu0 %v4998
        %6290 = vmatprep.subr.bf16.mxu0 %v5004
        %6291 = vmatpush1.bf16.msra.mxu0 %v5003
        %6292 = vmatprep.subr.bf16.mxu0 %v5009
        %6293 = vmatpush1.bf16.msra.mxu0 %v5008
        %6294 = vmatprep.mubr.bf16.mxu0 %v1503
        %6295 = vmatmul.mubr.bf16.gmra.mrb[0].mxu0 %v1502
        %v6296 = vpop.f32.mrb[0].mxu0
        %v6297 = vadd.f32 %v6256, %v6296
        %v6298 = vpop.f32.mrb[0].mxu0
        %v6299 = vadd.f32 %v6258, %v6298
        %v6300 = vpop.f32.mrb[0].mxu0
        %v6301 = vpop.f32.mrb[0].mxu0
        %6302 = vdwg.mxu0
        %6303 = vmatprep.subr.bf16.mxu0 %v5014
        %6304 = vmatpush1.bf16.msra.mxu0 %v5013
        %6305 = vmatprep.subr.bf16.mxu0 %v5019
        %6306 = vmatpush1.bf16.msra.mxu0 %v5018
        %6307 = vmatprep.subr.bf16.mxu0 %v5024
        %6308 = vmatpush1.bf16.msra.mxu0 %v5023
        %6309 = vmatprep.subr.bf16.mxu0 %v5029
        %6310 = vmatpush1.bf16.msra.mxu0 %v5028
        %6311 = vmatprep.subr.bf16.mxu0 %v5034
        %6312 = vmatpush1.bf16.msra.mxu0 %v5033
        %6313 = vmatprep.subr.bf16.mxu0 %v5039
        %6314 = vmatpush1.bf16.msra.mxu0 %v5038
        %6315 = vmatprep.subr.bf16.mxu0 %v5044
        %6316 = vmatpush1.bf16.msra.mxu0 %v5043
        %6317 = vmatprep.subr.bf16.mxu0 %v5049
        %6318 = vmatpush1.bf16.msra.mxu0 %v5048
        %6319 = vmatprep.subr.bf16.mxu0 0
        %6320 = vmatpush1.bf16.msra.mxu0 0
        %6321 = vmatprep.subr.bf16.mxu0 0
        %6322 = vmatpush1.bf16.msra.mxu0 0
        %6323 = vmatprep.subr.bf16.mxu0 0
        %6324 = vmatpush1.bf16.msra.mxu0 0
        %6325 = vmatprep.subr.bf16.mxu0 0
        %6326 = vmatpush1.bf16.msra.mxu0 0
        %6327 = vmatprep.subr.bf16.mxu0 0
        %6328 = vmatpush1.bf16.msra.mxu0 0
        %6329 = vmatprep.subr.bf16.mxu0 0
        %6330 = vmatpush1.bf16.msra.mxu0 0
        %6331 = vmatprep.subr.bf16.mxu0 0
        %6332 = vmatpush1.bf16.msra.mxu0 0
        %6333 = vmatprep.subr.bf16.mxu0 0
        %6334 = vmatpush1.bf16.msra.mxu0 0
        %6335 = vmatprep.mubr.bf16.mxu0 0
        %6336 = vmatmul.mubr.bf16.gmra.mrb[0].mxu0 %v1494
        %v6337 = vpop.f32.mrb[0].mxu0
        %v6338 = vadd.f32 %v6297, %v6337
        %v6339 = vpop.f32.mrb[0].mxu0
        %v6340 = vadd.f32 %v6299, %v6339
        %v6341 = vpop.f32.mrb[0].mxu0
        %v6342 = vpop.f32.mrb[0].mxu0
        %6343 = vdwg.mxu0
        %6344 = vmatprep.subr.bf16.mxu0 %v4216
        %6345 = vmatpush1.bf16.msra.mxu0 %v4215
        %6346 = vmatprep.subr.bf16.mxu0 %v4221
        %6347 = vmatpush1.bf16.msra.mxu0 %v4220
        %6348 = vmatprep.subr.bf16.mxu0 %v4226
        %6349 = vmatpush1.bf16.msra.mxu0 %v4225
        %6350 = vmatprep.subr.bf16.mxu0 %v4231
        %6351 = vmatpush1.bf16.msra.mxu0 %v4230
        %6352 = vmatprep.subr.bf16.mxu0 %v4236
        %6353 = vmatpush1.bf16.msra.mxu0 %v4235
        %6354 = vmatprep.subr.bf16.mxu0 %v4241
        %6355 = vmatpush1.bf16.msra.mxu0 %v4240
        %6356 = vmatprep.subr.bf16.mxu0 %v4246
        %6357 = vmatpush1.bf16.msra.mxu0 %v4245
        %6358 = vmatprep.subr.bf16.mxu0 %v4251
        %6359 = vmatpush1.bf16.msra.mxu0 %v4250
        %6360 = vmatprep.subr.bf16.mxu0 %v4256
        %6361 = vmatpush1.bf16.msra.mxu0 %v4255
        %6362 = vmatprep.subr.bf16.mxu0 %v4261
        %6363 = vmatpush1.bf16.msra.mxu0 %v4260
        %6364 = vmatprep.subr.bf16.mxu0 %v4266
        %6365 = vmatpush1.bf16.msra.mxu0 %v4265
        %6366 = vmatprep.subr.bf16.mxu0 %v4271
        %6367 = vmatpush1.bf16.msra.mxu0 %v4270
        %6368 = vmatprep.subr.bf16.mxu0 %v4276
        %6369 = vmatpush1.bf16.msra.mxu0 %v4275
        %6370 = vmatprep.subr.bf16.mxu0 %v4281
        %6371 = vmatpush1.bf16.msra.mxu0 %v4280
        %6372 = vmatprep.subr.bf16.mxu0 %v4286
        %6373 = vmatpush1.bf16.msra.mxu0 %v4285
        %6374 = vmatprep.subr.bf16.mxu0 %v4291
        %6375 = vmatpush1.bf16.msra.mxu0 %v4290
        %6376 = vmatprep.mubr.bf16.mxu0 %v1404
        %6377 = vmatmul.mubr.bf16.gmra.mrb[0].mxu0 %v1390
        %v6378 = vpop.f32.mrb[0].mxu0
        %v6379 = vadd.f32 0.0, %v6378
        %v6380 = vpop.f32.mrb[0].mxu0
        %v6381 = vadd.f32 0.0, %v6380
        %v6382 = vpop.f32.mrb[0].mxu0
        %v6383 = vpop.f32.mrb[0].mxu0
        %6384 = vdwg.mxu0
        %6385 = vmatprep.subr.bf16.mxu0 %v4296
        %6386 = vmatpush1.bf16.msra.mxu0 %v4295
        %6387 = vmatprep.subr.bf16.mxu0 %v4301
        %6388 = vmatpush1.bf16.msra.mxu0 %v4300
        %6389 = vmatprep.subr.bf16.mxu0 %v4306
        %6390 = vmatpush1.bf16.msra.mxu0 %v4305
        %6391 = vmatprep.subr.bf16.mxu0 %v4311
        %6392 = vmatpush1.bf16.msra.mxu0 %v4310
        %6393 = vmatprep.subr.bf16.mxu0 %v4316
        %6394 = vmatpush1.bf16.msra.mxu0 %v4315
        %6395 = vmatprep.subr.bf16.mxu0 %v4321
        %6396 = vmatpush1.bf16.msra.mxu0 %v4320
        %6397 = vmatprep.subr.bf16.mxu0 %v4326
        %6398 = vmatpush1.bf16.msra.mxu0 %v4325
        %6399 = vmatprep.subr.bf16.mxu0 %v4331
        %6400 = vmatpush1.bf16.msra.mxu0 %v4330
        %6401 = vmatprep.subr.bf16.mxu0 %v4336
        %6402 = vmatpush1.bf16.msra.mxu0 %v4335
        %6403 = vmatprep.subr.bf16.mxu0 %v4341
        %6404 = vmatpush1.bf16.msra.mxu0 %v4340
        %6405 = vmatprep.subr.bf16.mxu0 %v4346
        %6406 = vmatpush1.bf16.msra.mxu0 %v4345
        %6407 = vmatprep.subr.bf16.mxu0 %v4351
        %6408 = vmatpush1.bf16.msra.mxu0 %v4350
        %6409 = vmatprep.subr.bf16.mxu0 %v4356
        %6410 = vmatpush1.bf16.msra.mxu0 %v4355
        %6411 = vmatprep.subr.bf16.mxu0 %v4361
        %6412 = vmatpush1.bf16.msra.mxu0 %v4360
        %6413 = vmatprep.subr.bf16.mxu0 %v4366
        %6414 = vmatpush1.bf16.msra.mxu0 %v4365
        %6415 = vmatprep.subr.bf16.mxu0 %v4371
        %6416 = vmatpush1.bf16.msra.mxu0 %v4370
        %6417 = vmatprep.mubr.bf16.mxu0 %v1414
        %6418 = vmatmul.mubr.bf16.gmra.mrb[0].mxu0 %v1412
        %v6419 = vpop.f32.mrb[0].mxu0
        %v6420 = vadd.f32 %v6379, %v6419
        %v6421 = vpop.f32.mrb[0].mxu0
        %v6422 = vadd.f32 %v6381, %v6421
        %v6423 = vpop.f32.mrb[0].mxu0
        %v6424 = vpop.f32.mrb[0].mxu0
        %6425 = vdwg.mxu0
        %6426 = vmatprep.subr.bf16.mxu0 %v4376
        %6427 = vmatpush1.bf16.msra.mxu0 %v4375
        %6428 = vmatprep.subr.bf16.mxu0 %v4381
        %6429 = vmatpush1.bf16.msra.mxu0 %v4380
        %6430 = vmatprep.subr.bf16.mxu0 %v4386
        %6431 = vmatpush1.bf16.msra.mxu0 %v4385
        %6432 = vmatprep.subr.bf16.mxu0 %v4391
        %6433 = vmatpush1.bf16.msra.mxu0 %v4390
        %6434 = vmatprep.subr.bf16.mxu0 %v4396
        %6435 = vmatpush1.bf16.msra.mxu0 %v4395
        %6436 = vmatprep.subr.bf16.mxu0 %v4401
        %6437 = vmatpush1.bf16.msra.mxu0 %v4400
        %6438 = vmatprep.subr.bf16.mxu0 %v4406
        %6439 = vmatpush1.bf16.msra.mxu0 %v4405
        %6440 = vmatprep.subr.bf16.mxu0 %v4411
        %6441 = vmatpush1.bf16.msra.mxu0 %v4410
        %6442 = vmatprep.subr.bf16.mxu0 %v4416
        %6443 = vmatpush1.bf16.msra.mxu0 %v4415
        %6444 = vmatprep.subr.bf16.mxu0 %v4421
        %6445 = vmatpush1.bf16.msra.mxu0 %v4420
        %6446 = vmatprep.subr.bf16.mxu0 %v4426
        %6447 = vmatpush1.bf16.msra.mxu0 %v4425
        %6448 = vmatprep.subr.bf16.mxu0 %v4431
        %6449 = vmatpush1.bf16.msra.mxu0 %v4430
        %6450 = vmatprep.subr.bf16.mxu0 %v4436
        %6451 = vmatpush1.bf16.msra.mxu0 %v4435
        %6452 = vmatprep.subr.bf16.mxu0 %v4441
        %6453 = vmatpush1.bf16.msra.mxu0 %v4440
        %6454 = vmatprep.subr.bf16.mxu0 %v4446
        %6455 = vmatpush1.bf16.msra.mxu0 %v4445
        %6456 = vmatprep.subr.bf16.mxu0 %v4451
        %6457 = vmatpush1.bf16.msra.mxu0 %v4450
        %6458 = vmatprep.mubr.bf16.mxu0 %v1411
        %6459 = vmatmul.mubr.bf16.gmra.mrb[0].mxu0 %v1397
        %v6460 = vpop.f32.mrb[0].mxu0
        %v6461 = vadd.f32 %v6420, %v6460
        %v6462 = vpop.f32.mrb[0].mxu0
        %v6463 = vadd.f32 %v6422, %v6462
        %v6464 = vpop.f32.mrb[0].mxu0
        %v6465 = vpop.f32.mrb[0].mxu0
        %6466 = vdwg.mxu0
        %6467 = vmatprep.subr.bf16.mxu0 %v4456
        %6468 = vmatpush1.bf16.msra.mxu0 %v4455
        %6469 = vmatprep.subr.bf16.mxu0 %v4461
        %6470 = vmatpush1.bf16.msra.mxu0 %v4460
        %6471 = vmatprep.subr.bf16.mxu0 %v4466
        %6472 = vmatpush1.bf16.msra.mxu0 %v4465
        %6473 = vmatprep.subr.bf16.mxu0 %v4471
        %6474 = vmatpush1.bf16.msra.mxu0 %v4470
        %6475 = vmatprep.subr.bf16.mxu0 %v4476
        %6476 = vmatpush1.bf16.msra.mxu0 %v4475
        %6477 = vmatprep.subr.bf16.mxu0 %v4481
        %6478 = vmatpush1.bf16.msra.mxu0 %v4480
        %6479 = vmatprep.subr.bf16.mxu0 %v4486
        %6480 = vmatpush1.bf16.msra.mxu0 %v4485
        %6481 = vmatprep.subr.bf16.mxu0 %v4491
        %6482 = vmatpush1.bf16.msra.mxu0 %v4490
        %6483 = vmatprep.subr.bf16.mxu0 %v4496
        %6484 = vmatpush1.bf16.msra.mxu0 %v4495
        %6485 = vmatprep.subr.bf16.mxu0 %v4501
        %6486 = vmatpush1.bf16.msra.mxu0 %v4500
        %6487 = vmatprep.subr.bf16.mxu0 %v4506
        %6488 = vmatpush1.bf16.msra.mxu0 %v4505
        %6489 = vmatprep.subr.bf16.mxu0 %v4511
        %6490 = vmatpush1.bf16.msra.mxu0 %v4510
        %6491 = vmatprep.subr.bf16.mxu0 %v4516
        %6492 = vmatpush1.bf16.msra.mxu0 %v4515
        %6493 = vmatprep.subr.bf16.mxu0 %v4521
        %6494 = vmatpush1.bf16.msra.mxu0 %v4520
        %6495 = vmatprep.subr.bf16.mxu0 %v4526
        %6496 = vmatpush1.bf16.msra.mxu0 %v4525
        %6497 = vmatprep.subr.bf16.mxu0 %v4531
        %6498 = vmatpush1.bf16.msra.mxu0 %v4530
        %6499 = vmatprep.mubr.bf16.mxu0 %v1415
        %6500 = vmatmul.mubr.bf16.gmra.mrb[0].mxu0 %v1413
        %v6501 = vpop.f32.mrb[0].mxu0
        %v6502 = vadd.f32 %v6461, %v6501
        %v6503 = vpop.f32.mrb[0].mxu0
        %v6504 = vadd.f32 %v6463, %v6503
        %v6505 = vpop.f32.mrb[0].mxu0
        %v6506 = vpop.f32.mrb[0].mxu0
        %6507 = vdwg.mxu0
        %6508 = vmatprep.subr.bf16.mxu0 %v4536
        %6509 = vmatpush1.bf16.msra.mxu0 %v4535
        %6510 = vmatprep.subr.bf16.mxu0 %v4541
        %6511 = vmatpush1.bf16.msra.mxu0 %v4540
        %6512 = vmatprep.subr.bf16.mxu0 %v4546
        %6513 = vmatpush1.bf16.msra.mxu0 %v4545
        %6514 = vmatprep.subr.bf16.mxu0 %v4551
        %6515 = vmatpush1.bf16.msra.mxu0 %v4550
        %6516 = vmatprep.subr.bf16.mxu0 %v4556
        %6517 = vmatpush1.bf16.msra.mxu0 %v4555
        %6518 = vmatprep.subr.bf16.mxu0 %v4561
        %6519 = vmatpush1.bf16.msra.mxu0 %v4560
        %6520 = vmatprep.subr.bf16.mxu0 %v4566
        %6521 = vmatpush1.bf16.msra.mxu0 %v4565
        %6522 = vmatprep.subr.bf16.mxu0 %v4571
        %6523 = vmatpush1.bf16.msra.mxu0 %v4570
        %6524 = vmatprep.subr.bf16.mxu0 %v4576
        %6525 = vmatpush1.bf16.msra.mxu0 %v4575
        %6526 = vmatprep.subr.bf16.mxu0 %v4581
        %6527 = vmatpush1.bf16.msra.mxu0 %v4580
        %6528 = vmatprep.subr.bf16.mxu0 %v4586
        %6529 = vmatpush1.bf16.msra.mxu0 %v4585
        %6530 = vmatprep.subr.bf16.mxu0 %v4591
        %6531 = vmatpush1.bf16.msra.mxu0 %v4590
        %6532 = vmatprep.subr.bf16.mxu0 %v4596
        %6533 = vmatpush1.bf16.msra.mxu0 %v4595
        %6534 = vmatprep.subr.bf16.mxu0 %v4601
        %6535 = vmatpush1.bf16.msra.mxu0 %v4600
        %6536 = vmatprep.subr.bf16.mxu0 %v4606
        %6537 = vmatpush1.bf16.msra.mxu0 %v4605
        %6538 = vmatprep.subr.bf16.mxu0 %v4611
        %6539 = vmatpush1.bf16.msra.mxu0 %v4610
        %6540 = vmatprep.mubr.bf16.mxu0 %v1453
        %6541 = vmatmul.mubr.bf16.gmra.mrb[0].mxu0 %v1439
        %v6542 = vpop.f32.mrb[0].mxu0
        %v6543 = vadd.f32 %v6502, %v6542
        %v6544 = vpop.f32.mrb[0].mxu0
        %v6545 = vadd.f32 %v6504, %v6544
        %v6546 = vpop.f32.mrb[0].mxu0
        %v6547 = vpop.f32.mrb[0].mxu0
        %6548 = vdwg.mxu0
        %6549 = vmatprep.subr.bf16.mxu0 %v4616
        %6550 = vmatpush1.bf16.msra.mxu0 %v4615
        %6551 = vmatprep.subr.bf16.mxu0 %v4621
        %6552 = vmatpush1.bf16.msra.mxu0 %v4620
        %6553 = vmatprep.subr.bf16.mxu0 %v4626
        %6554 = vmatpush1.bf16.msra.mxu0 %v4625
        %6555 = vmatprep.subr.bf16.mxu0 %v4631
        %6556 = vmatpush1.bf16.msra.mxu0 %v4630
        %6557 = vmatprep.subr.bf16.mxu0 %v4636
        %6558 = vmatpush1.bf16.msra.mxu0 %v4635
        %6559 = vmatprep.subr.bf16.mxu0 %v4641
        %6560 = vmatpush1.bf16.msra.mxu0 %v4640
        %6561 = vmatprep.subr.bf16.mxu0 %v4646
        %6562 = vmatpush1.bf16.msra.mxu0 %v4645
        %6563 = vmatprep.subr.bf16.mxu0 %v4651
        %6564 = vmatpush1.bf16.msra.mxu0 %v4650
        %6565 = vmatprep.subr.bf16.mxu0 %v4656
        %6566 = vmatpush1.bf16.msra.mxu0 %v4655
        %6567 = vmatprep.subr.bf16.mxu0 %v4661
        %6568 = vmatpush1.bf16.msra.mxu0 %v4660
        %6569 = vmatprep.subr.bf16.mxu0 %v4666
        %6570 = vmatpush1.bf16.msra.mxu0 %v4665
        %6571 = vmatprep.subr.bf16.mxu0 %v4671
        %6572 = vmatpush1.bf16.msra.mxu0 %v4670
        %6573 = vmatprep.subr.bf16.mxu0 %v4676
        %6574 = vmatpush1.bf16.msra.mxu0 %v4675
        %6575 = vmatprep.subr.bf16.mxu0 %v4681
        %6576 = vmatpush1.bf16.msra.mxu0 %v4680
        %6577 = vmatprep.subr.bf16.mxu0 %v4686
        %6578 = vmatpush1.bf16.msra.mxu0 %v4685
        %6579 = vmatprep.subr.bf16.mxu0 %v4691
        %6580 = vmatpush1.bf16.msra.mxu0 %v4690
        %6581 = vmatprep.mubr.bf16.mxu0 %v1463
        %6582 = vmatmul.mubr.bf16.gmra.mrb[0].mxu0 %v1461
        %v6583 = vpop.f32.mrb[0].mxu0
        %v6584 = vadd.f32 %v6543, %v6583
        %v6585 = vpop.f32.mrb[0].mxu0
        %v6586 = vadd.f32 %v6545, %v6585
        %v6587 = vpop.f32.mrb[0].mxu0
        %v6588 = vpop.f32.mrb[0].mxu0
        %6589 = vdwg.mxu0
        %6590 = vmatprep.subr.bf16.mxu0 %v4696
        %6591 = vmatpush1.bf16.msra.mxu0 %v4695
        %6592 = vmatprep.subr.bf16.mxu0 %v4701
        %6593 = vmatpush1.bf16.msra.mxu0 %v4700
        %6594 = vmatprep.subr.bf16.mxu0 %v4706
        %6595 = vmatpush1.bf16.msra.mxu0 %v4705
        %6596 = vmatprep.subr.bf16.mxu0 %v4711
        %6597 = vmatpush1.bf16.msra.mxu0 %v4710
        %6598 = vmatprep.subr.bf16.mxu0 %v4716
        %6599 = vmatpush1.bf16.msra.mxu0 %v4715
        %6600 = vmatprep.subr.bf16.mxu0 %v4721
        %6601 = vmatpush1.bf16.msra.mxu0 %v4720
        %6602 = vmatprep.subr.bf16.mxu0 %v4726
        %6603 = vmatpush1.bf16.msra.mxu0 %v4725
        %6604 = vmatprep.subr.bf16.mxu0 %v4731
        %6605 = vmatpush1.bf16.msra.mxu0 %v4730
        %6606 = vmatprep.subr.bf16.mxu0 %v4736
        %6607 = vmatpush1.bf16.msra.mxu0 %v4735
        %6608 = vmatprep.subr.bf16.mxu0 %v4741
        %6609 = vmatpush1.bf16.msra.mxu0 %v4740
        %6610 = vmatprep.subr.bf16.mxu0 %v4746
        %6611 = vmatpush1.bf16.msra.mxu0 %v4745
        %6612 = vmatprep.subr.bf16.mxu0 %v4751
        %6613 = vmatpush1.bf16.msra.mxu0 %v4750
        %6614 = vmatprep.subr.bf16.mxu0 %v4756
        %6615 = vmatpush1.bf16.msra.mxu0 %v4755
        %6616 = vmatprep.subr.bf16.mxu0 %v4761
        %6617 = vmatpush1.bf16.msra.mxu0 %v4760
        %6618 = vmatprep.subr.bf16.mxu0 %v4766
        %6619 = vmatpush1.bf16.msra.mxu0 %v4765
        %6620 = vmatprep.subr.bf16.mxu0 %v4771
        %6621 = vmatpush1.bf16.msra.mxu0 %v4770
        %6622 = vmatprep.mubr.bf16.mxu0 %v1460
        %6623 = vmatmul.mubr.bf16.gmra.mrb[0].mxu0 %v1446
        %v6624 = vpop.f32.mrb[0].mxu0
        %v6625 = vadd.f32 %v6584, %v6624
        %v6626 = vpop.f32.mrb[0].mxu0
        %v6627 = vadd.f32 %v6586, %v6626
        %v6628 = vpop.f32.mrb[0].mxu0
        %v6629 = vpop.f32.mrb[0].mxu0
        %6630 = vdwg.mxu0
        %6631 = vmatprep.subr.bf16.mxu0 %v4776
        %6632 = vmatpush1.bf16.msra.mxu0 %v4775
        %6633 = vmatprep.subr.bf16.mxu0 %v4781
        %6634 = vmatpush1.bf16.msra.mxu0 %v4780
        %6635 = vmatprep.subr.bf16.mxu0 %v4786
        %6636 = vmatpush1.bf16.msra.mxu0 %v4785
        %6637 = vmatprep.subr.bf16.mxu0 %v4791
        %6638 = vmatpush1.bf16.msra.mxu0 %v4790
        %6639 = vmatprep.subr.bf16.mxu0 %v4796
        %6640 = vmatpush1.bf16.msra.mxu0 %v4795
        %6641 = vmatprep.subr.bf16.mxu0 %v4801
        %6642 = vmatpush1.bf16.msra.mxu0 %v4800
        %6643 = vmatprep.subr.bf16.mxu0 %v4806
        %6644 = vmatpush1.bf16.msra.mxu0 %v4805
        %6645 = vmatprep.subr.bf16.mxu0 %v4811
        %6646 = vmatpush1.bf16.msra.mxu0 %v4810
        %6647 = vmatprep.subr.bf16.mxu0 %v4816
        %6648 = vmatpush1.bf16.msra.mxu0 %v4815
        %6649 = vmatprep.subr.bf16.mxu0 %v4821
        %6650 = vmatpush1.bf16.msra.mxu0 %v4820
        %6651 = vmatprep.subr.bf16.mxu0 %v4826
        %6652 = vmatpush1.bf16.msra.mxu0 %v4825
        %6653 = vmatprep.subr.bf16.mxu0 %v4831
        %6654 = vmatpush1.bf16.msra.mxu0 %v4830
        %6655 = vmatprep.subr.bf16.mxu0 %v4836
        %6656 = vmatpush1.bf16.msra.mxu0 %v4835
        %6657 = vmatprep.subr.bf16.mxu0 %v4841
        %6658 = vmatpush1.bf16.msra.mxu0 %v4840
        %6659 = vmatprep.subr.bf16.mxu0 %v4846
        %6660 = vmatpush1.bf16.msra.mxu0 %v4845
        %6661 = vmatprep.subr.bf16.mxu0 %v4851
        %6662 = vmatpush1.bf16.msra.mxu0 %v4850
        %6663 = vmatprep.mubr.bf16.mxu0 %v1464
        %6664 = vmatmul.mubr.bf16.gmra.mrb[0].mxu0 %v1462
        %v6665 = vpop.f32.mrb[0].mxu0
        %v6666 = vadd.f32 %v6625, %v6665
        %v6667 = vpop.f32.mrb[0].mxu0
        %v6668 = vadd.f32 %v6627, %v6667
        %v6669 = vpop.f32.mrb[0].mxu0
        %v6670 = vpop.f32.mrb[0].mxu0
        %6671 = vdwg.mxu0
        %6672 = vmatprep.subr.bf16.mxu0 %v4856
        %6673 = vmatpush1.bf16.msra.mxu0 %v4855
        %6674 = vmatprep.subr.bf16.mxu0 %v4861
        %6675 = vmatpush1.bf16.msra.mxu0 %v4860
        %6676 = vmatprep.subr.bf16.mxu0 %v4866
        %6677 = vmatpush1.bf16.msra.mxu0 %v4865
        %6678 = vmatprep.subr.bf16.mxu0 %v4871
        %6679 = vmatpush1.bf16.msra.mxu0 %v4870
        %6680 = vmatprep.subr.bf16.mxu0 %v4876
        %6681 = vmatpush1.bf16.msra.mxu0 %v4875
        %6682 = vmatprep.subr.bf16.mxu0 %v4881
        %6683 = vmatpush1.bf16.msra.mxu0 %v4880
        %6684 = vmatprep.subr.bf16.mxu0 %v4886
        %6685 = vmatpush1.bf16.msra.mxu0 %v4885
        %6686 = vmatprep.subr.bf16.mxu0 %v4891
        %6687 = vmatpush1.bf16.msra.mxu0 %v4890
        %6688 = vmatprep.subr.bf16.mxu0 %v4896
        %6689 = vmatpush1.bf16.msra.mxu0 %v4895
        %6690 = vmatprep.subr.bf16.mxu0 %v4901
        %6691 = vmatpush1.bf16.msra.mxu0 %v4900
        %6692 = vmatprep.subr.bf16.mxu0 %v4906
        %6693 = vmatpush1.bf16.msra.mxu0 %v4905
        %6694 = vmatprep.subr.bf16.mxu0 %v4911
        %6695 = vmatpush1.bf16.msra.mxu0 %v4910
        %6696 = vmatprep.subr.bf16.mxu0 %v4916
        %6697 = vmatpush1.bf16.msra.mxu0 %v4915
        %6698 = vmatprep.subr.bf16.mxu0 %v4921
        %6699 = vmatpush1.bf16.msra.mxu0 %v4920
        %6700 = vmatprep.subr.bf16.mxu0 %v4926
        %6701 = vmatpush1.bf16.msra.mxu0 %v4925
        %6702 = vmatprep.subr.bf16.mxu0 %v4931
        %6703 = vmatpush1.bf16.msra.mxu0 %v4930
        %6704 = vmatprep.mubr.bf16.mxu0 %v1501
        %6705 = vmatmul.mubr.bf16.gmra.mrb[0].mxu0 %v1487
        %v6706 = vpop.f32.mrb[0].mxu0
        %v6707 = vadd.f32 %v6666, %v6706
        %v6708 = vpop.f32.mrb[0].mxu0
        %v6709 = vadd.f32 %v6668, %v6708
        %v6710 = vpop.f32.mrb[0].mxu0
        %v6711 = vpop.f32.mrb[0].mxu0
        %6712 = vdwg.mxu0
        %6713 = vmatprep.subr.bf16.mxu0 %v4936
        %6714 = vmatpush1.bf16.msra.mxu0 %v4935
        %6715 = vmatprep.subr.bf16.mxu0 %v4941
        %6716 = vmatpush1.bf16.msra.mxu0 %v4940
        %6717 = vmatprep.subr.bf16.mxu0 %v4946
        %6718 = vmatpush1.bf16.msra.mxu0 %v4945
        %6719 = vmatprep.subr.bf16.mxu0 %v4951
        %6720 = vmatpush1.bf16.msra.mxu0 %v4950
        %6721 = vmatprep.subr.bf16.mxu0 %v4956
        %6722 = vmatpush1.bf16.msra.mxu0 %v4955
        %6723 = vmatprep.subr.bf16.mxu0 %v4961
        %6724 = vmatpush1.bf16.msra.mxu0 %v4960
        %6725 = vmatprep.subr.bf16.mxu0 %v4966
        %6726 = vmatpush1.bf16.msra.mxu0 %v4965
        %6727 = vmatprep.subr.bf16.mxu0 %v4971
        %6728 = vmatpush1.bf16.msra.mxu0 %v4970
        %6729 = vmatprep.subr.bf16.mxu0 %v4976
        %6730 = vmatpush1.bf16.msra.mxu0 %v4975
        %6731 = vmatprep.subr.bf16.mxu0 %v4981
        %6732 = vmatpush1.bf16.msra.mxu0 %v4980
        %6733 = vmatprep.subr.bf16.mxu0 %v4986
        %6734 = vmatpush1.bf16.msra.mxu0 %v4985
        %6735 = vmatprep.subr.bf16.mxu0 %v4991
        %6736 = vmatpush1.bf16.msra.mxu0 %v4990
        %6737 = vmatprep.subr.bf16.mxu0 %v4996
        %6738 = vmatpush1.bf16.msra.mxu0 %v4995
        %6739 = vmatprep.subr.bf16.mxu0 %v5001
        %6740 = vmatpush1.bf16.msra.mxu0 %v5000
        %6741 = vmatprep.subr.bf16.mxu0 %v5006
        %6742 = vmatpush1.bf16.msra.mxu0 %v5005
        %6743 = vmatprep.subr.bf16.mxu0 %v5011
        %6744 = vmatpush1.bf16.msra.mxu0 %v5010
        %6745 = vmatprep.mubr.bf16.mxu0 %v1503
        %6746 = vmatmul.mubr.bf16.gmra.mrb[0].mxu0 %v1502
        %v6747 = vpop.f32.mrb[0].mxu0
        %v6748 = vadd.f32 %v6707, %v6747
        %v6749 = vpop.f32.mrb[0].mxu0
        %v6750 = vadd.f32 %v6709, %v6749
        %v6751 = vpop.f32.mrb[0].mxu0
        %v6752 = vpop.f32.mrb[0].mxu0
        %6753 = vdwg.mxu0
        %6754 = vmatprep.subr.bf16.mxu0 %v5016
        %6755 = vmatpush1.bf16.msra.mxu0 %v5015
        %6756 = vmatprep.subr.bf16.mxu0 %v5021
        %6757 = vmatpush1.bf16.msra.mxu0 %v5020
        %6758 = vmatprep.subr.bf16.mxu0 %v5026
        %6759 = vmatpush1.bf16.msra.mxu0 %v5025
        %6760 = vmatprep.subr.bf16.mxu0 %v5031
        %6761 = vmatpush1.bf16.msra.mxu0 %v5030
        %6762 = vmatprep.subr.bf16.mxu0 %v5036
        %6763 = vmatpush1.bf16.msra.mxu0 %v5035
        %6764 = vmatprep.subr.bf16.mxu0 %v5041
        %6765 = vmatpush1.bf16.msra.mxu0 %v5040
        %6766 = vmatprep.subr.bf16.mxu0 %v5046
        %6767 = vmatpush1.bf16.msra.mxu0 %v5045
        %6768 = vmatprep.subr.bf16.mxu0 %v5051
        %6769 = vmatpush1.bf16.msra.mxu0 %v5050
        %6770 = vmatprep.subr.bf16.mxu0 0
        %6771 = vmatpush1.bf16.msra.mxu0 0
        %6772 = vmatprep.subr.bf16.mxu0 0
        %6773 = vmatpush1.bf16.msra.mxu0 0
        %6774 = vmatprep.subr.bf16.mxu0 0
        %6775 = vmatpush1.bf16.msra.mxu0 0
        %6776 = vmatprep.subr.bf16.mxu0 0
        %6777 = vmatpush1.bf16.msra.mxu0 0
        %6778 = vmatprep.subr.bf16.mxu0 0
        %6779 = vmatpush1.bf16.msra.mxu0 0
        %6780 = vmatprep.subr.bf16.mxu0 0
        %6781 = vmatpush1.bf16.msra.mxu0 0
        %6782 = vmatprep.subr.bf16.mxu0 0
        %6783 = vmatpush1.bf16.msra.mxu0 0
        %6784 = vmatprep.subr.bf16.mxu0 0
        %6785 = vmatpush1.bf16.msra.mxu0 0
        %6786 = vmatprep.mubr.bf16.mxu0 0
        %6787 = vmatmul.mubr.bf16.gmra.mrb[0].mxu0 %v1494
        %v6788 = vpop.f32.mrb[0].mxu0
        %v6789 = vadd.f32 %v6748, %v6788
        %v6790 = vpop.f32.mrb[0].mxu0
        %v6791 = vadd.f32 %v6750, %v6790
        %v6792 = vpop.f32.mrb[0].mxu0
        %v6793 = vpop.f32.mrb[0].mxu0
        %6794 = vdwg.mxu0
        %6795 = vmatprep.subr.bf16.mxu0 0
        %6796 = vmatpush1.bf16.msra.mxu0 %v4217
        %6797 = vmatprep.subr.bf16.mxu0 0
        %6798 = vmatpush1.bf16.msra.mxu0 %v4222
        %6799 = vmatprep.subr.bf16.mxu0 0
        %6800 = vmatpush1.bf16.msra.mxu0 %v4227
        %6801 = vmatprep.subr.bf16.mxu0 0
        %6802 = vmatpush1.bf16.msra.mxu0 %v4232
        %6803 = vmatprep.subr.bf16.mxu0 0
        %6804 = vmatpush1.bf16.msra.mxu0 %v4237
        %6805 = vmatprep.subr.bf16.mxu0 0
        %6806 = vmatpush1.bf16.msra.mxu0 %v4242
        %6807 = vmatprep.subr.bf16.mxu0 0
        %6808 = vmatpush1.bf16.msra.mxu0 %v4247
        %6809 = vmatprep.subr.bf16.mxu0 0
        %6810 = vmatpush1.bf16.msra.mxu0 %v4252
        %6811 = vmatprep.subr.bf16.mxu0 0
        %6812 = vmatpush1.bf16.msra.mxu0 %v4257
        %6813 = vmatprep.subr.bf16.mxu0 0
        %6814 = vmatpush1.bf16.msra.mxu0 %v4262
        %6815 = vmatprep.subr.bf16.mxu0 0
        %6816 = vmatpush1.bf16.msra.mxu0 %v4267
        %6817 = vmatprep.subr.bf16.mxu0 0
        %6818 = vmatpush1.bf16.msra.mxu0 %v4272
        %6819 = vmatprep.subr.bf16.mxu0 0
        %6820 = vmatpush1.bf16.msra.mxu0 %v4277
        %6821 = vmatprep.subr.bf16.mxu0 0
        %6822 = vmatpush1.bf16.msra.mxu0 %v4282
        %6823 = vmatprep.subr.bf16.mxu0 0
        %6824 = vmatpush1.bf16.msra.mxu0 %v4287
        %6825 = vmatprep.subr.bf16.mxu0 0
        %6826 = vmatpush1.bf16.msra.mxu0 %v4292
        %6827 = vmatprep.mubr.bf16.mxu0 %v1404
        %6828 = vmatmul.mubr.bf16.gmra.mrb[0].mxu0 %v1390
        %v6829 = vpop.f32.mrb[0].mxu0
        %v6830 = vadd.f32 0.0, %v6829
        %v6831 = vpop.f32.mrb[0].mxu0
        %v6832 = vpop.f32.mrb[0].mxu0
        %v6833 = vpop.f32.mrb[0].mxu0
        %6834 = vdwg.mxu0
        %6835 = vmatprep.subr.bf16.mxu0 0
        %6836 = vmatpush1.bf16.msra.mxu0 %v4297
        %6837 = vmatprep.subr.bf16.mxu0 0
        %6838 = vmatpush1.bf16.msra.mxu0 %v4302
        %6839 = vmatprep.subr.bf16.mxu0 0
        %6840 = vmatpush1.bf16.msra.mxu0 %v4307
        %6841 = vmatprep.subr.bf16.mxu0 0
        %6842 = vmatpush1.bf16.msra.mxu0 %v4312
        %6843 = vmatprep.subr.bf16.mxu0 0
        %6844 = vmatpush1.bf16.msra.mxu0 %v4317
        %6845 = vmatprep.subr.bf16.mxu0 0
        %6846 = vmatpush1.bf16.msra.mxu0 %v4322
        %6847 = vmatprep.subr.bf16.mxu0 0
        %6848 = vmatpush1.bf16.msra.mxu0 %v4327
        %6849 = vmatprep.subr.bf16.mxu0 0
        %6850 = vmatpush1.bf16.msra.mxu0 %v4332
        %6851 = vmatprep.subr.bf16.mxu0 0
        %6852 = vmatpush1.bf16.msra.mxu0 %v4337
        %6853 = vmatprep.subr.bf16.mxu0 0
        %6854 = vmatpush1.bf16.msra.mxu0 %v4342
        %6855 = vmatprep.subr.bf16.mxu0 0
        %6856 = vmatpush1.bf16.msra.mxu0 %v4347
        %6857 = vmatprep.subr.bf16.mxu0 0
        %6858 = vmatpush1.bf16.msra.mxu0 %v4352
        %6859 = vmatprep.subr.bf16.mxu0 0
        %6860 = vmatpush1.bf16.msra.mxu0 %v4357
        %6861 = vmatprep.subr.bf16.mxu0 0
        %6862 = vmatpush1.bf16.msra.mxu0 %v4362
        %6863 = vmatprep.subr.bf16.mxu0 0
        %6864 = vmatpush1.bf16.msra.mxu0 %v4367
        %6865 = vmatprep.subr.bf16.mxu0 0
        %6866 = vmatpush1.bf16.msra.mxu0 %v4372
        %6867 = vmatprep.mubr.bf16.mxu0 %v1414
        %6868 = vmatmul.mubr.bf16.gmra.mrb[0].mxu0 %v1412
        %v6869 = vpop.f32.mrb[0].mxu0
        %v6870 = vadd.f32 %v6830, %v6869
        %v6871 = vpop.f32.mrb[0].mxu0
        %v6872 = vpop.f32.mrb[0].mxu0
        %v6873 = vpop.f32.mrb[0].mxu0
        %6874 = vdwg.mxu0
        %6875 = vmatprep.subr.bf16.mxu0 0
        %6876 = vmatpush1.bf16.msra.mxu0 %v4377
        %6877 = vmatprep.subr.bf16.mxu0 0
        %6878 = vmatpush1.bf16.msra.mxu0 %v4382
        %6879 = vmatprep.subr.bf16.mxu0 0
        %6880 = vmatpush1.bf16.msra.mxu0 %v4387
        %6881 = vmatprep.subr.bf16.mxu0 0
        %6882 = vmatpush1.bf16.msra.mxu0 %v4392
        %6883 = vmatprep.subr.bf16.mxu0 0
        %6884 = vmatpush1.bf16.msra.mxu0 %v4397
        %6885 = vmatprep.subr.bf16.mxu0 0
        %6886 = vmatpush1.bf16.msra.mxu0 %v4402
        %6887 = vmatprep.subr.bf16.mxu0 0
        %6888 = vmatpush1.bf16.msra.mxu0 %v4407
        %6889 = vmatprep.subr.bf16.mxu0 0
        %6890 = vmatpush1.bf16.msra.mxu0 %v4412
        %6891 = vmatprep.subr.bf16.mxu0 0
        %6892 = vmatpush1.bf16.msra.mxu0 %v4417
        %6893 = vmatprep.subr.bf16.mxu0 0
        %6894 = vmatpush1.bf16.msra.mxu0 %v4422
        %6895 = vmatprep.subr.bf16.mxu0 0
        %6896 = vmatpush1.bf16.msra.mxu0 %v4427
        %6897 = vmatprep.subr.bf16.mxu0 0
        %6898 = vmatpush1.bf16.msra.mxu0 %v4432
        %6899 = vmatprep.subr.bf16.mxu0 0
        %6900 = vmatpush1.bf16.msra.mxu0 %v4437
        %6901 = vmatprep.subr.bf16.mxu0 0
        %6902 = vmatpush1.bf16.msra.mxu0 %v4442
        %6903 = vmatprep.subr.bf16.mxu0 0
        %6904 = vmatpush1.bf16.msra.mxu0 %v4447
        %6905 = vmatprep.subr.bf16.mxu0 0
        %6906 = vmatpush1.bf16.msra.mxu0 %v4452
        %6907 = vmatprep.mubr.bf16.mxu0 %v1411
        %6908 = vmatmul.mubr.bf16.gmra.mrb[0].mxu0 %v1397
        %v6909 = vpop.f32.mrb[0].mxu0
        %v6910 = vadd.f32 %v6870, %v6909
        %v6911 = vpop.f32.mrb[0].mxu0
        %v6912 = vpop.f32.mrb[0].mxu0
        %v6913 = vpop.f32.mrb[0].mxu0
        %6914 = vdwg.mxu0
        %6915 = vmatprep.subr.bf16.mxu0 0
        %6916 = vmatpush1.bf16.msra.mxu0 %v4457
        %6917 = vmatprep.subr.bf16.mxu0 0
        %6918 = vmatpush1.bf16.msra.mxu0 %v4462
        %6919 = vmatprep.subr.bf16.mxu0 0
        %6920 = vmatpush1.bf16.msra.mxu0 %v4467
        %6921 = vmatprep.subr.bf16.mxu0 0
        %6922 = vmatpush1.bf16.msra.mxu0 %v4472
        %6923 = vmatprep.subr.bf16.mxu0 0
        %6924 = vmatpush1.bf16.msra.mxu0 %v4477
        %6925 = vmatprep.subr.bf16.mxu0 0
        %6926 = vmatpush1.bf16.msra.mxu0 %v4482
        %6927 = vmatprep.subr.bf16.mxu0 0
        %6928 = vmatpush1.bf16.msra.mxu0 %v4487
        %6929 = vmatprep.subr.bf16.mxu0 0
        %6930 = vmatpush1.bf16.msra.mxu0 %v4492
        %6931 = vmatprep.subr.bf16.mxu0 0
        %6932 = vmatpush1.bf16.msra.mxu0 %v4497
        %6933 = vmatprep.subr.bf16.mxu0 0
        %6934 = vmatpush1.bf16.msra.mxu0 %v4502
        %6935 = vmatprep.subr.bf16.mxu0 0
        %6936 = vmatpush1.bf16.msra.mxu0 %v4507
        %6937 = vmatprep.subr.bf16.mxu0 0
        %6938 = vmatpush1.bf16.msra.mxu0 %v4512
        %6939 = vmatprep.subr.bf16.mxu0 0
        %6940 = vmatpush1.bf16.msra.mxu0 %v4517
        %6941 = vmatprep.subr.bf16.mxu0 0
        %6942 = vmatpush1.bf16.msra.mxu0 %v4522
        %6943 = vmatprep.subr.bf16.mxu0 0
        %6944 = vmatpush1.bf16.msra.mxu0 %v4527
        %6945 = vmatprep.subr.bf16.mxu0 0
        %6946 = vmatpush1.bf16.msra.mxu0 %v4532
        %6947 = vmatprep.mubr.bf16.mxu0 %v1415
        %6948 = vmatmul.mubr.bf16.gmra.mrb[0].mxu0 %v1413
        %v6949 = vpop.f32.mrb[0].mxu0
        %v6950 = vadd.f32 %v6910, %v6949
        %v6951 = vpop.f32.mrb[0].mxu0
        %v6952 = vpop.f32.mrb[0].mxu0
        %v6953 = vpop.f32.mrb[0].mxu0
        %6954 = vdwg.mxu0
        %6955 = vmatprep.subr.bf16.mxu0 0
        %6956 = vmatpush1.bf16.msra.mxu0 %v4537
        %6957 = vmatprep.subr.bf16.mxu0 0
        %6958 = vmatpush1.bf16.msra.mxu0 %v4542
        %6959 = vmatprep.subr.bf16.mxu0 0
        %6960 = vmatpush1.bf16.msra.mxu0 %v4547
        %6961 = vmatprep.subr.bf16.mxu0 0
        %6962 = vmatpush1.bf16.msra.mxu0 %v4552
        %6963 = vmatprep.subr.bf16.mxu0 0
        %6964 = vmatpush1.bf16.msra.mxu0 %v4557
        %6965 = vmatprep.subr.bf16.mxu0 0
        %6966 = vmatpush1.bf16.msra.mxu0 %v4562
        %6967 = vmatprep.subr.bf16.mxu0 0
        %6968 = vmatpush1.bf16.msra.mxu0 %v4567
        %6969 = vmatprep.subr.bf16.mxu0 0
        %6970 = vmatpush1.bf16.msra.mxu0 %v4572
        %6971 = vmatprep.subr.bf16.mxu0 0
        %6972 = vmatpush1.bf16.msra.mxu0 %v4577
        %6973 = vmatprep.subr.bf16.mxu0 0
        %6974 = vmatpush1.bf16.msra.mxu0 %v4582
        %6975 = vmatprep.subr.bf16.mxu0 0
        %6976 = vmatpush1.bf16.msra.mxu0 %v4587
        %6977 = vmatprep.subr.bf16.mxu0 0
        %6978 = vmatpush1.bf16.msra.mxu0 %v4592
        %6979 = vmatprep.subr.bf16.mxu0 0
        %6980 = vmatpush1.bf16.msra.mxu0 %v4597
        %6981 = vmatprep.subr.bf16.mxu0 0
        %6982 = vmatpush1.bf16.msra.mxu0 %v4602
        %6983 = vmatprep.subr.bf16.mxu0 0
        %6984 = vmatpush1.bf16.msra.mxu0 %v4607
        %6985 = vmatprep.subr.bf16.mxu0 0
        %6986 = vmatpush1.bf16.msra.mxu0 %v4612
        %6987 = vmatprep.mubr.bf16.mxu0 %v1453
        %6988 = vmatmul.mubr.bf16.gmra.mrb[0].mxu0 %v1439
        %v6989 = vpop.f32.mrb[0].mxu0
        %v6990 = vadd.f32 %v6950, %v6989
        %v6991 = vpop.f32.mrb[0].mxu0
        %v6992 = vpop.f32.mrb[0].mxu0
        %v6993 = vpop.f32.mrb[0].mxu0
        %6994 = vdwg.mxu0
        %6995 = vmatprep.subr.bf16.mxu0 0
        %6996 = vmatpush1.bf16.msra.mxu0 %v4617
        %6997 = vmatprep.subr.bf16.mxu0 0
        %6998 = vmatpush1.bf16.msra.mxu0 %v4622
        %6999 = vmatprep.subr.bf16.mxu0 0
        %7000 = vmatpush1.bf16.msra.mxu0 %v4627
        %7001 = vmatprep.subr.bf16.mxu0 0
        %7002 = vmatpush1.bf16.msra.mxu0 %v4632
        %7003 = vmatprep.subr.bf16.mxu0 0
        %7004 = vmatpush1.bf16.msra.mxu0 %v4637
        %7005 = vmatprep.subr.bf16.mxu0 0
        %7006 = vmatpush1.bf16.msra.mxu0 %v4642
        %7007 = vmatprep.subr.bf16.mxu0 0
        %7008 = vmatpush1.bf16.msra.mxu0 %v4647
        %7009 = vmatprep.subr.bf16.mxu0 0
        %7010 = vmatpush1.bf16.msra.mxu0 %v4652
        %7011 = vmatprep.subr.bf16.mxu0 0
        %7012 = vmatpush1.bf16.msra.mxu0 %v4657
        %7013 = vmatprep.subr.bf16.mxu0 0
        %7014 = vmatpush1.bf16.msra.mxu0 %v4662
        %7015 = vmatprep.subr.bf16.mxu0 0
        %7016 = vmatpush1.bf16.msra.mxu0 %v4667
        %7017 = vmatprep.subr.bf16.mxu0 0
        %7018 = vmatpush1.bf16.msra.mxu0 %v4672
        %7019 = vmatprep.subr.bf16.mxu0 0
        %7020 = vmatpush1.bf16.msra.mxu0 %v4677
        %7021 = vmatprep.subr.bf16.mxu0 0
        %7022 = vmatpush1.bf16.msra.mxu0 %v4682
        %7023 = vmatprep.subr.bf16.mxu0 0
        %7024 = vmatpush1.bf16.msra.mxu0 %v4687
        %7025 = vmatprep.subr.bf16.mxu0 0
        %7026 = vmatpush1.bf16.msra.mxu0 %v4692
        %7027 = vmatprep.mubr.bf16.mxu0 %v1463
        %7028 = vmatmul.mubr.bf16.gmra.mrb[0].mxu0 %v1461
        %v7029 = vpop.f32.mrb[0].mxu0
        %v7030 = vadd.f32 %v6990, %v7029
        %v7031 = vpop.f32.mrb[0].mxu0
        %v7032 = vpop.f32.mrb[0].mxu0
        %v7033 = vpop.f32.mrb[0].mxu0
        %7034 = vdwg.mxu0
        %7035 = vmatprep.subr.bf16.mxu0 0
        %7036 = vmatpush1.bf16.msra.mxu0 %v4697
        %7037 = vmatprep.subr.bf16.mxu0 0
        %7038 = vmatpush1.bf16.msra.mxu0 %v4702
        %7039 = vmatprep.subr.bf16.mxu0 0
        %7040 = vmatpush1.bf16.msra.mxu0 %v4707
        %7041 = vmatprep.subr.bf16.mxu0 0
        %7042 = vmatpush1.bf16.msra.mxu0 %v4712
        %7043 = vmatprep.subr.bf16.mxu0 0
        %7044 = vmatpush1.bf16.msra.mxu0 %v4717
        %7045 = vmatprep.subr.bf16.mxu0 0
        %7046 = vmatpush1.bf16.msra.mxu0 %v4722
        %7047 = vmatprep.subr.bf16.mxu0 0
        %7048 = vmatpush1.bf16.msra.mxu0 %v4727
        %7049 = vmatprep.subr.bf16.mxu0 0
        %7050 = vmatpush1.bf16.msra.mxu0 %v4732
        %7051 = vmatprep.subr.bf16.mxu0 0
        %7052 = vmatpush1.bf16.msra.mxu0 %v4737
        %7053 = vmatprep.subr.bf16.mxu0 0
        %7054 = vmatpush1.bf16.msra.mxu0 %v4742
        %7055 = vmatprep.subr.bf16.mxu0 0
        %7056 = vmatpush1.bf16.msra.mxu0 %v4747
        %7057 = vmatprep.subr.bf16.mxu0 0
        %7058 = vmatpush1.bf16.msra.mxu0 %v4752
        %7059 = vmatprep.subr.bf16.mxu0 0
        %7060 = vmatpush1.bf16.msra.mxu0 %v4757
        %7061 = vmatprep.subr.bf16.mxu0 0
        %7062 = vmatpush1.bf16.msra.mxu0 %v4762
        %7063 = vmatprep.subr.bf16.mxu0 0
        %7064 = vmatpush1.bf16.msra.mxu0 %v4767
        %7065 = vmatprep.subr.bf16.mxu0 0
        %7066 = vmatpush1.bf16.msra.mxu0 %v4772
        %7067 = vmatprep.mubr.bf16.mxu0 %v1460
        %7068 = vmatmul.mubr.bf16.gmra.mrb[0].mxu0 %v1446
        %v7069 = vpop.f32.mrb[0].mxu0
        %v7070 = vadd.f32 %v7030, %v7069
        %v7071 = vpop.f32.mrb[0].mxu0
        %v7072 = vpop.f32.mrb[0].mxu0
        %v7073 = vpop.f32.mrb[0].mxu0
        %7074 = vdwg.mxu0
        %7075 = vmatprep.subr.bf16.mxu0 0
        %7076 = vmatpush1.bf16.msra.mxu0 %v4777
        %7077 = vmatprep.subr.bf16.mxu0 0
        %7078 = vmatpush1.bf16.msra.mxu0 %v4782
        %7079 = vmatprep.subr.bf16.mxu0 0
        %7080 = vmatpush1.bf16.msra.mxu0 %v4787
        %7081 = vmatprep.subr.bf16.mxu0 0
        %7082 = vmatpush1.bf16.msra.mxu0 %v4792
        %7083 = vmatprep.subr.bf16.mxu0 0
        %7084 = vmatpush1.bf16.msra.mxu0 %v4797
        %7085 = vmatprep.subr.bf16.mxu0 0
        %7086 = vmatpush1.bf16.msra.mxu0 %v4802
        %7087 = vmatprep.subr.bf16.mxu0 0
        %7088 = vmatpush1.bf16.msra.mxu0 %v4807
        %7089 = vmatprep.subr.bf16.mxu0 0
        %7090 = vmatpush1.bf16.msra.mxu0 %v4812
        %7091 = vmatprep.subr.bf16.mxu0 0
        %7092 = vmatpush1.bf16.msra.mxu0 %v4817
        %7093 = vmatprep.subr.bf16.mxu0 0
        %7094 = vmatpush1.bf16.msra.mxu0 %v4822
        %7095 = vmatprep.subr.bf16.mxu0 0
        %7096 = vmatpush1.bf16.msra.mxu0 %v4827
        %7097 = vmatprep.subr.bf16.mxu0 0
        %7098 = vmatpush1.bf16.msra.mxu0 %v4832
        %7099 = vmatprep.subr.bf16.mxu0 0
        %7100 = vmatpush1.bf16.msra.mxu0 %v4837
        %7101 = vmatprep.subr.bf16.mxu0 0
        %7102 = vmatpush1.bf16.msra.mxu0 %v4842
        %7103 = vmatprep.subr.bf16.mxu0 0
        %7104 = vmatpush1.bf16.msra.mxu0 %v4847
        %7105 = vmatprep.subr.bf16.mxu0 0
        %7106 = vmatpush1.bf16.msra.mxu0 %v4852
        %7107 = vmatprep.mubr.bf16.mxu0 %v1464
        %7108 = vmatmul.mubr.bf16.gmra.mrb[0].mxu0 %v1462
        %v7109 = vpop.f32.mrb[0].mxu0
        %v7110 = vadd.f32 %v7070, %v7109
        %v7111 = vpop.f32.mrb[0].mxu0
        %v7112 = vpop.f32.mrb[0].mxu0
        %v7113 = vpop.f32.mrb[0].mxu0
        %7114 = vdwg.mxu0
        %7115 = vmatprep.subr.bf16.mxu0 0
        %7116 = vmatpush1.bf16.msra.mxu0 %v4857
        %7117 = vmatprep.subr.bf16.mxu0 0
        %7118 = vmatpush1.bf16.msra.mxu0 %v4862
        %7119 = vmatprep.subr.bf16.mxu0 0
        %7120 = vmatpush1.bf16.msra.mxu0 %v4867
        %7121 = vmatprep.subr.bf16.mxu0 0
        %7122 = vmatpush1.bf16.msra.mxu0 %v4872
        %7123 = vmatprep.subr.bf16.mxu0 0
        %7124 = vmatpush1.bf16.msra.mxu0 %v4877
        %7125 = vmatprep.subr.bf16.mxu0 0
        %7126 = vmatpush1.bf16.msra.mxu0 %v4882
        %7127 = vmatprep.subr.bf16.mxu0 0
        %7128 = vmatpush1.bf16.msra.mxu0 %v4887
        %7129 = vmatprep.subr.bf16.mxu0 0
        %7130 = vmatpush1.bf16.msra.mxu0 %v4892
        %7131 = vmatprep.subr.bf16.mxu0 0
        %7132 = vmatpush1.bf16.msra.mxu0 %v4897
        %7133 = vmatprep.subr.bf16.mxu0 0
        %7134 = vmatpush1.bf16.msra.mxu0 %v4902
        %7135 = vmatprep.subr.bf16.mxu0 0
        %7136 = vmatpush1.bf16.msra.mxu0 %v4907
        %7137 = vmatprep.subr.bf16.mxu0 0
        %7138 = vmatpush1.bf16.msra.mxu0 %v4912
        %7139 = vmatprep.subr.bf16.mxu0 0
        %7140 = vmatpush1.bf16.msra.mxu0 %v4917
        %7141 = vmatprep.subr.bf16.mxu0 0
        %7142 = vmatpush1.bf16.msra.mxu0 %v4922
        %7143 = vmatprep.subr.bf16.mxu0 0
        %7144 = vmatpush1.bf16.msra.mxu0 %v4927
        %7145 = vmatprep.subr.bf16.mxu0 0
        %7146 = vmatpush1.bf16.msra.mxu0 %v4932
        %7147 = vmatprep.mubr.bf16.mxu0 %v1501
        %7148 = vmatmul.mubr.bf16.gmra.mrb[0].mxu0 %v1487
        %v7149 = vpop.f32.mrb[0].mxu0
        %v7150 = vadd.f32 %v7110, %v7149
        %v7151 = vpop.f32.mrb[0].mxu0
        %v7152 = vpop.f32.mrb[0].mxu0
        %v7153 = vpop.f32.mrb[0].mxu0
        %7154 = vdwg.mxu0
        %7155 = vmatprep.subr.bf16.mxu0 0
        %7156 = vmatpush1.bf16.msra.mxu0 %v4937
        %7157 = vmatprep.subr.bf16.mxu0 0
        %7158 = vmatpush1.bf16.msra.mxu0 %v4942
        %7159 = vmatprep.subr.bf16.mxu0 0
        %7160 = vmatpush1.bf16.msra.mxu0 %v4947
        %7161 = vmatprep.subr.bf16.mxu0 0
        %7162 = vmatpush1.bf16.msra.mxu0 %v4952
        %7163 = vmatprep.subr.bf16.mxu0 0
        %7164 = vmatpush1.bf16.msra.mxu0 %v4957
        %7165 = vmatprep.subr.bf16.mxu0 0
        %7166 = vmatpush1.bf16.msra.mxu0 %v4962
        %7167 = vmatprep.subr.bf16.mxu0 0
        %7168 = vmatpush1.bf16.msra.mxu0 %v4967
        %7169 = vmatprep.subr.bf16.mxu0 0
        %7170 = vmatpush1.bf16.msra.mxu0 %v4972
        %7171 = vmatprep.subr.bf16.mxu0 0
        %7172 = vmatpush1.bf16.msra.mxu0 %v4977
        %7173 = vmatprep.subr.bf16.mxu0 0
        %7174 = vmatpush1.bf16.msra.mxu0 %v4982
        %7175 = vmatprep.subr.bf16.mxu0 0
        %7176 = vmatpush1.bf16.msra.mxu0 %v4987
        %7177 = vmatprep.subr.bf16.mxu0 0
        %7178 = vmatpush1.bf16.msra.mxu0 %v4992
        %7179 = vmatprep.subr.bf16.mxu0 0
        %7180 = vmatpush1.bf16.msra.mxu0 %v4997
        %7181 = vmatprep.subr.bf16.mxu0 0
        %7182 = vmatpush1.bf16.msra.mxu0 %v5002
        %7183 = vmatprep.subr.bf16.mxu0 0
        %7184 = vmatpush1.bf16.msra.mxu0 %v5007
        %7185 = vmatprep.subr.bf16.mxu0 0
        %7186 = vmatpush1.bf16.msra.mxu0 %v5012
        %7187 = vmatprep.mubr.bf16.mxu0 %v1503
        %7188 = vmatmul.mubr.bf16.gmra.mrb[0].mxu0 %v1502
        %v7189 = vpop.f32.mrb[0].mxu0
        %v7190 = vadd.f32 %v7150, %v7189
        %v7191 = vpop.f32.mrb[0].mxu0
        %v7192 = vpop.f32.mrb[0].mxu0
        %v7193 = vpop.f32.mrb[0].mxu0
        %7194 = vdwg.mxu0
        %7195 = vmatprep.subr.bf16.mxu0 0
        %7196 = vmatpush1.bf16.msra.mxu0 %v5017
        %7197 = vmatprep.subr.bf16.mxu0 0
        %7198 = vmatpush1.bf16.msra.mxu0 %v5022
        %7199 = vmatprep.subr.bf16.mxu0 0
        %7200 = vmatpush1.bf16.msra.mxu0 %v5027
        %7201 = vmatprep.subr.bf16.mxu0 0
        %7202 = vmatpush1.bf16.msra.mxu0 %v5032
        %7203 = vmatprep.subr.bf16.mxu0 0
        %7204 = vmatpush1.bf16.msra.mxu0 %v5037
        %7205 = vmatprep.subr.bf16.mxu0 0
        %7206 = vmatpush1.bf16.msra.mxu0 %v5042
        %7207 = vmatprep.subr.bf16.mxu0 0
        %7208 = vmatpush1.bf16.msra.mxu0 %v5047
        %7209 = vmatprep.subr.bf16.mxu0 0
        %7210 = vmatpush1.bf16.msra.mxu0 %v5052
        %7211 = vmatprep.subr.bf16.mxu0 0
        %7212 = vmatpush1.bf16.msra.mxu0 0
        %7213 = vmatprep.subr.bf16.mxu0 0
        %7214 = vmatpush1.bf16.msra.mxu0 0
        %7215 = vmatprep.subr.bf16.mxu0 0
        %7216 = vmatpush1.bf16.msra.mxu0 0
        %7217 = vmatprep.subr.bf16.mxu0 0
        %7218 = vmatpush1.bf16.msra.mxu0 0
        %7219 = vmatprep.subr.bf16.mxu0 0
        %7220 = vmatpush1.bf16.msra.mxu0 0
        %7221 = vmatprep.subr.bf16.mxu0 0
        %7222 = vmatpush1.bf16.msra.mxu0 0
        %7223 = vmatprep.subr.bf16.mxu0 0
        %7224 = vmatpush1.bf16.msra.mxu0 0
        %7225 = vmatprep.subr.bf16.mxu0 0
        %7226 = vmatpush1.bf16.msra.mxu0 0
        %7227 = vmatprep.mubr.bf16.mxu0 0
        %7228 = vmatmul.mubr.bf16.gmra.mrb[0].mxu0 %v1494
        %v7229 = vpop.f32.mrb[0].mxu0
        %v7230 = vadd.f32 %v7190, %v7229
        %v7231 = vpop.f32.mrb[0].mxu0
        %v7232 = vpop.f32.mrb[0].mxu0
        %v7233 = vpop.f32.mrb[0].mxu0
        %7234 = vdwg.mxu0
        %v7240 = vcombine.low %v6338, %v6340
        %v7241 = vcombine.low %v6789, %v6791
        %v7243 = vunpack.c.l.s4 1983009808
        %v7244 = vunpack.c.0.s8 %v7243
        %v7245 = vlaneseq
        %v7246 = vshrl.u32 %v7245, 7
        %v7247 = vsub.s32 %v7244, %v7246
        %v7248 = vrot.slane %v7240, %v7247
        %v7250 = vunpack.c.l.s4 1983009808
        %v7251 = vunpack.c.0.s8 %v7250
        %v7252 = vlaneseq
        %v7253 = vshrl.u32 %v7252, 7
        %v7254 = vsub.s32 %v7251, %v7253
        %v7255 = vrot.slane %v7241, %v7254
        %v7256 = vcombine.low %v7248, %v7255
        %v7258 = vunpack.c.l.s4 1983009808
        %v7259 = vunpack.c.0.s8 %v7258
        %v7260 = vlaneseq
        %v7261 = vshrl.u32 %v7260, 7
        %v7262 = vsub.s32 %v7259, %v7261
        %v7263 = vrot.slane %v7230, %v7262
        %v7266 = vadd.f32 %v351, %v7256
        %v7267 = vadd.f32 %v352, %v7263
        %7268 = vst [vmem:[#allocation2] sm:$0xff] %v7266
        %7269 = vst [vmem:[#allocation2 + $0x8] sm:$0x3] %v7267
        %p7270 = scmp.eq.s32.totalorder %s24, 1
        // Predicated region
        $region69: #{cnn1_forward.3} parent=47 // pred_check
          %p7271 = pneg %p7270
        $region70: #{cnn1_forward.3} parent=47 // pred_check_branch
          %7273 = sbr.rel (%p7271) target = $region72
        $region71: #{cnn1_forward.3} parent=47 // pred_region
          %v7274 = vld [vmem:[#allocation2] sm:$0xff]
          %v7275 = vld [vmem:[#allocation2 + $0x8] sm:$0x3]
          %v7276 = vld [vmem:[#allocation6] sm:$0x1f]
          %v7278 = vlaneseq
          %v7279 = vshrl.u32 %v7278, 7
          %v7280 = vsub.s32 0, %v7279
          %v7281 = vrot.slane %v7276, %v7280
          %v7282 = vlaneseq
          %v7283 = vshrl.u32 %v7282, 7
          %v7284 = vsub.s32 1, %v7283
          %v7285 = vrot.slane %v7276, %v7284
          %v7286 = vlaneseq
          %v7287 = vshrl.u32 %v7286, 7
          %v7288 = vsub.s32 2, %v7287
          %v7289 = vrot.slane %v7276, %v7288
          %v7290 = vlaneseq
          %v7291 = vshrl.u32 %v7290, 7
          %v7292 = vsub.s32 3, %v7291
          %v7293 = vrot.slane %v7276, %v7292
          %v7294 = vlaneseq
          %v7295 = vshrl.u32 %v7294, 7
          %v7296 = vsub.s32 4, %v7295
          %v7297 = vrot.slane %v7276, %v7296
          %v7298 = vcombine.low %v7281, %v7285
          %v7299 = vcombine.low %v7289, %v7293
          %v7301 = vunpack.c.l.s4 1983009808
          %v7302 = vunpack.c.0.s8 %v7301
          %v7303 = vlaneseq
          %v7304 = vshrl.u32 %v7303, 7
          %v7305 = vsub.s32 %v7302, %v7304
          %v7306 = vrot.slane %v7298, %v7305
          %v7308 = vunpack.c.l.s4 1983009808
          %v7309 = vunpack.c.0.s8 %v7308
          %v7310 = vlaneseq
          %v7311 = vshrl.u32 %v7310, 7
          %v7312 = vsub.s32 %v7309, %v7311
          %v7313 = vrot.slane %v7299, %v7312
          %v7314 = vcombine.low %v7306, %v7313
          %v7316 = vunpack.c.l.s4 1983009808
          %v7317 = vunpack.c.0.s8 %v7316
          %v7318 = vlaneseq
          %v7319 = vshrl.u32 %v7318, 7
          %v7320 = vsub.s32 %v7317, %v7319
          %v7321 = vrot.slane %v7297, %v7320
          %v7324 = vadd.f32 %v7274, %v7314
          %v7325 = vadd.f32 %v7275, %v7321
          %v7326 = vmax.f32 %v7324, 0.0
          %v7327 = vmax.f32 %v7325, 0.0
          %v7328 = vld [vmem:[%s3] sm:$0xff]
          %v7329 = vld [vmem:[%s3 + $0x8] sm:$0xff]
          %v7330 = vld [vmem:[%s3 + $0x10] sm:$0xff]
          %v7331 = vld [vmem:[%s3 + $0x18] sm:$0xff]
          %v7332 = vld [vmem:[%s3 + $0x20] sm:$0xff]
          %v7333 = vld [vmem:[%s3 + $0x28] sm:$0xff]
          %v7334 = vld [vmem:[%s3 + $0x30] sm:$0xff]
          %v7335 = vld [vmem:[%s3 + $0x38] sm:$0xff]
          %v7336 = vld [vmem:[%s3 + $0x40] sm:$0xff]
          %v7337 = vld [vmem:[%s3 + $0x48] sm:$0xff]
          %v7338 = vld [vmem:[%s3 + $0x50] sm:$0xff]
          %v7339 = vld [vmem:[%s3 + $0x58] sm:$0xff]
          %v7340 = vld [vmem:[%s3 + $0x60] sm:$0xff]
          %v7341 = vld [vmem:[%s3 + $0x68] sm:$0xff]
          %v7342 = vld [vmem:[%s3 + $0x70] sm:$0xff]
          %v7343 = vld [vmem:[%s3 + $0x78] sm:$0xff]
          %v7344 = vld [vmem:[%s3 + $0x80] sm:$0xff]
          %v7345 = vld [vmem:[%s3 + $0x88] sm:$0xff]
          %v7346 = vld [vmem:[%s3 + $0x90] sm:$0xff]
          %v7347 = vld [vmem:[%s3 + $0x98] sm:$0xff]
          %v7348 = vld [vmem:[%s3 + $0xa0] sm:$0xff]
          %v7349 = vld [vmem:[%s3 + $0xa8] sm:$0xff]
          %v7350 = vld [vmem:[%s3 + $0xb0] sm:$0xff]
          %v7351 = vld [vmem:[%s3 + $0xb8] sm:$0xff]
          %v7352 = vld [vmem:[%s3 + $0xc0] sm:$0xff]
          %v7353 = vld [vmem:[%s3 + $0xc8] sm:$0xff]
          %v7354 = vld [vmem:[%s3 + $0xd0] sm:$0xff]
          %v7355 = vld [vmem:[%s3 + $0xd8] sm:$0xff]
          %v7356 = vld [vmem:[%s3 + $0xe0] sm:$0xff]
          %v7357 = vld [vmem:[%s3 + $0xe8] sm:$0xff]
          %v7358 = vld [vmem:[%s3 + $0xf0] sm:$0xff]
          %v7359 = vld [vmem:[%s3 + $0xf8] sm:$0xff]
          %v7360 = vld [vmem:[%s3 + $0x100] sm:$0xff]
          %v7361 = vld [vmem:[%s3 + $0x108] sm:$0xff]
          %v7362 = vld [vmem:[%s3 + $0x110] sm:$0xff]
          %v7363 = vld [vmem:[%s3 + $0x118] sm:$0xff]
          %v7364 = vld [vmem:[%s3 + $0x120] sm:$0xff]
          %v7365 = vld [vmem:[%s3 + $0x128] sm:$0xff]
          %v7366 = vld [vmem:[%s3 + $0x130] sm:$0xff]
          %v7367 = vld [vmem:[%s3 + $0x138] sm:$0xff]
          %v7368 = vld [vmem:[%s3 + $0x140] sm:$0xff]
          %v7369 = vld [vmem:[%s3 + $0x148] sm:$0xff]
          %v7370 = vld [vmem:[%s3 + $0x150] sm:$0xff]
          %v7371 = vld [vmem:[%s3 + $0x158] sm:$0xff]
          %v7372 = vld [vmem:[%s3 + $0x160] sm:$0xff]
          %v7373 = vld [vmem:[%s3 + $0x168] sm:$0xff]
          %v7374 = vld [vmem:[%s3 + $0x170] sm:$0xff]
          %v7375 = vld [vmem:[%s3 + $0x178] sm:$0xff]
          %v7376 = vld [vmem:[%s3 + $0x180] sm:$0xff]
          %v7377 = vld [vmem:[%s3 + $0x188] sm:$0xff]
          %v7378 = vld [vmem:[%s3 + $0x190] sm:$0xff]
          %v7379 = vld [vmem:[%s3 + $0x198] sm:$0xff]
          %v7380 = vld [vmem:[%s3 + $0x1a0] sm:$0xff]
          %v7381 = vld [vmem:[%s3 + $0x1a8] sm:$0xff]
          %v7382 = vld [vmem:[%s3 + $0x1b0] sm:$0xff]
          %v7383 = vld [vmem:[%s3 + $0x1b8] sm:$0xff]
          %v7384 = vld [vmem:[%s3 + $0x1c0] sm:$0xff]
          %v7385 = vld [vmem:[%s3 + $0x1c8] sm:$0xff]
          %v7386 = vld [vmem:[%s3 + $0x1d0] sm:$0xff]
          %v7387 = vld [vmem:[%s3 + $0x1d8] sm:$0xff]
          %v7388 = vld [vmem:[%s3 + $0x1e0] sm:$0xff]
          %v7389 = vld [vmem:[%s3 + $0x1e8] sm:$0xff]
          %v7390 = vld [vmem:[%s3 + $0x1f0] sm:$0xff]
          %v7391 = vld [vmem:[%s3 + $0x1f8] sm:$0xff]
          %v7392 = vld [vmem:[%s3 + $0x200] sm:$0xff]
          %v7393 = vld [vmem:[%s3 + $0x208] sm:$0xff]
          %v7394 = vld [vmem:[%s3 + $0x210] sm:$0xff]
          %v7395 = vld [vmem:[%s3 + $0x218] sm:$0xff]
          %v7396 = vld [vmem:[%s3 + $0x220] sm:$0xff]
          %v7397 = vld [vmem:[%s3 + $0x228] sm:$0xff]
          %v7398 = vld [vmem:[%s3 + $0x230] sm:$0xff]
          %v7399 = vld [vmem:[%s3 + $0x238] sm:$0xff]
          %v7400 = vld [vmem:[%s3 + $0x240] sm:$0xff]
          %v7401 = vld [vmem:[%s3 + $0x248] sm:$0xff]
          %v7402 = vld [vmem:[%s3 + $0x250] sm:$0xff]
          %v7403 = vld [vmem:[%s3 + $0x258] sm:$0xff]
          %v7404 = vld [vmem:[%s3 + $0x260] sm:$0xff]
          %v7405 = vld [vmem:[%s3 + $0x268] sm:$0xff]
          %v7406 = vld [vmem:[%s3 + $0x270] sm:$0xff]
          %v7407 = vld [vmem:[%s3 + $0x278] sm:$0xff]
          %v7408 = vld [vmem:[#allocation8] sm:$0x1]
          %v7410 = vlaneseq
          %v7411 = vshrl.u32 %v7410, 7
          %v7412 = vsub.s32 0, %v7411
          %v7413 = vrot.slane %v7408, %v7412
          %v7417 = vcombine.high %v7326, %v7326
          %v7419 = vunpack.c.l.s4 1983009808
          %v7420 = vunpack.c.0.s8 %v7419
          %v7421 = vlaneseq
          %v7422 = vshrl.u32 %v7421, 7
          %v7423 = vsub.s32 %v7420, %v7422
          %v7424 = vrot.slane %v7326, %v7423
          %v7426 = vunpack.c.l.s4 1983009808
          %v7427 = vunpack.c.0.s8 %v7426
          %v7428 = vlaneseq
          %v7429 = vshrl.u32 %v7428, 7
          %v7430 = vsub.s32 %v7427, %v7429
          %v7431 = vrot.slane %v7417, %v7430
          %v7432 = vcombine.high %v7424, %v7424
          %v7433 = vcombine.high %v7431, %v7431
          %v7435 = vunpack.c.l.s4 1983009808
          %v7436 = vunpack.c.0.s8 %v7435
          %v7437 = vlaneseq
          %v7438 = vshrl.u32 %v7437, 7
          %v7439 = vsub.s32 %v7436, %v7438
          %v7440 = vrot.slane %v7327, %v7439
          %7446 = vmatprep.subr.mxu0 0.0
          %7447 = vmatpush1.msra.mxu0 %v7328
          %7448 = vmatprep.subr.mxu0 0.0
          %7449 = vmatpush1.msra.mxu0 %v7329
          %7450 = vmatprep.subr.mxu0 0.0
          %7451 = vmatpush1.msra.mxu0 %v7330
          %7452 = vmatprep.subr.mxu0 0.0
          %7453 = vmatpush1.msra.mxu0 %v7331
          %7454 = vmatprep.subr.mxu0 0.0
          %7455 = vmatpush1.msra.mxu0 %v7332
          %7456 = vmatprep.subr.mxu0 0.0
          %7457 = vmatpush1.msra.mxu0 %v7333
          %7458 = vmatprep.subr.mxu0 0.0
          %7459 = vmatpush1.msra.mxu0 %v7334
          %7460 = vmatprep.subr.mxu0 0.0
          %7461 = vmatpush1.msra.mxu0 %v7335
          %7462 = vmatprep.subr.mxu0 0.0
          %7463 = vmatpush1.msra.mxu0 %v7336
          %7464 = vmatprep.subr.mxu0 0.0
          %7465 = vmatpush1.msra.mxu0 %v7337
          %7466 = vmatprep.subr.mxu0 0.0
          %7467 = vmatpush1.msra.mxu0 %v7338
          %7468 = vmatprep.subr.mxu0 0.0
          %7469 = vmatpush1.msra.mxu0 %v7339
          %7470 = vmatprep.subr.mxu0 0.0
          %7471 = vmatpush1.msra.mxu0 %v7340
          %7472 = vmatprep.subr.mxu0 0.0
          %7473 = vmatpush1.msra.mxu0 %v7341
          %7474 = vmatprep.subr.mxu0 0.0
          %7475 = vmatpush1.msra.mxu0 %v7342
          %7476 = vmatprep.subr.mxu0 0.0
          %7477 = vmatpush1.msra.mxu0 %v7343
          %7478 = vmatprep.subr.mxu0 0.0
          %7479 = vmatpush1.msra.mxu0 %v7344
          %7480 = vmatprep.subr.mxu0 0.0
          %7481 = vmatpush1.msra.mxu0 %v7345
          %7482 = vmatprep.subr.mxu0 0.0
          %7483 = vmatpush1.msra.mxu0 %v7346
          %7484 = vmatprep.subr.mxu0 0.0
          %7485 = vmatpush1.msra.mxu0 %v7347
          %7486 = vmatprep.subr.mxu0 0.0
          %7487 = vmatpush1.msra.mxu0 %v7348
          %7488 = vmatprep.subr.mxu0 0.0
          %7489 = vmatpush1.msra.mxu0 %v7349
          %7490 = vmatprep.subr.mxu0 0.0
          %7491 = vmatpush1.msra.mxu0 %v7350
          %7492 = vmatprep.subr.mxu0 0.0
          %7493 = vmatpush1.msra.mxu0 %v7351
          %7494 = vmatprep.subr.mxu0 0.0
          %7495 = vmatpush1.msra.mxu0 %v7352
          %7496 = vmatprep.subr.mxu0 0.0
          %7497 = vmatpush1.msra.mxu0 %v7353
          %7498 = vmatprep.subr.mxu0 0.0
          %7499 = vmatpush1.msra.mxu0 %v7354
          %7500 = vmatprep.subr.mxu0 0.0
          %7501 = vmatpush1.msra.mxu0 %v7355
          %7502 = vmatprep.subr.mxu0 0.0
          %7503 = vmatpush1.msra.mxu0 %v7356
          %7504 = vmatprep.subr.mxu0 0.0
          %7505 = vmatpush1.msra.mxu0 %v7357
          %7506 = vmatprep.subr.mxu0 0.0
          %7507 = vmatpush1.msra.mxu0 %v7358
          %7508 = vmatprep.subr.mxu0 0.0
          %7509 = vmatpush1.msra.mxu0 %v7359
          %7510 = vmatprep.mubr.f32.mxu0 %v7432
          %7511 = vmatmul.mubr.f32.gmra.mrb[0].mxu0 %v7424
          %v7512 = vpop.f32.mrb[0].mxu0
          %v7513 = vadd.f32 %v7413, %v7512
          %v7514 = vpop.f32.mrb[0].mxu0
          %7515 = vdwg.mxu0
          %7516 = vmatprep.subr.mxu0 0.0
          %7517 = vmatpush1.msra.mxu0 %v7360
          %7518 = vmatprep.subr.mxu0 0.0
          %7519 = vmatpush1.msra.mxu0 %v7361
          %7520 = vmatprep.subr.mxu0 0.0
          %7521 = vmatpush1.msra.mxu0 %v7362
          %7522 = vmatprep.subr.mxu0 0.0
          %7523 = vmatpush1.msra.mxu0 %v7363
          %7524 = vmatprep.subr.mxu0 0.0
          %7525 = vmatpush1.msra.mxu0 %v7364
          %7526 = vmatprep.subr.mxu0 0.0
          %7527 = vmatpush1.msra.mxu0 %v7365
          %7528 = vmatprep.subr.mxu0 0.0
          %7529 = vmatpush1.msra.mxu0 %v7366
          %7530 = vmatprep.subr.mxu0 0.0
          %7531 = vmatpush1.msra.mxu0 %v7367
          %7532 = vmatprep.subr.mxu0 0.0
          %7533 = vmatpush1.msra.mxu0 %v7368
          %7534 = vmatprep.subr.mxu0 0.0
          %7535 = vmatpush1.msra.mxu0 %v7369
          %7536 = vmatprep.subr.mxu0 0.0
          %7537 = vmatpush1.msra.mxu0 %v7370
          %7538 = vmatprep.subr.mxu0 0.0
          %7539 = vmatpush1.msra.mxu0 %v7371
          %7540 = vmatprep.subr.mxu0 0.0
          %7541 = vmatpush1.msra.mxu0 %v7372
          %7542 = vmatprep.subr.mxu0 0.0
          %7543 = vmatpush1.msra.mxu0 %v7373
          %7544 = vmatprep.subr.mxu0 0.0
          %7545 = vmatpush1.msra.mxu0 %v7374
          %7546 = vmatprep.subr.mxu0 0.0
          %7547 = vmatpush1.msra.mxu0 %v7375
          %7548 = vmatprep.subr.mxu0 0.0
          %7549 = vmatpush1.msra.mxu0 %v7376
          %7550 = vmatprep.subr.mxu0 0.0
          %7551 = vmatpush1.msra.mxu0 %v7377
          %7552 = vmatprep.subr.mxu0 0.0
          %7553 = vmatpush1.msra.mxu0 %v7378
          %7554 = vmatprep.subr.mxu0 0.0
          %7555 = vmatpush1.msra.mxu0 %v7379
          %7556 = vmatprep.subr.mxu0 0.0
          %7557 = vmatpush1.msra.mxu0 %v7380
          %7558 = vmatprep.subr.mxu0 0.0
          %7559 = vmatpush1.msra.mxu0 %v7381
          %7560 = vmatprep.subr.mxu0 0.0
          %7561 = vmatpush1.msra.mxu0 %v7382
          %7562 = vmatprep.subr.mxu0 0.0
          %7563 = vmatpush1.msra.mxu0 %v7383
          %7564 = vmatprep.subr.mxu0 0.0
          %7565 = vmatpush1.msra.mxu0 %v7384
          %7566 = vmatprep.subr.mxu0 0.0
          %7567 = vmatpush1.msra.mxu0 %v7385
          %7568 = vmatprep.subr.mxu0 0.0
          %7569 = vmatpush1.msra.mxu0 %v7386
          %7570 = vmatprep.subr.mxu0 0.0
          %7571 = vmatpush1.msra.mxu0 %v7387
          %7572 = vmatprep.subr.mxu0 0.0
          %7573 = vmatpush1.msra.mxu0 %v7388
          %7574 = vmatprep.subr.mxu0 0.0
          %7575 = vmatpush1.msra.mxu0 %v7389
          %7576 = vmatprep.subr.mxu0 0.0
          %7577 = vmatpush1.msra.mxu0 %v7390
          %7578 = vmatprep.subr.mxu0 0.0
          %7579 = vmatpush1.msra.mxu0 %v7391
          %7580 = vmatprep.mubr.f32.mxu0 %v7433
          %7581 = vmatmul.mubr.f32.gmra.mrb[0].mxu0 %v7431
          %v7582 = vpop.f32.mrb[0].mxu0
          %v7583 = vadd.f32 %v7513, %v7582
          %v7584 = vpop.f32.mrb[0].mxu0
          %7585 = vdwg.mxu0
          %7586 = vmatprep.subr.mxu0 0.0
          %7587 = vmatpush1.msra.mxu0 %v7392
          %7588 = vmatprep.subr.mxu0 0.0
          %7589 = vmatpush1.msra.mxu0 %v7393
          %7590 = vmatprep.subr.mxu0 0.0
          %7591 = vmatpush1.msra.mxu0 %v7394
          %7592 = vmatprep.subr.mxu0 0.0
          %7593 = vmatpush1.msra.mxu0 %v7395
          %7594 = vmatprep.subr.mxu0 0.0
          %7595 = vmatpush1.msra.mxu0 %v7396
          %7596 = vmatprep.subr.mxu0 0.0
          %7597 = vmatpush1.msra.mxu0 %v7397
          %7598 = vmatprep.subr.mxu0 0.0
          %7599 = vmatpush1.msra.mxu0 %v7398
          %7600 = vmatprep.subr.mxu0 0.0
          %7601 = vmatpush1.msra.mxu0 %v7399
          %7602 = vmatprep.subr.mxu0 0.0
          %7603 = vmatpush1.msra.mxu0 %v7400
          %7604 = vmatprep.subr.mxu0 0.0
          %7605 = vmatpush1.msra.mxu0 %v7401
          %7606 = vmatprep.subr.mxu0 0.0
          %7607 = vmatpush1.msra.mxu0 %v7402
          %7608 = vmatprep.subr.mxu0 0.0
          %7609 = vmatpush1.msra.mxu0 %v7403
          %7610 = vmatprep.subr.mxu0 0.0
          %7611 = vmatpush1.msra.mxu0 %v7404
          %7612 = vmatprep.subr.mxu0 0.0
          %7613 = vmatpush1.msra.mxu0 %v7405
          %7614 = vmatprep.subr.mxu0 0.0
          %7615 = vmatpush1.msra.mxu0 %v7406
          %7616 = vmatprep.subr.mxu0 0.0
          %7617 = vmatpush1.msra.mxu0 %v7407
          %7618 = vmatprep.subr.mxu0 0.0
          %7619 = vmatpush1.msra.mxu0 0.0
          %7620 = vmatprep.subr.mxu0 0.0
          %7621 = vmatpush1.msra.mxu0 0.0
          %7622 = vmatprep.subr.mxu0 0.0
          %7623 = vmatpush1.msra.mxu0 0.0
          %7624 = vmatprep.subr.mxu0 0.0
          %7625 = vmatpush1.msra.mxu0 0.0
          %7626 = vmatprep.subr.mxu0 0.0
          %7627 = vmatpush1.msra.mxu0 0.0
          %7628 = vmatprep.subr.mxu0 0.0
          %7629 = vmatpush1.msra.mxu0 0.0
          %7630 = vmatprep.subr.mxu0 0.0
          %7631 = vmatpush1.msra.mxu0 0.0
          %7632 = vmatprep.subr.mxu0 0.0
          %7633 = vmatpush1.msra.mxu0 0.0
          %7634 = vmatprep.subr.mxu0 0.0
          %7635 = vmatpush1.msra.mxu0 0.0
          %7636 = vmatprep.subr.mxu0 0.0
          %7637 = vmatpush1.msra.mxu0 0.0
          %7638 = vmatprep.subr.mxu0 0.0
          %7639 = vmatpush1.msra.mxu0 0.0
          %7640 = vmatprep.subr.mxu0 0.0
          %7641 = vmatpush1.msra.mxu0 0.0
          %7642 = vmatprep.subr.mxu0 0.0
          %7643 = vmatpush1.msra.mxu0 0.0
          %7644 = vmatprep.subr.mxu0 0.0
          %7645 = vmatpush1.msra.mxu0 0.0
          %7646 = vmatprep.subr.mxu0 0.0
          %7647 = vmatpush1.msra.mxu0 0.0
          %7648 = vmatprep.subr.mxu0 0.0
          %7649 = vmatpush1.msra.mxu0 0.0
          %7650 = vmatprep.mubr.f32.mxu0 0.0
          %7651 = vmatmul.mubr.f32.gmra.mrb[0].mxu0 %v7440
          %v7652 = vpop.f32.mrb[0].mxu0
          %v7653 = vadd.f32 %v7583, %v7652
          %v7654 = vpop.f32.mrb[0].mxu0
          %7655 = vdwg.mxu0
          %v7656 = vmax.f32 %v7653, 0.0
          %v7657 = vld [vmem:[%s5] sm:$0xff]
          %v7658 = vld [vmem:[%s5 + $0x8] sm:$0xff]
          %v7659 = vld [vmem:[%s5 + $0x10] sm:$0xff]
          %v7660 = vld [vmem:[%s5 + $0x18] sm:$0xff]
          %v7661 = vld [vmem:[%s5 + $0x20] sm:$0xff]
          %v7662 = vld [vmem:[%s5 + $0x28] sm:$0xff]
          %v7663 = vld [vmem:[%s5 + $0x30] sm:$0xff]
          %v7664 = vld [vmem:[%s5 + $0x38] sm:$0xff]
          %v7665 = vld [vmem:[%s5 + $0x40] sm:$0xff]
          %v7666 = vld [vmem:[%s5 + $0x48] sm:$0xff]
          %v7667 = vld [vmem:[%s5 + $0x50] sm:$0xff]
          %v7668 = vld [vmem:[%s5 + $0x58] sm:$0xff]
          %v7669 = vld [vmem:[%s5 + $0x60] sm:$0xff]
          %v7670 = vld [vmem:[%s5 + $0x68] sm:$0xff]
          %v7671 = vld [vmem:[%s5 + $0x70] sm:$0xff]
          %v7672 = vld [vmem:[#allocation9] sm:$0x1]
          %v7674 = vlaneseq
          %v7675 = vshrl.u32 %v7674, 7
          %v7676 = vsub.s32 0, %v7675
          %v7677 = vrot.slane %v7672, %v7676
          %vm7679 = vcmask 982016
          %v7681 = vsel %vm7679, %v7656, 0
          %7683 = vmatprep.subr.mxu0 0.0
          %7684 = vmatpush1.msra.mxu0 %v7657
          %7685 = vmatprep.subr.mxu0 0.0
          %7686 = vmatpush1.msra.mxu0 %v7658
          %7687 = vmatprep.subr.mxu0 0.0
          %7688 = vmatpush1.msra.mxu0 %v7659
          %7689 = vmatprep.subr.mxu0 0.0
          %7690 = vmatpush1.msra.mxu0 %v7660
          %7691 = vmatprep.subr.mxu0 0.0
          %7692 = vmatpush1.msra.mxu0 %v7661
          %7693 = vmatprep.subr.mxu0 0.0
          %7694 = vmatpush1.msra.mxu0 %v7662
          %7695 = vmatprep.subr.mxu0 0.0
          %7696 = vmatpush1.msra.mxu0 %v7663
          %7697 = vmatprep.subr.mxu0 0.0
          %7698 = vmatpush1.msra.mxu0 %v7664
          %7699 = vmatprep.subr.mxu0 0.0
          %7700 = vmatpush1.msra.mxu0 %v7665
          %7701 = vmatprep.subr.mxu0 0.0
          %7702 = vmatpush1.msra.mxu0 %v7666
          %7703 = vmatprep.subr.mxu0 0.0
          %7704 = vmatpush1.msra.mxu0 %v7667
          %7705 = vmatprep.subr.mxu0 0.0
          %7706 = vmatpush1.msra.mxu0 %v7668
          %7707 = vmatprep.subr.mxu0 0.0
          %7708 = vmatpush1.msra.mxu0 %v7669
          %7709 = vmatprep.subr.mxu0 0.0
          %7710 = vmatpush1.msra.mxu0 %v7670
          %7711 = vmatprep.subr.mxu0 0.0
          %7712 = vmatpush1.msra.mxu0 %v7671
          %7713 = vmatprep.subr.mxu0 0.0
          %7714 = vmatpush1.msra.mxu0 0.0
          %7715 = vmatprep.subr.mxu0 0.0
          %7716 = vmatpush1.msra.mxu0 0.0
          %7717 = vmatprep.subr.mxu0 0.0
          %7718 = vmatpush1.msra.mxu0 0.0
          %7719 = vmatprep.subr.mxu0 0.0
          %7720 = vmatpush1.msra.mxu0 0.0
          %7721 = vmatprep.subr.mxu0 0.0
          %7722 = vmatpush1.msra.mxu0 0.0
          %7723 = vmatprep.subr.mxu0 0.0
          %7724 = vmatpush1.msra.mxu0 0.0
          %7725 = vmatprep.subr.mxu0 0.0
          %7726 = vmatpush1.msra.mxu0 0.0
          %7727 = vmatprep.subr.mxu0 0.0
          %7728 = vmatpush1.msra.mxu0 0.0
          %7729 = vmatprep.subr.mxu0 0.0
          %7730 = vmatpush1.msra.mxu0 0.0
          %7731 = vmatprep.subr.mxu0 0.0
          %7732 = vmatpush1.msra.mxu0 0.0
          %7733 = vmatprep.subr.mxu0 0.0
          %7734 = vmatpush1.msra.mxu0 0.0
          %7735 = vmatprep.subr.mxu0 0.0
          %7736 = vmatpush1.msra.mxu0 0.0
          %7737 = vmatprep.subr.mxu0 0.0
          %7738 = vmatpush1.msra.mxu0 0.0
          %7739 = vmatprep.subr.mxu0 0.0
          %7740 = vmatpush1.msra.mxu0 0.0
          %7741 = vmatprep.subr.mxu0 0.0
          %7742 = vmatpush1.msra.mxu0 0.0
          %7743 = vmatprep.subr.mxu0 0.0
          %7744 = vmatpush1.msra.mxu0 0.0
          %7745 = vmatprep.subr.mxu0 0.0
          %7746 = vmatpush1.msra.mxu0 0.0
          %7747 = vmatprep.mubr.f32.mxu0 0.0
          %7748 = vmatmul.mubr.f32.gmra.mrb[0].mxu0 %v7681
          %v7749 = vpop.f32.mrb[0].mxu0
          %v7750 = vadd.f32 %v7677, %v7749
          %v7751 = vpop.f32.mrb[0].mxu0
          %7752 = vdwg.mxu0
          %vm7753 = vcmask 74752
          %7754 = vst.msk [vmem:[#allocation11] sm:$0x3] %vm7753, %v7750
        $region72: #{cnn1_forward.3} parent=47 // pred_fallthru
          _
        // Predicated region
        $region73: #{cnn1_forward.3} parent=47 // pred_check
          %p7755 = pneg %p194
        $region74: #{cnn1_forward.3} parent=47 // pred_check_branch
          %7757 = sbr.rel (%p7755) target = $region76
        $region75: #{cnn1_forward.3} parent=47 // pred_region
          %s7759 = ssub.s32 32, 32
          %7760 = vsyncadd [#allocation5], %s7759
          %s7762 = sshll.u32 [#allocation11], 4
          %s7763 = int_to_ptr.vmem [resolvable:$true] %s7762
          %7765 = dma.vmem_to_hbm [thread:$0]  %s7763, 32, %s7, [#allocation5]
        $region76: #{cnn1_forward.3} parent=47 // pred_fallthru
          _
        // Predicated region
        $region77: #{cnn1_forward.3} parent=47 // pred_check
          %p7766 = pneg %p194
        $region78: #{cnn1_forward.3} parent=47 // pred_check_branch
          %7768 = sbr.rel (%p7766) target = $region80
        $region79: #{cnn1_forward.3} parent=47 // pred_region
          %7769 = dma.done [#allocation5], 32
        $region80: #{cnn1_forward.3} parent=47 // pred_fallthru
          _
      $region48: #{cnn1_forward.3} parent=5 // pred_fallthru
        _
      %p7770 = scmp.le.s32.totalorder 2, %s19
      // Predicated region
      $region81: #{cnn1_forward.3} parent=5 // pred_check
        %p7771 = pneg %p7770
      $region82: #{cnn1_forward.3} parent=5 // pred_check_branch
        %7773 = sbr.rel (%p7771) target = $region84
      $region83: #{cnn1_forward.3} parent=5 // pred_region
        %s7774 = ssub.s32 %s19, 2
      $region84: #{cnn1_forward.3} parent=5 // pred_fallthru
        _
    $region6: #{cnn1_forward.3} parent=1 // loop_footer
      %s23 = sadd.s32 1, %s19
    $region7: #{cnn1_forward.3} parent=1 // loop_footer_branch
      %18 = sbr.rel target = $region3
    $region8: #{cnn1_forward.3} parent=1 // loop_exit
      _
    %7775 = vsyncpa [#allocation4], 1
    %s7776 = scalar_lea.sflag [#allocation4], 1
    %7777 = vsyncpa %s7776, 1
    %7778 = vsyncpa [#allocation7], 1
    %7779 = vsyncpa [#allocation10], 1
    %7780 = vsyncpa [#allocation5], 1
    %s7781 = scalar_lea.sflag [#allocation5], 1
    %7782 = vsyncpa %s7781, 1

</llo_original>
